<compile_context>
chip_gen: v7x
topology: tpu7x:2x2x1
jax: 0.10.0
libtpu: 0.0.40
codegen_flags: <defaults>
</compile_context>

<pallas_src>
import functools

import jax
import jax.numpy as jnp
from jax.experimental import pallas as pl
from jax.experimental.pallas import tpu as pltpu


# "-inf" for max-pool padding: never wins a max over real data, but small enough
# that junk-column conv accumulations stay finite in f32 (no inf/NaN anywhere).
_POOL_NEG = -1.0e30


def _round_up(x, m):
    return ((x + m - 1) // m) * m


def _default_vmem_limit():
    cap = 64 * 1024 * 1024                      # conservative default (v7x physical)
    try:
        cap = int(getattr(pltpu.get_tpu_info(), "vmem_capacity_bytes", cap))
    except Exception:
        pass
    return int(min(cap * 3 // 4, 96 * 1024 * 1024))


_VMEM_LIMIT = _default_vmem_limit()


def _compiler_params():
    return pltpu.CompilerParams(
        dimension_semantics=("parallel", "parallel"),
        vmem_limit_bytes=_VMEM_LIMIT)


def _tiling(mflat, max_off, target=1024):
    """Lane tile (TM), halo size (TH) and padded flat length for a flat map."""
    th = _round_up(max_off + 1, 128)
    tile_m = max(th, _round_up(min(target, _round_up(mflat, 128)), th))
    m_pad = _round_up(mflat, tile_m)
    return th, tile_m, m_pad


# ----------------------------------------------------------------------------
# Host-side relayout: pad + phase-decompose + flatten (ONE pad/reshape/transpose
# pass, ~1x traffic).  Every (pool x conv) tap then becomes a static contiguous
# lane slice of one phase plane inside the kernel ("junk-column" flat layout).
# ----------------------------------------------------------------------------
def _phase_planes(x, S, pad_lo, inner_pad, inner_val, rows, cols):
    """x: (N, C, H, W) -> (N, S*S, C, rows*cols).
    Plane (pr, pc) flat position m = y*cols + xc holds xpad[S*y + pr, S*xc + pc],
    where xpad has `inner_pad` cells of inner_val immediately around x (the
    pool's own -inf padding), `pad_lo` total low-side padding (rest zeros = the
    conv's zero padding) and zeros elsewhere."""
    n, c, h, w = x.shape
    xp = jnp.pad(x, ((0, 0), (0, 0), (inner_pad, inner_pad), (inner_pad, inner_pad)),
                 constant_values=inner_val)
    lo = pad_lo - inner_pad
    hi_h = S * rows - (h + 2 * inner_pad) - lo
    hi_w = S * cols - (w + 2 * inner_pad) - lo
    assert lo >= 0 and hi_h >= 0 and hi_w >= 0, (lo, hi_h, hi_w)
    xp = jnp.pad(xp, ((0, 0), (0, 0), (lo, hi_h), (lo, hi_w)))
    xp = xp.reshape(n, c, rows, S, cols, S)
    xp = jnp.transpose(xp, (0, 3, 5, 1, 2, 4))              # (N, S, S, C, rows, cols)
    return xp.reshape(n, S * S, c, rows * cols)


def _composite_taps(S, pad_lo, cols, kp, sp, pp, kc, pc):
    """(phase, flat offset) for every (conv tap, pool tap) pair of the composite
    max_pool(kp, sp, pp) -> conv(kc, stride=S/sp, pad=pc) operator."""
    groups = []
    for kh in range(kc):
        for kw in range(kc):
            g = []
            for qh in range(kp):
                for qw in range(kp):
                    kr = sp * (kh - pc) + qh - pp + pad_lo
                    kcol = sp * (kw - pc) + qw - pp + pad_lo
                    g.append((int((kr % S) * S + (kcol % S)),
                              int((kr // S) * cols + (kcol // S))))
            groups.append(tuple(g))
    return tuple(groups)


# ----------------------------------------------------------------------------
# Pallas kernels
# ----------------------------------------------------------------------------
def _pool_conv_kernel(conv_taps, x_ref, halo_ref, w_ref, scale_ref, shift_ref, o_ref):
    """(optional max-pool) + 3x3 conv + folded BN + ReLU6 on one lane tile.

    x_ref:    (P, Cin, TM)  bf16 phase planes (this tile's block)
    halo_ref: (P, Cin, TH)  bf16 (start of the NEXT block -> static tap slices)
    w_ref:    (Cout, 9*Cin) bf16 (taps folded into the matmul K dimension)
    scale/shift_ref: (Cout, 1) f32; o_ref: (Cout, TM) lane-dense output."""
    tm = o_ref.shape[-1]
    win = jnp.concatenate([x_ref[...], halo_ref[...]], axis=-1)   # (P, Cin, TM+TH)
    pieces = []
    for group in conv_taps:                       # 9 conv taps
        p0, off0 = group[0]
        v = win[p0, :, off0:off0 + tm]
        for (p, off) in group[1:]:                # rolling max over pool taps
            v = jnp.maximum(v, win[p, :, off:off + tm])
        pieces.append(v)
    kop = jnp.concatenate(pieces, axis=0)         # (9*Cin, TM) in VMEM
    y = jnp.dot(w_ref[...], kop, preferred_element_type=jnp.float32)   # (Cout, TM)
    y = y * scale_ref[...] + shift_ref[...]
    o_ref[...] = jnp.clip(y, 0.0, 6.0).astype(o_ref.dtype)


def _fused_head_kernel(l0_ref, l1_ref, l2_ref, l3_ref,
                       wblk_ref, scale_ref, shift_ref, wv_ref, bias_ref, o_ref):
    """Four 1x1 weight_level convs (block-diag 128->64 matmul) + BN + ReLU6 +
    weight_levels 1x1 conv (64->4) + softmax over the 4 levels + weighted
    fusion, all on one lane-dense tile.  The (4, TM) logits never touch HBM."""
    l0 = l0_ref[...]
    l1 = l1_ref[...]
    l2 = l2_ref[...]
    l3 = l3_ref[...]
    slab = jnp.concatenate([l0, l1, l2, l3], axis=0)                       # (4c, TM)
    v = jnp.dot(wblk_ref[...], slab, preferred_element_type=jnp.float32)   # (4cc, TM)
    v = jnp.clip(v * scale_ref[...] + shift_ref[...], 0.0, 6.0)
    logits = jnp.dot(wv_ref[...], v.astype(jnp.bfloat16),
                     preferred_element_type=jnp.float32) + bias_ref[...]   # (4, TM)
    m = jnp.max(logits, axis=0, keepdims=True)
    e = jnp.exp(logits - m)
    wgt = (e * pl.reciprocal(jnp.sum(e, axis=0, keepdims=True), approx=True)
           ).astype(jnp.bfloat16)                                          # (4, TM)
    fused = (l0 * wgt[0:1, :] + l1 * wgt[1:2, :]
             + l2 * wgt[2:3, :] + l3 * wgt[3:4, :])
    o_ref[...] = fused.astype(o_ref.dtype)


# ----------------------------------------------------------------------------
# pallas_call wrappers
# ----------------------------------------------------------------------------
def pool_conv_bn_relu6(x, conv_params, *, pool=None, conv_stride=1,
                       out_dtype=jnp.bfloat16, tile_m=None, m_pad=None,
                       return_flat=False):
    """[optional F.max_pool2d] -> add_conv(ksize=3, leaky=False): conv (no bias)
    + eval-mode BN + ReLU6.  x: (N, Cin, H, W) -> (N, Cout, Ho, Wo), or the flat
    junk-column layout (N, Cout, m_pad) with cols = Wo + e when return_flat."""
    w9, scale, shift = conv_params
    cout, ntap, cin = w9.shape
    assert ntap == 9
    kp, sp, pp = pool if pool is not None else (1, 1, 0)
    kc, sc, pc = 3, conv_stride, 1
    n, cin_x, h, w = x.shape
    assert cin_x == cin
    hp, wp = (h + 2 * pp - kp) // sp + 1, (w + 2 * pp - kp) // sp + 1
    ho, wo = (hp + 2 * pc - kc) // sc + 1, (wp + 2 * pc - kc) // sc + 1
    S = sp * sc
    pad_lo = sp * pc + pp
    kmax = sp * (kc - 1) + (kp - 1)
    e = kmax // S
    cols = wo + e
    if pool is not None:
        # (a) pool windows read only by conv zero-padding must be fully padded;
        # (b) the conv must never read a pooled row/col >= the pooled extent.
        assert kp <= sp + pp, "unsupported pool geometry for fused pool+conv"
        assert sc * (ho - 1) + kc - 1 - pc <= hp - 1, "odd pooled height unsupported"
        assert sc * (wo - 1) + kc - 1 - pc <= wp - 1, "odd pooled width unsupported"
    mflat = ho * cols
    max_off = e * cols + e
    th_i, tile_i, mpad_i = _tiling(mflat, max_off)
    th = th_i
    tile_m = tile_i if tile_m is None else tile_m
    m_pad = mpad_i if m_pad is None else m_pad
    assert tile_m % th == 0 and tile_m % 128 == 0 and m_pad % tile_m == 0

    rows = max(ho + e + 1, -(-(m_pad + th) // cols))
    inner_val = _POOL_NEG if pool is not None else 0.0
    planes = _phase_planes(x.astype(jnp.bfloat16), S, pad_lo, pp, inner_val, rows, cols)
    taps = _composite_taps(S, pad_lo, cols, kp, sp, pp, kc, pc)
    P = S * S
    ratio = tile_m // th
    wflat = w9.reshape(cout, ntap * cin)
    ntiles = m_pad // tile_m
    bytes_io = (planes.size * 2 + wflat.size * 2
                + n * m_pad * cout * jnp.dtype(out_dtype).itemsize)

    out = pl.pallas_call(
        functools.partial(_pool_conv_kernel, taps),
        out_shape=jax.ShapeDtypeStruct((n, cout, m_pad), out_dtype),
        grid=(n, ntiles),
        in_specs=[
            pl.BlockSpec((None, P, cin, tile_m), lambda b, j: (b, 0, 0, j)),
            pl.BlockSpec((None, P, cin, th), lambda b, j: (b, 0, 0, (j + 1) * ratio)),
            pl.BlockSpec((cout, ntap * cin), lambda b, j: (0, 0)),
            pl.BlockSpec((cout, 1), lambda b, j: (0, 0)),
            pl.BlockSpec((cout, 1), lambda b, j: (0, 0)),
        ],
        out_specs=pl.BlockSpec((None, cout, tile_m), lambda b, j: (b, 0, j)),
        compiler_params=_compiler_params(),
        cost_estimate=pl.CostEstimate(
            flops=2 * n * m_pad * cout * ntap * cin,
            transcendentals=0,
            bytes_accessed=int(bytes_io)),
    )(planes, planes, wflat, scale, shift)

    if return_flat:
        return out, (ho, wo, cols)
    # Junk-column removal (must stay before any spatial op on this output).
    out = out[:, :, :mflat].reshape(n, cout, ho, cols)[:, :, :, :wo]
    return out


def fused_weight_softmax(levels, wparams, tile_m):
    """levels: four (N, c, m_pad) bf16 flat maps (same junk-column layout).
    Returns the softmax-weighted fusion (N, c, m_pad) bf16."""
    wblk, scale, shift, wv, bias = wparams
    n, c, m_pad = levels[0].shape
    assert all(l.shape == (n, c, m_pad) for l in levels)
    assert m_pad % tile_m == 0
    lev_spec = pl.BlockSpec((None, c, tile_m), lambda b, j: (b, 0, j))
    out = pl.pallas_call(
        _fused_head_kernel,
        out_shape=jax.ShapeDtypeStruct((n, c, m_pad), jnp.bfloat16),
        grid=(n, m_pad // tile_m),
        in_specs=[lev_spec, lev_spec, lev_spec, lev_spec,
                  pl.BlockSpec(wblk.shape, lambda b, j: (0, 0)),
                  pl.BlockSpec(scale.shape, lambda b, j: (0, 0)),
                  pl.BlockSpec(shift.shape, lambda b, j: (0, 0)),
                  pl.BlockSpec(wv.shape, lambda b, j: (0, 0)),
                  pl.BlockSpec(bias.shape, lambda b, j: (0, 0))],
        out_specs=pl.BlockSpec((None, c, tile_m), lambda b, j: (b, 0, j)),
        compiler_params=_compiler_params(),
        cost_estimate=pl.CostEstimate(
            flops=2 * n * m_pad * (wblk.shape[0] * wblk.shape[1] + 4 * wblk.shape[0])
            + 12 * n * m_pad * c,
            transcendentals=4 * n * m_pad,
            bytes_accessed=5 * n * c * m_pad * 2),
    )(*levels, wblk, scale, shift, wv, bias)
    return out


# ----------------------------------------------------------------------------
# Deterministic parameters (bf16 conv weights + folded eval-mode BN in f32)
# ----------------------------------------------------------------------------
def _fold_bn(key, cout):
    k1, k2, k3, k4 = jax.random.split(key, 4)
    gamma = 1.0 + 0.1 * jax.random.normal(k1, (cout,), jnp.float32)
    beta = 0.1 * jax.random.normal(k2, (cout,), jnp.float32)
    mean = 0.1 * jax.random.normal(k3, (cout,), jnp.float32)
    var = jnp.abs(jax.random.normal(k4, (cout,), jnp.float32)) + 0.5
    scale = gamma / jnp.sqrt(var + 1e-5)
    shift = beta - mean * scale
    return scale, shift


def _init_conv_bn(key, cin, cout, ntap):
    kw, kb = jax.random.split(key)
    w = 0.05 * jax.random.normal(kw, (cout, ntap, cin), jnp.float32)
    scale, shift = _fold_bn(kb, cout)
    return (w.astype(jnp.bfloat16), scale.reshape(cout, 1), shift.reshape(cout, 1))


def init_asff_level0_params(key, dim, out_channels, compress_c=16):
    inter = dim[0]
    ks = jax.random.split(key, 10)
    params = {
        "stride_level_1": _init_conv_bn(ks[0], dim[1], inter, 9),
        "stride_level_2": _init_conv_bn(ks[1], dim[2], inter, 9),
        "stride_level_3": _init_conv_bn(ks[2], dim[3], inter, 9),
        "expand":         _init_conv_bn(ks[3], inter, out_channels[0], 9),
    }
    # Four 1x1 weight_level convs folded into one block-diagonal (64, 128) matmul.
    wblk = jnp.zeros((4 * compress_c, 4 * inter), jnp.float32)
    scales, shifts = [], []
    for li in range(4):
        kw, kb = jax.random.split(ks[4 + li])
        w = 0.05 * jax.random.normal(kw, (compress_c, inter), jnp.float32)
        wblk = wblk.at[li * compress_c:(li + 1) * compress_c,
                       li * inter:(li + 1) * inter].set(w)
        s, b = _fold_bn(kb, compress_c)
        scales.append(s)
        shifts.append(b)
    scale_cat = jnp.concatenate(scales).reshape(4 * compress_c, 1)
    shift_cat = jnp.concatenate(shifts).reshape(4 * compress_c, 1)
    kwv, kbv = jax.random.split(ks[8])
    wv = 0.05 * jax.random.normal(kwv, (4, 4 * compress_c), jnp.float32)
    bias = 0.1 * jax.random.normal(kbv, (4, 1), jnp.float32)
    params["weight_fused"] = (wblk.astype(jnp.bfloat16), scale_cat, shift_cat,
                              wv.astype(jnp.bfloat16), bias)
    return params


# ----------------------------------------------------------------------------
# ASFFNetwork forward (level = 0, rfb=False, vis=False)
# ----------------------------------------------------------------------------
@jax.jit
def asff_level0_forward(params, x0, x1, x2, x3):
    n, c0, h0, w0 = x0.shape
    # Shared level-0-resolution flat layout (junk-column width = w0 + 1).
    cols = w0 + 1
    mlev = h0 * cols
    _, tile_m, m_pad = _tiling(mlev, cols + 1)

    lvl1, g1 = pool_conv_bn_relu6(x1, params["stride_level_1"], pool=None,
                                  conv_stride=2, tile_m=tile_m, m_pad=m_pad,
                                  return_flat=True)
    lvl2, g2 = pool_conv_bn_relu6(x2, params["stride_level_2"], pool=(3, 2, 1),
                                  conv_stride=2, tile_m=tile_m, m_pad=m_pad,
                                  return_flat=True)
    lvl3, g3 = pool_conv_bn_relu6(x3, params["stride_level_3"], pool=(5, 4, 1),
                                  conv_stride=2, tile_m=tile_m, m_pad=m_pad,
                                  return_flat=True)
    assert g1 == g2 == g3 == (h0, w0, cols), (g1, g2, g3, (h0, w0, cols))

    # level_0 identity, laid into the same junk-column flat layout (no concat).
    lvl0 = jnp.pad(x0.astype(jnp.bfloat16), ((0, 0), (0, 0), (0, 0), (0, cols - w0)))
    lvl0 = lvl0.reshape(n, c0, mlev)
    lvl0 = jnp.pad(lvl0, ((0, 0), (0, 0), (0, m_pad - mlev)))

    fused = fused_weight_softmax([lvl0, lvl1, lvl2, lvl3],
                                 params["weight_fused"], tile_m)

    # Junk-column removal before the spatial expand conv.
    fused = fused[:, :, :mlev].reshape(n, c0, h0, cols)[:, :, :, :w0]
    out = pool_conv_bn_relu6(fused, params["expand"], pool=None, conv_stride=1,
                             out_dtype=jnp.float32)
    return out                                            # (N, out_ch, H0, W0) NCHW


# ----------------------------------------------------------------------------
# Pure-JAX (XLA, f32) reference of the same module for a tolerance check.
# ----------------------------------------------------------------------------
def reference_forward(params, x0, x1, x2, x3):
    def conv_bn_relu6(x, p, stride):
        w9, scale, shift = p
        cout, ntap, cin = w9.shape
        k = int(round(ntap ** 0.5))
        w = jnp.transpose(w9.astype(jnp.float32), (0, 2, 1)).reshape(cout, cin, k, k)
        y = jax.lax.conv_general_dilated(
            x, w, window_strides=(stride, stride),
            padding=((k // 2, k // 2), (k // 2, k // 2)),
            dimension_numbers=("NCHW", "OIHW", "NCHW"))
        y = y * scale.reshape(1, cout, 1, 1) + shift.reshape(1, cout, 1, 1)
        return jnp.clip(y, 0.0, 6.0)

    def maxpool(x, k, s, p):
        return jax.lax.reduce_window(
            x, -jnp.inf, jax.lax.max, (1, 1, k, k), (1, 1, s, s),
            padding=((0, 0), (0, 0), (p, p), (p, p)))

    l0 = x0
    l1 = conv_bn_relu6(x1, params["stride_level_1"], 2)
    l2 = conv_bn_relu6(maxpool(x2, 3, 2, 1), params["stride_level_2"], 2)
    l3 = conv_bn_relu6(maxpool(x3, 5, 4, 1), params["stride_level_3"], 2)
    cat = jnp.concatenate([l0, l1, l2, l3], axis=1)
    wblk, wscale, wshift, wv, wbias = params["weight_fused"]
    v = jnp.einsum("oc,nchw->nohw", wblk.astype(jnp.float32), cat)
    v = jnp.clip(v * wscale.reshape(1, -1, 1, 1) + wshift.reshape(1, -1, 1, 1), 0.0, 6.0)
    logits = jnp.einsum("oc,nchw->nohw", wv.astype(jnp.float32), v) + wbias.reshape(1, 4, 1, 1)
    wgt = jax.nn.softmax(logits, axis=1)
    c = l0.shape[1]
    fused = sum(cat[:, i * c:(i + 1) * c] * wgt[:, i:i + 1] for i in range(4))
    return conv_bn_relu6(fused, params["expand"], 1)


# ----------------------------------------------------------------------------
if __name__ == "__main__":
    # Small shapes consistent with the level=0 ASFF pyramid geometry:
    # x_level_i has dim[i] channels and spatial 2**i * H0.
    dim = [32, 24, 16, 8]
    out_channels = [64, 32, 16, 8]
    batch, h0 = 2, 8

    key = jax.random.PRNGKey(0)
    kp_, k0, k1, k2, k3 = jax.random.split(key, 5)

    params = init_asff_level0_params(kp_, dim, out_channels)

    x_level_0 = jax.random.normal(k0, (batch, dim[0], h0, h0), jnp.float32)
    x_level_1 = jax.random.normal(k1, (batch, dim[1], 2 * h0, 2 * h0), jnp.float32)
    x_level_2 = jax.random.normal(k2, (batch, dim[2], 4 * h0, 4 * h0), jnp.float32)
    x_level_3 = jax.random.normal(k3, (batch, dim[3], 8 * h0, 8 * h0), jnp.float32)

    out = asff_level0_forward(params, x_level_0, x_level_1, x_level_2, x_level_3)
    out = jax.block_until_ready(out)

    assert out.shape == (batch, out_channels[0], h0, h0), out.shape
    assert bool(jnp.all(jnp.isfinite(out)))

    ref = reference_forward(params, x_level_0, x_level_1, x_level_2, x_level_3)
    err = float(jnp.max(jnp.abs(out - ref)))
    # bf16 activations/weights vs f32 reference -> small drift is expected.
    assert err < 0.35, f"max |pallas - reference| too large: {err}"

    print("KERNEL_OK")
</pallas_src>

<mosaic_0001>
module attributes {stable_mosaic.version = 11 : i64} {
  func.func @_pool_conv_kernel(%arg0: i32, %arg1: i32, %arg2: memref<1x64x8x128xbf16, #tpu.memory_space<vmem>>, %arg3: memref<1x64x8x128xbf16, #tpu.memory_space<vmem>>, %arg4: memref<32x72xbf16, #tpu.memory_space<vmem>>, %arg5: memref<32x1xf32, #tpu.memory_space<vmem>>, %arg6: memref<32x1xf32, #tpu.memory_space<vmem>>, %arg7: memref<1x32x128xbf16, #tpu.memory_space<vmem>>) attributes {dimension_semantics = [#tpu.dimension_semantics<parallel>, #tpu.dimension_semantics<parallel>], iteration_bounds = array<i64: 2, 1>, scalar_prefetch = 0 : i64, scratch_operands = 0 : i64, tpu.core_type = #tpu.core_type<tc>, window_params = [{transform_indices = @transform_0, window_bounds = array<i64: 1, 64, 8, 128>}, {transform_indices = @transform_1, window_bounds = array<i64: 1, 64, 8, 128>}, {pipeline_mode = #tpu.pipeline_mode<synchronous>, transform_indices = @transform_2, window_bounds = array<i64: 32, 72>}, {pipeline_mode = #tpu.pipeline_mode<synchronous>, transform_indices = @transform_3, window_bounds = array<i64: 32, 1>}, {pipeline_mode = #tpu.pipeline_mode<synchronous>, transform_indices = @transform_4, window_bounds = array<i64: 32, 1>}, {transform_indices = @transform_5, window_bounds = array<i64: 1, 32, 128>}]} {
    %c0 = arith.constant 0 : index
    %c0_0 = arith.constant 0 : index
    %c0_1 = arith.constant 0 : index
    %c0_2 = arith.constant 0 : index
    %0 = vector.load %arg2[%c0, %c0_0, %c0_1, %c0_2] : memref<1x64x8x128xbf16, #tpu.memory_space<vmem>>, vector<1x64x8x128xbf16>
    %1 = vector.shape_cast %0 : vector<1x64x8x128xbf16> to vector<64x8x128xbf16>
    %c0_3 = arith.constant 0 : index
    %c0_4 = arith.constant 0 : index
    %c0_5 = arith.constant 0 : index
    %c0_6 = arith.constant 0 : index
    %2 = vector.load %arg3[%c0_3, %c0_4, %c0_5, %c0_6] : memref<1x64x8x128xbf16, #tpu.memory_space<vmem>>, vector<1x64x8x128xbf16>
    %3 = vector.shape_cast %2 : vector<1x64x8x128xbf16> to vector<64x8x128xbf16>
    %4 = tpu.concatenate %1, %3 in 2 : vector<64x8x128xbf16>, vector<64x8x128xbf16> -> vector<64x8x256xbf16>
    %5 = vector.extract_strided_slice %4 {offsets = [0, 0, 0], sizes = [1, 8, 128], strides = [1, 1, 1]} : vector<64x8x256xbf16> to vector<1x8x128xbf16>
    %6 = vector.shape_cast %5 : vector<1x8x128xbf16> to vector<8x128xbf16>
    %7 = vector.extract_strided_slice %4 {offsets = [1, 0, 0], sizes = [1, 8, 128], strides = [1, 1, 1]} : vector<64x8x256xbf16> to vector<1x8x128xbf16>
    %8 = vector.shape_cast %7 : vector<1x8x128xbf16> to vector<8x128xbf16>
    %9 = arith.maximumf %6, %8 : vector<8x128xbf16>
    %10 = vector.extract_strided_slice %4 {offsets = [2, 0, 0], sizes = [1, 8, 128], strides = [1, 1, 1]} : vector<64x8x256xbf16> to vector<1x8x128xbf16>
    %11 = vector.shape_cast %10 : vector<1x8x128xbf16> to vector<8x128xbf16>
    %12 = arith.maximumf %9, %11 : vector<8x128xbf16>
    %13 = vector.extract_strided_slice %4 {offsets = [3, 0, 0], sizes = [1, 8, 128], strides = [1, 1, 1]} : vector<64x8x256xbf16> to vector<1x8x128xbf16>
    %14 = vector.shape_cast %13 : vector<1x8x128xbf16> to vector<8x128xbf16>
    %15 = arith.maximumf %12, %14 : vector<8x128xbf16>
    %16 = vector.extract_strided_slice %4 {offsets = [4, 0, 0], sizes = [1, 8, 128], strides = [1, 1, 1]} : vector<64x8x256xbf16> to vector<1x8x128xbf16>
    %17 = vector.shape_cast %16 : vector<1x8x128xbf16> to vector<8x128xbf16>
    %18 = arith.maximumf %15, %17 : vector<8x128xbf16>
    %19 = vector.extract_strided_slice %4 {offsets = [8, 0, 0], sizes = [1, 8, 128], strides = [1, 1, 1]} : vector<64x8x256xbf16> to vector<1x8x128xbf16>
    %20 = vector.shape_cast %19 : vector<1x8x128xbf16> to vector<8x128xbf16>
    %21 = arith.maximumf %18, %20 : vector<8x128xbf16>
    %22 = vector.extract_strided_slice %4 {offsets = [9, 0, 0], sizes = [1, 8, 128], strides = [1, 1, 1]} : vector<64x8x256xbf16> to vector<1x8x128xbf16>
    %23 = vector.shape_cast %22 : vector<1x8x128xbf16> to vector<8x128xbf16>
    %24 = arith.maximumf %21, %23 : vector<8x128xbf16>
    %25 = vector.extract_strided_slice %4 {offsets = [10, 0, 0], sizes = [1, 8, 128], strides = [1, 1, 1]} : vector<64x8x256xbf16> to vector<1x8x128xbf16>
    %26 = vector.shape_cast %25 : vector<1x8x128xbf16> to vector<8x128xbf16>
    %27 = arith.maximumf %24, %26 : vector<8x128xbf16>
    %28 = vector.extract_strided_slice %4 {offsets = [11, 0, 0], sizes = [1, 8, 128], strides = [1, 1, 1]} : vector<64x8x256xbf16> to vector<1x8x128xbf16>
    %29 = vector.shape_cast %28 : vector<1x8x128xbf16> to vector<8x128xbf16>
    %30 = arith.maximumf %27, %29 : vector<8x128xbf16>
    %31 = vector.extract_strided_slice %4 {offsets = [12, 0, 0], sizes = [1, 8, 128], strides = [1, 1, 1]} : vector<64x8x256xbf16> to vector<1x8x128xbf16>
    %32 = vector.shape_cast %31 : vector<1x8x128xbf16> to vector<8x128xbf16>
    %33 = arith.maximumf %30, %32 : vector<8x128xbf16>
    %34 = vector.extract_strided_slice %4 {offsets = [16, 0, 0], sizes = [1, 8, 128], strides = [1, 1, 1]} : vector<64x8x256xbf16> to vector<1x8x128xbf16>
    %35 = vector.shape_cast %34 : vector<1x8x128xbf16> to vector<8x128xbf16>
    %36 = arith.maximumf %33, %35 : vector<8x128xbf16>
    %37 = vector.extract_strided_slice %4 {offsets = [17, 0, 0], sizes = [1, 8, 128], strides = [1, 1, 1]} : vector<64x8x256xbf16> to vector<1x8x128xbf16>
    %38 = vector.shape_cast %37 : vector<1x8x128xbf16> to vector<8x128xbf16>
    %39 = arith.maximumf %36, %38 : vector<8x128xbf16>
    %40 = vector.extract_strided_slice %4 {offsets = [18, 0, 0], sizes = [1, 8, 128], strides = [1, 1, 1]} : vector<64x8x256xbf16> to vector<1x8x128xbf16>
    %41 = vector.shape_cast %40 : vector<1x8x128xbf16> to vector<8x128xbf16>
    %42 = arith.maximumf %39, %41 : vector<8x128xbf16>
    %43 = vector.extract_strided_slice %4 {offsets = [19, 0, 0], sizes = [1, 8, 128], strides = [1, 1, 1]} : vector<64x8x256xbf16> to vector<1x8x128xbf16>
    %44 = vector.shape_cast %43 : vector<1x8x128xbf16> to vector<8x128xbf16>
    %45 = arith.maximumf %42, %44 : vector<8x128xbf16>
    %46 = vector.extract_strided_slice %4 {offsets = [20, 0, 0], sizes = [1, 8, 128], strides = [1, 1, 1]} : vector<64x8x256xbf16> to vector<1x8x128xbf16>
    %47 = vector.shape_cast %46 : vector<1x8x128xbf16> to vector<8x128xbf16>
    %48 = arith.maximumf %45, %47 : vector<8x128xbf16>
    %49 = vector.extract_strided_slice %4 {offsets = [24, 0, 0], sizes = [1, 8, 128], strides = [1, 1, 1]} : vector<64x8x256xbf16> to vector<1x8x128xbf16>
    %50 = vector.shape_cast %49 : vector<1x8x128xbf16> to vector<8x128xbf16>
    %51 = arith.maximumf %48, %50 : vector<8x128xbf16>
    %52 = vector.extract_strided_slice %4 {offsets = [25, 0, 0], sizes = [1, 8, 128], strides = [1, 1, 1]} : vector<64x8x256xbf16> to vector<1x8x128xbf16>
    %53 = vector.shape_cast %52 : vector<1x8x128xbf16> to vector<8x128xbf16>
    %54 = arith.maximumf %51, %53 : vector<8x128xbf16>
    %55 = vector.extract_strided_slice %4 {offsets = [26, 0, 0], sizes = [1, 8, 128], strides = [1, 1, 1]} : vector<64x8x256xbf16> to vector<1x8x128xbf16>
    %56 = vector.shape_cast %55 : vector<1x8x128xbf16> to vector<8x128xbf16>
    %57 = arith.maximumf %54, %56 : vector<8x128xbf16>
    %58 = vector.extract_strided_slice %4 {offsets = [27, 0, 0], sizes = [1, 8, 128], strides = [1, 1, 1]} : vector<64x8x256xbf16> to vector<1x8x128xbf16>
    %59 = vector.shape_cast %58 : vector<1x8x128xbf16> to vector<8x128xbf16>
    %60 = arith.maximumf %57, %59 : vector<8x128xbf16>
    %61 = vector.extract_strided_slice %4 {offsets = [28, 0, 0], sizes = [1, 8, 128], strides = [1, 1, 1]} : vector<64x8x256xbf16> to vector<1x8x128xbf16>
    %62 = vector.shape_cast %61 : vector<1x8x128xbf16> to vector<8x128xbf16>
    %63 = arith.maximumf %60, %62 : vector<8x128xbf16>
    %64 = vector.extract_strided_slice %4 {offsets = [32, 0, 0], sizes = [1, 8, 128], strides = [1, 1, 1]} : vector<64x8x256xbf16> to vector<1x8x128xbf16>
    %65 = vector.shape_cast %64 : vector<1x8x128xbf16> to vector<8x128xbf16>
    %66 = arith.maximumf %63, %65 : vector<8x128xbf16>
    %67 = vector.extract_strided_slice %4 {offsets = [33, 0, 0], sizes = [1, 8, 128], strides = [1, 1, 1]} : vector<64x8x256xbf16> to vector<1x8x128xbf16>
    %68 = vector.shape_cast %67 : vector<1x8x128xbf16> to vector<8x128xbf16>
    %69 = arith.maximumf %66, %68 : vector<8x128xbf16>
    %70 = vector.extract_strided_slice %4 {offsets = [34, 0, 0], sizes = [1, 8, 128], strides = [1, 1, 1]} : vector<64x8x256xbf16> to vector<1x8x128xbf16>
    %71 = vector.shape_cast %70 : vector<1x8x128xbf16> to vector<8x128xbf16>
    %72 = arith.maximumf %69, %71 : vector<8x128xbf16>
    %73 = vector.extract_strided_slice %4 {offsets = [35, 0, 0], sizes = [1, 8, 128], strides = [1, 1, 1]} : vector<64x8x256xbf16> to vector<1x8x128xbf16>
    %74 = vector.shape_cast %73 : vector<1x8x128xbf16> to vector<8x128xbf16>
    %75 = arith.maximumf %72, %74 : vector<8x128xbf16>
    %76 = vector.extract_strided_slice %4 {offsets = [36, 0, 0], sizes = [1, 8, 128], strides = [1, 1, 1]} : vector<64x8x256xbf16> to vector<1x8x128xbf16>
    %77 = vector.shape_cast %76 : vector<1x8x128xbf16> to vector<8x128xbf16>
    %78 = arith.maximumf %75, %77 : vector<8x128xbf16>
    %79 = vector.extract_strided_slice %4 {offsets = [4, 0, 0], sizes = [1, 8, 128], strides = [1, 1, 1]} : vector<64x8x256xbf16> to vector<1x8x128xbf16>
    %80 = vector.shape_cast %79 : vector<1x8x128xbf16> to vector<8x128xbf16>
    %81 = vector.extract_strided_slice %4 {offsets = [5, 0, 0], sizes = [1, 8, 128], strides = [1, 1, 1]} : vector<64x8x256xbf16> to vector<1x8x128xbf16>
    %82 = vector.shape_cast %81 : vector<1x8x128xbf16> to vector<8x128xbf16>
    %83 = arith.maximumf %80, %82 : vector<8x128xbf16>
    %84 = vector.extract_strided_slice %4 {offsets = [6, 0, 0], sizes = [1, 8, 128], strides = [1, 1, 1]} : vector<64x8x256xbf16> to vector<1x8x128xbf16>
    %85 = vector.shape_cast %84 : vector<1x8x128xbf16> to vector<8x128xbf16>
    %86 = arith.maximumf %83, %85 : vector<8x128xbf16>
    %87 = vector.extract_strided_slice %4 {offsets = [7, 0, 0], sizes = [1, 8, 128], strides = [1, 1, 1]} : vector<64x8x256xbf16> to vector<1x8x128xbf16>
    %88 = vector.shape_cast %87 : vector<1x8x128xbf16> to vector<8x128xbf16>
    %89 = arith.maximumf %86, %88 : vector<8x128xbf16>
    %90 = vector.extract_strided_slice %4 {offsets = [0, 0, 1], sizes = [1, 8, 128], strides = [1, 1, 1]} : vector<64x8x256xbf16> to vector<1x8x128xbf16>
    %91 = vector.shape_cast %90 : vector<1x8x128xbf16> to vector<8x128xbf16>
    %92 = arith.maximumf %89, %91 : vector<8x128xbf16>
    %93 = vector.extract_strided_slice %4 {offsets = [12, 0, 0], sizes = [1, 8, 128], strides = [1, 1, 1]} : vector<64x8x256xbf16> to vector<1x8x128xbf16>
    %94 = vector.shape_cast %93 : vector<1x8x128xbf16> to vector<8x128xbf16>
    %95 = arith.maximumf %92, %94 : vector<8x128xbf16>
    %96 = vector.extract_strided_slice %4 {offsets = [13, 0, 0], sizes = [1, 8, 128], strides = [1, 1, 1]} : vector<64x8x256xbf16> to vector<1x8x128xbf16>
    %97 = vector.shape_cast %96 : vector<1x8x128xbf16> to vector<8x128xbf16>
    %98 = arith.maximumf %95, %97 : vector<8x128xbf16>
    %99 = vector.extract_strided_slice %4 {offsets = [14, 0, 0], sizes = [1, 8, 128], strides = [1, 1, 1]} : vector<64x8x256xbf16> to vector<1x8x128xbf16>
    %100 = vector.shape_cast %99 : vector<1x8x128xbf16> to vector<8x128xbf16>
    %101 = arith.maximumf %98, %100 : vector<8x128xbf16>
    %102 = vector.extract_strided_slice %4 {offsets = [15, 0, 0], sizes = [1, 8, 128], strides = [1, 1, 1]} : vector<64x8x256xbf16> to vector<1x8x128xbf16>
    %103 = vector.shape_cast %102 : vector<1x8x128xbf16> to vector<8x128xbf16>
    %104 = arith.maximumf %101, %103 : vector<8x128xbf16>
    %105 = vector.extract_strided_slice %4 {offsets = [8, 0, 1], sizes = [1, 8, 128], strides = [1, 1, 1]} : vector<64x8x256xbf16> to vector<1x8x128xbf16>
    %106 = vector.shape_cast %105 : vector<1x8x128xbf16> to vector<8x128xbf16>
    %107 = arith.maximumf %104, %106 : vector<8x128xbf16>
    %108 = vector.extract_strided_slice %4 {offsets = [20, 0, 0], sizes = [1, 8, 128], strides = [1, 1, 1]} : vector<64x8x256xbf16> to vector<1x8x128xbf16>
    %109 = vector.shape_cast %108 : vector<1x8x128xbf16> to vector<8x128xbf16>
    %110 = arith.maximumf %107, %109 : vector<8x128xbf16>
    %111 = vector.extract_strided_slice %4 {offsets = [21, 0, 0], sizes = [1, 8, 128], strides = [1, 1, 1]} : vector<64x8x256xbf16> to vector<1x8x128xbf16>
    %112 = vector.shape_cast %111 : vector<1x8x128xbf16> to vector<8x128xbf16>
    %113 = arith.maximumf %110, %112 : vector<8x128xbf16>
    %114 = vector.extract_strided_slice %4 {offsets = [22, 0, 0], sizes = [1, 8, 128], strides = [1, 1, 1]} : vector<64x8x256xbf16> to vector<1x8x128xbf16>
    %115 = vector.shape_cast %114 : vector<1x8x128xbf16> to vector<8x128xbf16>
    %116 = arith.maximumf %113, %115 : vector<8x128xbf16>
    %117 = vector.extract_strided_slice %4 {offsets = [23, 0, 0], sizes = [1, 8, 128], strides = [1, 1, 1]} : vector<64x8x256xbf16> to vector<1x8x128xbf16>
    %118 = vector.shape_cast %117 : vector<1x8x128xbf16> to vector<8x128xbf16>
    %119 = arith.maximumf %116, %118 : vector<8x128xbf16>
    %120 = vector.extract_strided_slice %4 {offsets = [16, 0, 1], sizes = [1, 8, 128], strides = [1, 1, 1]} : vector<64x8x256xbf16> to vector<1x8x128xbf16>
    %121 = vector.shape_cast %120 : vector<1x8x128xbf16> to vector<8x128xbf16>
    %122 = arith.maximumf %119, %121 : vector<8x128xbf16>
    %123 = vector.extract_strided_slice %4 {offsets = [28, 0, 0], sizes = [1, 8, 128], strides = [1, 1, 1]} : vector<64x8x256xbf16> to vector<1x8x128xbf16>
    %124 = vector.shape_cast %123 : vector<1x8x128xbf16> to vector<8x128xbf16>
    %125 = arith.maximumf %122, %124 : vector<8x128xbf16>
    %126 = vector.extract_strided_slice %4 {offsets = [29, 0, 0], sizes = [1, 8, 128], strides = [1, 1, 1]} : vector<64x8x256xbf16> to vector<1x8x128xbf16>
    %127 = vector.shape_cast %126 : vector<1x8x128xbf16> to vector<8x128xbf16>
    %128 = arith.maximumf %125, %127 : vector<8x128xbf16>
    %129 = vector.extract_strided_slice %4 {offsets = [30, 0, 0], sizes = [1, 8, 128], strides = [1, 1, 1]} : vector<64x8x256xbf16> to vector<1x8x128xbf16>
    %130 = vector.shape_cast %129 : vector<1x8x128xbf16> to vector<8x128xbf16>
    %131 = arith.maximumf %128, %130 : vector<8x128xbf16>
    %132 = vector.extract_strided_slice %4 {offsets = [31, 0, 0], sizes = [1, 8, 128], strides = [1, 1, 1]} : vector<64x8x256xbf16> to vector<1x8x128xbf16>
    %133 = vector.shape_cast %132 : vector<1x8x128xbf16> to vector<8x128xbf16>
    %134 = arith.maximumf %131, %133 : vector<8x128xbf16>
    %135 = vector.extract_strided_slice %4 {offsets = [24, 0, 1], sizes = [1, 8, 128], strides = [1, 1, 1]} : vector<64x8x256xbf16> to vector<1x8x128xbf16>
    %136 = vector.shape_cast %135 : vector<1x8x128xbf16> to vector<8x128xbf16>
    %137 = arith.maximumf %134, %136 : vector<8x128xbf16>
    %138 = vector.extract_strided_slice %4 {offsets = [36, 0, 0], sizes = [1, 8, 128], strides = [1, 1, 1]} : vector<64x8x256xbf16> to vector<1x8x128xbf16>
    %139 = vector.shape_cast %138 : vector<1x8x128xbf16> to vector<8x128xbf16>
    %140 = arith.maximumf %137, %139 : vector<8x128xbf16>
    %141 = vector.extract_strided_slice %4 {offsets = [37, 0, 0], sizes = [1, 8, 128], strides = [1, 1, 1]} : vector<64x8x256xbf16> to vector<1x8x128xbf16>
    %142 = vector.shape_cast %141 : vector<1x8x128xbf16> to vector<8x128xbf16>
    %143 = arith.maximumf %140, %142 : vector<8x128xbf16>
    %144 = vector.extract_strided_slice %4 {offsets = [38, 0, 0], sizes = [1, 8, 128], strides = [1, 1, 1]} : vector<64x8x256xbf16> to vector<1x8x128xbf16>
    %145 = vector.shape_cast %144 : vector<1x8x128xbf16> to vector<8x128xbf16>
    %146 = arith.maximumf %143, %145 : vector<8x128xbf16>
    %147 = vector.extract_strided_slice %4 {offsets = [39, 0, 0], sizes = [1, 8, 128], strides = [1, 1, 1]} : vector<64x8x256xbf16> to vector<1x8x128xbf16>
    %148 = vector.shape_cast %147 : vector<1x8x128xbf16> to vector<8x128xbf16>
    %149 = arith.maximumf %146, %148 : vector<8x128xbf16>
    %150 = vector.extract_strided_slice %4 {offsets = [32, 0, 1], sizes = [1, 8, 128], strides = [1, 1, 1]} : vector<64x8x256xbf16> to vector<1x8x128xbf16>
    %151 = vector.shape_cast %150 : vector<1x8x128xbf16> to vector<8x128xbf16>
    %152 = arith.maximumf %149, %151 : vector<8x128xbf16>
    %153 = vector.extract_strided_slice %4 {offsets = [0, 0, 1], sizes = [1, 8, 128], strides = [1, 1, 1]} : vector<64x8x256xbf16> to vector<1x8x128xbf16>
    %154 = vector.shape_cast %153 : vector<1x8x128xbf16> to vector<8x128xbf16>
    %155 = vector.extract_strided_slice %4 {offsets = [1, 0, 1], sizes = [1, 8, 128], strides = [1, 1, 1]} : vector<64x8x256xbf16> to vector<1x8x128xbf16>
    %156 = vector.shape_cast %155 : vector<1x8x128xbf16> to vector<8x128xbf16>
    %157 = arith.maximumf %154, %156 : vector<8x128xbf16>
    %158 = vector.extract_strided_slice %4 {offsets = [2, 0, 1], sizes = [1, 8, 128], strides = [1, 1, 1]} : vector<64x8x256xbf16> to vector<1x8x128xbf16>
    %159 = vector.shape_cast %158 : vector<1x8x128xbf16> to vector<8x128xbf16>
    %160 = arith.maximumf %157, %159 : vector<8x128xbf16>
    %161 = vector.extract_strided_slice %4 {offsets = [3, 0, 1], sizes = [1, 8, 128], strides = [1, 1, 1]} : vector<64x8x256xbf16> to vector<1x8x128xbf16>
    %162 = vector.shape_cast %161 : vector<1x8x128xbf16> to vector<8x128xbf16>
    %163 = arith.maximumf %160, %162 : vector<8x128xbf16>
    %164 = vector.extract_strided_slice %4 {offsets = [4, 0, 1], sizes = [1, 8, 128], strides = [1, 1, 1]} : vector<64x8x256xbf16> to vector<1x8x128xbf16>
    %165 = vector.shape_cast %164 : vector<1x8x128xbf16> to vector<8x128xbf16>
    %166 = arith.maximumf %163, %165 : vector<8x128xbf16>
    %167 = vector.extract_strided_slice %4 {offsets = [8, 0, 1], sizes = [1, 8, 128], strides = [1, 1, 1]} : vector<64x8x256xbf16> to vector<1x8x128xbf16>
    %168 = vector.shape_cast %167 : vector<1x8x128xbf16> to vector<8x128xbf16>
    %169 = arith.maximumf %166, %168 : vector<8x128xbf16>
    %170 = vector.extract_strided_slice %4 {offsets = [9, 0, 1], sizes = [1, 8, 128], strides = [1, 1, 1]} : vector<64x8x256xbf16> to vector<1x8x128xbf16>
    %171 = vector.shape_cast %170 : vector<1x8x128xbf16> to vector<8x128xbf16>
    %172 = arith.maximumf %169, %171 : vector<8x128xbf16>
    %173 = vector.extract_strided_slice %4 {offsets = [10, 0, 1], sizes = [1, 8, 128], strides = [1, 1, 1]} : vector<64x8x256xbf16> to vector<1x8x128xbf16>
    %174 = vector.shape_cast %173 : vector<1x8x128xbf16> to vector<8x128xbf16>
    %175 = arith.maximumf %172, %174 : vector<8x128xbf16>
    %176 = vector.extract_strided_slice %4 {offsets = [11, 0, 1], sizes = [1, 8, 128], strides = [1, 1, 1]} : vector<64x8x256xbf16> to vector<1x8x128xbf16>
    %177 = vector.shape_cast %176 : vector<1x8x128xbf16> to vector<8x128xbf16>
    %178 = arith.maximumf %175, %177 : vector<8x128xbf16>
    %179 = vector.extract_strided_slice %4 {offsets = [12, 0, 1], sizes = [1, 8, 128], strides = [1, 1, 1]} : vector<64x8x256xbf16> to vector<1x8x128xbf16>
    %180 = vector.shape_cast %179 : vector<1x8x128xbf16> to vector<8x128xbf16>
    %181 = arith.maximumf %178, %180 : vector<8x128xbf16>
    %182 = vector.extract_strided_slice %4 {offsets = [16, 0, 1], sizes = [1, 8, 128], strides = [1, 1, 1]} : vector<64x8x256xbf16> to vector<1x8x128xbf16>
    %183 = vector.shape_cast %182 : vector<1x8x128xbf16> to vector<8x128xbf16>
    %184 = arith.maximumf %181, %183 : vector<8x128xbf16>
    %185 = vector.extract_strided_slice %4 {offsets = [17, 0, 1], sizes = [1, 8, 128], strides = [1, 1, 1]} : vector<64x8x256xbf16> to vector<1x8x128xbf16>
    %186 = vector.shape_cast %185 : vector<1x8x128xbf16> to vector<8x128xbf16>
    %187 = arith.maximumf %184, %186 : vector<8x128xbf16>
    %188 = vector.extract_strided_slice %4 {offsets = [18, 0, 1], sizes = [1, 8, 128], strides = [1, 1, 1]} : vector<64x8x256xbf16> to vector<1x8x128xbf16>
    %189 = vector.shape_cast %188 : vector<1x8x128xbf16> to vector<8x128xbf16>
    %190 = arith.maximumf %187, %189 : vector<8x128xbf16>
    %191 = vector.extract_strided_slice %4 {offsets = [19, 0, 1], sizes = [1, 8, 128], strides = [1, 1, 1]} : vector<64x8x256xbf16> to vector<1x8x128xbf16>
    %192 = vector.shape_cast %191 : vector<1x8x128xbf16> to vector<8x128xbf16>
    %193 = arith.maximumf %190, %192 : vector<8x128xbf16>
    %194 = vector.extract_strided_slice %4 {offsets = [20, 0, 1], sizes = [1, 8, 128], strides = [1, 1, 1]} : vector<64x8x256xbf16> to vector<1x8x128xbf16>
    %195 = vector.shape_cast %194 : vector<1x8x128xbf16> to vector<8x128xbf16>
    %196 = arith.maximumf %193, %195 : vector<8x128xbf16>
    %197 = vector.extract_strided_slice %4 {offsets = [24, 0, 1], sizes = [1, 8, 128], strides = [1, 1, 1]} : vector<64x8x256xbf16> to vector<1x8x128xbf16>
    %198 = vector.shape_cast %197 : vector<1x8x128xbf16> to vector<8x128xbf16>
    %199 = arith.maximumf %196, %198 : vector<8x128xbf16>
    %200 = vector.extract_strided_slice %4 {offsets = [25, 0, 1], sizes = [1, 8, 128], strides = [1, 1, 1]} : vector<64x8x256xbf16> to vector<1x8x128xbf16>
    %201 = vector.shape_cast %200 : vector<1x8x128xbf16> to vector<8x128xbf16>
    %202 = arith.maximumf %199, %201 : vector<8x128xbf16>
    %203 = vector.extract_strided_slice %4 {offsets = [26, 0, 1], sizes = [1, 8, 128], strides = [1, 1, 1]} : vector<64x8x256xbf16> to vector<1x8x128xbf16>
    %204 = vector.shape_cast %203 : vector<1x8x128xbf16> to vector<8x128xbf16>
    %205 = arith.maximumf %202, %204 : vector<8x128xbf16>
    %206 = vector.extract_strided_slice %4 {offsets = [27, 0, 1], sizes = [1, 8, 128], strides = [1, 1, 1]} : vector<64x8x256xbf16> to vector<1x8x128xbf16>
    %207 = vector.shape_cast %206 : vector<1x8x128xbf16> to vector<8x128xbf16>
    %208 = arith.maximumf %205, %207 : vector<8x128xbf16>
    %209 = vector.extract_strided_slice %4 {offsets = [28, 0, 1], sizes = [1, 8, 128], strides = [1, 1, 1]} : vector<64x8x256xbf16> to vector<1x8x128xbf16>
    %210 = vector.shape_cast %209 : vector<1x8x128xbf16> to vector<8x128xbf16>
    %211 = arith.maximumf %208, %210 : vector<8x128xbf16>
    %212 = vector.extract_strided_slice %4 {offsets = [32, 0, 1], sizes = [1, 8, 128], strides = [1, 1, 1]} : vector<64x8x256xbf16> to vector<1x8x128xbf16>
    %213 = vector.shape_cast %212 : vector<1x8x128xbf16> to vector<8x128xbf16>
    %214 = arith.maximumf %211, %213 : vector<8x128xbf16>
    %215 = vector.extract_strided_slice %4 {offsets = [33, 0, 1], sizes = [1, 8, 128], strides = [1, 1, 1]} : vector<64x8x256xbf16> to vector<1x8x128xbf16>
    %216 = vector.shape_cast %215 : vector<1x8x128xbf16> to vector<8x128xbf16>
    %217 = arith.maximumf %214, %216 : vector<8x128xbf16>
    %218 = vector.extract_strided_slice %4 {offsets = [34, 0, 1], sizes = [1, 8, 128], strides = [1, 1, 1]} : vector<64x8x256xbf16> to vector<1x8x128xbf16>
    %219 = vector.shape_cast %218 : vector<1x8x128xbf16> to vector<8x128xbf16>
    %220 = arith.maximumf %217, %219 : vector<8x128xbf16>
    %221 = vector.extract_strided_slice %4 {offsets = [35, 0, 1], sizes = [1, 8, 128], strides = [1, 1, 1]} : vector<64x8x256xbf16> to vector<1x8x128xbf16>
    %222 = vector.shape_cast %221 : vector<1x8x128xbf16> to vector<8x128xbf16>
    %223 = arith.maximumf %220, %222 : vector<8x128xbf16>
    %224 = vector.extract_strided_slice %4 {offsets = [36, 0, 1], sizes = [1, 8, 128], strides = [1, 1, 1]} : vector<64x8x256xbf16> to vector<1x8x128xbf16>
    %225 = vector.shape_cast %224 : vector<1x8x128xbf16> to vector<8x128xbf16>
    %226 = arith.maximumf %223, %225 : vector<8x128xbf16>
    %227 = vector.extract_strided_slice %4 {offsets = [32, 0, 0], sizes = [1, 8, 128], strides = [1, 1, 1]} : vector<64x8x256xbf16> to vector<1x8x128xbf16>
    %228 = vector.shape_cast %227 : vector<1x8x128xbf16> to vector<8x128xbf16>
    %229 = vector.extract_strided_slice %4 {offsets = [33, 0, 0], sizes = [1, 8, 128], strides = [1, 1, 1]} : vector<64x8x256xbf16> to vector<1x8x128xbf16>
    %230 = vector.shape_cast %229 : vector<1x8x128xbf16> to vector<8x128xbf16>
    %231 = arith.maximumf %228, %230 : vector<8x128xbf16>
    %232 = vector.extract_strided_slice %4 {offsets = [34, 0, 0], sizes = [1, 8, 128], strides = [1, 1, 1]} : vector<64x8x256xbf16> to vector<1x8x128xbf16>
    %233 = vector.shape_cast %232 : vector<1x8x128xbf16> to vector<8x128xbf16>
    %234 = arith.maximumf %231, %233 : vector<8x128xbf16>
    %235 = vector.extract_strided_slice %4 {offsets = [35, 0, 0], sizes = [1, 8, 128], strides = [1, 1, 1]} : vector<64x8x256xbf16> to vector<1x8x128xbf16>
    %236 = vector.shape_cast %235 : vector<1x8x128xbf16> to vector<8x128xbf16>
    %237 = arith.maximumf %234, %236 : vector<8x128xbf16>
    %238 = vector.extract_strided_slice %4 {offsets = [36, 0, 0], sizes = [1, 8, 128], strides = [1, 1, 1]} : vector<64x8x256xbf16> to vector<1x8x128xbf16>
    %239 = vector.shape_cast %238 : vector<1x8x128xbf16> to vector<8x128xbf16>
    %240 = arith.maximumf %237, %239 : vector<8x128xbf16>
    %241 = vector.extract_strided_slice %4 {offsets = [40, 0, 0], sizes = [1, 8, 128], strides = [1, 1, 1]} : vector<64x8x256xbf16> to vector<1x8x128xbf16>
    %242 = vector.shape_cast %241 : vector<1x8x128xbf16> to vector<8x128xbf16>
    %243 = arith.maximumf %240, %242 : vector<8x128xbf16>
    %244 = vector.extract_strided_slice %4 {offsets = [41, 0, 0], sizes = [1, 8, 128], strides = [1, 1, 1]} : vector<64x8x256xbf16> to vector<1x8x128xbf16>
    %245 = vector.shape_cast %244 : vector<1x8x128xbf16> to vector<8x128xbf16>
    %246 = arith.maximumf %243, %245 : vector<8x128xbf16>
    %247 = vector.extract_strided_slice %4 {offsets = [42, 0, 0], sizes = [1, 8, 128], strides = [1, 1, 1]} : vector<64x8x256xbf16> to vector<1x8x128xbf16>
    %248 = vector.shape_cast %247 : vector<1x8x128xbf16> to vector<8x128xbf16>
    %249 = arith.maximumf %246, %248 : vector<8x128xbf16>
    %250 = vector.extract_strided_slice %4 {offsets = [43, 0, 0], sizes = [1, 8, 128], strides = [1, 1, 1]} : vector<64x8x256xbf16> to vector<1x8x128xbf16>
    %251 = vector.shape_cast %250 : vector<1x8x128xbf16> to vector<8x128xbf16>
    %252 = arith.maximumf %249, %251 : vector<8x128xbf16>
    %253 = vector.extract_strided_slice %4 {offsets = [44, 0, 0], sizes = [1, 8, 128], strides = [1, 1, 1]} : vector<64x8x256xbf16> to vector<1x8x128xbf16>
    %254 = vector.shape_cast %253 : vector<1x8x128xbf16> to vector<8x128xbf16>
    %255 = arith.maximumf %252, %254 : vector<8x128xbf16>
    %256 = vector.extract_strided_slice %4 {offsets = [48, 0, 0], sizes = [1, 8, 128], strides = [1, 1, 1]} : vector<64x8x256xbf16> to vector<1x8x128xbf16>
    %257 = vector.shape_cast %256 : vector<1x8x128xbf16> to vector<8x128xbf16>
    %258 = arith.maximumf %255, %257 : vector<8x128xbf16>
    %259 = vector.extract_strided_slice %4 {offsets = [49, 0, 0], sizes = [1, 8, 128], strides = [1, 1, 1]} : vector<64x8x256xbf16> to vector<1x8x128xbf16>
    %260 = vector.shape_cast %259 : vector<1x8x128xbf16> to vector<8x128xbf16>
    %261 = arith.maximumf %258, %260 : vector<8x128xbf16>
    %262 = vector.extract_strided_slice %4 {offsets = [50, 0, 0], sizes = [1, 8, 128], strides = [1, 1, 1]} : vector<64x8x256xbf16> to vector<1x8x128xbf16>
    %263 = vector.shape_cast %262 : vector<1x8x128xbf16> to vector<8x128xbf16>
    %264 = arith.maximumf %261, %263 : vector<8x128xbf16>
    %265 = vector.extract_strided_slice %4 {offsets = [51, 0, 0], sizes = [1, 8, 128], strides = [1, 1, 1]} : vector<64x8x256xbf16> to vector<1x8x128xbf16>
    %266 = vector.shape_cast %265 : vector<1x8x128xbf16> to vector<8x128xbf16>
    %267 = arith.maximumf %264, %266 : vector<8x128xbf16>
    %268 = vector.extract_strided_slice %4 {offsets = [52, 0, 0], sizes = [1, 8, 128], strides = [1, 1, 1]} : vector<64x8x256xbf16> to vector<1x8x128xbf16>
    %269 = vector.shape_cast %268 : vector<1x8x128xbf16> to vector<8x128xbf16>
    %270 = arith.maximumf %267, %269 : vector<8x128xbf16>
    %271 = vector.extract_strided_slice %4 {offsets = [56, 0, 0], sizes = [1, 8, 128], strides = [1, 1, 1]} : vector<64x8x256xbf16> to vector<1x8x128xbf16>
    %272 = vector.shape_cast %271 : vector<1x8x128xbf16> to vector<8x128xbf16>
    %273 = arith.maximumf %270, %272 : vector<8x128xbf16>
    %274 = vector.extract_strided_slice %4 {offsets = [57, 0, 0], sizes = [1, 8, 128], strides = [1, 1, 1]} : vector<64x8x256xbf16> to vector<1x8x128xbf16>
    %275 = vector.shape_cast %274 : vector<1x8x128xbf16> to vector<8x128xbf16>
    %276 = arith.maximumf %273, %275 : vector<8x128xbf16>
    %277 = vector.extract_strided_slice %4 {offsets = [58, 0, 0], sizes = [1, 8, 128], strides = [1, 1, 1]} : vector<64x8x256xbf16> to vector<1x8x128xbf16>
    %278 = vector.shape_cast %277 : vector<1x8x128xbf16> to vector<8x128xbf16>
    %279 = arith.maximumf %276, %278 : vector<8x128xbf16>
    %280 = vector.extract_strided_slice %4 {offsets = [59, 0, 0], sizes = [1, 8, 128], strides = [1, 1, 1]} : vector<64x8x256xbf16> to vector<1x8x128xbf16>
    %281 = vector.shape_cast %280 : vector<1x8x128xbf16> to vector<8x128xbf16>
    %282 = arith.maximumf %279, %281 : vector<8x128xbf16>
    %283 = vector.extract_strided_slice %4 {offsets = [60, 0, 0], sizes = [1, 8, 128], strides = [1, 1, 1]} : vector<64x8x256xbf16> to vector<1x8x128xbf16>
    %284 = vector.shape_cast %283 : vector<1x8x128xbf16> to vector<8x128xbf16>
    %285 = arith.maximumf %282, %284 : vector<8x128xbf16>
    %286 = vector.extract_strided_slice %4 {offsets = [0, 0, 9], sizes = [1, 8, 128], strides = [1, 1, 1]} : vector<64x8x256xbf16> to vector<1x8x128xbf16>
    %287 = vector.shape_cast %286 : vector<1x8x128xbf16> to vector<8x128xbf16>
    %288 = arith.maximumf %285, %287 : vector<8x128xbf16>
    %289 = vector.extract_strided_slice %4 {offsets = [1, 0, 9], sizes = [1, 8, 128], strides = [1, 1, 1]} : vector<64x8x256xbf16> to vector<1x8x128xbf16>
    %290 = vector.shape_cast %289 : vector<1x8x128xbf16> to vector<8x128xbf16>
    %291 = arith.maximumf %288, %290 : vector<8x128xbf16>
    %292 = vector.extract_strided_slice %4 {offsets = [2, 0, 9], sizes = [1, 8, 128], strides = [1, 1, 1]} : vector<64x8x256xbf16> to vector<1x8x128xbf16>
    %293 = vector.shape_cast %292 : vector<1x8x128xbf16> to vector<8x128xbf16>
    %294 = arith.maximumf %291, %293 : vector<8x128xbf16>
    %295 = vector.extract_strided_slice %4 {offsets = [3, 0, 9], sizes = [1, 8, 128], strides = [1, 1, 1]} : vector<64x8x256xbf16> to vector<1x8x128xbf16>
    %296 = vector.shape_cast %295 : vector<1x8x128xbf16> to vector<8x128xbf16>
    %297 = arith.maximumf %294, %296 : vector<8x128xbf16>
    %298 = vector.extract_strided_slice %4 {offsets = [4, 0, 9], sizes = [1, 8, 128], strides = [1, 1, 1]} : vector<64x8x256xbf16> to vector<1x8x128xbf16>
    %299 = vector.shape_cast %298 : vector<1x8x128xbf16> to vector<8x128xbf16>
    %300 = arith.maximumf %297, %299 : vector<8x128xbf16>
    %301 = vector.extract_strided_slice %4 {offsets = [36, 0, 0], sizes = [1, 8, 128], strides = [1, 1, 1]} : vector<64x8x256xbf16> to vector<1x8x128xbf16>
    %302 = vector.shape_cast %301 : vector<1x8x128xbf16> to vector<8x128xbf16>
    %303 = vector.extract_strided_slice %4 {offsets = [37, 0, 0], sizes = [1, 8, 128], strides = [1, 1, 1]} : vector<64x8x256xbf16> to vector<1x8x128xbf16>
    %304 = vector.shape_cast %303 : vector<1x8x128xbf16> to vector<8x128xbf16>
    %305 = arith.maximumf %302, %304 : vector<8x128xbf16>
    %306 = vector.extract_strided_slice %4 {offsets = [38, 0, 0], sizes = [1, 8, 128], strides = [1, 1, 1]} : vector<64x8x256xbf16> to vector<1x8x128xbf16>
    %307 = vector.shape_cast %306 : vector<1x8x128xbf16> to vector<8x128xbf16>
    %308 = arith.maximumf %305, %307 : vector<8x128xbf16>
    %309 = vector.extract_strided_slice %4 {offsets = [39, 0, 0], sizes = [1, 8, 128], strides = [1, 1, 1]} : vector<64x8x256xbf16> to vector<1x8x128xbf16>
    %310 = vector.shape_cast %309 : vector<1x8x128xbf16> to vector<8x128xbf16>
    %311 = arith.maximumf %308, %310 : vector<8x128xbf16>
    %312 = vector.extract_strided_slice %4 {offsets = [32, 0, 1], sizes = [1, 8, 128], strides = [1, 1, 1]} : vector<64x8x256xbf16> to vector<1x8x128xbf16>
    %313 = vector.shape_cast %312 : vector<1x8x128xbf16> to vector<8x128xbf16>
    %314 = arith.maximumf %311, %313 : vector<8x128xbf16>
    %315 = vector.extract_strided_slice %4 {offsets = [44, 0, 0], sizes = [1, 8, 128], strides = [1, 1, 1]} : vector<64x8x256xbf16> to vector<1x8x128xbf16>
    %316 = vector.shape_cast %315 : vector<1x8x128xbf16> to vector<8x128xbf16>
    %317 = arith.maximumf %314, %316 : vector<8x128xbf16>
    %318 = vector.extract_strided_slice %4 {offsets = [45, 0, 0], sizes = [1, 8, 128], strides = [1, 1, 1]} : vector<64x8x256xbf16> to vector<1x8x128xbf16>
    %319 = vector.shape_cast %318 : vector<1x8x128xbf16> to vector<8x128xbf16>
    %320 = arith.maximumf %317, %319 : vector<8x128xbf16>
    %321 = vector.extract_strided_slice %4 {offsets = [46, 0, 0], sizes = [1, 8, 128], strides = [1, 1, 1]} : vector<64x8x256xbf16> to vector<1x8x128xbf16>
    %322 = vector.shape_cast %321 : vector<1x8x128xbf16> to vector<8x128xbf16>
    %323 = arith.maximumf %320, %322 : vector<8x128xbf16>
    %324 = vector.extract_strided_slice %4 {offsets = [47, 0, 0], sizes = [1, 8, 128], strides = [1, 1, 1]} : vector<64x8x256xbf16> to vector<1x8x128xbf16>
    %325 = vector.shape_cast %324 : vector<1x8x128xbf16> to vector<8x128xbf16>
    %326 = arith.maximumf %323, %325 : vector<8x128xbf16>
    %327 = vector.extract_strided_slice %4 {offsets = [40, 0, 1], sizes = [1, 8, 128], strides = [1, 1, 1]} : vector<64x8x256xbf16> to vector<1x8x128xbf16>
    %328 = vector.shape_cast %327 : vector<1x8x128xbf16> to vector<8x128xbf16>
    %329 = arith.maximumf %326, %328 : vector<8x128xbf16>
    %330 = vector.extract_strided_slice %4 {offsets = [52, 0, 0], sizes = [1, 8, 128], strides = [1, 1, 1]} : vector<64x8x256xbf16> to vector<1x8x128xbf16>
    %331 = vector.shape_cast %330 : vector<1x8x128xbf16> to vector<8x128xbf16>
    %332 = arith.maximumf %329, %331 : vector<8x128xbf16>
    %333 = vector.extract_strided_slice %4 {offsets = [53, 0, 0], sizes = [1, 8, 128], strides = [1, 1, 1]} : vector<64x8x256xbf16> to vector<1x8x128xbf16>
    %334 = vector.shape_cast %333 : vector<1x8x128xbf16> to vector<8x128xbf16>
    %335 = arith.maximumf %332, %334 : vector<8x128xbf16>
    %336 = vector.extract_strided_slice %4 {offsets = [54, 0, 0], sizes = [1, 8, 128], strides = [1, 1, 1]} : vector<64x8x256xbf16> to vector<1x8x128xbf16>
    %337 = vector.shape_cast %336 : vector<1x8x128xbf16> to vector<8x128xbf16>
    %338 = arith.maximumf %335, %337 : vector<8x128xbf16>
    %339 = vector.extract_strided_slice %4 {offsets = [55, 0, 0], sizes = [1, 8, 128], strides = [1, 1, 1]} : vector<64x8x256xbf16> to vector<1x8x128xbf16>
    %340 = vector.shape_cast %339 : vector<1x8x128xbf16> to vector<8x128xbf16>
    %341 = arith.maximumf %338, %340 : vector<8x128xbf16>
    %342 = vector.extract_strided_slice %4 {offsets = [48, 0, 1], sizes = [1, 8, 128], strides = [1, 1, 1]} : vector<64x8x256xbf16> to vector<1x8x128xbf16>
    %343 = vector.shape_cast %342 : vector<1x8x128xbf16> to vector<8x128xbf16>
    %344 = arith.maximumf %341, %343 : vector<8x128xbf16>
    %345 = vector.extract_strided_slice %4 {offsets = [60, 0, 0], sizes = [1, 8, 128], strides = [1, 1, 1]} : vector<64x8x256xbf16> to vector<1x8x128xbf16>
    %346 = vector.shape_cast %345 : vector<1x8x128xbf16> to vector<8x128xbf16>
    %347 = arith.maximumf %344, %346 : vector<8x128xbf16>
    %348 = vector.extract_strided_slice %4 {offsets = [61, 0, 0], sizes = [1, 8, 128], strides = [1, 1, 1]} : vector<64x8x256xbf16> to vector<1x8x128xbf16>
    %349 = vector.shape_cast %348 : vector<1x8x128xbf16> to vector<8x128xbf16>
    %350 = arith.maximumf %347, %349 : vector<8x128xbf16>
    %351 = vector.extract_strided_slice %4 {offsets = [62, 0, 0], sizes = [1, 8, 128], strides = [1, 1, 1]} : vector<64x8x256xbf16> to vector<1x8x128xbf16>
    %352 = vector.shape_cast %351 : vector<1x8x128xbf16> to vector<8x128xbf16>
    %353 = arith.maximumf %350, %352 : vector<8x128xbf16>
    %354 = vector.extract_strided_slice %4 {offsets = [63, 0, 0], sizes = [1, 8, 128], strides = [1, 1, 1]} : vector<64x8x256xbf16> to vector<1x8x128xbf16>
    %355 = vector.shape_cast %354 : vector<1x8x128xbf16> to vector<8x128xbf16>
    %356 = arith.maximumf %353, %355 : vector<8x128xbf16>
    %357 = vector.extract_strided_slice %4 {offsets = [56, 0, 1], sizes = [1, 8, 128], strides = [1, 1, 1]} : vector<64x8x256xbf16> to vector<1x8x128xbf16>
    %358 = vector.shape_cast %357 : vector<1x8x128xbf16> to vector<8x128xbf16>
    %359 = arith.maximumf %356, %358 : vector<8x128xbf16>
    %360 = vector.extract_strided_slice %4 {offsets = [4, 0, 9], sizes = [1, 8, 128], strides = [1, 1, 1]} : vector<64x8x256xbf16> to vector<1x8x128xbf16>
    %361 = vector.shape_cast %360 : vector<1x8x128xbf16> to vector<8x128xbf16>
    %362 = arith.maximumf %359, %361 : vector<8x128xbf16>
    %363 = vector.extract_strided_slice %4 {offsets = [5, 0, 9], sizes = [1, 8, 128], strides = [1, 1, 1]} : vector<64x8x256xbf16> to vector<1x8x128xbf16>
    %364 = vector.shape_cast %363 : vector<1x8x128xbf16> to vector<8x128xbf16>
    %365 = arith.maximumf %362, %364 : vector<8x128xbf16>
    %366 = vector.extract_strided_slice %4 {offsets = [6, 0, 9], sizes = [1, 8, 128], strides = [1, 1, 1]} : vector<64x8x256xbf16> to vector<1x8x128xbf16>
    %367 = vector.shape_cast %366 : vector<1x8x128xbf16> to vector<8x128xbf16>
    %368 = arith.maximumf %365, %367 : vector<8x128xbf16>
    %369 = vector.extract_strided_slice %4 {offsets = [7, 0, 9], sizes = [1, 8, 128], strides = [1, 1, 1]} : vector<64x8x256xbf16> to vector<1x8x128xbf16>
    %370 = vector.shape_cast %369 : vector<1x8x128xbf16> to vector<8x128xbf16>
    %371 = arith.maximumf %368, %370 : vector<8x128xbf16>
    %372 = vector.extract_strided_slice %4 {offsets = [0, 0, 10], sizes = [1, 8, 128], strides = [1, 1, 1]} : vector<64x8x256xbf16> to vector<1x8x128xbf16>
    %373 = vector.shape_cast %372 : vector<1x8x128xbf16> to vector<8x128xbf16>
    %374 = arith.maximumf %371, %373 : vector<8x128xbf16>
    %375 = vector.extract_strided_slice %4 {offsets = [32, 0, 1], sizes = [1, 8, 128], strides = [1, 1, 1]} : vector<64x8x256xbf16> to vector<1x8x128xbf16>
    %376 = vector.shape_cast %375 : vector<1x8x128xbf16> to vector<8x128xbf16>
    %377 = vector.extract_strided_slice %4 {offsets = [33, 0, 1], sizes = [1, 8, 128], strides = [1, 1, 1]} : vector<64x8x256xbf16> to vector<1x8x128xbf16>
    %378 = vector.shape_cast %377 : vector<1x8x128xbf16> to vector<8x128xbf16>
    %379 = arith.maximumf %376, %378 : vector<8x128xbf16>
    %380 = vector.extract_strided_slice %4 {offsets = [34, 0, 1], sizes = [1, 8, 128], strides = [1, 1, 1]} : vector<64x8x256xbf16> to vector<1x8x128xbf16>
    %381 = vector.shape_cast %380 : vector<1x8x128xbf16> to vector<8x128xbf16>
    %382 = arith.maximumf %379, %381 : vector<8x128xbf16>
    %383 = vector.extract_strided_slice %4 {offsets = [35, 0, 1], sizes = [1, 8, 128], strides = [1, 1, 1]} : vector<64x8x256xbf16> to vector<1x8x128xbf16>
    %384 = vector.shape_cast %383 : vector<1x8x128xbf16> to vector<8x128xbf16>
    %385 = arith.maximumf %382, %384 : vector<8x128xbf16>
    %386 = vector.extract_strided_slice %4 {offsets = [36, 0, 1], sizes = [1, 8, 128], strides = [1, 1, 1]} : vector<64x8x256xbf16> to vector<1x8x128xbf16>
    %387 = vector.shape_cast %386 : vector<1x8x128xbf16> to vector<8x128xbf16>
    %388 = arith.maximumf %385, %387 : vector<8x128xbf16>
    %389 = vector.extract_strided_slice %4 {offsets = [40, 0, 1], sizes = [1, 8, 128], strides = [1, 1, 1]} : vector<64x8x256xbf16> to vector<1x8x128xbf16>
    %390 = vector.shape_cast %389 : vector<1x8x128xbf16> to vector<8x128xbf16>
    %391 = arith.maximumf %388, %390 : vector<8x128xbf16>
    %392 = vector.extract_strided_slice %4 {offsets = [41, 0, 1], sizes = [1, 8, 128], strides = [1, 1, 1]} : vector<64x8x256xbf16> to vector<1x8x128xbf16>
    %393 = vector.shape_cast %392 : vector<1x8x128xbf16> to vector<8x128xbf16>
    %394 = arith.maximumf %391, %393 : vector<8x128xbf16>
    %395 = vector.extract_strided_slice %4 {offsets = [42, 0, 1], sizes = [1, 8, 128], strides = [1, 1, 1]} : vector<64x8x256xbf16> to vector<1x8x128xbf16>
    %396 = vector.shape_cast %395 : vector<1x8x128xbf16> to vector<8x128xbf16>
    %397 = arith.maximumf %394, %396 : vector<8x128xbf16>
    %398 = vector.extract_strided_slice %4 {offsets = [43, 0, 1], sizes = [1, 8, 128], strides = [1, 1, 1]} : vector<64x8x256xbf16> to vector<1x8x128xbf16>
    %399 = vector.shape_cast %398 : vector<1x8x128xbf16> to vector<8x128xbf16>
    %400 = arith.maximumf %397, %399 : vector<8x128xbf16>
    %401 = vector.extract_strided_slice %4 {offsets = [44, 0, 1], sizes = [1, 8, 128], strides = [1, 1, 1]} : vector<64x8x256xbf16> to vector<1x8x128xbf16>
    %402 = vector.shape_cast %401 : vector<1x8x128xbf16> to vector<8x128xbf16>
    %403 = arith.maximumf %400, %402 : vector<8x128xbf16>
    %404 = vector.extract_strided_slice %4 {offsets = [48, 0, 1], sizes = [1, 8, 128], strides = [1, 1, 1]} : vector<64x8x256xbf16> to vector<1x8x128xbf16>
    %405 = vector.shape_cast %404 : vector<1x8x128xbf16> to vector<8x128xbf16>
    %406 = arith.maximumf %403, %405 : vector<8x128xbf16>
    %407 = vector.extract_strided_slice %4 {offsets = [49, 0, 1], sizes = [1, 8, 128], strides = [1, 1, 1]} : vector<64x8x256xbf16> to vector<1x8x128xbf16>
    %408 = vector.shape_cast %407 : vector<1x8x128xbf16> to vector<8x128xbf16>
    %409 = arith.maximumf %406, %408 : vector<8x128xbf16>
    %410 = vector.extract_strided_slice %4 {offsets = [50, 0, 1], sizes = [1, 8, 128], strides = [1, 1, 1]} : vector<64x8x256xbf16> to vector<1x8x128xbf16>
    %411 = vector.shape_cast %410 : vector<1x8x128xbf16> to vector<8x128xbf16>
    %412 = arith.maximumf %409, %411 : vector<8x128xbf16>
    %413 = vector.extract_strided_slice %4 {offsets = [51, 0, 1], sizes = [1, 8, 128], strides = [1, 1, 1]} : vector<64x8x256xbf16> to vector<1x8x128xbf16>
    %414 = vector.shape_cast %413 : vector<1x8x128xbf16> to vector<8x128xbf16>
    %415 = arith.maximumf %412, %414 : vector<8x128xbf16>
    %416 = vector.extract_strided_slice %4 {offsets = [52, 0, 1], sizes = [1, 8, 128], strides = [1, 1, 1]} : vector<64x8x256xbf16> to vector<1x8x128xbf16>
    %417 = vector.shape_cast %416 : vector<1x8x128xbf16> to vector<8x128xbf16>
    %418 = arith.maximumf %415, %417 : vector<8x128xbf16>
    %419 = vector.extract_strided_slice %4 {offsets = [56, 0, 1], sizes = [1, 8, 128], strides = [1, 1, 1]} : vector<64x8x256xbf16> to vector<1x8x128xbf16>
    %420 = vector.shape_cast %419 : vector<1x8x128xbf16> to vector<8x128xbf16>
    %421 = arith.maximumf %418, %420 : vector<8x128xbf16>
    %422 = vector.extract_strided_slice %4 {offsets = [57, 0, 1], sizes = [1, 8, 128], strides = [1, 1, 1]} : vector<64x8x256xbf16> to vector<1x8x128xbf16>
    %423 = vector.shape_cast %422 : vector<1x8x128xbf16> to vector<8x128xbf16>
    %424 = arith.maximumf %421, %423 : vector<8x128xbf16>
    %425 = vector.extract_strided_slice %4 {offsets = [58, 0, 1], sizes = [1, 8, 128], strides = [1, 1, 1]} : vector<64x8x256xbf16> to vector<1x8x128xbf16>
    %426 = vector.shape_cast %425 : vector<1x8x128xbf16> to vector<8x128xbf16>
    %427 = arith.maximumf %424, %426 : vector<8x128xbf16>
    %428 = vector.extract_strided_slice %4 {offsets = [59, 0, 1], sizes = [1, 8, 128], strides = [1, 1, 1]} : vector<64x8x256xbf16> to vector<1x8x128xbf16>
    %429 = vector.shape_cast %428 : vector<1x8x128xbf16> to vector<8x128xbf16>
    %430 = arith.maximumf %427, %429 : vector<8x128xbf16>
    %431 = vector.extract_strided_slice %4 {offsets = [60, 0, 1], sizes = [1, 8, 128], strides = [1, 1, 1]} : vector<64x8x256xbf16> to vector<1x8x128xbf16>
    %432 = vector.shape_cast %431 : vector<1x8x128xbf16> to vector<8x128xbf16>
    %433 = arith.maximumf %430, %432 : vector<8x128xbf16>
    %434 = vector.extract_strided_slice %4 {offsets = [0, 0, 10], sizes = [1, 8, 128], strides = [1, 1, 1]} : vector<64x8x256xbf16> to vector<1x8x128xbf16>
    %435 = vector.shape_cast %434 : vector<1x8x128xbf16> to vector<8x128xbf16>
    %436 = arith.maximumf %433, %435 : vector<8x128xbf16>
    %437 = vector.extract_strided_slice %4 {offsets = [1, 0, 10], sizes = [1, 8, 128], strides = [1, 1, 1]} : vector<64x8x256xbf16> to vector<1x8x128xbf16>
    %438 = vector.shape_cast %437 : vector<1x8x128xbf16> to vector<8x128xbf16>
    %439 = arith.maximumf %436, %438 : vector<8x128xbf16>
    %440 = vector.extract_strided_slice %4 {offsets = [2, 0, 10], sizes = [1, 8, 128], strides = [1, 1, 1]} : vector<64x8x256xbf16> to vector<1x8x128xbf16>
    %441 = vector.shape_cast %440 : vector<1x8x128xbf16> to vector<8x128xbf16>
    %442 = arith.maximumf %439, %441 : vector<8x128xbf16>
    %443 = vector.extract_strided_slice %4 {offsets = [3, 0, 10], sizes = [1, 8, 128], strides = [1, 1, 1]} : vector<64x8x256xbf16> to vector<1x8x128xbf16>
    %444 = vector.shape_cast %443 : vector<1x8x128xbf16> to vector<8x128xbf16>
    %445 = arith.maximumf %442, %444 : vector<8x128xbf16>
    %446 = vector.extract_strided_slice %4 {offsets = [4, 0, 10], sizes = [1, 8, 128], strides = [1, 1, 1]} : vector<64x8x256xbf16> to vector<1x8x128xbf16>
    %447 = vector.shape_cast %446 : vector<1x8x128xbf16> to vector<8x128xbf16>
    %448 = arith.maximumf %445, %447 : vector<8x128xbf16>
    %449 = vector.extract_strided_slice %4 {offsets = [0, 0, 9], sizes = [1, 8, 128], strides = [1, 1, 1]} : vector<64x8x256xbf16> to vector<1x8x128xbf16>
    %450 = vector.shape_cast %449 : vector<1x8x128xbf16> to vector<8x128xbf16>
    %451 = vector.extract_strided_slice %4 {offsets = [1, 0, 9], sizes = [1, 8, 128], strides = [1, 1, 1]} : vector<64x8x256xbf16> to vector<1x8x128xbf16>
    %452 = vector.shape_cast %451 : vector<1x8x128xbf16> to vector<8x128xbf16>
    %453 = arith.maximumf %450, %452 : vector<8x128xbf16>
    %454 = vector.extract_strided_slice %4 {offsets = [2, 0, 9], sizes = [1, 8, 128], strides = [1, 1, 1]} : vector<64x8x256xbf16> to vector<1x8x128xbf16>
    %455 = vector.shape_cast %454 : vector<1x8x128xbf16> to vector<8x128xbf16>
    %456 = arith.maximumf %453, %455 : vector<8x128xbf16>
    %457 = vector.extract_strided_slice %4 {offsets = [3, 0, 9], sizes = [1, 8, 128], strides = [1, 1, 1]} : vector<64x8x256xbf16> to vector<1x8x128xbf16>
    %458 = vector.shape_cast %457 : vector<1x8x128xbf16> to vector<8x128xbf16>
    %459 = arith.maximumf %456, %458 : vector<8x128xbf16>
    %460 = vector.extract_strided_slice %4 {offsets = [4, 0, 9], sizes = [1, 8, 128], strides = [1, 1, 1]} : vector<64x8x256xbf16> to vector<1x8x128xbf16>
    %461 = vector.shape_cast %460 : vector<1x8x128xbf16> to vector<8x128xbf16>
    %462 = arith.maximumf %459, %461 : vector<8x128xbf16>
    %463 = vector.extract_strided_slice %4 {offsets = [8, 0, 9], sizes = [1, 8, 128], strides = [1, 1, 1]} : vector<64x8x256xbf16> to vector<1x8x128xbf16>
    %464 = vector.shape_cast %463 : vector<1x8x128xbf16> to vector<8x128xbf16>
    %465 = arith.maximumf %462, %464 : vector<8x128xbf16>
    %466 = vector.extract_strided_slice %4 {offsets = [9, 0, 9], sizes = [1, 8, 128], strides = [1, 1, 1]} : vector<64x8x256xbf16> to vector<1x8x128xbf16>
    %467 = vector.shape_cast %466 : vector<1x8x128xbf16> to vector<8x128xbf16>
    %468 = arith.maximumf %465, %467 : vector<8x128xbf16>
    %469 = vector.extract_strided_slice %4 {offsets = [10, 0, 9], sizes = [1, 8, 128], strides = [1, 1, 1]} : vector<64x8x256xbf16> to vector<1x8x128xbf16>
    %470 = vector.shape_cast %469 : vector<1x8x128xbf16> to vector<8x128xbf16>
    %471 = arith.maximumf %468, %470 : vector<8x128xbf16>
    %472 = vector.extract_strided_slice %4 {offsets = [11, 0, 9], sizes = [1, 8, 128], strides = [1, 1, 1]} : vector<64x8x256xbf16> to vector<1x8x128xbf16>
    %473 = vector.shape_cast %472 : vector<1x8x128xbf16> to vector<8x128xbf16>
    %474 = arith.maximumf %471, %473 : vector<8x128xbf16>
    %475 = vector.extract_strided_slice %4 {offsets = [12, 0, 9], sizes = [1, 8, 128], strides = [1, 1, 1]} : vector<64x8x256xbf16> to vector<1x8x128xbf16>
    %476 = vector.shape_cast %475 : vector<1x8x128xbf16> to vector<8x128xbf16>
    %477 = arith.maximumf %474, %476 : vector<8x128xbf16>
    %478 = vector.extract_strided_slice %4 {offsets = [16, 0, 9], sizes = [1, 8, 128], strides = [1, 1, 1]} : vector<64x8x256xbf16> to vector<1x8x128xbf16>
    %479 = vector.shape_cast %478 : vector<1x8x128xbf16> to vector<8x128xbf16>
    %480 = arith.maximumf %477, %479 : vector<8x128xbf16>
    %481 = vector.extract_strided_slice %4 {offsets = [17, 0, 9], sizes = [1, 8, 128], strides = [1, 1, 1]} : vector<64x8x256xbf16> to vector<1x8x128xbf16>
    %482 = vector.shape_cast %481 : vector<1x8x128xbf16> to vector<8x128xbf16>
    %483 = arith.maximumf %480, %482 : vector<8x128xbf16>
    %484 = vector.extract_strided_slice %4 {offsets = [18, 0, 9], sizes = [1, 8, 128], strides = [1, 1, 1]} : vector<64x8x256xbf16> to vector<1x8x128xbf16>
    %485 = vector.shape_cast %484 : vector<1x8x128xbf16> to vector<8x128xbf16>
    %486 = arith.maximumf %483, %485 : vector<8x128xbf16>
    %487 = vector.extract_strided_slice %4 {offsets = [19, 0, 9], sizes = [1, 8, 128], strides = [1, 1, 1]} : vector<64x8x256xbf16> to vector<1x8x128xbf16>
    %488 = vector.shape_cast %487 : vector<1x8x128xbf16> to vector<8x128xbf16>
    %489 = arith.maximumf %486, %488 : vector<8x128xbf16>
    %490 = vector.extract_strided_slice %4 {offsets = [20, 0, 9], sizes = [1, 8, 128], strides = [1, 1, 1]} : vector<64x8x256xbf16> to vector<1x8x128xbf16>
    %491 = vector.shape_cast %490 : vector<1x8x128xbf16> to vector<8x128xbf16>
    %492 = arith.maximumf %489, %491 : vector<8x128xbf16>
    %493 = vector.extract_strided_slice %4 {offsets = [24, 0, 9], sizes = [1, 8, 128], strides = [1, 1, 1]} : vector<64x8x256xbf16> to vector<1x8x128xbf16>
    %494 = vector.shape_cast %493 : vector<1x8x128xbf16> to vector<8x128xbf16>
    %495 = arith.maximumf %492, %494 : vector<8x128xbf16>
    %496 = vector.extract_strided_slice %4 {offsets = [25, 0, 9], sizes = [1, 8, 128], strides = [1, 1, 1]} : vector<64x8x256xbf16> to vector<1x8x128xbf16>
    %497 = vector.shape_cast %496 : vector<1x8x128xbf16> to vector<8x128xbf16>
    %498 = arith.maximumf %495, %497 : vector<8x128xbf16>
    %499 = vector.extract_strided_slice %4 {offsets = [26, 0, 9], sizes = [1, 8, 128], strides = [1, 1, 1]} : vector<64x8x256xbf16> to vector<1x8x128xbf16>
    %500 = vector.shape_cast %499 : vector<1x8x128xbf16> to vector<8x128xbf16>
    %501 = arith.maximumf %498, %500 : vector<8x128xbf16>
    %502 = vector.extract_strided_slice %4 {offsets = [27, 0, 9], sizes = [1, 8, 128], strides = [1, 1, 1]} : vector<64x8x256xbf16> to vector<1x8x128xbf16>
    %503 = vector.shape_cast %502 : vector<1x8x128xbf16> to vector<8x128xbf16>
    %504 = arith.maximumf %501, %503 : vector<8x128xbf16>
    %505 = vector.extract_strided_slice %4 {offsets = [28, 0, 9], sizes = [1, 8, 128], strides = [1, 1, 1]} : vector<64x8x256xbf16> to vector<1x8x128xbf16>
    %506 = vector.shape_cast %505 : vector<1x8x128xbf16> to vector<8x128xbf16>
    %507 = arith.maximumf %504, %506 : vector<8x128xbf16>
    %508 = vector.extract_strided_slice %4 {offsets = [32, 0, 9], sizes = [1, 8, 128], strides = [1, 1, 1]} : vector<64x8x256xbf16> to vector<1x8x128xbf16>
    %509 = vector.shape_cast %508 : vector<1x8x128xbf16> to vector<8x128xbf16>
    %510 = arith.maximumf %507, %509 : vector<8x128xbf16>
    %511 = vector.extract_strided_slice %4 {offsets = [33, 0, 9], sizes = [1, 8, 128], strides = [1, 1, 1]} : vector<64x8x256xbf16> to vector<1x8x128xbf16>
    %512 = vector.shape_cast %511 : vector<1x8x128xbf16> to vector<8x128xbf16>
    %513 = arith.maximumf %510, %512 : vector<8x128xbf16>
    %514 = vector.extract_strided_slice %4 {offsets = [34, 0, 9], sizes = [1, 8, 128], strides = [1, 1, 1]} : vector<64x8x256xbf16> to vector<1x8x128xbf16>
    %515 = vector.shape_cast %514 : vector<1x8x128xbf16> to vector<8x128xbf16>
    %516 = arith.maximumf %513, %515 : vector<8x128xbf16>
    %517 = vector.extract_strided_slice %4 {offsets = [35, 0, 9], sizes = [1, 8, 128], strides = [1, 1, 1]} : vector<64x8x256xbf16> to vector<1x8x128xbf16>
    %518 = vector.shape_cast %517 : vector<1x8x128xbf16> to vector<8x128xbf16>
    %519 = arith.maximumf %516, %518 : vector<8x128xbf16>
    %520 = vector.extract_strided_slice %4 {offsets = [36, 0, 9], sizes = [1, 8, 128], strides = [1, 1, 1]} : vector<64x8x256xbf16> to vector<1x8x128xbf16>
    %521 = vector.shape_cast %520 : vector<1x8x128xbf16> to vector<8x128xbf16>
    %522 = arith.maximumf %519, %521 : vector<8x128xbf16>
    %523 = vector.extract_strided_slice %4 {offsets = [4, 0, 9], sizes = [1, 8, 128], strides = [1, 1, 1]} : vector<64x8x256xbf16> to vector<1x8x128xbf16>
    %524 = vector.shape_cast %523 : vector<1x8x128xbf16> to vector<8x128xbf16>
    %525 = vector.extract_strided_slice %4 {offsets = [5, 0, 9], sizes = [1, 8, 128], strides = [1, 1, 1]} : vector<64x8x256xbf16> to vector<1x8x128xbf16>
    %526 = vector.shape_cast %525 : vector<1x8x128xbf16> to vector<8x128xbf16>
    %527 = arith.maximumf %524, %526 : vector<8x128xbf16>
    %528 = vector.extract_strided_slice %4 {offsets = [6, 0, 9], sizes = [1, 8, 128], strides = [1, 1, 1]} : vector<64x8x256xbf16> to vector<1x8x128xbf16>
    %529 = vector.shape_cast %528 : vector<1x8x128xbf16> to vector<8x128xbf16>
    %530 = arith.maximumf %527, %529 : vector<8x128xbf16>
    %531 = vector.extract_strided_slice %4 {offsets = [7, 0, 9], sizes = [1, 8, 128], strides = [1, 1, 1]} : vector<64x8x256xbf16> to vector<1x8x128xbf16>
    %532 = vector.shape_cast %531 : vector<1x8x128xbf16> to vector<8x128xbf16>
    %533 = arith.maximumf %530, %532 : vector<8x128xbf16>
    %534 = vector.extract_strided_slice %4 {offsets = [0, 0, 10], sizes = [1, 8, 128], strides = [1, 1, 1]} : vector<64x8x256xbf16> to vector<1x8x128xbf16>
    %535 = vector.shape_cast %534 : vector<1x8x128xbf16> to vector<8x128xbf16>
    %536 = arith.maximumf %533, %535 : vector<8x128xbf16>
    %537 = vector.extract_strided_slice %4 {offsets = [12, 0, 9], sizes = [1, 8, 128], strides = [1, 1, 1]} : vector<64x8x256xbf16> to vector<1x8x128xbf16>
    %538 = vector.shape_cast %537 : vector<1x8x128xbf16> to vector<8x128xbf16>
    %539 = arith.maximumf %536, %538 : vector<8x128xbf16>
    %540 = vector.extract_strided_slice %4 {offsets = [13, 0, 9], sizes = [1, 8, 128], strides = [1, 1, 1]} : vector<64x8x256xbf16> to vector<1x8x128xbf16>
    %541 = vector.shape_cast %540 : vector<1x8x128xbf16> to vector<8x128xbf16>
    %542 = arith.maximumf %539, %541 : vector<8x128xbf16>
    %543 = vector.extract_strided_slice %4 {offsets = [14, 0, 9], sizes = [1, 8, 128], strides = [1, 1, 1]} : vector<64x8x256xbf16> to vector<1x8x128xbf16>
    %544 = vector.shape_cast %543 : vector<1x8x128xbf16> to vector<8x128xbf16>
    %545 = arith.maximumf %542, %544 : vector<8x128xbf16>
    %546 = vector.extract_strided_slice %4 {offsets = [15, 0, 9], sizes = [1, 8, 128], strides = [1, 1, 1]} : vector<64x8x256xbf16> to vector<1x8x128xbf16>
    %547 = vector.shape_cast %546 : vector<1x8x128xbf16> to vector<8x128xbf16>
    %548 = arith.maximumf %545, %547 : vector<8x128xbf16>
    %549 = vector.extract_strided_slice %4 {offsets = [8, 0, 10], sizes = [1, 8, 128], strides = [1, 1, 1]} : vector<64x8x256xbf16> to vector<1x8x128xbf16>
    %550 = vector.shape_cast %549 : vector<1x8x128xbf16> to vector<8x128xbf16>
    %551 = arith.maximumf %548, %550 : vector<8x128xbf16>
    %552 = vector.extract_strided_slice %4 {offsets = [20, 0, 9], sizes = [1, 8, 128], strides = [1, 1, 1]} : vector<64x8x256xbf16> to vector<1x8x128xbf16>
    %553 = vector.shape_cast %552 : vector<1x8x128xbf16> to vector<8x128xbf16>
    %554 = arith.maximumf %551, %553 : vector<8x128xbf16>
    %555 = vector.extract_strided_slice %4 {offsets = [21, 0, 9], sizes = [1, 8, 128], strides = [1, 1, 1]} : vector<64x8x256xbf16> to vector<1x8x128xbf16>
    %556 = vector.shape_cast %555 : vector<1x8x128xbf16> to vector<8x128xbf16>
    %557 = arith.maximumf %554, %556 : vector<8x128xbf16>
    %558 = vector.extract_strided_slice %4 {offsets = [22, 0, 9], sizes = [1, 8, 128], strides = [1, 1, 1]} : vector<64x8x256xbf16> to vector<1x8x128xbf16>
    %559 = vector.shape_cast %558 : vector<1x8x128xbf16> to vector<8x128xbf16>
    %560 = arith.maximumf %557, %559 : vector<8x128xbf16>
    %561 = vector.extract_strided_slice %4 {offsets = [23, 0, 9], sizes = [1, 8, 128], strides = [1, 1, 1]} : vector<64x8x256xbf16> to vector<1x8x128xbf16>
    %562 = vector.shape_cast %561 : vector<1x8x128xbf16> to vector<8x128xbf16>
    %563 = arith.maximumf %560, %562 : vector<8x128xbf16>
    %564 = vector.extract_strided_slice %4 {offsets = [16, 0, 10], sizes = [1, 8, 128], strides = [1, 1, 1]} : vector<64x8x256xbf16> to vector<1x8x128xbf16>
    %565 = vector.shape_cast %564 : vector<1x8x128xbf16> to vector<8x128xbf16>
    %566 = arith.maximumf %563, %565 : vector<8x128xbf16>
    %567 = vector.extract_strided_slice %4 {offsets = [28, 0, 9], sizes = [1, 8, 128], strides = [1, 1, 1]} : vector<64x8x256xbf16> to vector<1x8x128xbf16>
    %568 = vector.shape_cast %567 : vector<1x8x128xbf16> to vector<8x128xbf16>
    %569 = arith.maximumf %566, %568 : vector<8x128xbf16>
    %570 = vector.extract_strided_slice %4 {offsets = [29, 0, 9], sizes = [1, 8, 128], strides = [1, 1, 1]} : vector<64x8x256xbf16> to vector<1x8x128xbf16>
    %571 = vector.shape_cast %570 : vector<1x8x128xbf16> to vector<8x128xbf16>
    %572 = arith.maximumf %569, %571 : vector<8x128xbf16>
    %573 = vector.extract_strided_slice %4 {offsets = [30, 0, 9], sizes = [1, 8, 128], strides = [1, 1, 1]} : vector<64x8x256xbf16> to vector<1x8x128xbf16>
    %574 = vector.shape_cast %573 : vector<1x8x128xbf16> to vector<8x128xbf16>
    %575 = arith.maximumf %572, %574 : vector<8x128xbf16>
    %576 = vector.extract_strided_slice %4 {offsets = [31, 0, 9], sizes = [1, 8, 128], strides = [1, 1, 1]} : vector<64x8x256xbf16> to vector<1x8x128xbf16>
    %577 = vector.shape_cast %576 : vector<1x8x128xbf16> to vector<8x128xbf16>
    %578 = arith.maximumf %575, %577 : vector<8x128xbf16>
    %579 = vector.extract_strided_slice %4 {offsets = [24, 0, 10], sizes = [1, 8, 128], strides = [1, 1, 1]} : vector<64x8x256xbf16> to vector<1x8x128xbf16>
    %580 = vector.shape_cast %579 : vector<1x8x128xbf16> to vector<8x128xbf16>
    %581 = arith.maximumf %578, %580 : vector<8x128xbf16>
    %582 = vector.extract_strided_slice %4 {offsets = [36, 0, 9], sizes = [1, 8, 128], strides = [1, 1, 1]} : vector<64x8x256xbf16> to vector<1x8x128xbf16>
    %583 = vector.shape_cast %582 : vector<1x8x128xbf16> to vector<8x128xbf16>
    %584 = arith.maximumf %581, %583 : vector<8x128xbf16>
    %585 = vector.extract_strided_slice %4 {offsets = [37, 0, 9], sizes = [1, 8, 128], strides = [1, 1, 1]} : vector<64x8x256xbf16> to vector<1x8x128xbf16>
    %586 = vector.shape_cast %585 : vector<1x8x128xbf16> to vector<8x128xbf16>
    %587 = arith.maximumf %584, %586 : vector<8x128xbf16>
    %588 = vector.extract_strided_slice %4 {offsets = [38, 0, 9], sizes = [1, 8, 128], strides = [1, 1, 1]} : vector<64x8x256xbf16> to vector<1x8x128xbf16>
    %589 = vector.shape_cast %588 : vector<1x8x128xbf16> to vector<8x128xbf16>
    %590 = arith.maximumf %587, %589 : vector<8x128xbf16>
    %591 = vector.extract_strided_slice %4 {offsets = [39, 0, 9], sizes = [1, 8, 128], strides = [1, 1, 1]} : vector<64x8x256xbf16> to vector<1x8x128xbf16>
    %592 = vector.shape_cast %591 : vector<1x8x128xbf16> to vector<8x128xbf16>
    %593 = arith.maximumf %590, %592 : vector<8x128xbf16>
    %594 = vector.extract_strided_slice %4 {offsets = [32, 0, 10], sizes = [1, 8, 128], strides = [1, 1, 1]} : vector<64x8x256xbf16> to vector<1x8x128xbf16>
    %595 = vector.shape_cast %594 : vector<1x8x128xbf16> to vector<8x128xbf16>
    %596 = arith.maximumf %593, %595 : vector<8x128xbf16>
    %597 = vector.extract_strided_slice %4 {offsets = [0, 0, 10], sizes = [1, 8, 128], strides = [1, 1, 1]} : vector<64x8x256xbf16> to vector<1x8x128xbf16>
    %598 = vector.shape_cast %597 : vector<1x8x128xbf16> to vector<8x128xbf16>
    %599 = vector.extract_strided_slice %4 {offsets = [1, 0, 10], sizes = [1, 8, 128], strides = [1, 1, 1]} : vector<64x8x256xbf16> to vector<1x8x128xbf16>
    %600 = vector.shape_cast %599 : vector<1x8x128xbf16> to vector<8x128xbf16>
    %601 = arith.maximumf %598, %600 : vector<8x128xbf16>
    %602 = vector.extract_strided_slice %4 {offsets = [2, 0, 10], sizes = [1, 8, 128], strides = [1, 1, 1]} : vector<64x8x256xbf16> to vector<1x8x128xbf16>
    %603 = vector.shape_cast %602 : vector<1x8x128xbf16> to vector<8x128xbf16>
    %604 = arith.maximumf %601, %603 : vector<8x128xbf16>
    %605 = vector.extract_strided_slice %4 {offsets = [3, 0, 10], sizes = [1, 8, 128], strides = [1, 1, 1]} : vector<64x8x256xbf16> to vector<1x8x128xbf16>
    %606 = vector.shape_cast %605 : vector<1x8x128xbf16> to vector<8x128xbf16>
    %607 = arith.maximumf %604, %606 : vector<8x128xbf16>
    %608 = vector.extract_strided_slice %4 {offsets = [4, 0, 10], sizes = [1, 8, 128], strides = [1, 1, 1]} : vector<64x8x256xbf16> to vector<1x8x128xbf16>
    %609 = vector.shape_cast %608 : vector<1x8x128xbf16> to vector<8x128xbf16>
    %610 = arith.maximumf %607, %609 : vector<8x128xbf16>
    %611 = vector.extract_strided_slice %4 {offsets = [8, 0, 10], sizes = [1, 8, 128], strides = [1, 1, 1]} : vector<64x8x256xbf16> to vector<1x8x128xbf16>
    %612 = vector.shape_cast %611 : vector<1x8x128xbf16> to vector<8x128xbf16>
    %613 = arith.maximumf %610, %612 : vector<8x128xbf16>
    %614 = vector.extract_strided_slice %4 {offsets = [9, 0, 10], sizes = [1, 8, 128], strides = [1, 1, 1]} : vector<64x8x256xbf16> to vector<1x8x128xbf16>
    %615 = vector.shape_cast %614 : vector<1x8x128xbf16> to vector<8x128xbf16>
    %616 = arith.maximumf %613, %615 : vector<8x128xbf16>
    %617 = vector.extract_strided_slice %4 {offsets = [10, 0, 10], sizes = [1, 8, 128], strides = [1, 1, 1]} : vector<64x8x256xbf16> to vector<1x8x128xbf16>
    %618 = vector.shape_cast %617 : vector<1x8x128xbf16> to vector<8x128xbf16>
    %619 = arith.maximumf %616, %618 : vector<8x128xbf16>
    %620 = vector.extract_strided_slice %4 {offsets = [11, 0, 10], sizes = [1, 8, 128], strides = [1, 1, 1]} : vector<64x8x256xbf16> to vector<1x8x128xbf16>
    %621 = vector.shape_cast %620 : vector<1x8x128xbf16> to vector<8x128xbf16>
    %622 = arith.maximumf %619, %621 : vector<8x128xbf16>
    %623 = vector.extract_strided_slice %4 {offsets = [12, 0, 10], sizes = [1, 8, 128], strides = [1, 1, 1]} : vector<64x8x256xbf16> to vector<1x8x128xbf16>
    %624 = vector.shape_cast %623 : vector<1x8x128xbf16> to vector<8x128xbf16>
    %625 = arith.maximumf %622, %624 : vector<8x128xbf16>
    %626 = vector.extract_strided_slice %4 {offsets = [16, 0, 10], sizes = [1, 8, 128], strides = [1, 1, 1]} : vector<64x8x256xbf16> to vector<1x8x128xbf16>
    %627 = vector.shape_cast %626 : vector<1x8x128xbf16> to vector<8x128xbf16>
    %628 = arith.maximumf %625, %627 : vector<8x128xbf16>
    %629 = vector.extract_strided_slice %4 {offsets = [17, 0, 10], sizes = [1, 8, 128], strides = [1, 1, 1]} : vector<64x8x256xbf16> to vector<1x8x128xbf16>
    %630 = vector.shape_cast %629 : vector<1x8x128xbf16> to vector<8x128xbf16>
    %631 = arith.maximumf %628, %630 : vector<8x128xbf16>
    %632 = vector.extract_strided_slice %4 {offsets = [18, 0, 10], sizes = [1, 8, 128], strides = [1, 1, 1]} : vector<64x8x256xbf16> to vector<1x8x128xbf16>
    %633 = vector.shape_cast %632 : vector<1x8x128xbf16> to vector<8x128xbf16>
    %634 = arith.maximumf %631, %633 : vector<8x128xbf16>
    %635 = vector.extract_strided_slice %4 {offsets = [19, 0, 10], sizes = [1, 8, 128], strides = [1, 1, 1]} : vector<64x8x256xbf16> to vector<1x8x128xbf16>
    %636 = vector.shape_cast %635 : vector<1x8x128xbf16> to vector<8x128xbf16>
    %637 = arith.maximumf %634, %636 : vector<8x128xbf16>
    %638 = vector.extract_strided_slice %4 {offsets = [20, 0, 10], sizes = [1, 8, 128], strides = [1, 1, 1]} : vector<64x8x256xbf16> to vector<1x8x128xbf16>
    %639 = vector.shape_cast %638 : vector<1x8x128xbf16> to vector<8x128xbf16>
    %640 = arith.maximumf %637, %639 : vector<8x128xbf16>
    %641 = vector.extract_strided_slice %4 {offsets = [24, 0, 10], sizes = [1, 8, 128], strides = [1, 1, 1]} : vector<64x8x256xbf16> to vector<1x8x128xbf16>
    %642 = vector.shape_cast %641 : vector<1x8x128xbf16> to vector<8x128xbf16>
    %643 = arith.maximumf %640, %642 : vector<8x128xbf16>
    %644 = vector.extract_strided_slice %4 {offsets = [25, 0, 10], sizes = [1, 8, 128], strides = [1, 1, 1]} : vector<64x8x256xbf16> to vector<1x8x128xbf16>
    %645 = vector.shape_cast %644 : vector<1x8x128xbf16> to vector<8x128xbf16>
    %646 = arith.maximumf %643, %645 : vector<8x128xbf16>
    %647 = vector.extract_strided_slice %4 {offsets = [26, 0, 10], sizes = [1, 8, 128], strides = [1, 1, 1]} : vector<64x8x256xbf16> to vector<1x8x128xbf16>
    %648 = vector.shape_cast %647 : vector<1x8x128xbf16> to vector<8x128xbf16>
    %649 = arith.maximumf %646, %648 : vector<8x128xbf16>
    %650 = vector.extract_strided_slice %4 {offsets = [27, 0, 10], sizes = [1, 8, 128], strides = [1, 1, 1]} : vector<64x8x256xbf16> to vector<1x8x128xbf16>
    %651 = vector.shape_cast %650 : vector<1x8x128xbf16> to vector<8x128xbf16>
    %652 = arith.maximumf %649, %651 : vector<8x128xbf16>
    %653 = vector.extract_strided_slice %4 {offsets = [28, 0, 10], sizes = [1, 8, 128], strides = [1, 1, 1]} : vector<64x8x256xbf16> to vector<1x8x128xbf16>
    %654 = vector.shape_cast %653 : vector<1x8x128xbf16> to vector<8x128xbf16>
    %655 = arith.maximumf %652, %654 : vector<8x128xbf16>
    %656 = vector.extract_strided_slice %4 {offsets = [32, 0, 10], sizes = [1, 8, 128], strides = [1, 1, 1]} : vector<64x8x256xbf16> to vector<1x8x128xbf16>
    %657 = vector.shape_cast %656 : vector<1x8x128xbf16> to vector<8x128xbf16>
    %658 = arith.maximumf %655, %657 : vector<8x128xbf16>
    %659 = vector.extract_strided_slice %4 {offsets = [33, 0, 10], sizes = [1, 8, 128], strides = [1, 1, 1]} : vector<64x8x256xbf16> to vector<1x8x128xbf16>
    %660 = vector.shape_cast %659 : vector<1x8x128xbf16> to vector<8x128xbf16>
    %661 = arith.maximumf %658, %660 : vector<8x128xbf16>
    %662 = vector.extract_strided_slice %4 {offsets = [34, 0, 10], sizes = [1, 8, 128], strides = [1, 1, 1]} : vector<64x8x256xbf16> to vector<1x8x128xbf16>
    %663 = vector.shape_cast %662 : vector<1x8x128xbf16> to vector<8x128xbf16>
    %664 = arith.maximumf %661, %663 : vector<8x128xbf16>
    %665 = vector.extract_strided_slice %4 {offsets = [35, 0, 10], sizes = [1, 8, 128], strides = [1, 1, 1]} : vector<64x8x256xbf16> to vector<1x8x128xbf16>
    %666 = vector.shape_cast %665 : vector<1x8x128xbf16> to vector<8x128xbf16>
    %667 = arith.maximumf %664, %666 : vector<8x128xbf16>
    %668 = vector.extract_strided_slice %4 {offsets = [36, 0, 10], sizes = [1, 8, 128], strides = [1, 1, 1]} : vector<64x8x256xbf16> to vector<1x8x128xbf16>
    %669 = vector.shape_cast %668 : vector<1x8x128xbf16> to vector<8x128xbf16>
    %670 = arith.maximumf %667, %669 : vector<8x128xbf16>
    %671 = tpu.concatenate %78, %152, %226, %300, %374, %448, %522, %596, %670 in 0 : vector<8x128xbf16>, vector<8x128xbf16>, vector<8x128xbf16>, vector<8x128xbf16>, vector<8x128xbf16>, vector<8x128xbf16>, vector<8x128xbf16>, vector<8x128xbf16>, vector<8x128xbf16> -> vector<72x128xbf16>
    %c0_7 = arith.constant 0 : index
    %c0_8 = arith.constant 0 : index
    %672 = vector.load %arg4[%c0_7, %c0_8] : memref<32x72xbf16, #tpu.memory_space<vmem>>, vector<32x72xbf16>
    %cst = arith.constant dense<0.000000e+00> : vector<32x128xf32>
    %673 = tpu.matmul %672, %671, %cst {dimension_numbers = #tpu.dot_dimension_numbers<[1], [0], [0], [1], [0, 0, 1, 1], [], []>} : vector<32x72xbf16>, vector<72x128xbf16>, vector<32x128xf32> -> vector<32x128xf32>
    %c0_9 = arith.constant 0 : index
    %c0_10 = arith.constant 0 : index
    %674 = vector.load %arg5[%c0_9, %c0_10] : memref<32x1xf32, #tpu.memory_space<vmem>>, vector<32x1xf32>
    %675 = vector.broadcast %674 : vector<32x1xf32> to vector<32x128xf32>
    %676 = arith.mulf %673, %675 : vector<32x128xf32>
    %c0_11 = arith.constant 0 : index
    %c0_12 = arith.constant 0 : index
    %677 = vector.load %arg6[%c0_11, %c0_12] : memref<32x1xf32, #tpu.memory_space<vmem>>, vector<32x1xf32>
    %678 = vector.broadcast %677 : vector<32x1xf32> to vector<32x128xf32>
    %679 = arith.addf %676, %678 : vector<32x128xf32>
    %cst_13 = arith.constant 0.000000e+00 : f32
    %cst_14 = arith.constant 6.000000e+00 : f32
    %680 = vector.broadcast %cst_13 : f32 to vector<32x128xf32>
    %681 = arith.maximumf %680, %679 : vector<32x128xf32>
    %682 = vector.broadcast %cst_14 : f32 to vector<32x128xf32>
    %683 = arith.minimumf %682, %681 : vector<32x128xf32>
    %684 = arith.truncf %683 : vector<32x128xf32> to vector<32x128xbf16>
    %c0_15 = arith.constant 0 : index
    %c0_16 = arith.constant 0 : index
    %c0_17 = arith.constant 0 : index
    %685 = vector.load %arg7[%c0_15, %c0_16, %c0_17] : memref<1x32x128xbf16, #tpu.memory_space<vmem>>, vector<1x32x128xbf16>
    %686 = vector.shape_cast %685 : vector<1x32x128xbf16> to vector<32x128xbf16>
    %687 = vector.shape_cast %684 : vector<32x128xbf16> to vector<1x32x128xbf16>
    tpu.vector_store %arg7[%c0_15, %c0_16, %c0_17], %687 {strides = array<i32>} : memref<1x32x128xbf16, #tpu.memory_space<vmem>>, vector<1x32x128xbf16>,
    return
  }
  func.func @transform_0(%arg0: i32, %arg1: i32) -> (i32, i32, i32, i32) {
    %c0_i32 = arith.constant 0 : i32
    %c0_i32_0 = arith.constant 0 : i32
    %c0_i32_1 = arith.constant 0 : i32
    return %arg0, %c0_i32, %c0_i32_0, %arg1 : i32, i32, i32, i32
  }
  func.func @transform_1(%arg0: i32, %arg1: i32) -> (i32, i32, i32, i32) {
    %c1_i32 = arith.constant 1 : i32
    %0 = arith.addi %arg1, %c1_i32 : i32
    %c1_i32_0 = arith.constant 1 : i32
    %1 = arith.muli %0, %c1_i32_0 : i32
    %c0_i32 = arith.constant 0 : i32
    %c0_i32_1 = arith.constant 0 : i32
    %c0_i32_2 = arith.constant 0 : i32
    return %arg0, %c0_i32, %c0_i32_1, %1 : i32, i32, i32, i32
  }
  func.func @transform_2(%arg0: i32, %arg1: i32) -> (i32, i32) {
    %c0_i32 = arith.constant 0 : i32
    %c0_i32_0 = arith.constant 0 : i32
    %c0_i32_1 = arith.constant 0 : i32
    return %c0_i32, %c0_i32_0 : i32, i32
  }
  func.func @transform_3(%arg0: i32, %arg1: i32) -> (i32, i32) {
    %c0_i32 = arith.constant 0 : i32
    %c0_i32_0 = arith.constant 0 : i32
    %c0_i32_1 = arith.constant 0 : i32
    return %c0_i32, %c0_i32_0 : i32, i32
  }
  func.func @transform_4(%arg0: i32, %arg1: i32) -> (i32, i32) {
    %c0_i32 = arith.constant 0 : i32
    %c0_i32_0 = arith.constant 0 : i32
    %c0_i32_1 = arith.constant 0 : i32
    return %c0_i32, %c0_i32_0 : i32, i32
  }
  func.func @transform_5(%arg0: i32, %arg1: i32) -> (i32, i32, i32) {
    %c0_i32 = arith.constant 0 : i32
    %c0_i32_0 = arith.constant 0 : i32
    return %arg0, %c0_i32, %arg1 : i32, i32, i32
  }
}

module attributes {stable_mosaic.version = 11 : i64} {
  func.func @_pool_conv_kernel(%arg0: i32, %arg1: i32, %arg2: memref<1x16x16x128xbf16, #tpu.memory_space<vmem>>, %arg3: memref<1x16x16x128xbf16, #tpu.memory_space<vmem>>, %arg4: memref<32x144xbf16, #tpu.memory_space<vmem>>, %arg5: memref<32x1xf32, #tpu.memory_space<vmem>>, %arg6: memref<32x1xf32, #tpu.memory_space<vmem>>, %arg7: memref<1x32x128xbf16, #tpu.memory_space<vmem>>) attributes {dimension_semantics = [#tpu.dimension_semantics<parallel>, #tpu.dimension_semantics<parallel>], iteration_bounds = array<i64: 2, 1>, scalar_prefetch = 0 : i64, scratch_operands = 0 : i64, tpu.core_type = #tpu.core_type<tc>, window_params = [{transform_indices = @transform_0, window_bounds = array<i64: 1, 16, 16, 128>}, {transform_indices = @transform_1, window_bounds = array<i64: 1, 16, 16, 128>}, {pipeline_mode = #tpu.pipeline_mode<synchronous>, transform_indices = @transform_2, window_bounds = array<i64: 32, 144>}, {pipeline_mode = #tpu.pipeline_mode<synchronous>, transform_indices = @transform_3, window_bounds = array<i64: 32, 1>}, {pipeline_mode = #tpu.pipeline_mode<synchronous>, transform_indices = @transform_4, window_bounds = array<i64: 32, 1>}, {transform_indices = @transform_5, window_bounds = array<i64: 1, 32, 128>}]} {
    %c0 = arith.constant 0 : index
    %c0_0 = arith.constant 0 : index
    %c0_1 = arith.constant 0 : index
    %c0_2 = arith.constant 0 : index
    %0 = vector.load %arg2[%c0, %c0_0, %c0_1, %c0_2] : memref<1x16x16x128xbf16, #tpu.memory_space<vmem>>, vector<1x16x16x128xbf16>
    %1 = vector.shape_cast %0 : vector<1x16x16x128xbf16> to vector<16x16x128xbf16>
    %c0_3 = arith.constant 0 : index
    %c0_4 = arith.constant 0 : index
    %c0_5 = arith.constant 0 : index
    %c0_6 = arith.constant 0 : index
    %2 = vector.load %arg3[%c0_3, %c0_4, %c0_5, %c0_6] : memref<1x16x16x128xbf16, #tpu.memory_space<vmem>>, vector<1x16x16x128xbf16>
    %3 = vector.shape_cast %2 : vector<1x16x16x128xbf16> to vector<16x16x128xbf16>
    %4 = tpu.concatenate %1, %3 in 2 : vector<16x16x128xbf16>, vector<16x16x128xbf16> -> vector<16x16x256xbf16>
    %5 = vector.extract_strided_slice %4 {offsets = [0, 0, 0], sizes = [1, 16, 128], strides = [1, 1, 1]} : vector<16x16x256xbf16> to vector<1x16x128xbf16>
    %6 = vector.shape_cast %5 : vector<1x16x128xbf16> to vector<16x128xbf16>
    %7 = vector.extract_strided_slice %4 {offsets = [1, 0, 0], sizes = [1, 16, 128], strides = [1, 1, 1]} : vector<16x16x256xbf16> to vector<1x16x128xbf16>
    %8 = vector.shape_cast %7 : vector<1x16x128xbf16> to vector<16x128xbf16>
    %9 = arith.maximumf %6, %8 : vector<16x128xbf16>
    %10 = vector.extract_strided_slice %4 {offsets = [2, 0, 0], sizes = [1, 16, 128], strides = [1, 1, 1]} : vector<16x16x256xbf16> to vector<1x16x128xbf16>
    %11 = vector.shape_cast %10 : vector<1x16x128xbf16> to vector<16x128xbf16>
    %12 = arith.maximumf %9, %11 : vector<16x128xbf16>
    %13 = vector.extract_strided_slice %4 {offsets = [4, 0, 0], sizes = [1, 16, 128], strides = [1, 1, 1]} : vector<16x16x256xbf16> to vector<1x16x128xbf16>
    %14 = vector.shape_cast %13 : vector<1x16x128xbf16> to vector<16x128xbf16>
    %15 = arith.maximumf %12, %14 : vector<16x128xbf16>
    %16 = vector.extract_strided_slice %4 {offsets = [5, 0, 0], sizes = [1, 16, 128], strides = [1, 1, 1]} : vector<16x16x256xbf16> to vector<1x16x128xbf16>
    %17 = vector.shape_cast %16 : vector<1x16x128xbf16> to vector<16x128xbf16>
    %18 = arith.maximumf %15, %17 : vector<16x128xbf16>
    %19 = vector.extract_strided_slice %4 {offsets = [6, 0, 0], sizes = [1, 16, 128], strides = [1, 1, 1]} : vector<16x16x256xbf16> to vector<1x16x128xbf16>
    %20 = vector.shape_cast %19 : vector<1x16x128xbf16> to vector<16x128xbf16>
    %21 = arith.maximumf %18, %20 : vector<16x128xbf16>
    %22 = vector.extract_strided_slice %4 {offsets = [8, 0, 0], sizes = [1, 16, 128], strides = [1, 1, 1]} : vector<16x16x256xbf16> to vector<1x16x128xbf16>
    %23 = vector.shape_cast %22 : vector<1x16x128xbf16> to vector<16x128xbf16>
    %24 = arith.maximumf %21, %23 : vector<16x128xbf16>
    %25 = vector.extract_strided_slice %4 {offsets = [9, 0, 0], sizes = [1, 16, 128], strides = [1, 1, 1]} : vector<16x16x256xbf16> to vector<1x16x128xbf16>
    %26 = vector.shape_cast %25 : vector<1x16x128xbf16> to vector<16x128xbf16>
    %27 = arith.maximumf %24, %26 : vector<16x128xbf16>
    %28 = vector.extract_strided_slice %4 {offsets = [10, 0, 0], sizes = [1, 16, 128], strides = [1, 1, 1]} : vector<16x16x256xbf16> to vector<1x16x128xbf16>
    %29 = vector.shape_cast %28 : vector<1x16x128xbf16> to vector<16x128xbf16>
    %30 = arith.maximumf %27, %29 : vector<16x128xbf16>
    %31 = vector.extract_strided_slice %4 {offsets = [2, 0, 0], sizes = [1, 16, 128], strides = [1, 1, 1]} : vector<16x16x256xbf16> to vector<1x16x128xbf16>
    %32 = vector.shape_cast %31 : vector<1x16x128xbf16> to vector<16x128xbf16>
    %33 = vector.extract_strided_slice %4 {offsets = [3, 0, 0], sizes = [1, 16, 128], strides = [1, 1, 1]} : vector<16x16x256xbf16> to vector<1x16x128xbf16>
    %34 = vector.shape_cast %33 : vector<1x16x128xbf16> to vector<16x128xbf16>
    %35 = arith.maximumf %32, %34 : vector<16x128xbf16>
    %36 = vector.extract_strided_slice %4 {offsets = [0, 0, 1], sizes = [1, 16, 128], strides = [1, 1, 1]} : vector<16x16x256xbf16> to vector<1x16x128xbf16>
    %37 = vector.shape_cast %36 : vector<1x16x128xbf16> to vector<16x128xbf16>
    %38 = arith.maximumf %35, %37 : vector<16x128xbf16>
    %39 = vector.extract_strided_slice %4 {offsets = [6, 0, 0], sizes = [1, 16, 128], strides = [1, 1, 1]} : vector<16x16x256xbf16> to vector<1x16x128xbf16>
    %40 = vector.shape_cast %39 : vector<1x16x128xbf16> to vector<16x128xbf16>
    %41 = arith.maximumf %38, %40 : vector<16x128xbf16>
    %42 = vector.extract_strided_slice %4 {offsets = [7, 0, 0], sizes = [1, 16, 128], strides = [1, 1, 1]} : vector<16x16x256xbf16> to vector<1x16x128xbf16>
    %43 = vector.shape_cast %42 : vector<1x16x128xbf16> to vector<16x128xbf16>
    %44 = arith.maximumf %41, %43 : vector<16x128xbf16>
    %45 = vector.extract_strided_slice %4 {offsets = [4, 0, 1], sizes = [1, 16, 128], strides = [1, 1, 1]} : vector<16x16x256xbf16> to vector<1x16x128xbf16>
    %46 = vector.shape_cast %45 : vector<1x16x128xbf16> to vector<16x128xbf16>
    %47 = arith.maximumf %44, %46 : vector<16x128xbf16>
    %48 = vector.extract_strided_slice %4 {offsets = [10, 0, 0], sizes = [1, 16, 128], strides = [1, 1, 1]} : vector<16x16x256xbf16> to vector<1x16x128xbf16>
    %49 = vector.shape_cast %48 : vector<1x16x128xbf16> to vector<16x128xbf16>
    %50 = arith.maximumf %47, %49 : vector<16x128xbf16>
    %51 = vector.extract_strided_slice %4 {offsets = [11, 0, 0], sizes = [1, 16, 128], strides = [1, 1, 1]} : vector<16x16x256xbf16> to vector<1x16x128xbf16>
    %52 = vector.shape_cast %51 : vector<1x16x128xbf16> to vector<16x128xbf16>
    %53 = arith.maximumf %50, %52 : vector<16x128xbf16>
    %54 = vector.extract_strided_slice %4 {offsets = [8, 0, 1], sizes = [1, 16, 128], strides = [1, 1, 1]} : vector<16x16x256xbf16> to vector<1x16x128xbf16>
    %55 = vector.shape_cast %54 : vector<1x16x128xbf16> to vector<16x128xbf16>
    %56 = arith.maximumf %53, %55 : vector<16x128xbf16>
    %57 = vector.extract_strided_slice %4 {offsets = [0, 0, 1], sizes = [1, 16, 128], strides = [1, 1, 1]} : vector<16x16x256xbf16> to vector<1x16x128xbf16>
    %58 = vector.shape_cast %57 : vector<1x16x128xbf16> to vector<16x128xbf16>
    %59 = vector.extract_strided_slice %4 {offsets = [1, 0, 1], sizes = [1, 16, 128], strides = [1, 1, 1]} : vector<16x16x256xbf16> to vector<1x16x128xbf16>
    %60 = vector.shape_cast %59 : vector<1x16x128xbf16> to vector<16x128xbf16>
    %61 = arith.maximumf %58, %60 : vector<16x128xbf16>
    %62 = vector.extract_strided_slice %4 {offsets = [2, 0, 1], sizes = [1, 16, 128], strides = [1, 1, 1]} : vector<16x16x256xbf16> to vector<1x16x128xbf16>
    %63 = vector.shape_cast %62 : vector<1x16x128xbf16> to vector<16x128xbf16>
    %64 = arith.maximumf %61, %63 : vector<16x128xbf16>
    %65 = vector.extract_strided_slice %4 {offsets = [4, 0, 1], sizes = [1, 16, 128], strides = [1, 1, 1]} : vector<16x16x256xbf16> to vector<1x16x128xbf16>
    %66 = vector.shape_cast %65 : vector<1x16x128xbf16> to vector<16x128xbf16>
    %67 = arith.maximumf %64, %66 : vector<16x128xbf16>
    %68 = vector.extract_strided_slice %4 {offsets = [5, 0, 1], sizes = [1, 16, 128], strides = [1, 1, 1]} : vector<16x16x256xbf16> to vector<1x16x128xbf16>
    %69 = vector.shape_cast %68 : vector<1x16x128xbf16> to vector<16x128xbf16>
    %70 = arith.maximumf %67, %69 : vector<16x128xbf16>
    %71 = vector.extract_strided_slice %4 {offsets = [6, 0, 1], sizes = [1, 16, 128], strides = [1, 1, 1]} : vector<16x16x256xbf16> to vector<1x16x128xbf16>
    %72 = vector.shape_cast %71 : vector<1x16x128xbf16> to vector<16x128xbf16>
    %73 = arith.maximumf %70, %72 : vector<16x128xbf16>
    %74 = vector.extract_strided_slice %4 {offsets = [8, 0, 1], sizes = [1, 16, 128], strides = [1, 1, 1]} : vector<16x16x256xbf16> to vector<1x16x128xbf16>
    %75 = vector.shape_cast %74 : vector<1x16x128xbf16> to vector<16x128xbf16>
    %76 = arith.maximumf %73, %75 : vector<16x128xbf16>
    %77 = vector.extract_strided_slice %4 {offsets = [9, 0, 1], sizes = [1, 16, 128], strides = [1, 1, 1]} : vector<16x16x256xbf16> to vector<1x16x128xbf16>
    %78 = vector.shape_cast %77 : vector<1x16x128xbf16> to vector<16x128xbf16>
    %79 = arith.maximumf %76, %78 : vector<16x128xbf16>
    %80 = vector.extract_strided_slice %4 {offsets = [10, 0, 1], sizes = [1, 16, 128], strides = [1, 1, 1]} : vector<16x16x256xbf16> to vector<1x16x128xbf16>
    %81 = vector.shape_cast %80 : vector<1x16x128xbf16> to vector<16x128xbf16>
    %82 = arith.maximumf %79, %81 : vector<16x128xbf16>
    %83 = vector.extract_strided_slice %4 {offsets = [8, 0, 0], sizes = [1, 16, 128], strides = [1, 1, 1]} : vector<16x16x256xbf16> to vector<1x16x128xbf16>
    %84 = vector.shape_cast %83 : vector<1x16x128xbf16> to vector<16x128xbf16>
    %85 = vector.extract_strided_slice %4 {offsets = [9, 0, 0], sizes = [1, 16, 128], strides = [1, 1, 1]} : vector<16x16x256xbf16> to vector<1x16x128xbf16>
    %86 = vector.shape_cast %85 : vector<1x16x128xbf16> to vector<16x128xbf16>
    %87 = arith.maximumf %84, %86 : vector<16x128xbf16>
    %88 = vector.extract_strided_slice %4 {offsets = [10, 0, 0], sizes = [1, 16, 128], strides = [1, 1, 1]} : vector<16x16x256xbf16> to vector<1x16x128xbf16>
    %89 = vector.shape_cast %88 : vector<1x16x128xbf16> to vector<16x128xbf16>
    %90 = arith.maximumf %87, %89 : vector<16x128xbf16>
    %91 = vector.extract_strided_slice %4 {offsets = [12, 0, 0], sizes = [1, 16, 128], strides = [1, 1, 1]} : vector<16x16x256xbf16> to vector<1x16x128xbf16>
    %92 = vector.shape_cast %91 : vector<1x16x128xbf16> to vector<16x128xbf16>
    %93 = arith.maximumf %90, %92 : vector<16x128xbf16>
    %94 = vector.extract_strided_slice %4 {offsets = [13, 0, 0], sizes = [1, 16, 128], strides = [1, 1, 1]} : vector<16x16x256xbf16> to vector<1x16x128xbf16>
    %95 = vector.shape_cast %94 : vector<1x16x128xbf16> to vector<16x128xbf16>
    %96 = arith.maximumf %93, %95 : vector<16x128xbf16>
    %97 = vector.extract_strided_slice %4 {offsets = [14, 0, 0], sizes = [1, 16, 128], strides = [1, 1, 1]} : vector<16x16x256xbf16> to vector<1x16x128xbf16>
    %98 = vector.shape_cast %97 : vector<1x16x128xbf16> to vector<16x128xbf16>
    %99 = arith.maximumf %96, %98 : vector<16x128xbf16>
    %100 = vector.extract_strided_slice %4 {offsets = [0, 0, 9], sizes = [1, 16, 128], strides = [1, 1, 1]} : vector<16x16x256xbf16> to vector<1x16x128xbf16>
    %101 = vector.shape_cast %100 : vector<1x16x128xbf16> to vector<16x128xbf16>
    %102 = arith.maximumf %99, %101 : vector<16x128xbf16>
    %103 = vector.extract_strided_slice %4 {offsets = [1, 0, 9], sizes = [1, 16, 128], strides = [1, 1, 1]} : vector<16x16x256xbf16> to vector<1x16x128xbf16>
    %104 = vector.shape_cast %103 : vector<1x16x128xbf16> to vector<16x128xbf16>
    %105 = arith.maximumf %102, %104 : vector<16x128xbf16>
    %106 = vector.extract_strided_slice %4 {offsets = [2, 0, 9], sizes = [1, 16, 128], strides = [1, 1, 1]} : vector<16x16x256xbf16> to vector<1x16x128xbf16>
    %107 = vector.shape_cast %106 : vector<1x16x128xbf16> to vector<16x128xbf16>
    %108 = arith.maximumf %105, %107 : vector<16x128xbf16>
    %109 = vector.extract_strided_slice %4 {offsets = [10, 0, 0], sizes = [1, 16, 128], strides = [1, 1, 1]} : vector<16x16x256xbf16> to vector<1x16x128xbf16>
    %110 = vector.shape_cast %109 : vector<1x16x128xbf16> to vector<16x128xbf16>
    %111 = vector.extract_strided_slice %4 {offsets = [11, 0, 0], sizes = [1, 16, 128], strides = [1, 1, 1]} : vector<16x16x256xbf16> to vector<1x16x128xbf16>
    %112 = vector.shape_cast %111 : vector<1x16x128xbf16> to vector<16x128xbf16>
    %113 = arith.maximumf %110, %112 : vector<16x128xbf16>
    %114 = vector.extract_strided_slice %4 {offsets = [8, 0, 1], sizes = [1, 16, 128], strides = [1, 1, 1]} : vector<16x16x256xbf16> to vector<1x16x128xbf16>
    %115 = vector.shape_cast %114 : vector<1x16x128xbf16> to vector<16x128xbf16>
    %116 = arith.maximumf %113, %115 : vector<16x128xbf16>
    %117 = vector.extract_strided_slice %4 {offsets = [14, 0, 0], sizes = [1, 16, 128], strides = [1, 1, 1]} : vector<16x16x256xbf16> to vector<1x16x128xbf16>
    %118 = vector.shape_cast %117 : vector<1x16x128xbf16> to vector<16x128xbf16>
    %119 = arith.maximumf %116, %118 : vector<16x128xbf16>
    %120 = vector.extract_strided_slice %4 {offsets = [15, 0, 0], sizes = [1, 16, 128], strides = [1, 1, 1]} : vector<16x16x256xbf16> to vector<1x16x128xbf16>
    %121 = vector.shape_cast %120 : vector<1x16x128xbf16> to vector<16x128xbf16>
    %122 = arith.maximumf %119, %121 : vector<16x128xbf16>
    %123 = vector.extract_strided_slice %4 {offsets = [12, 0, 1], sizes = [1, 16, 128], strides = [1, 1, 1]} : vector<16x16x256xbf16> to vector<1x16x128xbf16>
    %124 = vector.shape_cast %123 : vector<1x16x128xbf16> to vector<16x128xbf16>
    %125 = arith.maximumf %122, %124 : vector<16x128xbf16>
    %126 = vector.extract_strided_slice %4 {offsets = [2, 0, 9], sizes = [1, 16, 128], strides = [1, 1, 1]} : vector<16x16x256xbf16> to vector<1x16x128xbf16>
    %127 = vector.shape_cast %126 : vector<1x16x128xbf16> to vector<16x128xbf16>
    %128 = arith.maximumf %125, %127 : vector<16x128xbf16>
    %129 = vector.extract_strided_slice %4 {offsets = [3, 0, 9], sizes = [1, 16, 128], strides = [1, 1, 1]} : vector<16x16x256xbf16> to vector<1x16x128xbf16>
    %130 = vector.shape_cast %129 : vector<1x16x128xbf16> to vector<16x128xbf16>
    %131 = arith.maximumf %128, %130 : vector<16x128xbf16>
    %132 = vector.extract_strided_slice %4 {offsets = [0, 0, 10], sizes = [1, 16, 128], strides = [1, 1, 1]} : vector<16x16x256xbf16> to vector<1x16x128xbf16>
    %133 = vector.shape_cast %132 : vector<1x16x128xbf16> to vector<16x128xbf16>
    %134 = arith.maximumf %131, %133 : vector<16x128xbf16>
    %135 = vector.extract_strided_slice %4 {offsets = [8, 0, 1], sizes = [1, 16, 128], strides = [1, 1, 1]} : vector<16x16x256xbf16> to vector<1x16x128xbf16>
    %136 = vector.shape_cast %135 : vector<1x16x128xbf16> to vector<16x128xbf16>
    %137 = vector.extract_strided_slice %4 {offsets = [9, 0, 1], sizes = [1, 16, 128], strides = [1, 1, 1]} : vector<16x16x256xbf16> to vector<1x16x128xbf16>
    %138 = vector.shape_cast %137 : vector<1x16x128xbf16> to vector<16x128xbf16>
    %139 = arith.maximumf %136, %138 : vector<16x128xbf16>
    %140 = vector.extract_strided_slice %4 {offsets = [10, 0, 1], sizes = [1, 16, 128], strides = [1, 1, 1]} : vector<16x16x256xbf16> to vector<1x16x128xbf16>
    %141 = vector.shape_cast %140 : vector<1x16x128xbf16> to vector<16x128xbf16>
    %142 = arith.maximumf %139, %141 : vector<16x128xbf16>
    %143 = vector.extract_strided_slice %4 {offsets = [12, 0, 1], sizes = [1, 16, 128], strides = [1, 1, 1]} : vector<16x16x256xbf16> to vector<1x16x128xbf16>
    %144 = vector.shape_cast %143 : vector<1x16x128xbf16> to vector<16x128xbf16>
    %145 = arith.maximumf %142, %144 : vector<16x128xbf16>
    %146 = vector.extract_strided_slice %4 {offsets = [13, 0, 1], sizes = [1, 16, 128], strides = [1, 1, 1]} : vector<16x16x256xbf16> to vector<1x16x128xbf16>
    %147 = vector.shape_cast %146 : vector<1x16x128xbf16> to vector<16x128xbf16>
    %148 = arith.maximumf %145, %147 : vector<16x128xbf16>
    %149 = vector.extract_strided_slice %4 {offsets = [14, 0, 1], sizes = [1, 16, 128], strides = [1, 1, 1]} : vector<16x16x256xbf16> to vector<1x16x128xbf16>
    %150 = vector.shape_cast %149 : vector<1x16x128xbf16> to vector<16x128xbf16>
    %151 = arith.maximumf %148, %150 : vector<16x128xbf16>
    %152 = vector.extract_strided_slice %4 {offsets = [0, 0, 10], sizes = [1, 16, 128], strides = [1, 1, 1]} : vector<16x16x256xbf16> to vector<1x16x128xbf16>
    %153 = vector.shape_cast %152 : vector<1x16x128xbf16> to vector<16x128xbf16>
    %154 = arith.maximumf %151, %153 : vector<16x128xbf16>
    %155 = vector.extract_strided_slice %4 {offsets = [1, 0, 10], sizes = [1, 16, 128], strides = [1, 1, 1]} : vector<16x16x256xbf16> to vector<1x16x128xbf16>
    %156 = vector.shape_cast %155 : vector<1x16x128xbf16> to vector<16x128xbf16>
    %157 = arith.maximumf %154, %156 : vector<16x128xbf16>
    %158 = vector.extract_strided_slice %4 {offsets = [2, 0, 10], sizes = [1, 16, 128], strides = [1, 1, 1]} : vector<16x16x256xbf16> to vector<1x16x128xbf16>
    %159 = vector.shape_cast %158 : vector<1x16x128xbf16> to vector<16x128xbf16>
    %160 = arith.maximumf %157, %159 : vector<16x128xbf16>
    %161 = vector.extract_strided_slice %4 {offsets = [0, 0, 9], sizes = [1, 16, 128], strides = [1, 1, 1]} : vector<16x16x256xbf16> to vector<1x16x128xbf16>
    %162 = vector.shape_cast %161 : vector<1x16x128xbf16> to vector<16x128xbf16>
    %163 = vector.extract_strided_slice %4 {offsets = [1, 0, 9], sizes = [1, 16, 128], strides = [1, 1, 1]} : vector<16x16x256xbf16> to vector<1x16x128xbf16>
    %164 = vector.shape_cast %163 : vector<1x16x128xbf16> to vector<16x128xbf16>
    %165 = arith.maximumf %162, %164 : vector<16x128xbf16>
    %166 = vector.extract_strided_slice %4 {offsets = [2, 0, 9], sizes = [1, 16, 128], strides = [1, 1, 1]} : vector<16x16x256xbf16> to vector<1x16x128xbf16>
    %167 = vector.shape_cast %166 : vector<1x16x128xbf16> to vector<16x128xbf16>
    %168 = arith.maximumf %165, %167 : vector<16x128xbf16>
    %169 = vector.extract_strided_slice %4 {offsets = [4, 0, 9], sizes = [1, 16, 128], strides = [1, 1, 1]} : vector<16x16x256xbf16> to vector<1x16x128xbf16>
    %170 = vector.shape_cast %169 : vector<1x16x128xbf16> to vector<16x128xbf16>
    %171 = arith.maximumf %168, %170 : vector<16x128xbf16>
    %172 = vector.extract_strided_slice %4 {offsets = [5, 0, 9], sizes = [1, 16, 128], strides = [1, 1, 1]} : vector<16x16x256xbf16> to vector<1x16x128xbf16>
    %173 = vector.shape_cast %172 : vector<1x16x128xbf16> to vector<16x128xbf16>
    %174 = arith.maximumf %171, %173 : vector<16x128xbf16>
    %175 = vector.extract_strided_slice %4 {offsets = [6, 0, 9], sizes = [1, 16, 128], strides = [1, 1, 1]} : vector<16x16x256xbf16> to vector<1x16x128xbf16>
    %176 = vector.shape_cast %175 : vector<1x16x128xbf16> to vector<16x128xbf16>
    %177 = arith.maximumf %174, %176 : vector<16x128xbf16>
    %178 = vector.extract_strided_slice %4 {offsets = [8, 0, 9], sizes = [1, 16, 128], strides = [1, 1, 1]} : vector<16x16x256xbf16> to vector<1x16x128xbf16>
    %179 = vector.shape_cast %178 : vector<1x16x128xbf16> to vector<16x128xbf16>
    %180 = arith.maximumf %177, %179 : vector<16x128xbf16>
    %181 = vector.extract_strided_slice %4 {offsets = [9, 0, 9], sizes = [1, 16, 128], strides = [1, 1, 1]} : vector<16x16x256xbf16> to vector<1x16x128xbf16>
    %182 = vector.shape_cast %181 : vector<1x16x128xbf16> to vector<16x128xbf16>
    %183 = arith.maximumf %180, %182 : vector<16x128xbf16>
    %184 = vector.extract_strided_slice %4 {offsets = [10, 0, 9], sizes = [1, 16, 128], strides = [1, 1, 1]} : vector<16x16x256xbf16> to vector<1x16x128xbf16>
    %185 = vector.shape_cast %184 : vector<1x16x128xbf16> to vector<16x128xbf16>
    %186 = arith.maximumf %183, %185 : vector<16x128xbf16>
    %187 = vector.extract_strided_slice %4 {offsets = [2, 0, 9], sizes = [1, 16, 128], strides = [1, 1, 1]} : vector<16x16x256xbf16> to vector<1x16x128xbf16>
    %188 = vector.shape_cast %187 : vector<1x16x128xbf16> to vector<16x128xbf16>
    %189 = vector.extract_strided_slice %4 {offsets = [3, 0, 9], sizes = [1, 16, 128], strides = [1, 1, 1]} : vector<16x16x256xbf16> to vector<1x16x128xbf16>
    %190 = vector.shape_cast %189 : vector<1x16x128xbf16> to vector<16x128xbf16>
    %191 = arith.maximumf %188, %190 : vector<16x128xbf16>
    %192 = vector.extract_strided_slice %4 {offsets = [0, 0, 10], sizes = [1, 16, 128], strides = [1, 1, 1]} : vector<16x16x256xbf16> to vector<1x16x128xbf16>
    %193 = vector.shape_cast %192 : vector<1x16x128xbf16> to vector<16x128xbf16>
    %194 = arith.maximumf %191, %193 : vector<16x128xbf16>
    %195 = vector.extract_strided_slice %4 {offsets = [6, 0, 9], sizes = [1, 16, 128], strides = [1, 1, 1]} : vector<16x16x256xbf16> to vector<1x16x128xbf16>
    %196 = vector.shape_cast %195 : vector<1x16x128xbf16> to vector<16x128xbf16>
    %197 = arith.maximumf %194, %196 : vector<16x128xbf16>
    %198 = vector.extract_strided_slice %4 {offsets = [7, 0, 9], sizes = [1, 16, 128], strides = [1, 1, 1]} : vector<16x16x256xbf16> to vector<1x16x128xbf16>
    %199 = vector.shape_cast %198 : vector<1x16x128xbf16> to vector<16x128xbf16>
    %200 = arith.maximumf %197, %199 : vector<16x128xbf16>
    %201 = vector.extract_strided_slice %4 {offsets = [4, 0, 10], sizes = [1, 16, 128], strides = [1, 1, 1]} : vector<16x16x256xbf16> to vector<1x16x128xbf16>
    %202 = vector.shape_cast %201 : vector<1x16x128xbf16> to vector<16x128xbf16>
    %203 = arith.maximumf %200, %202 : vector<16x128xbf16>
    %204 = vector.extract_strided_slice %4 {offsets = [10, 0, 9], sizes = [1, 16, 128], strides = [1, 1, 1]} : vector<16x16x256xbf16> to vector<1x16x128xbf16>
    %205 = vector.shape_cast %204 : vector<1x16x128xbf16> to vector<16x128xbf16>
    %206 = arith.maximumf %203, %205 : vector<16x128xbf16>
    %207 = vector.extract_strided_slice %4 {offsets = [11, 0, 9], sizes = [1, 16, 128], strides = [1, 1, 1]} : vector<16x16x256xbf16> to vector<1x16x128xbf16>
    %208 = vector.shape_cast %207 : vector<1x16x128xbf16> to vector<16x128xbf16>
    %209 = arith.maximumf %206, %208 : vector<16x128xbf16>
    %210 = vector.extract_strided_slice %4 {offsets = [8, 0, 10], sizes = [1, 16, 128], strides = [1, 1, 1]} : vector<16x16x256xbf16> to vector<1x16x128xbf16>
    %211 = vector.shape_cast %210 : vector<1x16x128xbf16> to vector<16x128xbf16>
    %212 = arith.maximumf %209, %211 : vector<16x128xbf16>
    %213 = vector.extract_strided_slice %4 {offsets = [0, 0, 10], sizes = [1, 16, 128], strides = [1, 1, 1]} : vector<16x16x256xbf16> to vector<1x16x128xbf16>
    %214 = vector.shape_cast %213 : vector<1x16x128xbf16> to vector<16x128xbf16>
    %215 = vector.extract_strided_slice %4 {offsets = [1, 0, 10], sizes = [1, 16, 128], strides = [1, 1, 1]} : vector<16x16x256xbf16> to vector<1x16x128xbf16>
    %216 = vector.shape_cast %215 : vector<1x16x128xbf16> to vector<16x128xbf16>
    %217 = arith.maximumf %214, %216 : vector<16x128xbf16>
    %218 = vector.extract_strided_slice %4 {offsets = [2, 0, 10], sizes = [1, 16, 128], strides = [1, 1, 1]} : vector<16x16x256xbf16> to vector<1x16x128xbf16>
    %219 = vector.shape_cast %218 : vector<1x16x128xbf16> to vector<16x128xbf16>
    %220 = arith.maximumf %217, %219 : vector<16x128xbf16>
    %221 = vector.extract_strided_slice %4 {offsets = [4, 0, 10], sizes = [1, 16, 128], strides = [1, 1, 1]} : vector<16x16x256xbf16> to vector<1x16x128xbf16>
    %222 = vector.shape_cast %221 : vector<1x16x128xbf16> to vector<16x128xbf16>
    %223 = arith.maximumf %220, %222 : vector<16x128xbf16>
    %224 = vector.extract_strided_slice %4 {offsets = [5, 0, 10], sizes = [1, 16, 128], strides = [1, 1, 1]} : vector<16x16x256xbf16> to vector<1x16x128xbf16>
    %225 = vector.shape_cast %224 : vector<1x16x128xbf16> to vector<16x128xbf16>
    %226 = arith.maximumf %223, %225 : vector<16x128xbf16>
    %227 = vector.extract_strided_slice %4 {offsets = [6, 0, 10], sizes = [1, 16, 128], strides = [1, 1, 1]} : vector<16x16x256xbf16> to vector<1x16x128xbf16>
    %228 = vector.shape_cast %227 : vector<1x16x128xbf16> to vector<16x128xbf16>
    %229 = arith.maximumf %226, %228 : vector<16x128xbf16>
    %230 = vector.extract_strided_slice %4 {offsets = [8, 0, 10], sizes = [1, 16, 128], strides = [1, 1, 1]} : vector<16x16x256xbf16> to vector<1x16x128xbf16>
    %231 = vector.shape_cast %230 : vector<1x16x128xbf16> to vector<16x128xbf16>
    %232 = arith.maximumf %229, %231 : vector<16x128xbf16>
    %233 = vector.extract_strided_slice %4 {offsets = [9, 0, 10], sizes = [1, 16, 128], strides = [1, 1, 1]} : vector<16x16x256xbf16> to vector<1x16x128xbf16>
    %234 = vector.shape_cast %233 : vector<1x16x128xbf16> to vector<16x128xbf16>
    %235 = arith.maximumf %232, %234 : vector<16x128xbf16>
    %236 = vector.extract_strided_slice %4 {offsets = [10, 0, 10], sizes = [1, 16, 128], strides = [1, 1, 1]} : vector<16x16x256xbf16> to vector<1x16x128xbf16>
    %237 = vector.shape_cast %236 : vector<1x16x128xbf16> to vector<16x128xbf16>
    %238 = arith.maximumf %235, %237 : vector<16x128xbf16>
    %239 = tpu.concatenate %30, %56, %82, %108, %134, %160, %186, %212, %238 in 0 : vector<16x128xbf16>, vector<16x128xbf16>, vector<16x128xbf16>, vector<16x128xbf16>, vector<16x128xbf16>, vector<16x128xbf16>, vector<16x128xbf16>, vector<16x128xbf16>, vector<16x128xbf16> -> vector<144x128xbf16>
    %c0_7 = arith.constant 0 : index
    %c0_8 = arith.constant 0 : index
    %240 = vector.load %arg4[%c0_7, %c0_8] : memref<32x144xbf16, #tpu.memory_space<vmem>>, vector<32x144xbf16>
    %cst = arith.constant dense<0.000000e+00> : vector<32x128xf32>
    %241 = tpu.matmul %240, %239, %cst {dimension_numbers = #tpu.dot_dimension_numbers<[1], [0], [0], [1], [0, 0, 1, 1], [], []>} : vector<32x144xbf16>, vector<144x128xbf16>, vector<32x128xf32> -> vector<32x128xf32>
    %c0_9 = arith.constant 0 : index
    %c0_10 = arith.constant 0 : index
    %242 = vector.load %arg5[%c0_9, %c0_10] : memref<32x1xf32, #tpu.memory_space<vmem>>, vector<32x1xf32>
    %243 = vector.broadcast %242 : vector<32x1xf32> to vector<32x128xf32>
    %244 = arith.mulf %241, %243 : vector<32x128xf32>
    %c0_11 = arith.constant 0 : index
    %c0_12 = arith.constant 0 : index
    %245 = vector.load %arg6[%c0_11, %c0_12] : memref<32x1xf32, #tpu.memory_space<vmem>>, vector<32x1xf32>
    %246 = vector.broadcast %245 : vector<32x1xf32> to vector<32x128xf32>
    %247 = arith.addf %244, %246 : vector<32x128xf32>
    %cst_13 = arith.constant 0.000000e+00 : f32
    %cst_14 = arith.constant 6.000000e+00 : f32
    %248 = vector.broadcast %cst_13 : f32 to vector<32x128xf32>
    %249 = arith.maximumf %248, %247 : vector<32x128xf32>
    %250 = vector.broadcast %cst_14 : f32 to vector<32x128xf32>
    %251 = arith.minimumf %250, %249 : vector<32x128xf32>
    %252 = arith.truncf %251 : vector<32x128xf32> to vector<32x128xbf16>
    %c0_15 = arith.constant 0 : index
    %c0_16 = arith.constant 0 : index
    %c0_17 = arith.constant 0 : index
    %253 = vector.load %arg7[%c0_15, %c0_16, %c0_17] : memref<1x32x128xbf16, #tpu.memory_space<vmem>>, vector<1x32x128xbf16>
    %254 = vector.shape_cast %253 : vector<1x32x128xbf16> to vector<32x128xbf16>
    %255 = vector.shape_cast %252 : vector<32x128xbf16> to vector<1x32x128xbf16>
    tpu.vector_store %arg7[%c0_15, %c0_16, %c0_17], %255 {strides = array<i32>} : memref<1x32x128xbf16, #tpu.memory_space<vmem>>, vector<1x32x128xbf16>,
    return
  }
  func.func @transform_0(%arg0: i32, %arg1: i32) -> (i32, i32, i32, i32) {
    %c0_i32 = arith.constant 0 : i32
    %c0_i32_0 = arith.constant 0 : i32
    %c0_i32_1 = arith.constant 0 : i32
    return %arg0, %c0_i32, %c0_i32_0, %arg1 : i32, i32, i32, i32
  }
  func.func @transform_1(%arg0: i32, %arg1: i32) -> (i32, i32, i32, i32) {
    %c1_i32 = arith.constant 1 : i32
    %0 = arith.addi %arg1, %c1_i32 : i32
    %c1_i32_0 = arith.constant 1 : i32
    %1 = arith.muli %0, %c1_i32_0 : i32
    %c0_i32 = arith.constant 0 : i32
    %c0_i32_1 = arith.constant 0 : i32
    %c0_i32_2 = arith.constant 0 : i32
    return %arg0, %c0_i32, %c0_i32_1, %1 : i32, i32, i32, i32
  }
  func.func @transform_2(%arg0: i32, %arg1: i32) -> (i32, i32) {
    %c0_i32 = arith.constant 0 : i32
    %c0_i32_0 = arith.constant 0 : i32
    %c0_i32_1 = arith.constant 0 : i32
    return %c0_i32, %c0_i32_0 : i32, i32
  }
  func.func @transform_3(%arg0: i32, %arg1: i32) -> (i32, i32) {
    %c0_i32 = arith.constant 0 : i32
    %c0_i32_0 = arith.constant 0 : i32
    %c0_i32_1 = arith.constant 0 : i32
    return %c0_i32, %c0_i32_0 : i32, i32
  }
  func.func @transform_4(%arg0: i32, %arg1: i32) -> (i32, i32) {
    %c0_i32 = arith.constant 0 : i32
    %c0_i32_0 = arith.constant 0 : i32
    %c0_i32_1 = arith.constant 0 : i32
    return %c0_i32, %c0_i32_0 : i32, i32
  }
  func.func @transform_5(%arg0: i32, %arg1: i32) -> (i32, i32, i32) {
    %c0_i32 = arith.constant 0 : i32
    %c0_i32_0 = arith.constant 0 : i32
    return %arg0, %c0_i32, %arg1 : i32, i32, i32
  }
}

module attributes {stable_mosaic.version = 11 : i64} {
  func.func @_pool_conv_kernel(%arg0: i32, %arg1: i32, %arg2: memref<1x4x24x128xbf16, #tpu.memory_space<vmem>>, %arg3: memref<1x4x24x128xbf16, #tpu.memory_space<vmem>>, %arg4: memref<32x216xbf16, #tpu.memory_space<vmem>>, %arg5: memref<32x1xf32, #tpu.memory_space<vmem>>, %arg6: memref<32x1xf32, #tpu.memory_space<vmem>>, %arg7: memref<1x32x128xbf16, #tpu.memory_space<vmem>>) attributes {dimension_semantics = [#tpu.dimension_semantics<parallel>, #tpu.dimension_semantics<parallel>], iteration_bounds = array<i64: 2, 1>, scalar_prefetch = 0 : i64, scratch_operands = 0 : i64, tpu.core_type = #tpu.core_type<tc>, window_params = [{transform_indices = @transform_0, window_bounds = array<i64: 1, 4, 24, 128>}, {transform_indices = @transform_1, window_bounds = array<i64: 1, 4, 24, 128>}, {pipeline_mode = #tpu.pipeline_mode<synchronous>, transform_indices = @transform_2, window_bounds = array<i64: 32, 216>}, {pipeline_mode = #tpu.pipeline_mode<synchronous>, transform_indices = @transform_3, window_bounds = array<i64: 32, 1>}, {pipeline_mode = #tpu.pipeline_mode<synchronous>, transform_indices = @transform_4, window_bounds = array<i64: 32, 1>}, {transform_indices = @transform_5, window_bounds = array<i64: 1, 32, 128>}]} {
    %c0 = arith.constant 0 : index
    %c0_0 = arith.constant 0 : index
    %c0_1 = arith.constant 0 : index
    %c0_2 = arith.constant 0 : index
    %0 = vector.load %arg2[%c0, %c0_0, %c0_1, %c0_2] : memref<1x4x24x128xbf16, #tpu.memory_space<vmem>>, vector<1x4x24x128xbf16>
    %1 = vector.shape_cast %0 : vector<1x4x24x128xbf16> to vector<4x24x128xbf16>
    %c0_3 = arith.constant 0 : index
    %c0_4 = arith.constant 0 : index
    %c0_5 = arith.constant 0 : index
    %c0_6 = arith.constant 0 : index
    %2 = vector.load %arg3[%c0_3, %c0_4, %c0_5, %c0_6] : memref<1x4x24x128xbf16, #tpu.memory_space<vmem>>, vector<1x4x24x128xbf16>
    %3 = vector.shape_cast %2 : vector<1x4x24x128xbf16> to vector<4x24x128xbf16>
    %4 = tpu.concatenate %1, %3 in 2 : vector<4x24x128xbf16>, vector<4x24x128xbf16> -> vector<4x24x256xbf16>
    %5 = vector.extract_strided_slice %4 {offsets = [0, 0, 0], sizes = [1, 24, 128], strides = [1, 1, 1]} : vector<4x24x256xbf16> to vector<1x24x128xbf16>
    %6 = vector.shape_cast %5 : vector<1x24x128xbf16> to vector<24x128xbf16>
    %7 = vector.extract_strided_slice %4 {offsets = [1, 0, 0], sizes = [1, 24, 128], strides = [1, 1, 1]} : vector<4x24x256xbf16> to vector<1x24x128xbf16>
    %8 = vector.shape_cast %7 : vector<1x24x128xbf16> to vector<24x128xbf16>
    %9 = vector.extract_strided_slice %4 {offsets = [0, 0, 1], sizes = [1, 24, 128], strides = [1, 1, 1]} : vector<4x24x256xbf16> to vector<1x24x128xbf16>
    %10 = vector.shape_cast %9 : vector<1x24x128xbf16> to vector<24x128xbf16>
    %11 = vector.extract_strided_slice %4 {offsets = [2, 0, 0], sizes = [1, 24, 128], strides = [1, 1, 1]} : vector<4x24x256xbf16> to vector<1x24x128xbf16>
    %12 = vector.shape_cast %11 : vector<1x24x128xbf16> to vector<24x128xbf16>
    %13 = vector.extract_strided_slice %4 {offsets = [3, 0, 0], sizes = [1, 24, 128], strides = [1, 1, 1]} : vector<4x24x256xbf16> to vector<1x24x128xbf16>
    %14 = vector.shape_cast %13 : vector<1x24x128xbf16> to vector<24x128xbf16>
    %15 = vector.extract_strided_slice %4 {offsets = [2, 0, 1], sizes = [1, 24, 128], strides = [1, 1, 1]} : vector<4x24x256xbf16> to vector<1x24x128xbf16>
    %16 = vector.shape_cast %15 : vector<1x24x128xbf16> to vector<24x128xbf16>
    %17 = vector.extract_strided_slice %4 {offsets = [0, 0, 9], sizes = [1, 24, 128], strides = [1, 1, 1]} : vector<4x24x256xbf16> to vector<1x24x128xbf16>
    %18 = vector.shape_cast %17 : vector<1x24x128xbf16> to vector<24x128xbf16>
    %19 = vector.extract_strided_slice %4 {offsets = [1, 0, 9], sizes = [1, 24, 128], strides = [1, 1, 1]} : vector<4x24x256xbf16> to vector<1x24x128xbf16>
    %20 = vector.shape_cast %19 : vector<1x24x128xbf16> to vector<24x128xbf16>
    %21 = vector.extract_strided_slice %4 {offsets = [0, 0, 10], sizes = [1, 24, 128], strides = [1, 1, 1]} : vector<4x24x256xbf16> to vector<1x24x128xbf16>
    %22 = vector.shape_cast %21 : vector<1x24x128xbf16> to vector<24x128xbf16>
    %23 = tpu.concatenate %6, %8, %10, %12, %14, %16, %18, %20, %22 in 0 : vector<24x128xbf16>, vector<24x128xbf16>, vector<24x128xbf16>, vector<24x128xbf16>, vector<24x128xbf16>, vector<24x128xbf16>, vector<24x128xbf16>, vector<24x128xbf16>, vector<24x128xbf16> -> vector<216x128xbf16>
    %c0_7 = arith.constant 0 : index
    %c0_8 = arith.constant 0 : index
    %24 = vector.load %arg4[%c0_7, %c0_8] : memref<32x216xbf16, #tpu.memory_space<vmem>>, vector<32x216xbf16>
    %cst = arith.constant dense<0.000000e+00> : vector<32x128xf32>
    %25 = tpu.matmul %24, %23, %cst {dimension_numbers = #tpu.dot_dimension_numbers<[1], [0], [0], [1], [0, 0, 1, 1], [], []>} : vector<32x216xbf16>, vector<216x128xbf16>, vector<32x128xf32> -> vector<32x128xf32>
    %c0_9 = arith.constant 0 : index
    %c0_10 = arith.constant 0 : index
    %26 = vector.load %arg5[%c0_9, %c0_10] : memref<32x1xf32, #tpu.memory_space<vmem>>, vector<32x1xf32>
    %27 = vector.broadcast %26 : vector<32x1xf32> to vector<32x128xf32>
    %28 = arith.mulf %25, %27 : vector<32x128xf32>
    %c0_11 = arith.constant 0 : index
    %c0_12 = arith.constant 0 : index
    %29 = vector.load %arg6[%c0_11, %c0_12] : memref<32x1xf32, #tpu.memory_space<vmem>>, vector<32x1xf32>
    %30 = vector.broadcast %29 : vector<32x1xf32> to vector<32x128xf32>
    %31 = arith.addf %28, %30 : vector<32x128xf32>
    %cst_13 = arith.constant 0.000000e+00 : f32
    %cst_14 = arith.constant 6.000000e+00 : f32
    %32 = vector.broadcast %cst_13 : f32 to vector<32x128xf32>
    %33 = arith.maximumf %32, %31 : vector<32x128xf32>
    %34 = vector.broadcast %cst_14 : f32 to vector<32x128xf32>
    %35 = arith.minimumf %34, %33 : vector<32x128xf32>
    %36 = arith.truncf %35 : vector<32x128xf32> to vector<32x128xbf16>
    %c0_15 = arith.constant 0 : index
    %c0_16 = arith.constant 0 : index
    %c0_17 = arith.constant 0 : index
    %37 = vector.load %arg7[%c0_15, %c0_16, %c0_17] : memref<1x32x128xbf16, #tpu.memory_space<vmem>>, vector<1x32x128xbf16>
    %38 = vector.shape_cast %37 : vector<1x32x128xbf16> to vector<32x128xbf16>
    %39 = vector.shape_cast %36 : vector<32x128xbf16> to vector<1x32x128xbf16>
    tpu.vector_store %arg7[%c0_15, %c0_16, %c0_17], %39 {strides = array<i32>} : memref<1x32x128xbf16, #tpu.memory_space<vmem>>, vector<1x32x128xbf16>,
    return
  }
  func.func @transform_0(%arg0: i32, %arg1: i32) -> (i32, i32, i32, i32) {
    %c0_i32 = arith.constant 0 : i32
    %c0_i32_0 = arith.constant 0 : i32
    %c0_i32_1 = arith.constant 0 : i32
    return %arg0, %c0_i32, %c0_i32_0, %arg1 : i32, i32, i32, i32
  }
  func.func @transform_1(%arg0: i32, %arg1: i32) -> (i32, i32, i32, i32) {
    %c1_i32 = arith.constant 1 : i32
    %0 = arith.addi %arg1, %c1_i32 : i32
    %c1_i32_0 = arith.constant 1 : i32
    %1 = arith.muli %0, %c1_i32_0 : i32
    %c0_i32 = arith.constant 0 : i32
    %c0_i32_1 = arith.constant 0 : i32
    %c0_i32_2 = arith.constant 0 : i32
    return %arg0, %c0_i32, %c0_i32_1, %1 : i32, i32, i32, i32
  }
  func.func @transform_2(%arg0: i32, %arg1: i32) -> (i32, i32) {
    %c0_i32 = arith.constant 0 : i32
    %c0_i32_0 = arith.constant 0 : i32
    %c0_i32_1 = arith.constant 0 : i32
    return %c0_i32, %c0_i32_0 : i32, i32
  }
  func.func @transform_3(%arg0: i32, %arg1: i32) -> (i32, i32) {
    %c0_i32 = arith.constant 0 : i32
    %c0_i32_0 = arith.constant 0 : i32
    %c0_i32_1 = arith.constant 0 : i32
    return %c0_i32, %c0_i32_0 : i32, i32
  }
  func.func @transform_4(%arg0: i32, %arg1: i32) -> (i32, i32) {
    %c0_i32 = arith.constant 0 : i32
    %c0_i32_0 = arith.constant 0 : i32
    %c0_i32_1 = arith.constant 0 : i32
    return %c0_i32, %c0_i32_0 : i32, i32
  }
  func.func @transform_5(%arg0: i32, %arg1: i32) -> (i32, i32, i32) {
    %c0_i32 = arith.constant 0 : i32
    %c0_i32_0 = arith.constant 0 : i32
    return %arg0, %c0_i32, %arg1 : i32, i32, i32
  }
}

module attributes {stable_mosaic.version = 11 : i64} {
  func.func @_fused_head_kernel(%arg0: i32, %arg1: i32, %arg2: memref<1x32x128xbf16, #tpu.memory_space<vmem>>, %arg3: memref<1x32x128xbf16, #tpu.memory_space<vmem>>, %arg4: memref<1x32x128xbf16, #tpu.memory_space<vmem>>, %arg5: memref<1x32x128xbf16, #tpu.memory_space<vmem>>, %arg6: memref<64x128xbf16, #tpu.memory_space<vmem>>, %arg7: memref<64x1xf32, #tpu.memory_space<vmem>>, %arg8: memref<64x1xf32, #tpu.memory_space<vmem>>, %arg9: memref<4x64xbf16, #tpu.memory_space<vmem>>, %arg10: memref<4x1xf32, #tpu.memory_space<vmem>>, %arg11: memref<1x32x128xbf16, #tpu.memory_space<vmem>>) attributes {dimension_semantics = [#tpu.dimension_semantics<parallel>, #tpu.dimension_semantics<parallel>], iteration_bounds = array<i64: 2, 1>, scalar_prefetch = 0 : i64, scratch_operands = 0 : i64, tpu.core_type = #tpu.core_type<tc>, window_params = [{transform_indices = @transform_0, window_bounds = array<i64: 1, 32, 128>}, {transform_indices = @transform_1, window_bounds = array<i64: 1, 32, 128>}, {transform_indices = @transform_2, window_bounds = array<i64: 1, 32, 128>}, {transform_indices = @transform_3, window_bounds = array<i64: 1, 32, 128>}, {pipeline_mode = #tpu.pipeline_mode<synchronous>, transform_indices = @transform_4, window_bounds = array<i64: 64, 128>}, {pipeline_mode = #tpu.pipeline_mode<synchronous>, transform_indices = @transform_5, window_bounds = array<i64: 64, 1>}, {pipeline_mode = #tpu.pipeline_mode<synchronous>, transform_indices = @transform_6, window_bounds = array<i64: 64, 1>}, {pipeline_mode = #tpu.pipeline_mode<synchronous>, transform_indices = @transform_7, window_bounds = array<i64: 4, 64>}, {pipeline_mode = #tpu.pipeline_mode<synchronous>, transform_indices = @transform_8, window_bounds = array<i64: 4, 1>}, {transform_indices = @transform_9, window_bounds = array<i64: 1, 32, 128>}]} {
    %c0 = arith.constant 0 : index
    %c0_0 = arith.constant 0 : index
    %c0_1 = arith.constant 0 : index
    %0 = vector.load %arg2[%c0, %c0_0, %c0_1] : memref<1x32x128xbf16, #tpu.memory_space<vmem>>, vector<1x32x128xbf16>
    %1 = vector.shape_cast %0 : vector<1x32x128xbf16> to vector<32x128xbf16>
    %c0_2 = arith.constant 0 : index
    %c0_3 = arith.constant 0 : index
    %c0_4 = arith.constant 0 : index
    %2 = vector.load %arg3[%c0_2, %c0_3, %c0_4] : memref<1x32x128xbf16, #tpu.memory_space<vmem>>, vector<1x32x128xbf16>
    %3 = vector.shape_cast %2 : vector<1x32x128xbf16> to vector<32x128xbf16>
    %c0_5 = arith.constant 0 : index
    %c0_6 = arith.constant 0 : index
    %c0_7 = arith.constant 0 : index
    %4 = vector.load %arg4[%c0_5, %c0_6, %c0_7] : memref<1x32x128xbf16, #tpu.memory_space<vmem>>, vector<1x32x128xbf16>
    %5 = vector.shape_cast %4 : vector<1x32x128xbf16> to vector<32x128xbf16>
    %c0_8 = arith.constant 0 : index
    %c0_9 = arith.constant 0 : index
    %c0_10 = arith.constant 0 : index
    %6 = vector.load %arg5[%c0_8, %c0_9, %c0_10] : memref<1x32x128xbf16, #tpu.memory_space<vmem>>, vector<1x32x128xbf16>
    %7 = vector.shape_cast %6 : vector<1x32x128xbf16> to vector<32x128xbf16>
    %8 = tpu.concatenate %1, %3, %5, %7 in 0 : vector<32x128xbf16>, vector<32x128xbf16>, vector<32x128xbf16>, vector<32x128xbf16> -> vector<128x128xbf16>
    %c0_11 = arith.constant 0 : index
    %c0_12 = arith.constant 0 : index
    %9 = vector.load %arg6[%c0_11, %c0_12] : memref<64x128xbf16, #tpu.memory_space<vmem>>, vector<64x128xbf16>
    %cst = arith.constant dense<0.000000e+00> : vector<64x128xf32>
    %10 = tpu.matmul %9, %8, %cst {dimension_numbers = #tpu.dot_dimension_numbers<[1], [0], [0], [1], [0, 0, 1, 1], [], []>} : vector<64x128xbf16>, vector<128x128xbf16>, vector<64x128xf32> -> vector<64x128xf32>
    %c0_13 = arith.constant 0 : index
    %c0_14 = arith.constant 0 : index
    %11 = vector.load %arg7[%c0_13, %c0_14] : memref<64x1xf32, #tpu.memory_space<vmem>>, vector<64x1xf32>
    %12 = vector.broadcast %11 : vector<64x1xf32> to vector<64x128xf32>
    %13 = arith.mulf %10, %12 : vector<64x128xf32>
    %c0_15 = arith.constant 0 : index
    %c0_16 = arith.constant 0 : index
    %14 = vector.load %arg8[%c0_15, %c0_16] : memref<64x1xf32, #tpu.memory_space<vmem>>, vector<64x1xf32>
    %15 = vector.broadcast %14 : vector<64x1xf32> to vector<64x128xf32>
    %16 = arith.addf %13, %15 : vector<64x128xf32>
    %cst_17 = arith.constant 0.000000e+00 : f32
    %cst_18 = arith.constant 6.000000e+00 : f32
    %17 = vector.broadcast %cst_17 : f32 to vector<64x128xf32>
    %18 = arith.maximumf %17, %16 : vector<64x128xf32>
    %19 = vector.broadcast %cst_18 : f32 to vector<64x128xf32>
    %20 = arith.minimumf %19, %18 : vector<64x128xf32>
    %c0_19 = arith.constant 0 : index
    %c0_20 = arith.constant 0 : index
    %21 = vector.load %arg9[%c0_19, %c0_20] : memref<4x64xbf16, #tpu.memory_space<vmem>>, vector<4x64xbf16>
    %22 = arith.truncf %20 : vector<64x128xf32> to vector<64x128xbf16>
    %cst_21 = arith.constant dense<0.000000e+00> : vector<4x128xf32>
    %23 = tpu.matmul %21, %22, %cst_21 {dimension_numbers = #tpu.dot_dimension_numbers<[1], [0], [0], [1], [0, 0, 1, 1], [], []>} : vector<4x64xbf16>, vector<64x128xbf16>, vector<4x128xf32> -> vector<4x128xf32>
    %c0_22 = arith.constant 0 : index
    %c0_23 = arith.constant 0 : index
    %24 = vector.load %arg10[%c0_22, %c0_23] : memref<4x1xf32, #tpu.memory_space<vmem>>, vector<4x1xf32>
    %25 = vector.broadcast %24 : vector<4x1xf32> to vector<4x128xf32>
    %26 = arith.addf %23, %25 : vector<4x128xf32>
    %cst_24 = arith.constant dense<0xFF800000> : vector<128xf32>
    %27 = vector.multi_reduction <maximumf>, %26, %cst_24 [0] : vector<4x128xf32> to vector<128xf32>
    %28 = vector.shape_cast %27 : vector<128xf32> to vector<1x128xf32>
    %29 = vector.broadcast %28 : vector<1x128xf32> to vector<4x128xf32>
    %30 = arith.subf %26, %29 : vector<4x128xf32>
    %31 = math.exp %30 : vector<4x128xf32>
    %cst_25 = arith.constant dense<0.000000e+00> : vector<128xf32>
    %32 = vector.multi_reduction <add>, %31, %cst_25 [0] : vector<4x128xf32> to vector<128xf32>
    %33 = vector.shape_cast %32 : vector<128xf32> to vector<1x128xf32>
    %34 = tpu.reciprocal %33 {approx = true} : vector<1x128xf32> -> vector<1x128xf32>
    %35 = vector.broadcast %34 : vector<1x128xf32> to vector<4x128xf32>
    %36 = arith.mulf %31, %35 : vector<4x128xf32>
    %37 = arith.truncf %36 : vector<4x128xf32> to vector<4x128xbf16>
    %38 = vector.extract_strided_slice %37 {offsets = [0, 0], sizes = [1, 128], strides = [1, 1]} : vector<4x128xbf16> to vector<1x128xbf16>
    %39 = vector.broadcast %38 : vector<1x128xbf16> to vector<32x128xbf16>
    %40 = arith.mulf %1, %39 : vector<32x128xbf16>
    %41 = vector.extract_strided_slice %37 {offsets = [1, 0], sizes = [1, 128], strides = [1, 1]} : vector<4x128xbf16> to vector<1x128xbf16>
    %42 = vector.broadcast %41 : vector<1x128xbf16> to vector<32x128xbf16>
    %43 = arith.mulf %3, %42 : vector<32x128xbf16>
    %44 = arith.addf %40, %43 : vector<32x128xbf16>
    %45 = vector.extract_strided_slice %37 {offsets = [2, 0], sizes = [1, 128], strides = [1, 1]} : vector<4x128xbf16> to vector<1x128xbf16>
    %46 = vector.broadcast %45 : vector<1x128xbf16> to vector<32x128xbf16>
    %47 = arith.mulf %5, %46 : vector<32x128xbf16>
    %48 = arith.addf %44, %47 : vector<32x128xbf16>
    %49 = vector.extract_strided_slice %37 {offsets = [3, 0], sizes = [1, 128], strides = [1, 1]} : vector<4x128xbf16> to vector<1x128xbf16>
    %50 = vector.broadcast %49 : vector<1x128xbf16> to vector<32x128xbf16>
    %51 = arith.mulf %7, %50 : vector<32x128xbf16>
    %52 = arith.addf %48, %51 : vector<32x128xbf16>
    %c0_26 = arith.constant 0 : index
    %c0_27 = arith.constant 0 : index
    %c0_28 = arith.constant 0 : index
    %53 = vector.load %arg11[%c0_26, %c0_27, %c0_28] : memref<1x32x128xbf16, #tpu.memory_space<vmem>>, vector<1x32x128xbf16>
    %54 = vector.shape_cast %53 : vector<1x32x128xbf16> to vector<32x128xbf16>
    %55 = vector.shape_cast %52 : vector<32x128xbf16> to vector<1x32x128xbf16>
    tpu.vector_store %arg11[%c0_26, %c0_27, %c0_28], %55 {strides = array<i32>} : memref<1x32x128xbf16, #tpu.memory_space<vmem>>, vector<1x32x128xbf16>,
    return
  }
  func.func @transform_0(%arg0: i32, %arg1: i32) -> (i32, i32, i32) {
    %c0_i32 = arith.constant 0 : i32
    %c0_i32_0 = arith.constant 0 : i32
    return %arg0, %c0_i32, %arg1 : i32, i32, i32
  }
  func.func @transform_1(%arg0: i32, %arg1: i32) -> (i32, i32, i32) {
    %c0_i32 = arith.constant 0 : i32
    %c0_i32_0 = arith.constant 0 : i32
    return %arg0, %c0_i32, %arg1 : i32, i32, i32
  }
  func.func @transform_2(%arg0: i32, %arg1: i32) -> (i32, i32, i32) {
    %c0_i32 = arith.constant 0 : i32
    %c0_i32_0 = arith.constant 0 : i32
    return %arg0, %c0_i32, %arg1 : i32, i32, i32
  }
  func.func @transform_3(%arg0: i32, %arg1: i32) -> (i32, i32, i32) {
    %c0_i32 = arith.constant 0 : i32
    %c0_i32_0 = arith.constant 0 : i32
    return %arg0, %c0_i32, %arg1 : i32, i32, i32
  }
  func.func @transform_4(%arg0: i32, %arg1: i32) -> (i32, i32) {
    %c0_i32 = arith.constant 0 : i32
    %c0_i32_0 = arith.constant 0 : i32
    %c0_i32_1 = arith.constant 0 : i32
    return %c0_i32, %c0_i32_0 : i32, i32
  }
  func.func @transform_5(%arg0: i32, %arg1: i32) -> (i32, i32) {
    %c0_i32 = arith.constant 0 : i32
    %c0_i32_0 = arith.constant 0 : i32
    %c0_i32_1 = arith.constant 0 : i32
    return %c0_i32, %c0_i32_0 : i32, i32
  }
  func.func @transform_6(%arg0: i32, %arg1: i32) -> (i32, i32) {
    %c0_i32 = arith.constant 0 : i32
    %c0_i32_0 = arith.constant 0 : i32
    %c0_i32_1 = arith.constant 0 : i32
    return %c0_i32, %c0_i32_0 : i32, i32
  }
  func.func @transform_7(%arg0: i32, %arg1: i32) -> (i32, i32) {
    %c0_i32 = arith.constant 0 : i32
    %c0_i32_0 = arith.constant 0 : i32
    %c0_i32_1 = arith.constant 0 : i32
    return %c0_i32, %c0_i32_0 : i32, i32
  }
  func.func @transform_8(%arg0: i32, %arg1: i32) -> (i32, i32) {
    %c0_i32 = arith.constant 0 : i32
    %c0_i32_0 = arith.constant 0 : i32
    %c0_i32_1 = arith.constant 0 : i32
    return %c0_i32, %c0_i32_0 : i32, i32
  }
  func.func @transform_9(%arg0: i32, %arg1: i32) -> (i32, i32, i32) {
    %c0_i32 = arith.constant 0 : i32
    %c0_i32_0 = arith.constant 0 : i32
    return %arg0, %c0_i32, %arg1 : i32, i32, i32
  }
}

module attributes {stable_mosaic.version = 11 : i64} {
  func.func @_pool_conv_kernel(%arg0: i32, %arg1: i32, %arg2: memref<1x1x32x128xbf16, #tpu.memory_space<vmem>>, %arg3: memref<1x1x32x128xbf16, #tpu.memory_space<vmem>>, %arg4: memref<64x288xbf16, #tpu.memory_space<vmem>>, %arg5: memref<64x1xf32, #tpu.memory_space<vmem>>, %arg6: memref<64x1xf32, #tpu.memory_space<vmem>>, %arg7: memref<1x64x128xf32, #tpu.memory_space<vmem>>) attributes {dimension_semantics = [#tpu.dimension_semantics<parallel>, #tpu.dimension_semantics<parallel>], iteration_bounds = array<i64: 2, 1>, scalar_prefetch = 0 : i64, scratch_operands = 0 : i64, tpu.core_type = #tpu.core_type<tc>, window_params = [{transform_indices = @transform_0, window_bounds = array<i64: 1, 1, 32, 128>}, {transform_indices = @transform_1, window_bounds = array<i64: 1, 1, 32, 128>}, {pipeline_mode = #tpu.pipeline_mode<synchronous>, transform_indices = @transform_2, window_bounds = array<i64: 64, 288>}, {pipeline_mode = #tpu.pipeline_mode<synchronous>, transform_indices = @transform_3, window_bounds = array<i64: 64, 1>}, {pipeline_mode = #tpu.pipeline_mode<synchronous>, transform_indices = @transform_4, window_bounds = array<i64: 64, 1>}, {transform_indices = @transform_5, window_bounds = array<i64: 1, 64, 128>}]} {
    %c0 = arith.constant 0 : index
    %c0_0 = arith.constant 0 : index
    %c0_1 = arith.constant 0 : index
    %c0_2 = arith.constant 0 : index
    %0 = vector.load %arg2[%c0, %c0_0, %c0_1, %c0_2] : memref<1x1x32x128xbf16, #tpu.memory_space<vmem>>, vector<1x1x32x128xbf16>
    %1 = vector.shape_cast %0 : vector<1x1x32x128xbf16> to vector<1x32x128xbf16>
    %c0_3 = arith.constant 0 : index
    %c0_4 = arith.constant 0 : index
    %c0_5 = arith.constant 0 : index
    %c0_6 = arith.constant 0 : index
    %2 = vector.load %arg3[%c0_3, %c0_4, %c0_5, %c0_6] : memref<1x1x32x128xbf16, #tpu.memory_space<vmem>>, vector<1x1x32x128xbf16>
    %3 = vector.shape_cast %2 : vector<1x1x32x128xbf16> to vector<1x32x128xbf16>
    %4 = tpu.concatenate %1, %3 in 2 : vector<1x32x128xbf16>, vector<1x32x128xbf16> -> vector<1x32x256xbf16>
    %5 = vector.extract_strided_slice %4 {offsets = [0, 0, 0], sizes = [1, 32, 128], strides = [1, 1, 1]} : vector<1x32x256xbf16> to vector<1x32x128xbf16>
    %6 = vector.shape_cast %5 : vector<1x32x128xbf16> to vector<32x128xbf16>
    %7 = vector.extract_strided_slice %4 {offsets = [0, 0, 1], sizes = [1, 32, 128], strides = [1, 1, 1]} : vector<1x32x256xbf16> to vector<1x32x128xbf16>
    %8 = vector.shape_cast %7 : vector<1x32x128xbf16> to vector<32x128xbf16>
    %9 = vector.extract_strided_slice %4 {offsets = [0, 0, 2], sizes = [1, 32, 128], strides = [1, 1, 1]} : vector<1x32x256xbf16> to vector<1x32x128xbf16>
    %10 = vector.shape_cast %9 : vector<1x32x128xbf16> to vector<32x128xbf16>
    %11 = vector.extract_strided_slice %4 {offsets = [0, 0, 10], sizes = [1, 32, 128], strides = [1, 1, 1]} : vector<1x32x256xbf16> to vector<1x32x128xbf16>
    %12 = vector.shape_cast %11 : vector<1x32x128xbf16> to vector<32x128xbf16>
    %13 = vector.extract_strided_slice %4 {offsets = [0, 0, 11], sizes = [1, 32, 128], strides = [1, 1, 1]} : vector<1x32x256xbf16> to vector<1x32x128xbf16>
    %14 = vector.shape_cast %13 : vector<1x32x128xbf16> to vector<32x128xbf16>
    %15 = vector.extract_strided_slice %4 {offsets = [0, 0, 12], sizes = [1, 32, 128], strides = [1, 1, 1]} : vector<1x32x256xbf16> to vector<1x32x128xbf16>
    %16 = vector.shape_cast %15 : vector<1x32x128xbf16> to vector<32x128xbf16>
    %17 = vector.extract_strided_slice %4 {offsets = [0, 0, 20], sizes = [1, 32, 128], strides = [1, 1, 1]} : vector<1x32x256xbf16> to vector<1x32x128xbf16>
    %18 = vector.shape_cast %17 : vector<1x32x128xbf16> to vector<32x128xbf16>
    %19 = vector.extract_strided_slice %4 {offsets = [0, 0, 21], sizes = [1, 32, 128], strides = [1, 1, 1]} : vector<1x32x256xbf16> to vector<1x32x128xbf16>
    %20 = vector.shape_cast %19 : vector<1x32x128xbf16> to vector<32x128xbf16>
    %21 = vector.extract_strided_slice %4 {offsets = [0, 0, 22], sizes = [1, 32, 128], strides = [1, 1, 1]} : vector<1x32x256xbf16> to vector<1x32x128xbf16>
    %22 = vector.shape_cast %21 : vector<1x32x128xbf16> to vector<32x128xbf16>
    %23 = tpu.concatenate %6, %8, %10, %12, %14, %16, %18, %20, %22 in 0 : vector<32x128xbf16>, vector<32x128xbf16>, vector<32x128xbf16>, vector<32x128xbf16>, vector<32x128xbf16>, vector<32x128xbf16>, vector<32x128xbf16>, vector<32x128xbf16>, vector<32x128xbf16> -> vector<288x128xbf16>
    %c0_7 = arith.constant 0 : index
    %c0_8 = arith.constant 0 : index
    %24 = vector.load %arg4[%c0_7, %c0_8] : memref<64x288xbf16, #tpu.memory_space<vmem>>, vector<64x288xbf16>
    %cst = arith.constant dense<0.000000e+00> : vector<64x128xf32>
    %25 = tpu.matmul %24, %23, %cst {dimension_numbers = #tpu.dot_dimension_numbers<[1], [0], [0], [1], [0, 0, 1, 1], [], []>} : vector<64x288xbf16>, vector<288x128xbf16>, vector<64x128xf32> -> vector<64x128xf32>
    %c0_9 = arith.constant 0 : index
    %c0_10 = arith.constant 0 : index
    %26 = vector.load %arg5[%c0_9, %c0_10] : memref<64x1xf32, #tpu.memory_space<vmem>>, vector<64x1xf32>
    %27 = vector.broadcast %26 : vector<64x1xf32> to vector<64x128xf32>
    %28 = arith.mulf %25, %27 : vector<64x128xf32>
    %c0_11 = arith.constant 0 : index
    %c0_12 = arith.constant 0 : index
    %29 = vector.load %arg6[%c0_11, %c0_12] : memref<64x1xf32, #tpu.memory_space<vmem>>, vector<64x1xf32>
    %30 = vector.broadcast %29 : vector<64x1xf32> to vector<64x128xf32>
    %31 = arith.addf %28, %30 : vector<64x128xf32>
    %cst_13 = arith.constant 0.000000e+00 : f32
    %cst_14 = arith.constant 6.000000e+00 : f32
    %32 = vector.broadcast %cst_13 : f32 to vector<64x128xf32>
    %33 = arith.maximumf %32, %31 : vector<64x128xf32>
    %34 = vector.broadcast %cst_14 : f32 to vector<64x128xf32>
    %35 = arith.minimumf %34, %33 : vector<64x128xf32>
    %c0_15 = arith.constant 0 : index
    %c0_16 = arith.constant 0 : index
    %c0_17 = arith.constant 0 : index
    %36 = vector.load %arg7[%c0_15, %c0_16, %c0_17] : memref<1x64x128xf32, #tpu.memory_space<vmem>>, vector<1x64x128xf32>
    %37 = vector.shape_cast %36 : vector<1x64x128xf32> to vector<64x128xf32>
    %38 = vector.shape_cast %35 : vector<64x128xf32> to vector<1x64x128xf32>
    tpu.vector_store %arg7[%c0_15, %c0_16, %c0_17], %38 {strides = array<i32>} : memref<1x64x128xf32, #tpu.memory_space<vmem>>, vector<1x64x128xf32>,
    return
  }
  func.func @transform_0(%arg0: i32, %arg1: i32) -> (i32, i32, i32, i32) {
    %c0_i32 = arith.constant 0 : i32
    %c0_i32_0 = arith.constant 0 : i32
    %c0_i32_1 = arith.constant 0 : i32
    return %arg0, %c0_i32, %c0_i32_0, %arg1 : i32, i32, i32, i32
  }
  func.func @transform_1(%arg0: i32, %arg1: i32) -> (i32, i32, i32, i32) {
    %c1_i32 = arith.constant 1 : i32
    %0 = arith.addi %arg1, %c1_i32 : i32
    %c1_i32_0 = arith.constant 1 : i32
    %1 = arith.muli %0, %c1_i32_0 : i32
    %c0_i32 = arith.constant 0 : i32
    %c0_i32_1 = arith.constant 0 : i32
    %c0_i32_2 = arith.constant 0 : i32
    return %arg0, %c0_i32, %c0_i32_1, %1 : i32, i32, i32, i32
  }
  func.func @transform_2(%arg0: i32, %arg1: i32) -> (i32, i32) {
    %c0_i32 = arith.constant 0 : i32
    %c0_i32_0 = arith.constant 0 : i32
    %c0_i32_1 = arith.constant 0 : i32
    return %c0_i32, %c0_i32_0 : i32, i32
  }
  func.func @transform_3(%arg0: i32, %arg1: i32) -> (i32, i32) {
    %c0_i32 = arith.constant 0 : i32
    %c0_i32_0 = arith.constant 0 : i32
    %c0_i32_1 = arith.constant 0 : i32
    return %c0_i32, %c0_i32_0 : i32, i32
  }
  func.func @transform_4(%arg0: i32, %arg1: i32) -> (i32, i32) {
    %c0_i32 = arith.constant 0 : i32
    %c0_i32_0 = arith.constant 0 : i32
    %c0_i32_1 = arith.constant 0 : i32
    return %c0_i32, %c0_i32_0 : i32, i32
  }
  func.func @transform_5(%arg0: i32, %arg1: i32) -> (i32, i32, i32) {
    %c0_i32 = arith.constant 0 : i32
    %c0_i32_0 = arith.constant 0 : i32
    return %arg0, %c0_i32, %arg1 : i32, i32, i32
  }
}

</mosaic_0001>

<llo_original>
// kernel: asff_level0_forward.7
$region0: #{asff_level0_forward.7}
  #allocation0 [shape = 'u32[]', space=smem, size = 0x4, offset = 0x4, fixed_abs, tag = 'smem constant byte address 0x4 - core index']
  #allocation1 [shape = 'u32[144,128]{1,0:T(1,128)}', space=vmem, size = 0x12000, scoped, tag = 'internal scratch']
  %s0 = inlined_call_operand.vmem [shape: bf16[2,64,8,261], index: 0, kind: input, shape index: {}, may-alias: {0,1}]
  %s1 = inlined_call_operand.vmem [shape: bf16[2,64,8,261], index: 1, kind: input, shape index: {}, may-alias: {0,1}]
  %s2 = inlined_call_operand.vmem [shape: bf16[32,72], index: 2, kind: input, shape index: {}]
  %s3 = inlined_call_operand.vmem [shape: f32[32,1], index: 3, kind: input, shape index: {}]
  %s4 = inlined_call_operand.vmem [shape: f32[32,1], index: 4, kind: input, shape index: {}]
  %s5 = inlined_call_operand.vmem [shape: bf16[2,32,128], index: 5, kind: output, shape index: {}]
  %s6 = sld [smem:[#allocation0]]
  $region135: #{asff_level0_forward.7} parent=0
    _
  %s8 = ssub.s32 1, %s6
  %s9 = scalar_select 0, %s8, %s6
  $region1: #{asff_level0_forward.7} parent=0
    #allocation2 [shape = 'u8[262144]{0}', space=vmem, size = 0x40000, scoped, tag = 'input window, operand 0']
    #allocation3 [shape = 'u8[262144]{0}', space=vmem, size = 0x40000, scoped, tag = 'input window, operand 1']
    loop: start=0, step=1, limit=4
    $region2: #{asff_level0_forward.7} parent=1 // loop_pre_header
      _
    $region3: #{asff_level0_forward.7} parent=1 // loop_header
      %s11 = sphi 0, %s15
      %p12 = scmp.ge.s32.totalorder %s11, 4
      %s18 = sphi 0, %s30
      %s19 = sphi 0, %s26
      %s20 = sphi 0, %s18
      %s21 = sphi 0, %s19
      %s22 = sphi 0, %s20
      %s23 = sphi 0, %s21
      %s35 = sphi 0, %s37
      %s38 = sphi 0, %s35
      %s39 = sphi 0, %s38
      %s55 = sphi 0, %s39
      %s65 = sphi 0, %s67
      %s68 = sphi 0, %s65
      %s69 = sphi 0, %s68
      %s85 = sphi 0, %s69
      %s89 = sphi 0, %s89
      %s91 = sphi 0, %s89
      %s92 = sphi 0, %s91
      %s106 = sphi 0, %s92
      %s110 = sphi 0, %s110
      %s112 = sphi 0, %s110
      %s113 = sphi 0, %s112
      %s127 = sphi 0, %s113
      %s131 = sphi 0, %s131
      %s133 = sphi 0, %s131
      %s134 = sphi 0, %s133
      %s148 = sphi 0, %s134
      %s156 = sphi 0, %s158
      %s159 = sphi 0, %s156
      %s160 = sphi 0, %s159
      %s176 = sphi 0, %s160
    $region4: #{asff_level0_forward.7} parent=1 // loop_header_branch
      %14 = sbr.rel (%p12) target = $region8
    $region5: #{asff_level0_forward.7} parent=1 // loop_body
      %s16 = ssub.s32 %s11, 1
      %s17 = ssub.s32 %s11, 2
      %s24 = sadd.s32 1, %s19
      %p25 = scmp.ge.s32.totalorder %s24, 1
      %s26 = scalar_select %p25, 0, %s24
      %s27 = sadd.s32 1, %s18
      %s28 = scalar_select %p25, %s27, %s18
      %p29 = scmp.ge.s32.totalorder %s28, 2
      %s30 = scalar_select %p29, 0, %s28
      %s31 = ssub.s32 %s18, %s30
      %s32 = ssub.s32 %s19, %s26
      %s33 = sor.u32 %s31, %s32
      %p34 = scmp.eq.s32.totalorder %s33, 0
      %s36 = sadd.s32 %s35, 1
      %s37 = scalar_select %p34, %s35, %s36
      %p40 = pneg %p34
      %p41 = scmp.eq.s32.totalorder %s11, 1
      %p42 = por %p40, %p41
      %p43 = scmp.ne.s32.totalorder %s35, %s38
      %p44 = scmp.eq.s32.totalorder %s11, 0
      %p45 = por %p43, %p44
      %p46 = scmp.ne.s32.totalorder %s35, %s38
      %p47 = scmp.eq.s32.totalorder %s16, 1
      %p48 = por %p46, %p47
      %p49 = scmp.ne.s32.totalorder %s38, %s39
      %p50 = scmp.eq.s32.totalorder %s16, 0
      %p51 = por %p49, %p50
      %p52 = scmp.ne.s32.totalorder %s38, %s39
      %p53 = scmp.eq.s32.totalorder %s17, 1
      %p54 = por %p52, %p53
      %p56 = scmp.ne.s32.totalorder %s39, %s55
      %p57 = scmp.eq.s32.totalorder %s17, 0
      %p58 = por %p56, %p57
      %s59 = sadd.s32 %s19, 1
      %s60 = sadd.s32 %s26, 1
      %s61 = ssub.s32 %s18, %s30
      %s62 = ssub.s32 %s59, %s60
      %s63 = sor.u32 %s61, %s62
      %p64 = scmp.eq.s32.totalorder %s63, 0
      %s66 = sadd.s32 %s65, 1
      %s67 = scalar_select %p64, %s65, %s66
      %p70 = pneg %p64
      %p71 = scmp.eq.s32.totalorder %s11, 1
      %p72 = por %p70, %p71
      %p73 = scmp.ne.s32.totalorder %s65, %s68
      %p74 = scmp.eq.s32.totalorder %s11, 0
      %p75 = por %p73, %p74
      %p76 = scmp.ne.s32.totalorder %s65, %s68
      %p77 = scmp.eq.s32.totalorder %s16, 1
      %p78 = por %p76, %p77
      %p79 = scmp.ne.s32.totalorder %s68, %s69
      %p80 = scmp.eq.s32.totalorder %s16, 0
      %p81 = por %p79, %p80
      %p82 = scmp.ne.s32.totalorder %s68, %s69
      %p83 = scmp.eq.s32.totalorder %s17, 1
      %p84 = por %p82, %p83
      %p86 = scmp.ne.s32.totalorder %s69, %s85
      %p87 = scmp.eq.s32.totalorder %s17, 0
      %p88 = por %p86, %p87
      %s90 = sadd.s32 %s89, 1
      %p93 = scmp.eq.s32.totalorder %s11, 1
      %p94 = scmp.ne.s32.totalorder %s89, %s91
      %p95 = scmp.eq.s32.totalorder %s11, 0
      %p96 = por %p94, %p95
      %p97 = scmp.ne.s32.totalorder %s89, %s91
      %p98 = scmp.eq.s32.totalorder %s16, 1
      %p99 = por %p97, %p98
      %p100 = scmp.ne.s32.totalorder %s91, %s92
      %p101 = scmp.eq.s32.totalorder %s16, 0
      %p102 = por %p100, %p101
      %p103 = scmp.ne.s32.totalorder %s91, %s92
      %p104 = scmp.eq.s32.totalorder %s17, 1
      %p105 = por %p103, %p104
      %p107 = scmp.ne.s32.totalorder %s92, %s106
      %p108 = scmp.eq.s32.totalorder %s17, 0
      %p109 = por %p107, %p108
      %s111 = sadd.s32 %s110, 1
      %p114 = scmp.eq.s32.totalorder %s11, 1
      %p115 = scmp.ne.s32.totalorder %s110, %s112
      %p116 = scmp.eq.s32.totalorder %s11, 0
      %p117 = por %p115, %p116
      %p118 = scmp.ne.s32.totalorder %s110, %s112
      %p119 = scmp.eq.s32.totalorder %s16, 1
      %p120 = por %p118, %p119
      %p121 = scmp.ne.s32.totalorder %s112, %s113
      %p122 = scmp.eq.s32.totalorder %s16, 0
      %p123 = por %p121, %p122
      %p124 = scmp.ne.s32.totalorder %s112, %s113
      %p125 = scmp.eq.s32.totalorder %s17, 1
      %p126 = por %p124, %p125
      %p128 = scmp.ne.s32.totalorder %s113, %s127
      %p129 = scmp.eq.s32.totalorder %s17, 0
      %p130 = por %p128, %p129
      %s132 = sadd.s32 %s131, 1
      %p135 = scmp.eq.s32.totalorder %s11, 1
      %p136 = scmp.ne.s32.totalorder %s131, %s133
      %p137 = scmp.eq.s32.totalorder %s11, 0
      %p138 = por %p136, %p137
      %p139 = scmp.ne.s32.totalorder %s131, %s133
      %p140 = scmp.eq.s32.totalorder %s16, 1
      %p141 = por %p139, %p140
      %p142 = scmp.ne.s32.totalorder %s133, %s134
      %p143 = scmp.eq.s32.totalorder %s16, 0
      %p144 = por %p142, %p143
      %p145 = scmp.ne.s32.totalorder %s133, %s134
      %p146 = scmp.eq.s32.totalorder %s17, 1
      %p147 = por %p145, %p146
      %p149 = scmp.ne.s32.totalorder %s134, %s148
      %p150 = scmp.eq.s32.totalorder %s17, 0
      %p151 = por %p149, %p150
      %s152 = ssub.s32 %s18, %s30
      %s153 = ssub.s32 %s19, %s26
      %s154 = sor.u32 %s152, %s153
      %p155 = scmp.eq.s32.totalorder %s154, 0
      %s157 = sadd.s32 %s156, 1
      %s158 = scalar_select %p155, %s156, %s157
      %p161 = pneg %p155
      %p162 = scmp.eq.s32.totalorder %s11, 1
      %p163 = por %p161, %p162
      %p164 = scmp.ne.s32.totalorder %s156, %s159
      %p165 = scmp.eq.s32.totalorder %s11, 0
      %p166 = por %p164, %p165
      %p167 = scmp.ne.s32.totalorder %s156, %s159
      %p168 = scmp.eq.s32.totalorder %s16, 1
      %p169 = por %p167, %p168
      %p170 = scmp.ne.s32.totalorder %s159, %s160
      %p171 = scmp.eq.s32.totalorder %s16, 0
      %p172 = por %p170, %p171
      %p173 = scmp.ne.s32.totalorder %s159, %s160
      %p174 = scmp.eq.s32.totalorder %s17, 1
      %p175 = por %p173, %p174
      %p177 = scmp.ne.s32.totalorder %s160, %s176
      %p178 = scmp.eq.s32.totalorder %s17, 0
      %p179 = por %p177, %p178
      %p180 = scmp.le.s32.totalorder 1, %s11
      %p181 = scmp.lt.s32.totalorder %s11, 3
      %p182 = pnand %p180, %p181
      %p183 = pneg %p182
      // Predicated region
      $region9: #{asff_level0_forward.7} parent=5 // pred_check
        _
      $region10: #{asff_level0_forward.7} parent=5 // pred_check_branch
        %185 = sbr.rel (%p182) target = $region12
      $region11: #{asff_level0_forward.7} parent=5 // pred_region
        %s186 = ssub.s32 %s11, 1
        // Predicated region
        $region13: #{asff_level0_forward.7} parent=11 // pred_check
          %p187 = pneg %p102
        $region14: #{asff_level0_forward.7} parent=11 // pred_check_branch
          %189 = sbr.rel (%p187) target = $region16
        $region15: #{asff_level0_forward.7} parent=11 // pred_region
          _
        $region16: #{asff_level0_forward.7} parent=11 // pred_fallthru
          _
        // Predicated region
        $region17: #{asff_level0_forward.7} parent=11 // pred_check
          %p190 = pneg %p123
        $region18: #{asff_level0_forward.7} parent=11 // pred_check_branch
          %192 = sbr.rel (%p190) target = $region20
        $region19: #{asff_level0_forward.7} parent=11 // pred_region
          _
        $region20: #{asff_level0_forward.7} parent=11 // pred_fallthru
          _
        // Predicated region
        $region21: #{asff_level0_forward.7} parent=11 // pred_check
          %p193 = pneg %p144
        $region22: #{asff_level0_forward.7} parent=11 // pred_check_branch
          %195 = sbr.rel (%p193) target = $region24
        $region23: #{asff_level0_forward.7} parent=11 // pred_region
          _
        $region24: #{asff_level0_forward.7} parent=11 // pred_fallthru
          _
      $region12: #{asff_level0_forward.7} parent=5 // pred_fallthru
        _
      %p196 = scmp.lt.s32.totalorder %s11, 2
      // Predicated region
      $region25: #{asff_level0_forward.7} parent=5 // pred_check
        %p197 = pneg %p196
      $region26: #{asff_level0_forward.7} parent=5 // pred_check_branch
        %199 = sbr.rel (%p197) target = $region28
      $region27: #{asff_level0_forward.7} parent=5 // pred_region
        // Predicated region
        $region29: #{asff_level0_forward.7} parent=27 // pred_check
          %p200 = pneg %p45
        $region30: #{asff_level0_forward.7} parent=27 // pred_check_branch
          %202 = sbr.rel (%p200) target = $region32
        $region31: #{asff_level0_forward.7} parent=27 // pred_region
          %s203 = sand.u32 %s35, 1
          %s204 = sand.u32 %s35, 1
          %s205 = smul.addr %s204, 256
          %s206 = scalar_lea.vmem [#allocation2], %s205
          %s207 = smul.addr %s18, 192
          %s208 = sadd.s32 %s19, %s207
          %s209 = smul.addr %s208, 4
          %s210 = scalar_lea.vmem %s0, %s209
          // Predicated region
          $region33: #{asff_level0_forward.7} parent=31 // pred_check
            _
          $region34: #{asff_level0_forward.7} parent=31 // pred_check_branch
            %212 = sbr.rel (0) target = $region36
          $region35: #{asff_level0_forward.7} parent=31 // pred_region
            // Predicated region
            $region37: #{asff_level0_forward.7} parent=35 // pred_check
              _
            $region38: #{asff_level0_forward.7} parent=35 // pred_check_branch
              %214 = sbr.rel target = $region40
            $region39: #{asff_level0_forward.7} parent=35 // pred_region
              // Predicated region
              $region52: #{asff_level0_forward.7} parent=39 // pred_check
                _
              $region53: #{asff_level0_forward.7} parent=39 // pred_check_branch
                %355 = sbr.rel (0) target = $region55
              $region54: #{asff_level0_forward.7} parent=39 // pred_region
                loop: start=0, step=1, limit=1
                $region56: #{asff_level0_forward.7} parent=54 // loop_pre_header
                  _
                $region57: #{asff_level0_forward.7} parent=54 // loop_header
                  %s357 = sphi 0, %s361
                  %p358 = scmp.ge.s32.totalorder %s357, 1
                  %s362 = sphi %s210, %s210
                  %s363 = sphi %s206, %s206
                $region58: #{asff_level0_forward.7} parent=54 // loop_header_branch
                  %360 = sbr.rel (%p358) target = $region62
                $region59: #{asff_level0_forward.7} parent=54 // loop_body
                  _
                $region60: #{asff_level0_forward.7} parent=54 // loop_footer
                  %s361 = sadd.s32 1, %s357
                $region61: #{asff_level0_forward.7} parent=54 // loop_footer_branch
                  %356 = sbr.rel target = $region57
                $region62: #{asff_level0_forward.7} parent=54 // loop_exit
                  _
                loop: start=0, step=1, limit=1
                $region63: #{asff_level0_forward.7} parent=54 // loop_pre_header
                  _
                $region64: #{asff_level0_forward.7} parent=54 // loop_header
                  %s366 = sphi 0, %s370
                  %p367 = scmp.ge.s32.totalorder %s366, 1
                  %s371 = sphi %s210, %s210
                  %s372 = sphi %s206, %s206
                $region65: #{asff_level0_forward.7} parent=54 // loop_header_branch
                  %369 = sbr.rel (%p367) target = $region69
                $region66: #{asff_level0_forward.7} parent=54 // loop_body
                  %v373 = vld [vmem:[%s371] sm:$0xf]
                  %374 = vst [vmem:[%s372] sm:$0xf] %v373
                  %v375 = vld [vmem:[%s371 + $0xc] sm:$0xf]
                  %376 = vst [vmem:[%s372 + $0x4] sm:$0xf] %v375
                  %v377 = vld [vmem:[%s371 + $0x18] sm:$0xf]
                  %378 = vst [vmem:[%s372 + $0x8] sm:$0xf] %v377
                  %v379 = vld [vmem:[%s371 + $0x24] sm:$0xf]
                  %380 = vst [vmem:[%s372 + $0xc] sm:$0xf] %v379
                  %v381 = vld [vmem:[%s371 + $0x30] sm:$0xf]
                  %382 = vst [vmem:[%s372 + $0x10] sm:$0xf] %v381
                  %v383 = vld [vmem:[%s371 + $0x3c] sm:$0xf]
                  %384 = vst [vmem:[%s372 + $0x14] sm:$0xf] %v383
                  %v385 = vld [vmem:[%s371 + $0x48] sm:$0xf]
                  %386 = vst [vmem:[%s372 + $0x18] sm:$0xf] %v385
                  %v387 = vld [vmem:[%s371 + $0x54] sm:$0xf]
                  %388 = vst [vmem:[%s372 + $0x1c] sm:$0xf] %v387
                  %v389 = vld [vmem:[%s371 + $0x60] sm:$0xf]
                  %390 = vst [vmem:[%s372 + $0x20] sm:$0xf] %v389
                  %v391 = vld [vmem:[%s371 + $0x6c] sm:$0xf]
                  %392 = vst [vmem:[%s372 + $0x24] sm:$0xf] %v391
                  %v393 = vld [vmem:[%s371 + $0x78] sm:$0xf]
                  %394 = vst [vmem:[%s372 + $0x28] sm:$0xf] %v393
                  %v395 = vld [vmem:[%s371 + $0x84] sm:$0xf]
                  %396 = vst [vmem:[%s372 + $0x2c] sm:$0xf] %v395
                  %v397 = vld [vmem:[%s371 + $0x90] sm:$0xf]
                  %398 = vst [vmem:[%s372 + $0x30] sm:$0xf] %v397
                  %v399 = vld [vmem:[%s371 + $0x9c] sm:$0xf]
                  %400 = vst [vmem:[%s372 + $0x34] sm:$0xf] %v399
                  %v401 = vld [vmem:[%s371 + $0xa8] sm:$0xf]
                  %402 = vst [vmem:[%s372 + $0x38] sm:$0xf] %v401
                  %v403 = vld [vmem:[%s371 + $0xb4] sm:$0xf]
                  %404 = vst [vmem:[%s372 + $0x3c] sm:$0xf] %v403
                  %v405 = vld [vmem:[%s371 + $0xc0] sm:$0xf]
                  %406 = vst [vmem:[%s372 + $0x40] sm:$0xf] %v405
                  %v407 = vld [vmem:[%s371 + $0xcc] sm:$0xf]
                  %408 = vst [vmem:[%s372 + $0x44] sm:$0xf] %v407
                  %v409 = vld [vmem:[%s371 + $0xd8] sm:$0xf]
                  %410 = vst [vmem:[%s372 + $0x48] sm:$0xf] %v409
                  %v411 = vld [vmem:[%s371 + $0xe4] sm:$0xf]
                  %412 = vst [vmem:[%s372 + $0x4c] sm:$0xf] %v411
                  %v413 = vld [vmem:[%s371 + $0xf0] sm:$0xf]
                  %414 = vst [vmem:[%s372 + $0x50] sm:$0xf] %v413
                  %v415 = vld [vmem:[%s371 + $0xfc] sm:$0xf]
                  %416 = vst [vmem:[%s372 + $0x54] sm:$0xf] %v415
                  %v417 = vld [vmem:[%s371 + $0x108] sm:$0xf]
                  %418 = vst [vmem:[%s372 + $0x58] sm:$0xf] %v417
                  %v419 = vld [vmem:[%s371 + $0x114] sm:$0xf]
                  %420 = vst [vmem:[%s372 + $0x5c] sm:$0xf] %v419
                  %v421 = vld [vmem:[%s371 + $0x120] sm:$0xf]
                  %422 = vst [vmem:[%s372 + $0x60] sm:$0xf] %v421
                  %v423 = vld [vmem:[%s371 + $0x12c] sm:$0xf]
                  %424 = vst [vmem:[%s372 + $0x64] sm:$0xf] %v423
                  %v425 = vld [vmem:[%s371 + $0x138] sm:$0xf]
                  %426 = vst [vmem:[%s372 + $0x68] sm:$0xf] %v425
                  %v427 = vld [vmem:[%s371 + $0x144] sm:$0xf]
                  %428 = vst [vmem:[%s372 + $0x6c] sm:$0xf] %v427
                  %v429 = vld [vmem:[%s371 + $0x150] sm:$0xf]
                  %430 = vst [vmem:[%s372 + $0x70] sm:$0xf] %v429
                  %v431 = vld [vmem:[%s371 + $0x15c] sm:$0xf]
                  %432 = vst [vmem:[%s372 + $0x74] sm:$0xf] %v431
                  %v433 = vld [vmem:[%s371 + $0x168] sm:$0xf]
                  %434 = vst [vmem:[%s372 + $0x78] sm:$0xf] %v433
                  %v435 = vld [vmem:[%s371 + $0x174] sm:$0xf]
                  %436 = vst [vmem:[%s372 + $0x7c] sm:$0xf] %v435
                  %v437 = vld [vmem:[%s371 + $0x180] sm:$0xf]
                  %438 = vst [vmem:[%s372 + $0x80] sm:$0xf] %v437
                  %v439 = vld [vmem:[%s371 + $0x18c] sm:$0xf]
                  %440 = vst [vmem:[%s372 + $0x84] sm:$0xf] %v439
                  %v441 = vld [vmem:[%s371 + $0x198] sm:$0xf]
                  %442 = vst [vmem:[%s372 + $0x88] sm:$0xf] %v441
                  %v443 = vld [vmem:[%s371 + $0x1a4] sm:$0xf]
                  %444 = vst [vmem:[%s372 + $0x8c] sm:$0xf] %v443
                  %v445 = vld [vmem:[%s371 + $0x1b0] sm:$0xf]
                  %446 = vst [vmem:[%s372 + $0x90] sm:$0xf] %v445
                  %v447 = vld [vmem:[%s371 + $0x1bc] sm:$0xf]
                  %448 = vst [vmem:[%s372 + $0x94] sm:$0xf] %v447
                  %v449 = vld [vmem:[%s371 + $0x1c8] sm:$0xf]
                  %450 = vst [vmem:[%s372 + $0x98] sm:$0xf] %v449
                  %v451 = vld [vmem:[%s371 + $0x1d4] sm:$0xf]
                  %452 = vst [vmem:[%s372 + $0x9c] sm:$0xf] %v451
                  %v453 = vld [vmem:[%s371 + $0x1e0] sm:$0xf]
                  %454 = vst [vmem:[%s372 + $0xa0] sm:$0xf] %v453
                  %v455 = vld [vmem:[%s371 + $0x1ec] sm:$0xf]
                  %456 = vst [vmem:[%s372 + $0xa4] sm:$0xf] %v455
                  %v457 = vld [vmem:[%s371 + $0x1f8] sm:$0xf]
                  %458 = vst [vmem:[%s372 + $0xa8] sm:$0xf] %v457
                  %v459 = vld [vmem:[%s371 + $0x204] sm:$0xf]
                  %460 = vst [vmem:[%s372 + $0xac] sm:$0xf] %v459
                  %v461 = vld [vmem:[%s371 + $0x210] sm:$0xf]
                  %462 = vst [vmem:[%s372 + $0xb0] sm:$0xf] %v461
                  %v463 = vld [vmem:[%s371 + $0x21c] sm:$0xf]
                  %464 = vst [vmem:[%s372 + $0xb4] sm:$0xf] %v463
                  %v465 = vld [vmem:[%s371 + $0x228] sm:$0xf]
                  %466 = vst [vmem:[%s372 + $0xb8] sm:$0xf] %v465
                  %v467 = vld [vmem:[%s371 + $0x234] sm:$0xf]
                  %468 = vst [vmem:[%s372 + $0xbc] sm:$0xf] %v467
                  %v469 = vld [vmem:[%s371 + $0x240] sm:$0xf]
                  %470 = vst [vmem:[%s372 + $0xc0] sm:$0xf] %v469
                  %v471 = vld [vmem:[%s371 + $0x24c] sm:$0xf]
                  %472 = vst [vmem:[%s372 + $0xc4] sm:$0xf] %v471
                  %v473 = vld [vmem:[%s371 + $0x258] sm:$0xf]
                  %474 = vst [vmem:[%s372 + $0xc8] sm:$0xf] %v473
                  %v475 = vld [vmem:[%s371 + $0x264] sm:$0xf]
                  %476 = vst [vmem:[%s372 + $0xcc] sm:$0xf] %v475
                  %v477 = vld [vmem:[%s371 + $0x270] sm:$0xf]
                  %478 = vst [vmem:[%s372 + $0xd0] sm:$0xf] %v477
                  %v479 = vld [vmem:[%s371 + $0x27c] sm:$0xf]
                  %480 = vst [vmem:[%s372 + $0xd4] sm:$0xf] %v479
                  %v481 = vld [vmem:[%s371 + $0x288] sm:$0xf]
                  %482 = vst [vmem:[%s372 + $0xd8] sm:$0xf] %v481
                  %v483 = vld [vmem:[%s371 + $0x294] sm:$0xf]
                  %484 = vst [vmem:[%s372 + $0xdc] sm:$0xf] %v483
                  %v485 = vld [vmem:[%s371 + $0x2a0] sm:$0xf]
                  %486 = vst [vmem:[%s372 + $0xe0] sm:$0xf] %v485
                  %v487 = vld [vmem:[%s371 + $0x2ac] sm:$0xf]
                  %488 = vst [vmem:[%s372 + $0xe4] sm:$0xf] %v487
                  %v489 = vld [vmem:[%s371 + $0x2b8] sm:$0xf]
                  %490 = vst [vmem:[%s372 + $0xe8] sm:$0xf] %v489
                  %v491 = vld [vmem:[%s371 + $0x2c4] sm:$0xf]
                  %492 = vst [vmem:[%s372 + $0xec] sm:$0xf] %v491
                  %v493 = vld [vmem:[%s371 + $0x2d0] sm:$0xf]
                  %494 = vst [vmem:[%s372 + $0xf0] sm:$0xf] %v493
                  %v495 = vld [vmem:[%s371 + $0x2dc] sm:$0xf]
                  %496 = vst [vmem:[%s372 + $0xf4] sm:$0xf] %v495
                  %v497 = vld [vmem:[%s371 + $0x2e8] sm:$0xf]
                  %498 = vst [vmem:[%s372 + $0xf8] sm:$0xf] %v497
                  %v499 = vld [vmem:[%s371 + $0x2f4] sm:$0xf]
                  %500 = vst [vmem:[%s372 + $0xfc] sm:$0xf] %v499
                $region67: #{asff_level0_forward.7} parent=54 // loop_footer
                  %s370 = sadd.s32 1, %s366
                $region68: #{asff_level0_forward.7} parent=54 // loop_footer_branch
                  %365 = sbr.rel target = $region64
                $region69: #{asff_level0_forward.7} parent=54 // loop_exit
                  _
              $region55: #{asff_level0_forward.7} parent=39 // pred_fallthru
                _
            $region40: #{asff_level0_forward.7} parent=35 // pred_fallthru
              _
            // Predicated region
            $region41: #{asff_level0_forward.7} parent=35 // pred_check
              _
            $region42: #{asff_level0_forward.7} parent=35 // pred_check_branch
              %216 = sbr.rel (0) target = $region44
            $region43: #{asff_level0_forward.7} parent=35 // pred_region
              loop: start=0, step=1, limit=1
              $region45: #{asff_level0_forward.7} parent=43 // loop_pre_header
                _
              $region46: #{asff_level0_forward.7} parent=43 // loop_header
                %s219 = sphi 0, %s223
                %p220 = scmp.ge.s32.totalorder %s219, 1
                %s224 = sphi %s210, %s210
                %s225 = sphi %s206, %s206
              $region47: #{asff_level0_forward.7} parent=43 // loop_header_branch
                %222 = sbr.rel (%p220) target = $region51
              $region48: #{asff_level0_forward.7} parent=43 // loop_body
                %v226 = vld [vmem:[%s224] sm:$0xf]
                %227 = vst [vmem:[%s225] sm:$0xf] %v226
                %v228 = vld [vmem:[%s224 + $0xc] sm:$0xf]
                %229 = vst [vmem:[%s225 + $0x4] sm:$0xf] %v228
                %v230 = vld [vmem:[%s224 + $0x18] sm:$0xf]
                %231 = vst [vmem:[%s225 + $0x8] sm:$0xf] %v230
                %v232 = vld [vmem:[%s224 + $0x24] sm:$0xf]
                %233 = vst [vmem:[%s225 + $0xc] sm:$0xf] %v232
                %v234 = vld [vmem:[%s224 + $0x30] sm:$0xf]
                %235 = vst [vmem:[%s225 + $0x10] sm:$0xf] %v234
                %v236 = vld [vmem:[%s224 + $0x3c] sm:$0xf]
                %237 = vst [vmem:[%s225 + $0x14] sm:$0xf] %v236
                %v238 = vld [vmem:[%s224 + $0x48] sm:$0xf]
                %239 = vst [vmem:[%s225 + $0x18] sm:$0xf] %v238
                %v240 = vld [vmem:[%s224 + $0x54] sm:$0xf]
                %241 = vst [vmem:[%s225 + $0x1c] sm:$0xf] %v240
                %v242 = vld [vmem:[%s224 + $0x60] sm:$0xf]
                %243 = vst [vmem:[%s225 + $0x20] sm:$0xf] %v242
                %v244 = vld [vmem:[%s224 + $0x6c] sm:$0xf]
                %245 = vst [vmem:[%s225 + $0x24] sm:$0xf] %v244
                %v246 = vld [vmem:[%s224 + $0x78] sm:$0xf]
                %247 = vst [vmem:[%s225 + $0x28] sm:$0xf] %v246
                %v248 = vld [vmem:[%s224 + $0x84] sm:$0xf]
                %249 = vst [vmem:[%s225 + $0x2c] sm:$0xf] %v248
                %v250 = vld [vmem:[%s224 + $0x90] sm:$0xf]
                %251 = vst [vmem:[%s225 + $0x30] sm:$0xf] %v250
                %v252 = vld [vmem:[%s224 + $0x9c] sm:$0xf]
                %253 = vst [vmem:[%s225 + $0x34] sm:$0xf] %v252
                %v254 = vld [vmem:[%s224 + $0xa8] sm:$0xf]
                %255 = vst [vmem:[%s225 + $0x38] sm:$0xf] %v254
                %v256 = vld [vmem:[%s224 + $0xb4] sm:$0xf]
                %257 = vst [vmem:[%s225 + $0x3c] sm:$0xf] %v256
                %v258 = vld [vmem:[%s224 + $0xc0] sm:$0xf]
                %259 = vst [vmem:[%s225 + $0x40] sm:$0xf] %v258
                %v260 = vld [vmem:[%s224 + $0xcc] sm:$0xf]
                %261 = vst [vmem:[%s225 + $0x44] sm:$0xf] %v260
                %v262 = vld [vmem:[%s224 + $0xd8] sm:$0xf]
                %263 = vst [vmem:[%s225 + $0x48] sm:$0xf] %v262
                %v264 = vld [vmem:[%s224 + $0xe4] sm:$0xf]
                %265 = vst [vmem:[%s225 + $0x4c] sm:$0xf] %v264
                %v266 = vld [vmem:[%s224 + $0xf0] sm:$0xf]
                %267 = vst [vmem:[%s225 + $0x50] sm:$0xf] %v266
                %v268 = vld [vmem:[%s224 + $0xfc] sm:$0xf]
                %269 = vst [vmem:[%s225 + $0x54] sm:$0xf] %v268
                %v270 = vld [vmem:[%s224 + $0x108] sm:$0xf]
                %271 = vst [vmem:[%s225 + $0x58] sm:$0xf] %v270
                %v272 = vld [vmem:[%s224 + $0x114] sm:$0xf]
                %273 = vst [vmem:[%s225 + $0x5c] sm:$0xf] %v272
                %v274 = vld [vmem:[%s224 + $0x120] sm:$0xf]
                %275 = vst [vmem:[%s225 + $0x60] sm:$0xf] %v274
                %v276 = vld [vmem:[%s224 + $0x12c] sm:$0xf]
                %277 = vst [vmem:[%s225 + $0x64] sm:$0xf] %v276
                %v278 = vld [vmem:[%s224 + $0x138] sm:$0xf]
                %279 = vst [vmem:[%s225 + $0x68] sm:$0xf] %v278
                %v280 = vld [vmem:[%s224 + $0x144] sm:$0xf]
                %281 = vst [vmem:[%s225 + $0x6c] sm:$0xf] %v280
                %v282 = vld [vmem:[%s224 + $0x150] sm:$0xf]
                %283 = vst [vmem:[%s225 + $0x70] sm:$0xf] %v282
                %v284 = vld [vmem:[%s224 + $0x15c] sm:$0xf]
                %285 = vst [vmem:[%s225 + $0x74] sm:$0xf] %v284
                %v286 = vld [vmem:[%s224 + $0x168] sm:$0xf]
                %287 = vst [vmem:[%s225 + $0x78] sm:$0xf] %v286
                %v288 = vld [vmem:[%s224 + $0x174] sm:$0xf]
                %289 = vst [vmem:[%s225 + $0x7c] sm:$0xf] %v288
                %v290 = vld [vmem:[%s224 + $0x180] sm:$0xf]
                %291 = vst [vmem:[%s225 + $0x80] sm:$0xf] %v290
                %v292 = vld [vmem:[%s224 + $0x18c] sm:$0xf]
                %293 = vst [vmem:[%s225 + $0x84] sm:$0xf] %v292
                %v294 = vld [vmem:[%s224 + $0x198] sm:$0xf]
                %295 = vst [vmem:[%s225 + $0x88] sm:$0xf] %v294
                %v296 = vld [vmem:[%s224 + $0x1a4] sm:$0xf]
                %297 = vst [vmem:[%s225 + $0x8c] sm:$0xf] %v296
                %v298 = vld [vmem:[%s224 + $0x1b0] sm:$0xf]
                %299 = vst [vmem:[%s225 + $0x90] sm:$0xf] %v298
                %v300 = vld [vmem:[%s224 + $0x1bc] sm:$0xf]
                %301 = vst [vmem:[%s225 + $0x94] sm:$0xf] %v300
                %v302 = vld [vmem:[%s224 + $0x1c8] sm:$0xf]
                %303 = vst [vmem:[%s225 + $0x98] sm:$0xf] %v302
                %v304 = vld [vmem:[%s224 + $0x1d4] sm:$0xf]
                %305 = vst [vmem:[%s225 + $0x9c] sm:$0xf] %v304
                %v306 = vld [vmem:[%s224 + $0x1e0] sm:$0xf]
                %307 = vst [vmem:[%s225 + $0xa0] sm:$0xf] %v306
                %v308 = vld [vmem:[%s224 + $0x1ec] sm:$0xf]
                %309 = vst [vmem:[%s225 + $0xa4] sm:$0xf] %v308
                %v310 = vld [vmem:[%s224 + $0x1f8] sm:$0xf]
                %311 = vst [vmem:[%s225 + $0xa8] sm:$0xf] %v310
                %v312 = vld [vmem:[%s224 + $0x204] sm:$0xf]
                %313 = vst [vmem:[%s225 + $0xac] sm:$0xf] %v312
                %v314 = vld [vmem:[%s224 + $0x210] sm:$0xf]
                %315 = vst [vmem:[%s225 + $0xb0] sm:$0xf] %v314
                %v316 = vld [vmem:[%s224 + $0x21c] sm:$0xf]
                %317 = vst [vmem:[%s225 + $0xb4] sm:$0xf] %v316
                %v318 = vld [vmem:[%s224 + $0x228] sm:$0xf]
                %319 = vst [vmem:[%s225 + $0xb8] sm:$0xf] %v318
                %v320 = vld [vmem:[%s224 + $0x234] sm:$0xf]
                %321 = vst [vmem:[%s225 + $0xbc] sm:$0xf] %v320
                %v322 = vld [vmem:[%s224 + $0x240] sm:$0xf]
                %323 = vst [vmem:[%s225 + $0xc0] sm:$0xf] %v322
                %v324 = vld [vmem:[%s224 + $0x24c] sm:$0xf]
                %325 = vst [vmem:[%s225 + $0xc4] sm:$0xf] %v324
                %v326 = vld [vmem:[%s224 + $0x258] sm:$0xf]
                %327 = vst [vmem:[%s225 + $0xc8] sm:$0xf] %v326
                %v328 = vld [vmem:[%s224 + $0x264] sm:$0xf]
                %329 = vst [vmem:[%s225 + $0xcc] sm:$0xf] %v328
                %v330 = vld [vmem:[%s224 + $0x270] sm:$0xf]
                %331 = vst [vmem:[%s225 + $0xd0] sm:$0xf] %v330
                %v332 = vld [vmem:[%s224 + $0x27c] sm:$0xf]
                %333 = vst [vmem:[%s225 + $0xd4] sm:$0xf] %v332
                %v334 = vld [vmem:[%s224 + $0x288] sm:$0xf]
                %335 = vst [vmem:[%s225 + $0xd8] sm:$0xf] %v334
                %v336 = vld [vmem:[%s224 + $0x294] sm:$0xf]
                %337 = vst [vmem:[%s225 + $0xdc] sm:$0xf] %v336
                %v338 = vld [vmem:[%s224 + $0x2a0] sm:$0xf]
                %339 = vst [vmem:[%s225 + $0xe0] sm:$0xf] %v338
                %v340 = vld [vmem:[%s224 + $0x2ac] sm:$0xf]
                %341 = vst [vmem:[%s225 + $0xe4] sm:$0xf] %v340
                %v342 = vld [vmem:[%s224 + $0x2b8] sm:$0xf]
                %343 = vst [vmem:[%s225 + $0xe8] sm:$0xf] %v342
                %v344 = vld [vmem:[%s224 + $0x2c4] sm:$0xf]
                %345 = vst [vmem:[%s225 + $0xec] sm:$0xf] %v344
                %v346 = vld [vmem:[%s224 + $0x2d0] sm:$0xf]
                %347 = vst [vmem:[%s225 + $0xf0] sm:$0xf] %v346
                %v348 = vld [vmem:[%s224 + $0x2dc] sm:$0xf]
                %349 = vst [vmem:[%s225 + $0xf4] sm:$0xf] %v348
                %v350 = vld [vmem:[%s224 + $0x2e8] sm:$0xf]
                %351 = vst [vmem:[%s225 + $0xf8] sm:$0xf] %v350
                %v352 = vld [vmem:[%s224 + $0x2f4] sm:$0xf]
                %353 = vst [vmem:[%s225 + $0xfc] sm:$0xf] %v352
              $region49: #{asff_level0_forward.7} parent=43 // loop_footer
                %s223 = sadd.s32 1, %s219
              $region50: #{asff_level0_forward.7} parent=43 // loop_footer_branch
                %218 = sbr.rel target = $region46
              $region51: #{asff_level0_forward.7} parent=43 // loop_exit
                _
            $region44: #{asff_level0_forward.7} parent=35 // pred_fallthru
              _
          $region36: #{asff_level0_forward.7} parent=31 // pred_fallthru
            _
          %501 = vnop
        $region32: #{asff_level0_forward.7} parent=27 // pred_fallthru
          _
        // Predicated region
        $region70: #{asff_level0_forward.7} parent=27 // pred_check
          %p502 = pneg %p75
        $region71: #{asff_level0_forward.7} parent=27 // pred_check_branch
          %504 = sbr.rel (%p502) target = $region73
        $region72: #{asff_level0_forward.7} parent=27 // pred_region
          %s505 = sand.u32 %s65, 1
          %s506 = sand.u32 %s65, 1
          %s507 = smul.addr %s506, 256
          %s508 = scalar_lea.vmem [#allocation3], %s507
          %s509 = sadd.s32 %s19, 1
          %s510 = smul.addr %s18, 192
          %s511 = sadd.s32 %s509, %s510
          %s512 = smul.addr %s511, 4
          %s513 = scalar_lea.vmem %s1, %s512
          // Predicated region
          $region74: #{asff_level0_forward.7} parent=72 // pred_check
            _
          $region75: #{asff_level0_forward.7} parent=72 // pred_check_branch
            %515 = sbr.rel (0) target = $region77
          $region76: #{asff_level0_forward.7} parent=72 // pred_region
            // Predicated region
            $region78: #{asff_level0_forward.7} parent=76 // pred_check
              _
            $region79: #{asff_level0_forward.7} parent=76 // pred_check_branch
              %517 = sbr.rel target = $region81
            $region80: #{asff_level0_forward.7} parent=76 // pred_region
              // Predicated region
              $region93: #{asff_level0_forward.7} parent=80 // pred_check
                _
              $region94: #{asff_level0_forward.7} parent=80 // pred_check_branch
                %658 = sbr.rel (0) target = $region96
              $region95: #{asff_level0_forward.7} parent=80 // pred_region
                loop: start=0, step=1, limit=1
                $region97: #{asff_level0_forward.7} parent=95 // loop_pre_header
                  _
                $region98: #{asff_level0_forward.7} parent=95 // loop_header
                  %s660 = sphi 0, %s664
                  %p661 = scmp.ge.s32.totalorder %s660, 1
                  %s665 = sphi %s513, %s513
                  %s666 = sphi %s508, %s508
                $region99: #{asff_level0_forward.7} parent=95 // loop_header_branch
                  %663 = sbr.rel (%p661) target = $region103
                $region100: #{asff_level0_forward.7} parent=95 // loop_body
                  _
                $region101: #{asff_level0_forward.7} parent=95 // loop_footer
                  %s664 = sadd.s32 1, %s660
                $region102: #{asff_level0_forward.7} parent=95 // loop_footer_branch
                  %659 = sbr.rel target = $region98
                $region103: #{asff_level0_forward.7} parent=95 // loop_exit
                  _
                loop: start=0, step=1, limit=1
                $region104: #{asff_level0_forward.7} parent=95 // loop_pre_header
                  _
                $region105: #{asff_level0_forward.7} parent=95 // loop_header
                  %s669 = sphi 0, %s673
                  %p670 = scmp.ge.s32.totalorder %s669, 1
                  %s674 = sphi %s513, %s513
                  %s675 = sphi %s508, %s508
                $region106: #{asff_level0_forward.7} parent=95 // loop_header_branch
                  %672 = sbr.rel (%p670) target = $region110
                $region107: #{asff_level0_forward.7} parent=95 // loop_body
                  %v676 = vld [vmem:[%s674] sm:$0xf]
                  %677 = vst [vmem:[%s675] sm:$0xf] %v676
                  %v678 = vld [vmem:[%s674 + $0xc] sm:$0xf]
                  %679 = vst [vmem:[%s675 + $0x4] sm:$0xf] %v678
                  %v680 = vld [vmem:[%s674 + $0x18] sm:$0xf]
                  %681 = vst [vmem:[%s675 + $0x8] sm:$0xf] %v680
                  %v682 = vld [vmem:[%s674 + $0x24] sm:$0xf]
                  %683 = vst [vmem:[%s675 + $0xc] sm:$0xf] %v682
                  %v684 = vld [vmem:[%s674 + $0x30] sm:$0xf]
                  %685 = vst [vmem:[%s675 + $0x10] sm:$0xf] %v684
                  %v686 = vld [vmem:[%s674 + $0x3c] sm:$0xf]
                  %687 = vst [vmem:[%s675 + $0x14] sm:$0xf] %v686
                  %v688 = vld [vmem:[%s674 + $0x48] sm:$0xf]
                  %689 = vst [vmem:[%s675 + $0x18] sm:$0xf] %v688
                  %v690 = vld [vmem:[%s674 + $0x54] sm:$0xf]
                  %691 = vst [vmem:[%s675 + $0x1c] sm:$0xf] %v690
                  %v692 = vld [vmem:[%s674 + $0x60] sm:$0xf]
                  %693 = vst [vmem:[%s675 + $0x20] sm:$0xf] %v692
                  %v694 = vld [vmem:[%s674 + $0x6c] sm:$0xf]
                  %695 = vst [vmem:[%s675 + $0x24] sm:$0xf] %v694
                  %v696 = vld [vmem:[%s674 + $0x78] sm:$0xf]
                  %697 = vst [vmem:[%s675 + $0x28] sm:$0xf] %v696
                  %v698 = vld [vmem:[%s674 + $0x84] sm:$0xf]
                  %699 = vst [vmem:[%s675 + $0x2c] sm:$0xf] %v698
                  %v700 = vld [vmem:[%s674 + $0x90] sm:$0xf]
                  %701 = vst [vmem:[%s675 + $0x30] sm:$0xf] %v700
                  %v702 = vld [vmem:[%s674 + $0x9c] sm:$0xf]
                  %703 = vst [vmem:[%s675 + $0x34] sm:$0xf] %v702
                  %v704 = vld [vmem:[%s674 + $0xa8] sm:$0xf]
                  %705 = vst [vmem:[%s675 + $0x38] sm:$0xf] %v704
                  %v706 = vld [vmem:[%s674 + $0xb4] sm:$0xf]
                  %707 = vst [vmem:[%s675 + $0x3c] sm:$0xf] %v706
                  %v708 = vld [vmem:[%s674 + $0xc0] sm:$0xf]
                  %709 = vst [vmem:[%s675 + $0x40] sm:$0xf] %v708
                  %v710 = vld [vmem:[%s674 + $0xcc] sm:$0xf]
                  %711 = vst [vmem:[%s675 + $0x44] sm:$0xf] %v710
                  %v712 = vld [vmem:[%s674 + $0xd8] sm:$0xf]
                  %713 = vst [vmem:[%s675 + $0x48] sm:$0xf] %v712
                  %v714 = vld [vmem:[%s674 + $0xe4] sm:$0xf]
                  %715 = vst [vmem:[%s675 + $0x4c] sm:$0xf] %v714
                  %v716 = vld [vmem:[%s674 + $0xf0] sm:$0xf]
                  %717 = vst [vmem:[%s675 + $0x50] sm:$0xf] %v716
                  %v718 = vld [vmem:[%s674 + $0xfc] sm:$0xf]
                  %719 = vst [vmem:[%s675 + $0x54] sm:$0xf] %v718
                  %v720 = vld [vmem:[%s674 + $0x108] sm:$0xf]
                  %721 = vst [vmem:[%s675 + $0x58] sm:$0xf] %v720
                  %v722 = vld [vmem:[%s674 + $0x114] sm:$0xf]
                  %723 = vst [vmem:[%s675 + $0x5c] sm:$0xf] %v722
                  %v724 = vld [vmem:[%s674 + $0x120] sm:$0xf]
                  %725 = vst [vmem:[%s675 + $0x60] sm:$0xf] %v724
                  %v726 = vld [vmem:[%s674 + $0x12c] sm:$0xf]
                  %727 = vst [vmem:[%s675 + $0x64] sm:$0xf] %v726
                  %v728 = vld [vmem:[%s674 + $0x138] sm:$0xf]
                  %729 = vst [vmem:[%s675 + $0x68] sm:$0xf] %v728
                  %v730 = vld [vmem:[%s674 + $0x144] sm:$0xf]
                  %731 = vst [vmem:[%s675 + $0x6c] sm:$0xf] %v730
                  %v732 = vld [vmem:[%s674 + $0x150] sm:$0xf]
                  %733 = vst [vmem:[%s675 + $0x70] sm:$0xf] %v732
                  %v734 = vld [vmem:[%s674 + $0x15c] sm:$0xf]
                  %735 = vst [vmem:[%s675 + $0x74] sm:$0xf] %v734
                  %v736 = vld [vmem:[%s674 + $0x168] sm:$0xf]
                  %737 = vst [vmem:[%s675 + $0x78] sm:$0xf] %v736
                  %v738 = vld [vmem:[%s674 + $0x174] sm:$0xf]
                  %739 = vst [vmem:[%s675 + $0x7c] sm:$0xf] %v738
                  %v740 = vld [vmem:[%s674 + $0x180] sm:$0xf]
                  %741 = vst [vmem:[%s675 + $0x80] sm:$0xf] %v740
                  %v742 = vld [vmem:[%s674 + $0x18c] sm:$0xf]
                  %743 = vst [vmem:[%s675 + $0x84] sm:$0xf] %v742
                  %v744 = vld [vmem:[%s674 + $0x198] sm:$0xf]
                  %745 = vst [vmem:[%s675 + $0x88] sm:$0xf] %v744
                  %v746 = vld [vmem:[%s674 + $0x1a4] sm:$0xf]
                  %747 = vst [vmem:[%s675 + $0x8c] sm:$0xf] %v746
                  %v748 = vld [vmem:[%s674 + $0x1b0] sm:$0xf]
                  %749 = vst [vmem:[%s675 + $0x90] sm:$0xf] %v748
                  %v750 = vld [vmem:[%s674 + $0x1bc] sm:$0xf]
                  %751 = vst [vmem:[%s675 + $0x94] sm:$0xf] %v750
                  %v752 = vld [vmem:[%s674 + $0x1c8] sm:$0xf]
                  %753 = vst [vmem:[%s675 + $0x98] sm:$0xf] %v752
                  %v754 = vld [vmem:[%s674 + $0x1d4] sm:$0xf]
                  %755 = vst [vmem:[%s675 + $0x9c] sm:$0xf] %v754
                  %v756 = vld [vmem:[%s674 + $0x1e0] sm:$0xf]
                  %757 = vst [vmem:[%s675 + $0xa0] sm:$0xf] %v756
                  %v758 = vld [vmem:[%s674 + $0x1ec] sm:$0xf]
                  %759 = vst [vmem:[%s675 + $0xa4] sm:$0xf] %v758
                  %v760 = vld [vmem:[%s674 + $0x1f8] sm:$0xf]
                  %761 = vst [vmem:[%s675 + $0xa8] sm:$0xf] %v760
                  %v762 = vld [vmem:[%s674 + $0x204] sm:$0xf]
                  %763 = vst [vmem:[%s675 + $0xac] sm:$0xf] %v762
                  %v764 = vld [vmem:[%s674 + $0x210] sm:$0xf]
                  %765 = vst [vmem:[%s675 + $0xb0] sm:$0xf] %v764
                  %v766 = vld [vmem:[%s674 + $0x21c] sm:$0xf]
                  %767 = vst [vmem:[%s675 + $0xb4] sm:$0xf] %v766
                  %v768 = vld [vmem:[%s674 + $0x228] sm:$0xf]
                  %769 = vst [vmem:[%s675 + $0xb8] sm:$0xf] %v768
                  %v770 = vld [vmem:[%s674 + $0x234] sm:$0xf]
                  %771 = vst [vmem:[%s675 + $0xbc] sm:$0xf] %v770
                  %v772 = vld [vmem:[%s674 + $0x240] sm:$0xf]
                  %773 = vst [vmem:[%s675 + $0xc0] sm:$0xf] %v772
                  %v774 = vld [vmem:[%s674 + $0x24c] sm:$0xf]
                  %775 = vst [vmem:[%s675 + $0xc4] sm:$0xf] %v774
                  %v776 = vld [vmem:[%s674 + $0x258] sm:$0xf]
                  %777 = vst [vmem:[%s675 + $0xc8] sm:$0xf] %v776
                  %v778 = vld [vmem:[%s674 + $0x264] sm:$0xf]
                  %779 = vst [vmem:[%s675 + $0xcc] sm:$0xf] %v778
                  %v780 = vld [vmem:[%s674 + $0x270] sm:$0xf]
                  %781 = vst [vmem:[%s675 + $0xd0] sm:$0xf] %v780
                  %v782 = vld [vmem:[%s674 + $0x27c] sm:$0xf]
                  %783 = vst [vmem:[%s675 + $0xd4] sm:$0xf] %v782
                  %v784 = vld [vmem:[%s674 + $0x288] sm:$0xf]
                  %785 = vst [vmem:[%s675 + $0xd8] sm:$0xf] %v784
                  %v786 = vld [vmem:[%s674 + $0x294] sm:$0xf]
                  %787 = vst [vmem:[%s675 + $0xdc] sm:$0xf] %v786
                  %v788 = vld [vmem:[%s674 + $0x2a0] sm:$0xf]
                  %789 = vst [vmem:[%s675 + $0xe0] sm:$0xf] %v788
                  %v790 = vld [vmem:[%s674 + $0x2ac] sm:$0xf]
                  %791 = vst [vmem:[%s675 + $0xe4] sm:$0xf] %v790
                  %v792 = vld [vmem:[%s674 + $0x2b8] sm:$0xf]
                  %793 = vst [vmem:[%s675 + $0xe8] sm:$0xf] %v792
                  %v794 = vld [vmem:[%s674 + $0x2c4] sm:$0xf]
                  %795 = vst [vmem:[%s675 + $0xec] sm:$0xf] %v794
                  %v796 = vld [vmem:[%s674 + $0x2d0] sm:$0xf]
                  %797 = vst [vmem:[%s675 + $0xf0] sm:$0xf] %v796
                  %v798 = vld [vmem:[%s674 + $0x2dc] sm:$0xf]
                  %799 = vst [vmem:[%s675 + $0xf4] sm:$0xf] %v798
                  %v800 = vld [vmem:[%s674 + $0x2e8] sm:$0xf]
                  %801 = vst [vmem:[%s675 + $0xf8] sm:$0xf] %v800
                  %v802 = vld [vmem:[%s674 + $0x2f4] sm:$0xf]
                  %803 = vst [vmem:[%s675 + $0xfc] sm:$0xf] %v802
                $region108: #{asff_level0_forward.7} parent=95 // loop_footer
                  %s673 = sadd.s32 1, %s669
                $region109: #{asff_level0_forward.7} parent=95 // loop_footer_branch
                  %668 = sbr.rel target = $region105
                $region110: #{asff_level0_forward.7} parent=95 // loop_exit
                  _
              $region96: #{asff_level0_forward.7} parent=80 // pred_fallthru
                _
            $region81: #{asff_level0_forward.7} parent=76 // pred_fallthru
              _
            // Predicated region
            $region82: #{asff_level0_forward.7} parent=76 // pred_check
              _
            $region83: #{asff_level0_forward.7} parent=76 // pred_check_branch
              %519 = sbr.rel (0) target = $region85
            $region84: #{asff_level0_forward.7} parent=76 // pred_region
              loop: start=0, step=1, limit=1
              $region86: #{asff_level0_forward.7} parent=84 // loop_pre_header
                _
              $region87: #{asff_level0_forward.7} parent=84 // loop_header
                %s522 = sphi 0, %s526
                %p523 = scmp.ge.s32.totalorder %s522, 1
                %s527 = sphi %s513, %s513
                %s528 = sphi %s508, %s508
              $region88: #{asff_level0_forward.7} parent=84 // loop_header_branch
                %525 = sbr.rel (%p523) target = $region92
              $region89: #{asff_level0_forward.7} parent=84 // loop_body
                %v529 = vld [vmem:[%s527] sm:$0xf]
                %530 = vst [vmem:[%s528] sm:$0xf] %v529
                %v531 = vld [vmem:[%s527 + $0xc] sm:$0xf]
                %532 = vst [vmem:[%s528 + $0x4] sm:$0xf] %v531
                %v533 = vld [vmem:[%s527 + $0x18] sm:$0xf]
                %534 = vst [vmem:[%s528 + $0x8] sm:$0xf] %v533
                %v535 = vld [vmem:[%s527 + $0x24] sm:$0xf]
                %536 = vst [vmem:[%s528 + $0xc] sm:$0xf] %v535
                %v537 = vld [vmem:[%s527 + $0x30] sm:$0xf]
                %538 = vst [vmem:[%s528 + $0x10] sm:$0xf] %v537
                %v539 = vld [vmem:[%s527 + $0x3c] sm:$0xf]
                %540 = vst [vmem:[%s528 + $0x14] sm:$0xf] %v539
                %v541 = vld [vmem:[%s527 + $0x48] sm:$0xf]
                %542 = vst [vmem:[%s528 + $0x18] sm:$0xf] %v541
                %v543 = vld [vmem:[%s527 + $0x54] sm:$0xf]
                %544 = vst [vmem:[%s528 + $0x1c] sm:$0xf] %v543
                %v545 = vld [vmem:[%s527 + $0x60] sm:$0xf]
                %546 = vst [vmem:[%s528 + $0x20] sm:$0xf] %v545
                %v547 = vld [vmem:[%s527 + $0x6c] sm:$0xf]
                %548 = vst [vmem:[%s528 + $0x24] sm:$0xf] %v547
                %v549 = vld [vmem:[%s527 + $0x78] sm:$0xf]
                %550 = vst [vmem:[%s528 + $0x28] sm:$0xf] %v549
                %v551 = vld [vmem:[%s527 + $0x84] sm:$0xf]
                %552 = vst [vmem:[%s528 + $0x2c] sm:$0xf] %v551
                %v553 = vld [vmem:[%s527 + $0x90] sm:$0xf]
                %554 = vst [vmem:[%s528 + $0x30] sm:$0xf] %v553
                %v555 = vld [vmem:[%s527 + $0x9c] sm:$0xf]
                %556 = vst [vmem:[%s528 + $0x34] sm:$0xf] %v555
                %v557 = vld [vmem:[%s527 + $0xa8] sm:$0xf]
                %558 = vst [vmem:[%s528 + $0x38] sm:$0xf] %v557
                %v559 = vld [vmem:[%s527 + $0xb4] sm:$0xf]
                %560 = vst [vmem:[%s528 + $0x3c] sm:$0xf] %v559
                %v561 = vld [vmem:[%s527 + $0xc0] sm:$0xf]
                %562 = vst [vmem:[%s528 + $0x40] sm:$0xf] %v561
                %v563 = vld [vmem:[%s527 + $0xcc] sm:$0xf]
                %564 = vst [vmem:[%s528 + $0x44] sm:$0xf] %v563
                %v565 = vld [vmem:[%s527 + $0xd8] sm:$0xf]
                %566 = vst [vmem:[%s528 + $0x48] sm:$0xf] %v565
                %v567 = vld [vmem:[%s527 + $0xe4] sm:$0xf]
                %568 = vst [vmem:[%s528 + $0x4c] sm:$0xf] %v567
                %v569 = vld [vmem:[%s527 + $0xf0] sm:$0xf]
                %570 = vst [vmem:[%s528 + $0x50] sm:$0xf] %v569
                %v571 = vld [vmem:[%s527 + $0xfc] sm:$0xf]
                %572 = vst [vmem:[%s528 + $0x54] sm:$0xf] %v571
                %v573 = vld [vmem:[%s527 + $0x108] sm:$0xf]
                %574 = vst [vmem:[%s528 + $0x58] sm:$0xf] %v573
                %v575 = vld [vmem:[%s527 + $0x114] sm:$0xf]
                %576 = vst [vmem:[%s528 + $0x5c] sm:$0xf] %v575
                %v577 = vld [vmem:[%s527 + $0x120] sm:$0xf]
                %578 = vst [vmem:[%s528 + $0x60] sm:$0xf] %v577
                %v579 = vld [vmem:[%s527 + $0x12c] sm:$0xf]
                %580 = vst [vmem:[%s528 + $0x64] sm:$0xf] %v579
                %v581 = vld [vmem:[%s527 + $0x138] sm:$0xf]
                %582 = vst [vmem:[%s528 + $0x68] sm:$0xf] %v581
                %v583 = vld [vmem:[%s527 + $0x144] sm:$0xf]
                %584 = vst [vmem:[%s528 + $0x6c] sm:$0xf] %v583
                %v585 = vld [vmem:[%s527 + $0x150] sm:$0xf]
                %586 = vst [vmem:[%s528 + $0x70] sm:$0xf] %v585
                %v587 = vld [vmem:[%s527 + $0x15c] sm:$0xf]
                %588 = vst [vmem:[%s528 + $0x74] sm:$0xf] %v587
                %v589 = vld [vmem:[%s527 + $0x168] sm:$0xf]
                %590 = vst [vmem:[%s528 + $0x78] sm:$0xf] %v589
                %v591 = vld [vmem:[%s527 + $0x174] sm:$0xf]
                %592 = vst [vmem:[%s528 + $0x7c] sm:$0xf] %v591
                %v593 = vld [vmem:[%s527 + $0x180] sm:$0xf]
                %594 = vst [vmem:[%s528 + $0x80] sm:$0xf] %v593
                %v595 = vld [vmem:[%s527 + $0x18c] sm:$0xf]
                %596 = vst [vmem:[%s528 + $0x84] sm:$0xf] %v595
                %v597 = vld [vmem:[%s527 + $0x198] sm:$0xf]
                %598 = vst [vmem:[%s528 + $0x88] sm:$0xf] %v597
                %v599 = vld [vmem:[%s527 + $0x1a4] sm:$0xf]
                %600 = vst [vmem:[%s528 + $0x8c] sm:$0xf] %v599
                %v601 = vld [vmem:[%s527 + $0x1b0] sm:$0xf]
                %602 = vst [vmem:[%s528 + $0x90] sm:$0xf] %v601
                %v603 = vld [vmem:[%s527 + $0x1bc] sm:$0xf]
                %604 = vst [vmem:[%s528 + $0x94] sm:$0xf] %v603
                %v605 = vld [vmem:[%s527 + $0x1c8] sm:$0xf]
                %606 = vst [vmem:[%s528 + $0x98] sm:$0xf] %v605
                %v607 = vld [vmem:[%s527 + $0x1d4] sm:$0xf]
                %608 = vst [vmem:[%s528 + $0x9c] sm:$0xf] %v607
                %v609 = vld [vmem:[%s527 + $0x1e0] sm:$0xf]
                %610 = vst [vmem:[%s528 + $0xa0] sm:$0xf] %v609
                %v611 = vld [vmem:[%s527 + $0x1ec] sm:$0xf]
                %612 = vst [vmem:[%s528 + $0xa4] sm:$0xf] %v611
                %v613 = vld [vmem:[%s527 + $0x1f8] sm:$0xf]
                %614 = vst [vmem:[%s528 + $0xa8] sm:$0xf] %v613
                %v615 = vld [vmem:[%s527 + $0x204] sm:$0xf]
                %616 = vst [vmem:[%s528 + $0xac] sm:$0xf] %v615
                %v617 = vld [vmem:[%s527 + $0x210] sm:$0xf]
                %618 = vst [vmem:[%s528 + $0xb0] sm:$0xf] %v617
                %v619 = vld [vmem:[%s527 + $0x21c] sm:$0xf]
                %620 = vst [vmem:[%s528 + $0xb4] sm:$0xf] %v619
                %v621 = vld [vmem:[%s527 + $0x228] sm:$0xf]
                %622 = vst [vmem:[%s528 + $0xb8] sm:$0xf] %v621
                %v623 = vld [vmem:[%s527 + $0x234] sm:$0xf]
                %624 = vst [vmem:[%s528 + $0xbc] sm:$0xf] %v623
                %v625 = vld [vmem:[%s527 + $0x240] sm:$0xf]
                %626 = vst [vmem:[%s528 + $0xc0] sm:$0xf] %v625
                %v627 = vld [vmem:[%s527 + $0x24c] sm:$0xf]
                %628 = vst [vmem:[%s528 + $0xc4] sm:$0xf] %v627
                %v629 = vld [vmem:[%s527 + $0x258] sm:$0xf]
                %630 = vst [vmem:[%s528 + $0xc8] sm:$0xf] %v629
                %v631 = vld [vmem:[%s527 + $0x264] sm:$0xf]
                %632 = vst [vmem:[%s528 + $0xcc] sm:$0xf] %v631
                %v633 = vld [vmem:[%s527 + $0x270] sm:$0xf]
                %634 = vst [vmem:[%s528 + $0xd0] sm:$0xf] %v633
                %v635 = vld [vmem:[%s527 + $0x27c] sm:$0xf]
                %636 = vst [vmem:[%s528 + $0xd4] sm:$0xf] %v635
                %v637 = vld [vmem:[%s527 + $0x288] sm:$0xf]
                %638 = vst [vmem:[%s528 + $0xd8] sm:$0xf] %v637
                %v639 = vld [vmem:[%s527 + $0x294] sm:$0xf]
                %640 = vst [vmem:[%s528 + $0xdc] sm:$0xf] %v639
                %v641 = vld [vmem:[%s527 + $0x2a0] sm:$0xf]
                %642 = vst [vmem:[%s528 + $0xe0] sm:$0xf] %v641
                %v643 = vld [vmem:[%s527 + $0x2ac] sm:$0xf]
                %644 = vst [vmem:[%s528 + $0xe4] sm:$0xf] %v643
                %v645 = vld [vmem:[%s527 + $0x2b8] sm:$0xf]
                %646 = vst [vmem:[%s528 + $0xe8] sm:$0xf] %v645
                %v647 = vld [vmem:[%s527 + $0x2c4] sm:$0xf]
                %648 = vst [vmem:[%s528 + $0xec] sm:$0xf] %v647
                %v649 = vld [vmem:[%s527 + $0x2d0] sm:$0xf]
                %650 = vst [vmem:[%s528 + $0xf0] sm:$0xf] %v649
                %v651 = vld [vmem:[%s527 + $0x2dc] sm:$0xf]
                %652 = vst [vmem:[%s528 + $0xf4] sm:$0xf] %v651
                %v653 = vld [vmem:[%s527 + $0x2e8] sm:$0xf]
                %654 = vst [vmem:[%s528 + $0xf8] sm:$0xf] %v653
                %v655 = vld [vmem:[%s527 + $0x2f4] sm:$0xf]
                %656 = vst [vmem:[%s528 + $0xfc] sm:$0xf] %v655
              $region90: #{asff_level0_forward.7} parent=84 // loop_footer
                %s526 = sadd.s32 1, %s522
              $region91: #{asff_level0_forward.7} parent=84 // loop_footer_branch
                %521 = sbr.rel target = $region87
              $region92: #{asff_level0_forward.7} parent=84 // loop_exit
                _
            $region85: #{asff_level0_forward.7} parent=76 // pred_fallthru
              _
          $region77: #{asff_level0_forward.7} parent=72 // pred_fallthru
            _
          %804 = vnop
        $region73: #{asff_level0_forward.7} parent=27 // pred_fallthru
          _
      $region28: #{asff_level0_forward.7} parent=5 // pred_fallthru
        _
      %p805 = scmp.le.s32.totalorder 1, %s11
      %p806 = scmp.lt.s32.totalorder %s11, 3
      %p807 = pnand %p805, %p806
      %p808 = pneg %p807
      // Predicated region
      $region111: #{asff_level0_forward.7} parent=5 // pred_check
        _
      $region112: #{asff_level0_forward.7} parent=5 // pred_check_branch
        %810 = sbr.rel (%p807) target = $region114
      $region113: #{asff_level0_forward.7} parent=5 // pred_region
        %s811 = ssub.s32 %s11, 1
        %s812 = sand.u32 %s38, 1
        %s813 = sand.u32 %s38, 1
        %s814 = smul.addr %s813, 256
        %s815 = scalar_lea.vmem [#allocation2], %s814
        // Predicated region
        $region115: #{asff_level0_forward.7} parent=113 // pred_check
          %p816 = pneg %p51
        $region116: #{asff_level0_forward.7} parent=113 // pred_check_branch
          %818 = sbr.rel (%p816) target = $region118
        $region117: #{asff_level0_forward.7} parent=113 // pred_region
          _
        $region118: #{asff_level0_forward.7} parent=113 // pred_fallthru
          _
        %s819 = sand.u32 %s68, 1
        %s820 = sand.u32 %s68, 1
        %s821 = smul.addr %s820, 256
        %s822 = scalar_lea.vmem [#allocation3], %s821
        // Predicated region
        $region119: #{asff_level0_forward.7} parent=113 // pred_check
          %p823 = pneg %p81
        $region120: #{asff_level0_forward.7} parent=113 // pred_check_branch
          %825 = sbr.rel (%p823) target = $region122
        $region121: #{asff_level0_forward.7} parent=113 // pred_region
          _
        $region122: #{asff_level0_forward.7} parent=113 // pred_fallthru
          _
        %s826 = sand.u32 %s38, 1
        %s827 = sand.u32 %s38, 1
        %s828 = smul.addr %s827, 256
        %s829 = scalar_lea.vmem [#allocation2], %s828
        %p830 = pneg %p51
        %p831 = pneg %p48
        %s832 = sand.u32 %s68, 1
        %s833 = sand.u32 %s68, 1
        %s834 = smul.addr %s833, 256
        %s835 = scalar_lea.vmem [#allocation3], %s834
        %p836 = pneg %p81
        %p837 = pneg %p78
        %p838 = pneg %p102
        %p839 = pneg %p99
        %p840 = pneg %p123
        %p841 = pneg %p120
        %p842 = pneg %p144
        %p843 = pneg %p141
        %p844 = pneg %p172
        %p845 = pneg %p169
        %p846 = scmp.lt.s32.totalorder %s20, 1
        %s847 = scalar_select %p846, %s20, 1
        %p848 = scmp.lt.s32.totalorder %s21, 0
        %s849 = scalar_select %p848, %s21, 0
        %s850 = smul.addr %s847, 4
        %s851 = sadd.s32 %s849, %s850
        %s852 = smul.addr %s851, 4
        %s853 = scalar_lea.vmem %s5, %s852
        %s854 = sadd.s32 %s21, 1
        %p855 = scmp.lt.s32.totalorder %s20, 1
        %s856 = scalar_select %p855, %s20, 1
        %p857 = scmp.lt.s32.totalorder %s21, 0
        %s858 = scalar_select %p857, %s21, 0
        %s859 = smul.addr %s856, 4
        %s860 = sadd.s32 %s858, %s859
        %s861 = smul.addr %s860, 4
        %s862 = scalar_lea.vmem %s5, %s861
        %v864 = vld [vmem:[%s815] sm:$0xf]
        %v865 = vld [vmem:[%s815 + $0x4] sm:$0xf]
        %v866 = vld [vmem:[%s815 + $0x8] sm:$0xf]
        %v867 = vld [vmem:[%s815 + $0xc] sm:$0xf]
        %v868 = vld [vmem:[%s815 + $0x10] sm:$0xf]
        %v869 = vld [vmem:[%s815 + $0x14] sm:$0xf]
        %v870 = vld [vmem:[%s815 + $0x18] sm:$0xf]
        %v871 = vld [vmem:[%s815 + $0x1c] sm:$0xf]
        %v872 = vld [vmem:[%s815 + $0x20] sm:$0xf]
        %v873 = vld [vmem:[%s815 + $0x24] sm:$0xf]
        %v874 = vld [vmem:[%s815 + $0x28] sm:$0xf]
        %v875 = vld [vmem:[%s815 + $0x2c] sm:$0xf]
        %v876 = vld [vmem:[%s815 + $0x30] sm:$0xf]
        %v877 = vld [vmem:[%s815 + $0x34] sm:$0xf]
        %v878 = vld [vmem:[%s815 + $0x38] sm:$0xf]
        %v879 = vld [vmem:[%s815 + $0x3c] sm:$0xf]
        %v880 = vld [vmem:[%s815 + $0x40] sm:$0xf]
        %v881 = vld [vmem:[%s815 + $0x44] sm:$0xf]
        %v882 = vld [vmem:[%s815 + $0x48] sm:$0xf]
        %v883 = vld [vmem:[%s815 + $0x4c] sm:$0xf]
        %v884 = vld [vmem:[%s815 + $0x50] sm:$0xf]
        %v885 = vld [vmem:[%s815 + $0x54] sm:$0xf]
        %v886 = vld [vmem:[%s815 + $0x58] sm:$0xf]
        %v887 = vld [vmem:[%s815 + $0x5c] sm:$0xf]
        %v888 = vld [vmem:[%s815 + $0x60] sm:$0xf]
        %v889 = vld [vmem:[%s815 + $0x64] sm:$0xf]
        %v890 = vld [vmem:[%s815 + $0x68] sm:$0xf]
        %v891 = vld [vmem:[%s815 + $0x6c] sm:$0xf]
        %v892 = vld [vmem:[%s815 + $0x70] sm:$0xf]
        %v893 = vld [vmem:[%s815 + $0x74] sm:$0xf]
        %v894 = vld [vmem:[%s815 + $0x78] sm:$0xf]
        %v895 = vld [vmem:[%s815 + $0x7c] sm:$0xf]
        %v896 = vld [vmem:[%s815 + $0x80] sm:$0xf]
        %v897 = vld [vmem:[%s815 + $0x84] sm:$0xf]
        %v898 = vld [vmem:[%s815 + $0x88] sm:$0xf]
        %v899 = vld [vmem:[%s815 + $0x8c] sm:$0xf]
        %v900 = vld [vmem:[%s815 + $0x90] sm:$0xf]
        %v901 = vld [vmem:[%s815 + $0x94] sm:$0xf]
        %v902 = vld [vmem:[%s815 + $0x98] sm:$0xf]
        %v903 = vld [vmem:[%s815 + $0x9c] sm:$0xf]
        %v904 = vld [vmem:[%s815 + $0xa0] sm:$0xf]
        %v905 = vld [vmem:[%s815 + $0xa4] sm:$0xf]
        %v906 = vld [vmem:[%s815 + $0xa8] sm:$0xf]
        %v907 = vld [vmem:[%s815 + $0xac] sm:$0xf]
        %v908 = vld [vmem:[%s815 + $0xb0] sm:$0xf]
        %v909 = vld [vmem:[%s815 + $0xb4] sm:$0xf]
        %v910 = vld [vmem:[%s815 + $0xb8] sm:$0xf]
        %v911 = vld [vmem:[%s815 + $0xbc] sm:$0xf]
        %v912 = vld [vmem:[%s815 + $0xc0] sm:$0xf]
        %v913 = vld [vmem:[%s815 + $0xc4] sm:$0xf]
        %v914 = vld [vmem:[%s815 + $0xc8] sm:$0xf]
        %v915 = vld [vmem:[%s815 + $0xcc] sm:$0xf]
        %v916 = vld [vmem:[%s815 + $0xd0] sm:$0xf]
        %v917 = vld [vmem:[%s815 + $0xd4] sm:$0xf]
        %v918 = vld [vmem:[%s815 + $0xd8] sm:$0xf]
        %v919 = vld [vmem:[%s815 + $0xdc] sm:$0xf]
        %v920 = vld [vmem:[%s815 + $0xe0] sm:$0xf]
        %v921 = vld [vmem:[%s815 + $0xe4] sm:$0xf]
        %v922 = vld [vmem:[%s815 + $0xe8] sm:$0xf]
        %v923 = vld [vmem:[%s815 + $0xec] sm:$0xf]
        %v924 = vld [vmem:[%s815 + $0xf0] sm:$0xf]
        %v925 = vld [vmem:[%s815 + $0xf4] sm:$0xf]
        %v926 = vld [vmem:[%s815 + $0xf8] sm:$0xf]
        %v927 = vld [vmem:[%s815 + $0xfc] sm:$0xf]
        %v928 = vld [vmem:[%s822] sm:$0xf]
        %v929 = vld [vmem:[%s822 + $0x4] sm:$0xf]
        %v930 = vld [vmem:[%s822 + $0x8] sm:$0xf]
        %v931 = vld [vmem:[%s822 + $0xc] sm:$0xf]
        %v932 = vld [vmem:[%s822 + $0x10] sm:$0xf]
        %v933 = vld [vmem:[%s822 + $0x14] sm:$0xf]
        %v934 = vld [vmem:[%s822 + $0x18] sm:$0xf]
        %v935 = vld [vmem:[%s822 + $0x1c] sm:$0xf]
        %v936 = vld [vmem:[%s822 + $0x20] sm:$0xf]
        %v937 = vld [vmem:[%s822 + $0x24] sm:$0xf]
        %v938 = vld [vmem:[%s822 + $0x28] sm:$0xf]
        %v939 = vld [vmem:[%s822 + $0x2c] sm:$0xf]
        %v940 = vld [vmem:[%s822 + $0x30] sm:$0xf]
        %v941 = vld [vmem:[%s822 + $0x34] sm:$0xf]
        %v942 = vld [vmem:[%s822 + $0x38] sm:$0xf]
        %v943 = vld [vmem:[%s822 + $0x3c] sm:$0xf]
        %v944 = vld [vmem:[%s822 + $0x40] sm:$0xf]
        %v945 = vld [vmem:[%s822 + $0x44] sm:$0xf]
        %v946 = vld [vmem:[%s822 + $0x48] sm:$0xf]
        %v947 = vld [vmem:[%s822 + $0x4c] sm:$0xf]
        %v948 = vld [vmem:[%s822 + $0x50] sm:$0xf]
        %v949 = vld [vmem:[%s822 + $0x54] sm:$0xf]
        %v950 = vld [vmem:[%s822 + $0x58] sm:$0xf]
        %v951 = vld [vmem:[%s822 + $0x5c] sm:$0xf]
        %v952 = vld [vmem:[%s822 + $0x60] sm:$0xf]
        %v953 = vld [vmem:[%s822 + $0x64] sm:$0xf]
        %v954 = vld [vmem:[%s822 + $0x68] sm:$0xf]
        %v955 = vld [vmem:[%s822 + $0x6c] sm:$0xf]
        %v956 = vld [vmem:[%s822 + $0x70] sm:$0xf]
        %v957 = vld [vmem:[%s822 + $0x74] sm:$0xf]
        %v958 = vld [vmem:[%s822 + $0x78] sm:$0xf]
        %v959 = vld [vmem:[%s822 + $0x7c] sm:$0xf]
        %v960 = vld [vmem:[%s822 + $0x80] sm:$0xf]
        %v961 = vld [vmem:[%s822 + $0x84] sm:$0xf]
        %v962 = vld [vmem:[%s822 + $0x88] sm:$0xf]
        %v963 = vld [vmem:[%s822 + $0x8c] sm:$0xf]
        %v964 = vld [vmem:[%s822 + $0x90] sm:$0xf]
        %v965 = vld [vmem:[%s822 + $0x94] sm:$0xf]
        %v966 = vld [vmem:[%s822 + $0x98] sm:$0xf]
        %v967 = vld [vmem:[%s822 + $0x9c] sm:$0xf]
        %v968 = vld [vmem:[%s822 + $0xa0] sm:$0xf]
        %v969 = vld [vmem:[%s822 + $0xa4] sm:$0xf]
        %v970 = vld [vmem:[%s822 + $0xa8] sm:$0xf]
        %v971 = vld [vmem:[%s822 + $0xac] sm:$0xf]
        %v972 = vld [vmem:[%s822 + $0xb0] sm:$0xf]
        %v973 = vld [vmem:[%s822 + $0xc0] sm:$0xf]
        %v974 = vld [vmem:[%s822 + $0xc4] sm:$0xf]
        %v975 = vld [vmem:[%s822 + $0xc8] sm:$0xf]
        %v976 = vld [vmem:[%s822 + $0xcc] sm:$0xf]
        %v977 = vld [vmem:[%s822 + $0xd0] sm:$0xf]
        %v978 = vld [vmem:[%s822 + $0xe0] sm:$0xf]
        %v979 = vld [vmem:[%s822 + $0xe4] sm:$0xf]
        %v980 = vld [vmem:[%s822 + $0xe8] sm:$0xf]
        %v981 = vld [vmem:[%s822 + $0xec] sm:$0xf]
        %v982 = vld [vmem:[%s822 + $0xf0] sm:$0xf]
        %v983 = vmax.bf16 %v864, %v865
        %v984 = vmax.bf16 %v983, %v866
        %v985 = vmax.bf16 %v984, %v867
        %v986 = vmax.bf16 %v985, %v868
        %v987 = vmax.bf16 %v986, %v872
        %v988 = vmax.bf16 %v987, %v873
        %v989 = vmax.bf16 %v988, %v874
        %v990 = vmax.bf16 %v989, %v875
        %v991 = vmax.bf16 %v990, %v876
        %v992 = vmax.bf16 %v991, %v880
        %v993 = vmax.bf16 %v992, %v881
        %v994 = vmax.bf16 %v993, %v882
        %v995 = vmax.bf16 %v994, %v883
        %v996 = vmax.bf16 %v995, %v884
        %v997 = vmax.bf16 %v996, %v888
        %v998 = vmax.bf16 %v997, %v889
        %v999 = vmax.bf16 %v998, %v890
        %v1000 = vmax.bf16 %v999, %v891
        %v1001 = vmax.bf16 %v1000, %v892
        %v1002 = vmax.bf16 %v1001, %v896
        %v1003 = vmax.bf16 %v1002, %v897
        %v1004 = vmax.bf16 %v1003, %v898
        %v1005 = vmax.bf16 %v1004, %v899
        %v1006 = vmax.bf16 %v1005, %v900
        %v1007 = vmax.bf16 %v868, %v869
        %v1008 = vmax.bf16 %v1007, %v870
        %v1009 = vmax.bf16 %v1008, %v871
        %1012 = vrot.lane.b32.xlu0 %v864, 127
        %v1013 = vpop.permute.xlu0 %1012
        %1014 = vrot.lane.b32.xlu0 %v928, 127
        %v1015 = vpop.permute.xlu0 %1014
        %vm1016 = vcmask 1039360
        %v1017 = vsel %vm1016, %v1013, %v1015
        %v1019 = vmax.bf16 %v1009, %v1017
        %v1020 = vmax.bf16 %v1019, %v876
        %v1021 = vmax.bf16 %v1020, %v877
        %v1022 = vmax.bf16 %v1021, %v878
        %v1023 = vmax.bf16 %v1022, %v879
        %1026 = vrot.lane.b32.xlu0 %v872, 127
        %v1027 = vpop.permute.xlu0 %1026
        %1028 = vrot.lane.b32.xlu0 %v936, 127
        %v1029 = vpop.permute.xlu0 %1028
        %v1030 = vsel %vm1016, %v1027, %v1029
        %v1032 = vmax.bf16 %v1023, %v1030
        %v1033 = vmax.bf16 %v1032, %v884
        %v1034 = vmax.bf16 %v1033, %v885
        %v1035 = vmax.bf16 %v1034, %v886
        %v1036 = vmax.bf16 %v1035, %v887
        %1039 = vrot.lane.b32.xlu0 %v880, 127
        %v1040 = vpop.permute.xlu0 %1039
        %1041 = vrot.lane.b32.xlu0 %v944, 127
        %v1042 = vpop.permute.xlu0 %1041
        %v1043 = vsel %vm1016, %v1040, %v1042
        %v1045 = vmax.bf16 %v1036, %v1043
        %v1046 = vmax.bf16 %v1045, %v892
        %v1047 = vmax.bf16 %v1046, %v893
        %v1048 = vmax.bf16 %v1047, %v894
        %v1049 = vmax.bf16 %v1048, %v895
        %1052 = vrot.lane.b32.xlu0 %v888, 127
        %v1053 = vpop.permute.xlu0 %1052
        %1054 = vrot.lane.b32.xlu0 %v952, 127
        %v1055 = vpop.permute.xlu0 %1054
        %v1056 = vsel %vm1016, %v1053, %v1055
        %v1058 = vmax.bf16 %v1049, %v1056
        %v1059 = vmax.bf16 %v1058, %v900
        %v1060 = vmax.bf16 %v1059, %v901
        %v1061 = vmax.bf16 %v1060, %v902
        %v1062 = vmax.bf16 %v1061, %v903
        %1065 = vrot.lane.b32.xlu0 %v896, 127
        %v1066 = vpop.permute.xlu0 %1065
        %1067 = vrot.lane.b32.xlu0 %v960, 127
        %v1068 = vpop.permute.xlu0 %1067
        %v1069 = vsel %vm1016, %v1066, %v1068
        %v1071 = vmax.bf16 %v1062, %v1069
        %v1072 = vmax.bf16 %v928, %v929
        %v1073 = vmax.bf16 %v1072, %v930
        %v1074 = vmax.bf16 %v1073, %v931
        %v1075 = vmax.bf16 %v1074, %v932
        %v1076 = vmax.bf16 %v1075, %v936
        %v1077 = vmax.bf16 %v1076, %v937
        %v1078 = vmax.bf16 %v1077, %v938
        %v1079 = vmax.bf16 %v1078, %v939
        %v1080 = vmax.bf16 %v1079, %v940
        %v1081 = vmax.bf16 %v1080, %v944
        %v1082 = vmax.bf16 %v1081, %v945
        %v1083 = vmax.bf16 %v1082, %v946
        %v1084 = vmax.bf16 %v1083, %v947
        %v1085 = vmax.bf16 %v1084, %v948
        %v1086 = vmax.bf16 %v1085, %v952
        %v1087 = vmax.bf16 %v1086, %v953
        %v1088 = vmax.bf16 %v1087, %v954
        %v1089 = vmax.bf16 %v1088, %v955
        %v1090 = vmax.bf16 %v1089, %v956
        %v1091 = vmax.bf16 %v1090, %v960
        %v1092 = vmax.bf16 %v1091, %v961
        %v1093 = vmax.bf16 %v1092, %v962
        %v1094 = vmax.bf16 %v1093, %v963
        %v1095 = vmax.bf16 %v1094, %v964
        %v1096 = vmax.bf16 %v896, %v897
        %v1097 = vmax.bf16 %v1096, %v898
        %v1098 = vmax.bf16 %v1097, %v899
        %v1099 = vmax.bf16 %v1098, %v900
        %v1100 = vmax.bf16 %v1099, %v904
        %v1101 = vmax.bf16 %v1100, %v905
        %v1102 = vmax.bf16 %v1101, %v906
        %v1103 = vmax.bf16 %v1102, %v907
        %v1104 = vmax.bf16 %v1103, %v908
        %v1105 = vmax.bf16 %v1104, %v912
        %v1106 = vmax.bf16 %v1105, %v913
        %v1107 = vmax.bf16 %v1106, %v914
        %v1108 = vmax.bf16 %v1107, %v915
        %v1109 = vmax.bf16 %v1108, %v916
        %v1110 = vmax.bf16 %v1109, %v920
        %v1111 = vmax.bf16 %v1110, %v921
        %v1112 = vmax.bf16 %v1111, %v922
        %v1113 = vmax.bf16 %v1112, %v923
        %v1114 = vmax.bf16 %v1113, %v924
        %1115 = vrot.lane.b32.xlu0 %v864, 119
        %v1116 = vpop.permute.xlu0 %1115
        %1117 = vrot.lane.b32.xlu0 %v928, 119
        %v1118 = vpop.permute.xlu0 %1117
        %vm1119 = vcmask 973824
        %v1120 = vsel %vm1119, %v1116, %v1118
        %v1122 = vmax.bf16 %v1114, %v1120
        %1125 = vrot.lane.b32.xlu0 %v865, 119
        %v1126 = vpop.permute.xlu0 %1125
        %1127 = vrot.lane.b32.xlu0 %v929, 119
        %v1128 = vpop.permute.xlu0 %1127
        %v1129 = vsel %vm1119, %v1126, %v1128
        %v1131 = vmax.bf16 %v1122, %v1129
        %1134 = vrot.lane.b32.xlu0 %v866, 119
        %v1135 = vpop.permute.xlu0 %1134
        %1136 = vrot.lane.b32.xlu0 %v930, 119
        %v1137 = vpop.permute.xlu0 %1136
        %v1138 = vsel %vm1119, %v1135, %v1137
        %v1140 = vmax.bf16 %v1131, %v1138
        %1143 = vrot.lane.b32.xlu0 %v867, 119
        %v1144 = vpop.permute.xlu0 %1143
        %1145 = vrot.lane.b32.xlu0 %v931, 119
        %v1146 = vpop.permute.xlu0 %1145
        %v1147 = vsel %vm1119, %v1144, %v1146
        %v1149 = vmax.bf16 %v1140, %v1147
        %1152 = vrot.lane.b32.xlu0 %v868, 119
        %v1153 = vpop.permute.xlu0 %1152
        %1154 = vrot.lane.b32.xlu0 %v932, 119
        %v1155 = vpop.permute.xlu0 %1154
        %v1156 = vsel %vm1119, %v1153, %v1155
        %v1158 = vmax.bf16 %v1149, %v1156
        %v1159 = vmax.bf16 %v900, %v901
        %v1160 = vmax.bf16 %v1159, %v902
        %v1161 = vmax.bf16 %v1160, %v903
        %v1162 = vmax.bf16 %v1161, %v1069
        %v1163 = vmax.bf16 %v1162, %v908
        %v1164 = vmax.bf16 %v1163, %v909
        %v1165 = vmax.bf16 %v1164, %v910
        %v1166 = vmax.bf16 %v1165, %v911
        %1169 = vrot.lane.b32.xlu0 %v904, 127
        %v1170 = vpop.permute.xlu0 %1169
        %1171 = vrot.lane.b32.xlu0 %v968, 127
        %v1172 = vpop.permute.xlu0 %1171
        %v1173 = vsel %vm1016, %v1170, %v1172
        %v1175 = vmax.bf16 %v1166, %v1173
        %v1176 = vmax.bf16 %v1175, %v916
        %v1177 = vmax.bf16 %v1176, %v917
        %v1178 = vmax.bf16 %v1177, %v918
        %v1179 = vmax.bf16 %v1178, %v919
        %1182 = vrot.lane.b32.xlu0 %v912, 127
        %v1183 = vpop.permute.xlu0 %1182
        %1184 = vrot.lane.b32.xlu0 %v973, 127
        %v1185 = vpop.permute.xlu0 %1184
        %v1186 = vsel %vm1016, %v1183, %v1185
        %v1188 = vmax.bf16 %v1179, %v1186
        %v1189 = vmax.bf16 %v1188, %v924
        %v1190 = vmax.bf16 %v1189, %v925
        %v1191 = vmax.bf16 %v1190, %v926
        %v1192 = vmax.bf16 %v1191, %v927
        %1195 = vrot.lane.b32.xlu0 %v920, 127
        %v1196 = vpop.permute.xlu0 %1195
        %1197 = vrot.lane.b32.xlu0 %v978, 127
        %v1198 = vpop.permute.xlu0 %1197
        %v1199 = vsel %vm1016, %v1196, %v1198
        %v1201 = vmax.bf16 %v1192, %v1199
        %v1202 = vmax.bf16 %v1201, %v1156
        %1205 = vrot.lane.b32.xlu0 %v869, 119
        %v1206 = vpop.permute.xlu0 %1205
        %1207 = vrot.lane.b32.xlu0 %v933, 119
        %v1208 = vpop.permute.xlu0 %1207
        %v1209 = vsel %vm1119, %v1206, %v1208
        %v1211 = vmax.bf16 %v1202, %v1209
        %1214 = vrot.lane.b32.xlu0 %v870, 119
        %v1215 = vpop.permute.xlu0 %1214
        %1216 = vrot.lane.b32.xlu0 %v934, 119
        %v1217 = vpop.permute.xlu0 %1216
        %v1218 = vsel %vm1119, %v1215, %v1217
        %v1220 = vmax.bf16 %v1211, %v1218
        %1223 = vrot.lane.b32.xlu0 %v871, 119
        %v1224 = vpop.permute.xlu0 %1223
        %1225 = vrot.lane.b32.xlu0 %v935, 119
        %v1226 = vpop.permute.xlu0 %1225
        %v1227 = vsel %vm1119, %v1224, %v1226
        %v1229 = vmax.bf16 %v1220, %v1227
        %1230 = vrot.lane.b32.xlu0 %v864, 118
        %v1231 = vpop.permute.xlu0 %1230
        %1232 = vrot.lane.b32.xlu0 %v928, 118
        %v1233 = vpop.permute.xlu0 %1232
        %vm1234 = vcmask 965632
        %v1235 = vsel %vm1234, %v1231, %v1233
        %v1237 = vmax.bf16 %v1229, %v1235
        %v1238 = vmax.bf16 %v960, %v961
        %v1239 = vmax.bf16 %v1238, %v962
        %v1240 = vmax.bf16 %v1239, %v963
        %v1241 = vmax.bf16 %v1240, %v964
        %v1242 = vmax.bf16 %v1241, %v968
        %v1243 = vmax.bf16 %v1242, %v969
        %v1244 = vmax.bf16 %v1243, %v970
        %v1245 = vmax.bf16 %v1244, %v971
        %v1246 = vmax.bf16 %v1245, %v972
        %v1247 = vmax.bf16 %v1246, %v973
        %v1248 = vmax.bf16 %v1247, %v974
        %v1249 = vmax.bf16 %v1248, %v975
        %v1250 = vmax.bf16 %v1249, %v976
        %v1251 = vmax.bf16 %v1250, %v977
        %v1252 = vmax.bf16 %v1251, %v978
        %v1253 = vmax.bf16 %v1252, %v979
        %v1254 = vmax.bf16 %v1253, %v980
        %v1255 = vmax.bf16 %v1254, %v981
        %v1256 = vmax.bf16 %v1255, %v982
        %v1258 = vmax.bf16 %v1256, %v1118
        %v1260 = vmax.bf16 %v1258, %v1128
        %v1262 = vmax.bf16 %v1260, %v1137
        %v1264 = vmax.bf16 %v1262, %v1146
        %v1266 = vmax.bf16 %v1264, %v1155
        %v1267 = vmax.bf16 %v932, %v933
        %v1268 = vmax.bf16 %v1267, %v934
        %v1269 = vmax.bf16 %v1268, %v935
        %v1271 = vmax.bf16 %v1269, %v1015
        %v1272 = vmax.bf16 %v1271, %v940
        %v1273 = vmax.bf16 %v1272, %v941
        %v1274 = vmax.bf16 %v1273, %v942
        %v1275 = vmax.bf16 %v1274, %v943
        %v1277 = vmax.bf16 %v1275, %v1029
        %v1278 = vmax.bf16 %v1277, %v948
        %v1279 = vmax.bf16 %v1278, %v949
        %v1280 = vmax.bf16 %v1279, %v950
        %v1281 = vmax.bf16 %v1280, %v951
        %v1283 = vmax.bf16 %v1281, %v1042
        %v1284 = vmax.bf16 %v1283, %v956
        %v1285 = vmax.bf16 %v1284, %v957
        %v1286 = vmax.bf16 %v1285, %v958
        %v1287 = vmax.bf16 %v1286, %v959
        %v1289 = vmax.bf16 %v1287, %v1055
        %v1290 = vmax.bf16 %v1289, %v964
        %v1291 = vmax.bf16 %v1290, %v965
        %v1292 = vmax.bf16 %v1291, %v966
        %v1293 = vmax.bf16 %v1292, %v967
        %v1295 = vmax.bf16 %v1293, %v1068
        %v1297 = vrot.slane %v1071, 4
        %1300 = vrot.lane.b32.xlu0 %v1006, 127
        %v1301 = vpop.permute.xlu0 %1300
        %1302 = vrot.lane.b32.xlu0 %v1095, 127
        %v1303 = vpop.permute.xlu0 %1302
        %v1304 = vsel %vm1016, %v1301, %v1303
        %v1306 = vrot.slane %v1158, 4
        %v1308 = vrot.slane %v1266, 4
        %1309 = vrot.lane.b32.xlu0 %v1306, 127
        %v1310 = vpop.permute.xlu0 %1309
        %1311 = vrot.lane.b32.xlu0 %v1308, 127
        %v1312 = vpop.permute.xlu0 %1311
        %v1313 = vsel %vm1016, %v1310, %v1312
        %1314 = vrot.lane.b32.xlu0 %v1006, 119
        %v1315 = vpop.permute.xlu0 %1314
        %1316 = vrot.lane.b32.xlu0 %v1095, 119
        %v1317 = vpop.permute.xlu0 %1316
        %v1318 = vsel %vm1119, %v1315, %v1317
        %v1320 = vrot.slane %v1295, 4
        %1321 = vrot.lane.b32.xlu0 %v1297, 119
        %v1322 = vpop.permute.xlu0 %1321
        %1323 = vrot.lane.b32.xlu0 %v1320, 119
        %v1324 = vpop.permute.xlu0 %1323
        %v1325 = vsel %vm1119, %v1322, %v1324
        %1326 = vrot.lane.b32.xlu0 %v1006, 118
        %v1327 = vpop.permute.xlu0 %1326
        %1328 = vrot.lane.b32.xlu0 %v1095, 118
        %v1329 = vpop.permute.xlu0 %1328
        %v1330 = vsel %vm1234, %v1327, %v1329
        %vm1331 = vcmask 1043456
        %v1334 = vsel %vm1331, %v1006, %v1297
        %v1338 = vsel %vm1331, %v1304, %v1306
        %v1342 = vsel %vm1331, %v1237, %v1313
        %v1346 = vsel %vm1331, %v1318, %v1325
        %v1348 = vld [vmem:[%s2] sm:$0xf]
        %v1349 = vld [vmem:[%s2 + $0x4] sm:$0xf]
        %v1350 = vld [vmem:[%s2 + $0x8] sm:$0xf]
        %v1351 = vld [vmem:[%s2 + $0xc] sm:$0xf]
        %v1356 = vunpack.c.l.b16 %v1348
        %v1357 = vunpack.c.l.b16 %v1349
        %v1358 = vunpack.c.l.b16 %v1350
        %v1359 = vunpack.c.l.b16 %v1351
        %v1360 = vpack.c.b16 %v1357, %v1356
        %v1361 = vpack.c.b16 %v1359, %v1358
        %vm1362 = vcmask 588800
        %v1364 = vsel %vm1362, %v1360, 0
        %v1367 = vsel %vm1362, %v1361, 0
        %v1370 = vsel %vm1331, %v1330, 0
        %1372 = vmatprep.subr.bf16.mxu0 0
        %1373 = vmatpush1.bf16.msra.mxu0 %v1334
        %1374 = vmatprep.subr.bf16.mxu0 0
        %1375 = vmatpush1.bf16.msra.mxu0 %v1338
        %1376 = vmatprep.subr.bf16.mxu0 0
        %1377 = vmatpush1.bf16.msra.mxu0 %v1342
        %1378 = vmatprep.subr.bf16.mxu0 0
        %1379 = vmatpush1.bf16.msra.mxu0 %v1346
        %1380 = vmatprep.subr.bf16.mxu0 0
        %1381 = vmatpush1.bf16.msra.mxu0 %v1370
        %1382 = vmatprep.subr.bf16.mxu0 0
        %1383 = vmatpush1.bf16.msra.mxu0 0
        %1384 = vmatprep.subr.bf16.mxu0 0
        %1385 = vmatpush1.bf16.msra.mxu0 0
        %1386 = vmatprep.subr.bf16.mxu0 0
        %1387 = vmatpush1.bf16.msra.mxu0 0
        %1388 = vmatprep.subr.bf16.mxu0 0
        %1389 = vmatpush1.bf16.msra.mxu0 0
        %1390 = vmatprep.subr.bf16.mxu0 0
        %1391 = vmatpush1.bf16.msra.mxu0 0
        %1392 = vmatprep.subr.bf16.mxu0 0
        %1393 = vmatpush1.bf16.msra.mxu0 0
        %1394 = vmatprep.subr.bf16.mxu0 0
        %1395 = vmatpush1.bf16.msra.mxu0 0
        %1396 = vmatprep.subr.bf16.mxu0 0
        %1397 = vmatpush1.bf16.msra.mxu0 0
        %1398 = vmatprep.subr.bf16.mxu0 0
        %1399 = vmatpush1.bf16.msra.mxu0 0
        %1400 = vmatprep.subr.bf16.mxu0 0
        %1401 = vmatpush1.bf16.msra.mxu0 0
        %1402 = vmatprep.subr.bf16.mxu0 0
        %1403 = vmatpush1.bf16.msra.mxu0 0
        %1404 = vmatprep.mubr.bf16.mxu0 0
        %1405 = vmatmul.mubr.bf16.gmra.mrb[0].mxu0 %v1364
        %v1406 = vpop.f32.mrb[0].mxu0
        %v1407 = vadd.f32 0.0, %v1406
        %v1408 = vpop.f32.mrb[0].mxu0
        %v1409 = vpop.f32.mrb[0].mxu0
        %v1410 = vadd.f32 0.0, %v1409
        %v1411 = vpop.f32.mrb[0].mxu0
        %1412 = vmatprep.mubr.bf16.mxu0 0
        %1413 = vmatmul.mubr.bf16.gmra.mrb[0].mxu0 %v1367
        %v1414 = vpop.f32.mrb[0].mxu0
        %v1415 = vadd.f32 0.0, %v1414
        %v1416 = vpop.f32.mrb[0].mxu0
        %v1417 = vpop.f32.mrb[0].mxu0
        %v1418 = vadd.f32 0.0, %v1417
        %v1419 = vpop.f32.mrb[0].mxu0
        %1420 = vdwg.mxu0
        %v1421 = vld [vmem:[%s3] sm:$0xff]
        %v1422 = vld [vmem:[%s3 + $0x8] sm:$0xff]
        %v1423 = vld [vmem:[%s3 + $0x10] sm:$0xff]
        %v1424 = vld [vmem:[%s3 + $0x18] sm:$0xff]
        %1426 = vset.pattern.permute.xlu0 0
        %1427 = vperm.xlu0 %1426, %v1421
        %v1428 = vpop.permute.xlu0 %1427
        %1431 = vset.pattern.permute.xlu0 0
        %1432 = vperm.xlu0 %1431, %v1422
        %v1433 = vpop.permute.xlu0 %1432
        %1436 = vset.pattern.permute.xlu0 0
        %1437 = vperm.xlu0 %1436, %v1423
        %v1438 = vpop.permute.xlu0 %1437
        %1441 = vset.pattern.permute.xlu0 0
        %1442 = vperm.xlu0 %1441, %v1424
        %v1443 = vpop.permute.xlu0 %1442
        %v1445 = vmul.f32 %v1407, %v1428
        %v1446 = vmul.f32 %v1410, %v1433
        %v1447 = vmul.f32 %v1415, %v1438
        %v1448 = vmul.f32 %v1418, %v1443
        %v1449 = vld [vmem:[%s4] sm:$0xff]
        %v1450 = vld [vmem:[%s4 + $0x8] sm:$0xff]
        %v1451 = vld [vmem:[%s4 + $0x10] sm:$0xff]
        %v1452 = vld [vmem:[%s4 + $0x18] sm:$0xff]
        %1454 = vset.pattern.permute.xlu0 0
        %1455 = vperm.xlu0 %1454, %v1449
        %v1456 = vpop.permute.xlu0 %1455
        %1459 = vset.pattern.permute.xlu0 0
        %1460 = vperm.xlu0 %1459, %v1450
        %v1461 = vpop.permute.xlu0 %1460
        %1464 = vset.pattern.permute.xlu0 0
        %1465 = vperm.xlu0 %1464, %v1451
        %v1466 = vpop.permute.xlu0 %1465
        %1469 = vset.pattern.permute.xlu0 0
        %1470 = vperm.xlu0 %1469, %v1452
        %v1471 = vpop.permute.xlu0 %1470
        %v1473 = vadd.f32 %v1445, %v1456
        %v1474 = vadd.f32 %v1446, %v1461
        %v1475 = vadd.f32 %v1447, %v1466
        %v1476 = vadd.f32 %v1448, %v1471
        %v1477 = vmax.f32 %v1473, 0.0
        %v1478 = vmax.f32 %v1474, 0.0
        %v1479 = vmax.f32 %v1475, 0.0
        %v1480 = vmax.f32 %v1476, 0.0
        %v1481 = vmin.f32 %v1477, 6.0
        %v1482 = vmin.f32 %v1478, 6.0
        %v1483 = vmin.f32 %v1479, 6.0
        %v1484 = vmin.f32 %v1480, 6.0
        %v1485 = vpack.c.bf16 %v1482, %v1481
        %v1486 = vpack.c.bf16 %v1484, %v1483
        %v1489 = vunpack.c.l.b16 %v1485
        %v1490 = vunpack.c.h.b16 %v1485
        %v1491 = vunpack.c.l.b16 %v1486
        %v1492 = vunpack.c.h.b16 %v1486
        %v1493 = vpack.c.b16 %v1489, %v1489
        %v1494 = vpack.c.b16 %v1490, %v1490
        %v1495 = vpack.c.b16 %v1491, %v1491
        %v1496 = vpack.c.b16 %v1492, %v1492
        %1501 = vst [vmem:[%s862] sm:$0xf] %v1493
        %1502 = vst [vmem:[%s862 + $0x4] sm:$0xf] %v1494
        %1503 = vst [vmem:[%s862 + $0x8] sm:$0xf] %v1495
        %1504 = vst [vmem:[%s862 + $0xc] sm:$0xf] %v1496
        %p1505 = scmp.lt.s32.totalorder %s20, 1
        %s1506 = scalar_select %p1505, %s20, 1
        %p1507 = scmp.lt.s32.totalorder %s21, 0
        %s1508 = scalar_select %p1507, %s21, 0
        %s1509 = smul.addr %s1506, 4
        %s1510 = sadd.s32 %s1508, %s1509
        %s1511 = smul.addr %s1510, 4
        %s1512 = scalar_lea.vmem %s5, %s1511
        // Predicated region
        $region123: #{asff_level0_forward.7} parent=113 // pred_check
          %p1513 = pneg %p169
        $region124: #{asff_level0_forward.7} parent=113 // pred_check_branch
          %1515 = sbr.rel (%p1513) target = $region126
        $region125: #{asff_level0_forward.7} parent=113 // pred_region
          _
        $region126: #{asff_level0_forward.7} parent=113 // pred_fallthru
          _
      $region114: #{asff_level0_forward.7} parent=5 // pred_fallthru
        _
      %p1516 = scmp.le.s32.totalorder 2, %s11
      // Predicated region
      $region127: #{asff_level0_forward.7} parent=5 // pred_check
        %p1517 = pneg %p1516
      $region128: #{asff_level0_forward.7} parent=5 // pred_check_branch
        %1519 = sbr.rel (%p1517) target = $region130
      $region129: #{asff_level0_forward.7} parent=5 // pred_region
        %s1520 = ssub.s32 %s11, 2
        // Predicated region
        $region131: #{asff_level0_forward.7} parent=129 // pred_check
          %p1521 = pneg %p175
        $region132: #{asff_level0_forward.7} parent=129 // pred_check_branch
          %1523 = sbr.rel (%p1521) target = $region134
        $region133: #{asff_level0_forward.7} parent=129 // pred_region
          %p1524 = scmp.lt.s32.totalorder %s22, 1
          %s1525 = scalar_select %p1524, %s22, 1
          %p1526 = scmp.lt.s32.totalorder %s23, 0
          %s1527 = scalar_select %p1526, %s23, 0
          %s1528 = smul.addr %s1525, 4
          %s1529 = sadd.s32 %s1527, %s1528
          %s1530 = smul.addr %s1529, 4
          %s1531 = scalar_lea.vmem %s5, %s1530
        $region134: #{asff_level0_forward.7} parent=129 // pred_fallthru
          _
      $region130: #{asff_level0_forward.7} parent=5 // pred_fallthru
        _
    $region6: #{asff_level0_forward.7} parent=1 // loop_footer
      %s15 = sadd.s32 1, %s11
    $region7: #{asff_level0_forward.7} parent=1 // loop_footer_branch
      %10 = sbr.rel target = $region3
    $region8: #{asff_level0_forward.7} parent=1 // loop_exit
      _

// kernel: asff_level0_forward.6
$region0: #{asff_level0_forward.6}
  #allocation0 [shape = 'u32[]', space=smem, size = 0x4, offset = 0x4, fixed_abs, tag = 'smem constant byte address 0x4 - core index']
  #allocation1 [shape = 'u32[144,128]{1,0:T(1,128)}', space=vmem, size = 0x12000, scoped, tag = 'internal scratch']
  %s0 = inlined_call_operand.vmem [shape: bf16[2,16,16,261], index: 0, kind: input, shape index: {}, may-alias: {0,1}]
  %s1 = inlined_call_operand.vmem [shape: bf16[2,16,16,261], index: 1, kind: input, shape index: {}, may-alias: {0,1}]
  %s2 = inlined_call_operand.vmem [shape: bf16[32,144], index: 2, kind: input, shape index: {}]
  %s3 = inlined_call_operand.vmem [shape: f32[32,1], index: 3, kind: input, shape index: {}]
  %s4 = inlined_call_operand.vmem [shape: f32[32,1], index: 4, kind: input, shape index: {}]
  %s5 = inlined_call_operand.vmem [shape: bf16[2,32,128], index: 5, kind: output, shape index: {}]
  %s6 = sld [smem:[#allocation0]]
  $region135: #{asff_level0_forward.6} parent=0
    _
  %s8 = ssub.s32 1, %s6
  %s9 = scalar_select 0, %s8, %s6
  $region1: #{asff_level0_forward.6} parent=0
    #allocation2 [shape = 'u8[131072]{0}', space=vmem, size = 0x20000, scoped, tag = 'input window, operand 0']
    #allocation3 [shape = 'u8[131072]{0}', space=vmem, size = 0x20000, scoped, tag = 'input window, operand 1']
    loop: start=0, step=1, limit=4
    $region2: #{asff_level0_forward.6} parent=1 // loop_pre_header
      _
    $region3: #{asff_level0_forward.6} parent=1 // loop_header
      %s11 = sphi 0, %s15
      %p12 = scmp.ge.s32.totalorder %s11, 4
      %s18 = sphi 0, %s30
      %s19 = sphi 0, %s26
      %s20 = sphi 0, %s18
      %s21 = sphi 0, %s19
      %s22 = sphi 0, %s20
      %s23 = sphi 0, %s21
      %s35 = sphi 0, %s37
      %s38 = sphi 0, %s35
      %s39 = sphi 0, %s38
      %s55 = sphi 0, %s39
      %s65 = sphi 0, %s67
      %s68 = sphi 0, %s65
      %s69 = sphi 0, %s68
      %s85 = sphi 0, %s69
      %s89 = sphi 0, %s89
      %s91 = sphi 0, %s89
      %s92 = sphi 0, %s91
      %s106 = sphi 0, %s92
      %s110 = sphi 0, %s110
      %s112 = sphi 0, %s110
      %s113 = sphi 0, %s112
      %s127 = sphi 0, %s113
      %s131 = sphi 0, %s131
      %s133 = sphi 0, %s131
      %s134 = sphi 0, %s133
      %s148 = sphi 0, %s134
      %s156 = sphi 0, %s158
      %s159 = sphi 0, %s156
      %s160 = sphi 0, %s159
      %s176 = sphi 0, %s160
    $region4: #{asff_level0_forward.6} parent=1 // loop_header_branch
      %14 = sbr.rel (%p12) target = $region8
    $region5: #{asff_level0_forward.6} parent=1 // loop_body
      %s16 = ssub.s32 %s11, 1
      %s17 = ssub.s32 %s11, 2
      %s24 = sadd.s32 1, %s19
      %p25 = scmp.ge.s32.totalorder %s24, 1
      %s26 = scalar_select %p25, 0, %s24
      %s27 = sadd.s32 1, %s18
      %s28 = scalar_select %p25, %s27, %s18
      %p29 = scmp.ge.s32.totalorder %s28, 2
      %s30 = scalar_select %p29, 0, %s28
      %s31 = ssub.s32 %s18, %s30
      %s32 = ssub.s32 %s19, %s26
      %s33 = sor.u32 %s31, %s32
      %p34 = scmp.eq.s32.totalorder %s33, 0
      %s36 = sadd.s32 %s35, 1
      %s37 = scalar_select %p34, %s35, %s36
      %p40 = pneg %p34
      %p41 = scmp.eq.s32.totalorder %s11, 1
      %p42 = por %p40, %p41
      %p43 = scmp.ne.s32.totalorder %s35, %s38
      %p44 = scmp.eq.s32.totalorder %s11, 0
      %p45 = por %p43, %p44
      %p46 = scmp.ne.s32.totalorder %s35, %s38
      %p47 = scmp.eq.s32.totalorder %s16, 1
      %p48 = por %p46, %p47
      %p49 = scmp.ne.s32.totalorder %s38, %s39
      %p50 = scmp.eq.s32.totalorder %s16, 0
      %p51 = por %p49, %p50
      %p52 = scmp.ne.s32.totalorder %s38, %s39
      %p53 = scmp.eq.s32.totalorder %s17, 1
      %p54 = por %p52, %p53
      %p56 = scmp.ne.s32.totalorder %s39, %s55
      %p57 = scmp.eq.s32.totalorder %s17, 0
      %p58 = por %p56, %p57
      %s59 = sadd.s32 %s19, 1
      %s60 = sadd.s32 %s26, 1
      %s61 = ssub.s32 %s18, %s30
      %s62 = ssub.s32 %s59, %s60
      %s63 = sor.u32 %s61, %s62
      %p64 = scmp.eq.s32.totalorder %s63, 0
      %s66 = sadd.s32 %s65, 1
      %s67 = scalar_select %p64, %s65, %s66
      %p70 = pneg %p64
      %p71 = scmp.eq.s32.totalorder %s11, 1
      %p72 = por %p70, %p71
      %p73 = scmp.ne.s32.totalorder %s65, %s68
      %p74 = scmp.eq.s32.totalorder %s11, 0
      %p75 = por %p73, %p74
      %p76 = scmp.ne.s32.totalorder %s65, %s68
      %p77 = scmp.eq.s32.totalorder %s16, 1
      %p78 = por %p76, %p77
      %p79 = scmp.ne.s32.totalorder %s68, %s69
      %p80 = scmp.eq.s32.totalorder %s16, 0
      %p81 = por %p79, %p80
      %p82 = scmp.ne.s32.totalorder %s68, %s69
      %p83 = scmp.eq.s32.totalorder %s17, 1
      %p84 = por %p82, %p83
      %p86 = scmp.ne.s32.totalorder %s69, %s85
      %p87 = scmp.eq.s32.totalorder %s17, 0
      %p88 = por %p86, %p87
      %s90 = sadd.s32 %s89, 1
      %p93 = scmp.eq.s32.totalorder %s11, 1
      %p94 = scmp.ne.s32.totalorder %s89, %s91
      %p95 = scmp.eq.s32.totalorder %s11, 0
      %p96 = por %p94, %p95
      %p97 = scmp.ne.s32.totalorder %s89, %s91
      %p98 = scmp.eq.s32.totalorder %s16, 1
      %p99 = por %p97, %p98
      %p100 = scmp.ne.s32.totalorder %s91, %s92
      %p101 = scmp.eq.s32.totalorder %s16, 0
      %p102 = por %p100, %p101
      %p103 = scmp.ne.s32.totalorder %s91, %s92
      %p104 = scmp.eq.s32.totalorder %s17, 1
      %p105 = por %p103, %p104
      %p107 = scmp.ne.s32.totalorder %s92, %s106
      %p108 = scmp.eq.s32.totalorder %s17, 0
      %p109 = por %p107, %p108
      %s111 = sadd.s32 %s110, 1
      %p114 = scmp.eq.s32.totalorder %s11, 1
      %p115 = scmp.ne.s32.totalorder %s110, %s112
      %p116 = scmp.eq.s32.totalorder %s11, 0
      %p117 = por %p115, %p116
      %p118 = scmp.ne.s32.totalorder %s110, %s112
      %p119 = scmp.eq.s32.totalorder %s16, 1
      %p120 = por %p118, %p119
      %p121 = scmp.ne.s32.totalorder %s112, %s113
      %p122 = scmp.eq.s32.totalorder %s16, 0
      %p123 = por %p121, %p122
      %p124 = scmp.ne.s32.totalorder %s112, %s113
      %p125 = scmp.eq.s32.totalorder %s17, 1
      %p126 = por %p124, %p125
      %p128 = scmp.ne.s32.totalorder %s113, %s127
      %p129 = scmp.eq.s32.totalorder %s17, 0
      %p130 = por %p128, %p129
      %s132 = sadd.s32 %s131, 1
      %p135 = scmp.eq.s32.totalorder %s11, 1
      %p136 = scmp.ne.s32.totalorder %s131, %s133
      %p137 = scmp.eq.s32.totalorder %s11, 0
      %p138 = por %p136, %p137
      %p139 = scmp.ne.s32.totalorder %s131, %s133
      %p140 = scmp.eq.s32.totalorder %s16, 1
      %p141 = por %p139, %p140
      %p142 = scmp.ne.s32.totalorder %s133, %s134
      %p143 = scmp.eq.s32.totalorder %s16, 0
      %p144 = por %p142, %p143
      %p145 = scmp.ne.s32.totalorder %s133, %s134
      %p146 = scmp.eq.s32.totalorder %s17, 1
      %p147 = por %p145, %p146
      %p149 = scmp.ne.s32.totalorder %s134, %s148
      %p150 = scmp.eq.s32.totalorder %s17, 0
      %p151 = por %p149, %p150
      %s152 = ssub.s32 %s18, %s30
      %s153 = ssub.s32 %s19, %s26
      %s154 = sor.u32 %s152, %s153
      %p155 = scmp.eq.s32.totalorder %s154, 0
      %s157 = sadd.s32 %s156, 1
      %s158 = scalar_select %p155, %s156, %s157
      %p161 = pneg %p155
      %p162 = scmp.eq.s32.totalorder %s11, 1
      %p163 = por %p161, %p162
      %p164 = scmp.ne.s32.totalorder %s156, %s159
      %p165 = scmp.eq.s32.totalorder %s11, 0
      %p166 = por %p164, %p165
      %p167 = scmp.ne.s32.totalorder %s156, %s159
      %p168 = scmp.eq.s32.totalorder %s16, 1
      %p169 = por %p167, %p168
      %p170 = scmp.ne.s32.totalorder %s159, %s160
      %p171 = scmp.eq.s32.totalorder %s16, 0
      %p172 = por %p170, %p171
      %p173 = scmp.ne.s32.totalorder %s159, %s160
      %p174 = scmp.eq.s32.totalorder %s17, 1
      %p175 = por %p173, %p174
      %p177 = scmp.ne.s32.totalorder %s160, %s176
      %p178 = scmp.eq.s32.totalorder %s17, 0
      %p179 = por %p177, %p178
      %p180 = scmp.le.s32.totalorder 1, %s11
      %p181 = scmp.lt.s32.totalorder %s11, 3
      %p182 = pnand %p180, %p181
      %p183 = pneg %p182
      // Predicated region
      $region9: #{asff_level0_forward.6} parent=5 // pred_check
        _
      $region10: #{asff_level0_forward.6} parent=5 // pred_check_branch
        %185 = sbr.rel (%p182) target = $region12
      $region11: #{asff_level0_forward.6} parent=5 // pred_region
        %s186 = ssub.s32 %s11, 1
        // Predicated region
        $region13: #{asff_level0_forward.6} parent=11 // pred_check
          %p187 = pneg %p102
        $region14: #{asff_level0_forward.6} parent=11 // pred_check_branch
          %189 = sbr.rel (%p187) target = $region16
        $region15: #{asff_level0_forward.6} parent=11 // pred_region
          _
        $region16: #{asff_level0_forward.6} parent=11 // pred_fallthru
          _
        // Predicated region
        $region17: #{asff_level0_forward.6} parent=11 // pred_check
          %p190 = pneg %p123
        $region18: #{asff_level0_forward.6} parent=11 // pred_check_branch
          %192 = sbr.rel (%p190) target = $region20
        $region19: #{asff_level0_forward.6} parent=11 // pred_region
          _
        $region20: #{asff_level0_forward.6} parent=11 // pred_fallthru
          _
        // Predicated region
        $region21: #{asff_level0_forward.6} parent=11 // pred_check
          %p193 = pneg %p144
        $region22: #{asff_level0_forward.6} parent=11 // pred_check_branch
          %195 = sbr.rel (%p193) target = $region24
        $region23: #{asff_level0_forward.6} parent=11 // pred_region
          _
        $region24: #{asff_level0_forward.6} parent=11 // pred_fallthru
          _
      $region12: #{asff_level0_forward.6} parent=5 // pred_fallthru
        _
      %p196 = scmp.lt.s32.totalorder %s11, 2
      // Predicated region
      $region25: #{asff_level0_forward.6} parent=5 // pred_check
        %p197 = pneg %p196
      $region26: #{asff_level0_forward.6} parent=5 // pred_check_branch
        %199 = sbr.rel (%p197) target = $region28
      $region27: #{asff_level0_forward.6} parent=5 // pred_region
        // Predicated region
        $region29: #{asff_level0_forward.6} parent=27 // pred_check
          %p200 = pneg %p45
        $region30: #{asff_level0_forward.6} parent=27 // pred_check_branch
          %202 = sbr.rel (%p200) target = $region32
        $region31: #{asff_level0_forward.6} parent=27 // pred_region
          %s203 = sand.u32 %s35, 1
          %s204 = sand.u32 %s35, 1
          %s205 = smul.addr %s204, 128
          %s206 = scalar_lea.vmem [#allocation2], %s205
          %s207 = smul.addr %s18, 96
          %s208 = sadd.s32 %s19, %s207
          %s209 = smul.addr %s208, 4
          %s210 = scalar_lea.vmem %s0, %s209
          // Predicated region
          $region33: #{asff_level0_forward.6} parent=31 // pred_check
            _
          $region34: #{asff_level0_forward.6} parent=31 // pred_check_branch
            %212 = sbr.rel (0) target = $region36
          $region35: #{asff_level0_forward.6} parent=31 // pred_region
            // Predicated region
            $region37: #{asff_level0_forward.6} parent=35 // pred_check
              _
            $region38: #{asff_level0_forward.6} parent=35 // pred_check_branch
              %214 = sbr.rel target = $region40
            $region39: #{asff_level0_forward.6} parent=35 // pred_region
              // Predicated region
              $region52: #{asff_level0_forward.6} parent=39 // pred_check
                _
              $region53: #{asff_level0_forward.6} parent=39 // pred_check_branch
                %291 = sbr.rel (0) target = $region55
              $region54: #{asff_level0_forward.6} parent=39 // pred_region
                loop: start=0, step=1, limit=1
                $region56: #{asff_level0_forward.6} parent=54 // loop_pre_header
                  _
                $region57: #{asff_level0_forward.6} parent=54 // loop_header
                  %s293 = sphi 0, %s297
                  %p294 = scmp.ge.s32.totalorder %s293, 1
                  %s298 = sphi %s210, %s210
                  %s299 = sphi %s206, %s206
                $region58: #{asff_level0_forward.6} parent=54 // loop_header_branch
                  %296 = sbr.rel (%p294) target = $region62
                $region59: #{asff_level0_forward.6} parent=54 // loop_body
                  _
                $region60: #{asff_level0_forward.6} parent=54 // loop_footer
                  %s297 = sadd.s32 1, %s293
                $region61: #{asff_level0_forward.6} parent=54 // loop_footer_branch
                  %292 = sbr.rel target = $region57
                $region62: #{asff_level0_forward.6} parent=54 // loop_exit
                  _
                loop: start=0, step=1, limit=1
                $region63: #{asff_level0_forward.6} parent=54 // loop_pre_header
                  _
                $region64: #{asff_level0_forward.6} parent=54 // loop_header
                  %s302 = sphi 0, %s306
                  %p303 = scmp.ge.s32.totalorder %s302, 1
                  %s307 = sphi %s210, %s210
                  %s308 = sphi %s206, %s206
                $region65: #{asff_level0_forward.6} parent=54 // loop_header_branch
                  %305 = sbr.rel (%p303) target = $region69
                $region66: #{asff_level0_forward.6} parent=54 // loop_body
                  %v309 = vld [vmem:[%s307] sm:$0xf]
                  %310 = vst [vmem:[%s308] sm:$0xf] %v309
                  %v311 = vld [vmem:[%s307 + $0xc] sm:$0xf]
                  %312 = vst [vmem:[%s308 + $0x4] sm:$0xf] %v311
                  %v313 = vld [vmem:[%s307 + $0x18] sm:$0xf]
                  %314 = vst [vmem:[%s308 + $0x8] sm:$0xf] %v313
                  %v315 = vld [vmem:[%s307 + $0x24] sm:$0xf]
                  %316 = vst [vmem:[%s308 + $0xc] sm:$0xf] %v315
                  %v317 = vld [vmem:[%s307 + $0x30] sm:$0xf]
                  %318 = vst [vmem:[%s308 + $0x10] sm:$0xf] %v317
                  %v319 = vld [vmem:[%s307 + $0x3c] sm:$0xf]
                  %320 = vst [vmem:[%s308 + $0x14] sm:$0xf] %v319
                  %v321 = vld [vmem:[%s307 + $0x48] sm:$0xf]
                  %322 = vst [vmem:[%s308 + $0x18] sm:$0xf] %v321
                  %v323 = vld [vmem:[%s307 + $0x54] sm:$0xf]
                  %324 = vst [vmem:[%s308 + $0x1c] sm:$0xf] %v323
                  %v325 = vld [vmem:[%s307 + $0x60] sm:$0xf]
                  %326 = vst [vmem:[%s308 + $0x20] sm:$0xf] %v325
                  %v327 = vld [vmem:[%s307 + $0x6c] sm:$0xf]
                  %328 = vst [vmem:[%s308 + $0x24] sm:$0xf] %v327
                  %v329 = vld [vmem:[%s307 + $0x78] sm:$0xf]
                  %330 = vst [vmem:[%s308 + $0x28] sm:$0xf] %v329
                  %v331 = vld [vmem:[%s307 + $0x84] sm:$0xf]
                  %332 = vst [vmem:[%s308 + $0x2c] sm:$0xf] %v331
                  %v333 = vld [vmem:[%s307 + $0x90] sm:$0xf]
                  %334 = vst [vmem:[%s308 + $0x30] sm:$0xf] %v333
                  %v335 = vld [vmem:[%s307 + $0x9c] sm:$0xf]
                  %336 = vst [vmem:[%s308 + $0x34] sm:$0xf] %v335
                  %v337 = vld [vmem:[%s307 + $0xa8] sm:$0xf]
                  %338 = vst [vmem:[%s308 + $0x38] sm:$0xf] %v337
                  %v339 = vld [vmem:[%s307 + $0xb4] sm:$0xf]
                  %340 = vst [vmem:[%s308 + $0x3c] sm:$0xf] %v339
                  %v341 = vld [vmem:[%s307 + $0xc0] sm:$0xf]
                  %342 = vst [vmem:[%s308 + $0x40] sm:$0xf] %v341
                  %v343 = vld [vmem:[%s307 + $0xcc] sm:$0xf]
                  %344 = vst [vmem:[%s308 + $0x44] sm:$0xf] %v343
                  %v345 = vld [vmem:[%s307 + $0xd8] sm:$0xf]
                  %346 = vst [vmem:[%s308 + $0x48] sm:$0xf] %v345
                  %v347 = vld [vmem:[%s307 + $0xe4] sm:$0xf]
                  %348 = vst [vmem:[%s308 + $0x4c] sm:$0xf] %v347
                  %v349 = vld [vmem:[%s307 + $0xf0] sm:$0xf]
                  %350 = vst [vmem:[%s308 + $0x50] sm:$0xf] %v349
                  %v351 = vld [vmem:[%s307 + $0xfc] sm:$0xf]
                  %352 = vst [vmem:[%s308 + $0x54] sm:$0xf] %v351
                  %v353 = vld [vmem:[%s307 + $0x108] sm:$0xf]
                  %354 = vst [vmem:[%s308 + $0x58] sm:$0xf] %v353
                  %v355 = vld [vmem:[%s307 + $0x114] sm:$0xf]
                  %356 = vst [vmem:[%s308 + $0x5c] sm:$0xf] %v355
                  %v357 = vld [vmem:[%s307 + $0x120] sm:$0xf]
                  %358 = vst [vmem:[%s308 + $0x60] sm:$0xf] %v357
                  %v359 = vld [vmem:[%s307 + $0x12c] sm:$0xf]
                  %360 = vst [vmem:[%s308 + $0x64] sm:$0xf] %v359
                  %v361 = vld [vmem:[%s307 + $0x138] sm:$0xf]
                  %362 = vst [vmem:[%s308 + $0x68] sm:$0xf] %v361
                  %v363 = vld [vmem:[%s307 + $0x144] sm:$0xf]
                  %364 = vst [vmem:[%s308 + $0x6c] sm:$0xf] %v363
                  %v365 = vld [vmem:[%s307 + $0x150] sm:$0xf]
                  %366 = vst [vmem:[%s308 + $0x70] sm:$0xf] %v365
                  %v367 = vld [vmem:[%s307 + $0x15c] sm:$0xf]
                  %368 = vst [vmem:[%s308 + $0x74] sm:$0xf] %v367
                  %v369 = vld [vmem:[%s307 + $0x168] sm:$0xf]
                  %370 = vst [vmem:[%s308 + $0x78] sm:$0xf] %v369
                  %v371 = vld [vmem:[%s307 + $0x174] sm:$0xf]
                  %372 = vst [vmem:[%s308 + $0x7c] sm:$0xf] %v371
                $region67: #{asff_level0_forward.6} parent=54 // loop_footer
                  %s306 = sadd.s32 1, %s302
                $region68: #{asff_level0_forward.6} parent=54 // loop_footer_branch
                  %301 = sbr.rel target = $region64
                $region69: #{asff_level0_forward.6} parent=54 // loop_exit
                  _
              $region55: #{asff_level0_forward.6} parent=39 // pred_fallthru
                _
            $region40: #{asff_level0_forward.6} parent=35 // pred_fallthru
              _
            // Predicated region
            $region41: #{asff_level0_forward.6} parent=35 // pred_check
              _
            $region42: #{asff_level0_forward.6} parent=35 // pred_check_branch
              %216 = sbr.rel (0) target = $region44
            $region43: #{asff_level0_forward.6} parent=35 // pred_region
              loop: start=0, step=1, limit=1
              $region45: #{asff_level0_forward.6} parent=43 // loop_pre_header
                _
              $region46: #{asff_level0_forward.6} parent=43 // loop_header
                %s219 = sphi 0, %s223
                %p220 = scmp.ge.s32.totalorder %s219, 1
                %s224 = sphi %s210, %s210
                %s225 = sphi %s206, %s206
              $region47: #{asff_level0_forward.6} parent=43 // loop_header_branch
                %222 = sbr.rel (%p220) target = $region51
              $region48: #{asff_level0_forward.6} parent=43 // loop_body
                %v226 = vld [vmem:[%s224] sm:$0xf]
                %227 = vst [vmem:[%s225] sm:$0xf] %v226
                %v228 = vld [vmem:[%s224 + $0xc] sm:$0xf]
                %229 = vst [vmem:[%s225 + $0x4] sm:$0xf] %v228
                %v230 = vld [vmem:[%s224 + $0x18] sm:$0xf]
                %231 = vst [vmem:[%s225 + $0x8] sm:$0xf] %v230
                %v232 = vld [vmem:[%s224 + $0x24] sm:$0xf]
                %233 = vst [vmem:[%s225 + $0xc] sm:$0xf] %v232
                %v234 = vld [vmem:[%s224 + $0x30] sm:$0xf]
                %235 = vst [vmem:[%s225 + $0x10] sm:$0xf] %v234
                %v236 = vld [vmem:[%s224 + $0x3c] sm:$0xf]
                %237 = vst [vmem:[%s225 + $0x14] sm:$0xf] %v236
                %v238 = vld [vmem:[%s224 + $0x48] sm:$0xf]
                %239 = vst [vmem:[%s225 + $0x18] sm:$0xf] %v238
                %v240 = vld [vmem:[%s224 + $0x54] sm:$0xf]
                %241 = vst [vmem:[%s225 + $0x1c] sm:$0xf] %v240
                %v242 = vld [vmem:[%s224 + $0x60] sm:$0xf]
                %243 = vst [vmem:[%s225 + $0x20] sm:$0xf] %v242
                %v244 = vld [vmem:[%s224 + $0x6c] sm:$0xf]
                %245 = vst [vmem:[%s225 + $0x24] sm:$0xf] %v244
                %v246 = vld [vmem:[%s224 + $0x78] sm:$0xf]
                %247 = vst [vmem:[%s225 + $0x28] sm:$0xf] %v246
                %v248 = vld [vmem:[%s224 + $0x84] sm:$0xf]
                %249 = vst [vmem:[%s225 + $0x2c] sm:$0xf] %v248
                %v250 = vld [vmem:[%s224 + $0x90] sm:$0xf]
                %251 = vst [vmem:[%s225 + $0x30] sm:$0xf] %v250
                %v252 = vld [vmem:[%s224 + $0x9c] sm:$0xf]
                %253 = vst [vmem:[%s225 + $0x34] sm:$0xf] %v252
                %v254 = vld [vmem:[%s224 + $0xa8] sm:$0xf]
                %255 = vst [vmem:[%s225 + $0x38] sm:$0xf] %v254
                %v256 = vld [vmem:[%s224 + $0xb4] sm:$0xf]
                %257 = vst [vmem:[%s225 + $0x3c] sm:$0xf] %v256
                %v258 = vld [vmem:[%s224 + $0xc0] sm:$0xf]
                %259 = vst [vmem:[%s225 + $0x40] sm:$0xf] %v258
                %v260 = vld [vmem:[%s224 + $0xcc] sm:$0xf]
                %261 = vst [vmem:[%s225 + $0x44] sm:$0xf] %v260
                %v262 = vld [vmem:[%s224 + $0xd8] sm:$0xf]
                %263 = vst [vmem:[%s225 + $0x48] sm:$0xf] %v262
                %v264 = vld [vmem:[%s224 + $0xe4] sm:$0xf]
                %265 = vst [vmem:[%s225 + $0x4c] sm:$0xf] %v264
                %v266 = vld [vmem:[%s224 + $0xf0] sm:$0xf]
                %267 = vst [vmem:[%s225 + $0x50] sm:$0xf] %v266
                %v268 = vld [vmem:[%s224 + $0xfc] sm:$0xf]
                %269 = vst [vmem:[%s225 + $0x54] sm:$0xf] %v268
                %v270 = vld [vmem:[%s224 + $0x108] sm:$0xf]
                %271 = vst [vmem:[%s225 + $0x58] sm:$0xf] %v270
                %v272 = vld [vmem:[%s224 + $0x114] sm:$0xf]
                %273 = vst [vmem:[%s225 + $0x5c] sm:$0xf] %v272
                %v274 = vld [vmem:[%s224 + $0x120] sm:$0xf]
                %275 = vst [vmem:[%s225 + $0x60] sm:$0xf] %v274
                %v276 = vld [vmem:[%s224 + $0x12c] sm:$0xf]
                %277 = vst [vmem:[%s225 + $0x64] sm:$0xf] %v276
                %v278 = vld [vmem:[%s224 + $0x138] sm:$0xf]
                %279 = vst [vmem:[%s225 + $0x68] sm:$0xf] %v278
                %v280 = vld [vmem:[%s224 + $0x144] sm:$0xf]
                %281 = vst [vmem:[%s225 + $0x6c] sm:$0xf] %v280
                %v282 = vld [vmem:[%s224 + $0x150] sm:$0xf]
                %283 = vst [vmem:[%s225 + $0x70] sm:$0xf] %v282
                %v284 = vld [vmem:[%s224 + $0x15c] sm:$0xf]
                %285 = vst [vmem:[%s225 + $0x74] sm:$0xf] %v284
                %v286 = vld [vmem:[%s224 + $0x168] sm:$0xf]
                %287 = vst [vmem:[%s225 + $0x78] sm:$0xf] %v286
                %v288 = vld [vmem:[%s224 + $0x174] sm:$0xf]
                %289 = vst [vmem:[%s225 + $0x7c] sm:$0xf] %v288
              $region49: #{asff_level0_forward.6} parent=43 // loop_footer
                %s223 = sadd.s32 1, %s219
              $region50: #{asff_level0_forward.6} parent=43 // loop_footer_branch
                %218 = sbr.rel target = $region46
              $region51: #{asff_level0_forward.6} parent=43 // loop_exit
                _
            $region44: #{asff_level0_forward.6} parent=35 // pred_fallthru
              _
          $region36: #{asff_level0_forward.6} parent=31 // pred_fallthru
            _
          %373 = vnop
        $region32: #{asff_level0_forward.6} parent=27 // pred_fallthru
          _
        // Predicated region
        $region70: #{asff_level0_forward.6} parent=27 // pred_check
          %p374 = pneg %p75
        $region71: #{asff_level0_forward.6} parent=27 // pred_check_branch
          %376 = sbr.rel (%p374) target = $region73
        $region72: #{asff_level0_forward.6} parent=27 // pred_region
          %s377 = sand.u32 %s65, 1
          %s378 = sand.u32 %s65, 1
          %s379 = smul.addr %s378, 128
          %s380 = scalar_lea.vmem [#allocation3], %s379
          %s381 = sadd.s32 %s19, 1
          %s382 = smul.addr %s18, 96
          %s383 = sadd.s32 %s381, %s382
          %s384 = smul.addr %s383, 4
          %s385 = scalar_lea.vmem %s1, %s384
          // Predicated region
          $region74: #{asff_level0_forward.6} parent=72 // pred_check
            _
          $region75: #{asff_level0_forward.6} parent=72 // pred_check_branch
            %387 = sbr.rel (0) target = $region77
          $region76: #{asff_level0_forward.6} parent=72 // pred_region
            // Predicated region
            $region78: #{asff_level0_forward.6} parent=76 // pred_check
              _
            $region79: #{asff_level0_forward.6} parent=76 // pred_check_branch
              %389 = sbr.rel target = $region81
            $region80: #{asff_level0_forward.6} parent=76 // pred_region
              // Predicated region
              $region93: #{asff_level0_forward.6} parent=80 // pred_check
                _
              $region94: #{asff_level0_forward.6} parent=80 // pred_check_branch
                %466 = sbr.rel (0) target = $region96
              $region95: #{asff_level0_forward.6} parent=80 // pred_region
                loop: start=0, step=1, limit=1
                $region97: #{asff_level0_forward.6} parent=95 // loop_pre_header
                  _
                $region98: #{asff_level0_forward.6} parent=95 // loop_header
                  %s468 = sphi 0, %s472
                  %p469 = scmp.ge.s32.totalorder %s468, 1
                  %s473 = sphi %s385, %s385
                  %s474 = sphi %s380, %s380
                $region99: #{asff_level0_forward.6} parent=95 // loop_header_branch
                  %471 = sbr.rel (%p469) target = $region103
                $region100: #{asff_level0_forward.6} parent=95 // loop_body
                  _
                $region101: #{asff_level0_forward.6} parent=95 // loop_footer
                  %s472 = sadd.s32 1, %s468
                $region102: #{asff_level0_forward.6} parent=95 // loop_footer_branch
                  %467 = sbr.rel target = $region98
                $region103: #{asff_level0_forward.6} parent=95 // loop_exit
                  _
                loop: start=0, step=1, limit=1
                $region104: #{asff_level0_forward.6} parent=95 // loop_pre_header
                  _
                $region105: #{asff_level0_forward.6} parent=95 // loop_header
                  %s477 = sphi 0, %s481
                  %p478 = scmp.ge.s32.totalorder %s477, 1
                  %s482 = sphi %s385, %s385
                  %s483 = sphi %s380, %s380
                $region106: #{asff_level0_forward.6} parent=95 // loop_header_branch
                  %480 = sbr.rel (%p478) target = $region110
                $region107: #{asff_level0_forward.6} parent=95 // loop_body
                  %v484 = vld [vmem:[%s482] sm:$0xf]
                  %485 = vst [vmem:[%s483] sm:$0xf] %v484
                  %v486 = vld [vmem:[%s482 + $0xc] sm:$0xf]
                  %487 = vst [vmem:[%s483 + $0x4] sm:$0xf] %v486
                  %v488 = vld [vmem:[%s482 + $0x18] sm:$0xf]
                  %489 = vst [vmem:[%s483 + $0x8] sm:$0xf] %v488
                  %v490 = vld [vmem:[%s482 + $0x24] sm:$0xf]
                  %491 = vst [vmem:[%s483 + $0xc] sm:$0xf] %v490
                  %v492 = vld [vmem:[%s482 + $0x30] sm:$0xf]
                  %493 = vst [vmem:[%s483 + $0x10] sm:$0xf] %v492
                  %v494 = vld [vmem:[%s482 + $0x3c] sm:$0xf]
                  %495 = vst [vmem:[%s483 + $0x14] sm:$0xf] %v494
                  %v496 = vld [vmem:[%s482 + $0x48] sm:$0xf]
                  %497 = vst [vmem:[%s483 + $0x18] sm:$0xf] %v496
                  %v498 = vld [vmem:[%s482 + $0x54] sm:$0xf]
                  %499 = vst [vmem:[%s483 + $0x1c] sm:$0xf] %v498
                  %v500 = vld [vmem:[%s482 + $0x60] sm:$0xf]
                  %501 = vst [vmem:[%s483 + $0x20] sm:$0xf] %v500
                  %v502 = vld [vmem:[%s482 + $0x6c] sm:$0xf]
                  %503 = vst [vmem:[%s483 + $0x24] sm:$0xf] %v502
                  %v504 = vld [vmem:[%s482 + $0x78] sm:$0xf]
                  %505 = vst [vmem:[%s483 + $0x28] sm:$0xf] %v504
                  %v506 = vld [vmem:[%s482 + $0x84] sm:$0xf]
                  %507 = vst [vmem:[%s483 + $0x2c] sm:$0xf] %v506
                  %v508 = vld [vmem:[%s482 + $0x90] sm:$0xf]
                  %509 = vst [vmem:[%s483 + $0x30] sm:$0xf] %v508
                  %v510 = vld [vmem:[%s482 + $0x9c] sm:$0xf]
                  %511 = vst [vmem:[%s483 + $0x34] sm:$0xf] %v510
                  %v512 = vld [vmem:[%s482 + $0xa8] sm:$0xf]
                  %513 = vst [vmem:[%s483 + $0x38] sm:$0xf] %v512
                  %v514 = vld [vmem:[%s482 + $0xb4] sm:$0xf]
                  %515 = vst [vmem:[%s483 + $0x3c] sm:$0xf] %v514
                  %v516 = vld [vmem:[%s482 + $0xc0] sm:$0xf]
                  %517 = vst [vmem:[%s483 + $0x40] sm:$0xf] %v516
                  %v518 = vld [vmem:[%s482 + $0xcc] sm:$0xf]
                  %519 = vst [vmem:[%s483 + $0x44] sm:$0xf] %v518
                  %v520 = vld [vmem:[%s482 + $0xd8] sm:$0xf]
                  %521 = vst [vmem:[%s483 + $0x48] sm:$0xf] %v520
                  %v522 = vld [vmem:[%s482 + $0xe4] sm:$0xf]
                  %523 = vst [vmem:[%s483 + $0x4c] sm:$0xf] %v522
                  %v524 = vld [vmem:[%s482 + $0xf0] sm:$0xf]
                  %525 = vst [vmem:[%s483 + $0x50] sm:$0xf] %v524
                  %v526 = vld [vmem:[%s482 + $0xfc] sm:$0xf]
                  %527 = vst [vmem:[%s483 + $0x54] sm:$0xf] %v526
                  %v528 = vld [vmem:[%s482 + $0x108] sm:$0xf]
                  %529 = vst [vmem:[%s483 + $0x58] sm:$0xf] %v528
                  %v530 = vld [vmem:[%s482 + $0x114] sm:$0xf]
                  %531 = vst [vmem:[%s483 + $0x5c] sm:$0xf] %v530
                  %v532 = vld [vmem:[%s482 + $0x120] sm:$0xf]
                  %533 = vst [vmem:[%s483 + $0x60] sm:$0xf] %v532
                  %v534 = vld [vmem:[%s482 + $0x12c] sm:$0xf]
                  %535 = vst [vmem:[%s483 + $0x64] sm:$0xf] %v534
                  %v536 = vld [vmem:[%s482 + $0x138] sm:$0xf]
                  %537 = vst [vmem:[%s483 + $0x68] sm:$0xf] %v536
                  %v538 = vld [vmem:[%s482 + $0x144] sm:$0xf]
                  %539 = vst [vmem:[%s483 + $0x6c] sm:$0xf] %v538
                  %v540 = vld [vmem:[%s482 + $0x150] sm:$0xf]
                  %541 = vst [vmem:[%s483 + $0x70] sm:$0xf] %v540
                  %v542 = vld [vmem:[%s482 + $0x15c] sm:$0xf]
                  %543 = vst [vmem:[%s483 + $0x74] sm:$0xf] %v542
                  %v544 = vld [vmem:[%s482 + $0x168] sm:$0xf]
                  %545 = vst [vmem:[%s483 + $0x78] sm:$0xf] %v544
                  %v546 = vld [vmem:[%s482 + $0x174] sm:$0xf]
                  %547 = vst [vmem:[%s483 + $0x7c] sm:$0xf] %v546
                $region108: #{asff_level0_forward.6} parent=95 // loop_footer
                  %s481 = sadd.s32 1, %s477
                $region109: #{asff_level0_forward.6} parent=95 // loop_footer_branch
                  %476 = sbr.rel target = $region105
                $region110: #{asff_level0_forward.6} parent=95 // loop_exit
                  _
              $region96: #{asff_level0_forward.6} parent=80 // pred_fallthru
                _
            $region81: #{asff_level0_forward.6} parent=76 // pred_fallthru
              _
            // Predicated region
            $region82: #{asff_level0_forward.6} parent=76 // pred_check
              _
            $region83: #{asff_level0_forward.6} parent=76 // pred_check_branch
              %391 = sbr.rel (0) target = $region85
            $region84: #{asff_level0_forward.6} parent=76 // pred_region
              loop: start=0, step=1, limit=1
              $region86: #{asff_level0_forward.6} parent=84 // loop_pre_header
                _
              $region87: #{asff_level0_forward.6} parent=84 // loop_header
                %s394 = sphi 0, %s398
                %p395 = scmp.ge.s32.totalorder %s394, 1
                %s399 = sphi %s385, %s385
                %s400 = sphi %s380, %s380
              $region88: #{asff_level0_forward.6} parent=84 // loop_header_branch
                %397 = sbr.rel (%p395) target = $region92
              $region89: #{asff_level0_forward.6} parent=84 // loop_body
                %v401 = vld [vmem:[%s399] sm:$0xf]
                %402 = vst [vmem:[%s400] sm:$0xf] %v401
                %v403 = vld [vmem:[%s399 + $0xc] sm:$0xf]
                %404 = vst [vmem:[%s400 + $0x4] sm:$0xf] %v403
                %v405 = vld [vmem:[%s399 + $0x18] sm:$0xf]
                %406 = vst [vmem:[%s400 + $0x8] sm:$0xf] %v405
                %v407 = vld [vmem:[%s399 + $0x24] sm:$0xf]
                %408 = vst [vmem:[%s400 + $0xc] sm:$0xf] %v407
                %v409 = vld [vmem:[%s399 + $0x30] sm:$0xf]
                %410 = vst [vmem:[%s400 + $0x10] sm:$0xf] %v409
                %v411 = vld [vmem:[%s399 + $0x3c] sm:$0xf]
                %412 = vst [vmem:[%s400 + $0x14] sm:$0xf] %v411
                %v413 = vld [vmem:[%s399 + $0x48] sm:$0xf]
                %414 = vst [vmem:[%s400 + $0x18] sm:$0xf] %v413
                %v415 = vld [vmem:[%s399 + $0x54] sm:$0xf]
                %416 = vst [vmem:[%s400 + $0x1c] sm:$0xf] %v415
                %v417 = vld [vmem:[%s399 + $0x60] sm:$0xf]
                %418 = vst [vmem:[%s400 + $0x20] sm:$0xf] %v417
                %v419 = vld [vmem:[%s399 + $0x6c] sm:$0xf]
                %420 = vst [vmem:[%s400 + $0x24] sm:$0xf] %v419
                %v421 = vld [vmem:[%s399 + $0x78] sm:$0xf]
                %422 = vst [vmem:[%s400 + $0x28] sm:$0xf] %v421
                %v423 = vld [vmem:[%s399 + $0x84] sm:$0xf]
                %424 = vst [vmem:[%s400 + $0x2c] sm:$0xf] %v423
                %v425 = vld [vmem:[%s399 + $0x90] sm:$0xf]
                %426 = vst [vmem:[%s400 + $0x30] sm:$0xf] %v425
                %v427 = vld [vmem:[%s399 + $0x9c] sm:$0xf]
                %428 = vst [vmem:[%s400 + $0x34] sm:$0xf] %v427
                %v429 = vld [vmem:[%s399 + $0xa8] sm:$0xf]
                %430 = vst [vmem:[%s400 + $0x38] sm:$0xf] %v429
                %v431 = vld [vmem:[%s399 + $0xb4] sm:$0xf]
                %432 = vst [vmem:[%s400 + $0x3c] sm:$0xf] %v431
                %v433 = vld [vmem:[%s399 + $0xc0] sm:$0xf]
                %434 = vst [vmem:[%s400 + $0x40] sm:$0xf] %v433
                %v435 = vld [vmem:[%s399 + $0xcc] sm:$0xf]
                %436 = vst [vmem:[%s400 + $0x44] sm:$0xf] %v435
                %v437 = vld [vmem:[%s399 + $0xd8] sm:$0xf]
                %438 = vst [vmem:[%s400 + $0x48] sm:$0xf] %v437
                %v439 = vld [vmem:[%s399 + $0xe4] sm:$0xf]
                %440 = vst [vmem:[%s400 + $0x4c] sm:$0xf] %v439
                %v441 = vld [vmem:[%s399 + $0xf0] sm:$0xf]
                %442 = vst [vmem:[%s400 + $0x50] sm:$0xf] %v441
                %v443 = vld [vmem:[%s399 + $0xfc] sm:$0xf]
                %444 = vst [vmem:[%s400 + $0x54] sm:$0xf] %v443
                %v445 = vld [vmem:[%s399 + $0x108] sm:$0xf]
                %446 = vst [vmem:[%s400 + $0x58] sm:$0xf] %v445
                %v447 = vld [vmem:[%s399 + $0x114] sm:$0xf]
                %448 = vst [vmem:[%s400 + $0x5c] sm:$0xf] %v447
                %v449 = vld [vmem:[%s399 + $0x120] sm:$0xf]
                %450 = vst [vmem:[%s400 + $0x60] sm:$0xf] %v449
                %v451 = vld [vmem:[%s399 + $0x12c] sm:$0xf]
                %452 = vst [vmem:[%s400 + $0x64] sm:$0xf] %v451
                %v453 = vld [vmem:[%s399 + $0x138] sm:$0xf]
                %454 = vst [vmem:[%s400 + $0x68] sm:$0xf] %v453
                %v455 = vld [vmem:[%s399 + $0x144] sm:$0xf]
                %456 = vst [vmem:[%s400 + $0x6c] sm:$0xf] %v455
                %v457 = vld [vmem:[%s399 + $0x150] sm:$0xf]
                %458 = vst [vmem:[%s400 + $0x70] sm:$0xf] %v457
                %v459 = vld [vmem:[%s399 + $0x15c] sm:$0xf]
                %460 = vst [vmem:[%s400 + $0x74] sm:$0xf] %v459
                %v461 = vld [vmem:[%s399 + $0x168] sm:$0xf]
                %462 = vst [vmem:[%s400 + $0x78] sm:$0xf] %v461
                %v463 = vld [vmem:[%s399 + $0x174] sm:$0xf]
                %464 = vst [vmem:[%s400 + $0x7c] sm:$0xf] %v463
              $region90: #{asff_level0_forward.6} parent=84 // loop_footer
                %s398 = sadd.s32 1, %s394
              $region91: #{asff_level0_forward.6} parent=84 // loop_footer_branch
                %393 = sbr.rel target = $region87
              $region92: #{asff_level0_forward.6} parent=84 // loop_exit
                _
            $region85: #{asff_level0_forward.6} parent=76 // pred_fallthru
              _
          $region77: #{asff_level0_forward.6} parent=72 // pred_fallthru
            _
          %548 = vnop
        $region73: #{asff_level0_forward.6} parent=27 // pred_fallthru
          _
      $region28: #{asff_level0_forward.6} parent=5 // pred_fallthru
        _
      %p549 = scmp.le.s32.totalorder 1, %s11
      %p550 = scmp.lt.s32.totalorder %s11, 3
      %p551 = pnand %p549, %p550
      %p552 = pneg %p551
      // Predicated region
      $region111: #{asff_level0_forward.6} parent=5 // pred_check
        _
      $region112: #{asff_level0_forward.6} parent=5 // pred_check_branch
        %554 = sbr.rel (%p551) target = $region114
      $region113: #{asff_level0_forward.6} parent=5 // pred_region
        %s555 = ssub.s32 %s11, 1
        %s556 = sand.u32 %s38, 1
        %s557 = sand.u32 %s38, 1
        %s558 = smul.addr %s557, 128
        %s559 = scalar_lea.vmem [#allocation2], %s558
        // Predicated region
        $region115: #{asff_level0_forward.6} parent=113 // pred_check
          %p560 = pneg %p51
        $region116: #{asff_level0_forward.6} parent=113 // pred_check_branch
          %562 = sbr.rel (%p560) target = $region118
        $region117: #{asff_level0_forward.6} parent=113 // pred_region
          _
        $region118: #{asff_level0_forward.6} parent=113 // pred_fallthru
          _
        %s563 = sand.u32 %s68, 1
        %s564 = sand.u32 %s68, 1
        %s565 = smul.addr %s564, 128
        %s566 = scalar_lea.vmem [#allocation3], %s565
        // Predicated region
        $region119: #{asff_level0_forward.6} parent=113 // pred_check
          %p567 = pneg %p81
        $region120: #{asff_level0_forward.6} parent=113 // pred_check_branch
          %569 = sbr.rel (%p567) target = $region122
        $region121: #{asff_level0_forward.6} parent=113 // pred_region
          _
        $region122: #{asff_level0_forward.6} parent=113 // pred_fallthru
          _
        %s570 = sand.u32 %s38, 1
        %s571 = sand.u32 %s38, 1
        %s572 = smul.addr %s571, 128
        %s573 = scalar_lea.vmem [#allocation2], %s572
        %p574 = pneg %p51
        %p575 = pneg %p48
        %s576 = sand.u32 %s68, 1
        %s577 = sand.u32 %s68, 1
        %s578 = smul.addr %s577, 128
        %s579 = scalar_lea.vmem [#allocation3], %s578
        %p580 = pneg %p81
        %p581 = pneg %p78
        %p582 = pneg %p102
        %p583 = pneg %p99
        %p584 = pneg %p123
        %p585 = pneg %p120
        %p586 = pneg %p144
        %p587 = pneg %p141
        %p588 = pneg %p172
        %p589 = pneg %p169
        %p590 = scmp.lt.s32.totalorder %s20, 1
        %s591 = scalar_select %p590, %s20, 1
        %p592 = scmp.lt.s32.totalorder %s21, 0
        %s593 = scalar_select %p592, %s21, 0
        %s594 = smul.addr %s591, 4
        %s595 = sadd.s32 %s593, %s594
        %s596 = smul.addr %s595, 4
        %s597 = scalar_lea.vmem %s5, %s596
        %s598 = sadd.s32 %s21, 1
        %p599 = scmp.lt.s32.totalorder %s20, 1
        %s600 = scalar_select %p599, %s20, 1
        %p601 = scmp.lt.s32.totalorder %s21, 0
        %s602 = scalar_select %p601, %s21, 0
        %s603 = smul.addr %s600, 4
        %s604 = sadd.s32 %s602, %s603
        %s605 = smul.addr %s604, 4
        %s606 = scalar_lea.vmem %s5, %s605
        %v608 = vld [vmem:[%s559] sm:$0xf]
        %v609 = vld [vmem:[%s559 + $0x4] sm:$0xf]
        %v610 = vld [vmem:[%s559 + $0x8] sm:$0xf]
        %v611 = vld [vmem:[%s559 + $0xc] sm:$0xf]
        %v612 = vld [vmem:[%s559 + $0x10] sm:$0xf]
        %v613 = vld [vmem:[%s559 + $0x14] sm:$0xf]
        %v614 = vld [vmem:[%s559 + $0x18] sm:$0xf]
        %v615 = vld [vmem:[%s559 + $0x1c] sm:$0xf]
        %v616 = vld [vmem:[%s559 + $0x20] sm:$0xf]
        %v617 = vld [vmem:[%s559 + $0x24] sm:$0xf]
        %v618 = vld [vmem:[%s559 + $0x28] sm:$0xf]
        %v619 = vld [vmem:[%s559 + $0x2c] sm:$0xf]
        %v620 = vld [vmem:[%s559 + $0x30] sm:$0xf]
        %v621 = vld [vmem:[%s559 + $0x34] sm:$0xf]
        %v622 = vld [vmem:[%s559 + $0x38] sm:$0xf]
        %v623 = vld [vmem:[%s559 + $0x3c] sm:$0xf]
        %v624 = vld [vmem:[%s559 + $0x40] sm:$0xf]
        %v625 = vld [vmem:[%s559 + $0x44] sm:$0xf]
        %v626 = vld [vmem:[%s559 + $0x48] sm:$0xf]
        %v627 = vld [vmem:[%s559 + $0x4c] sm:$0xf]
        %v628 = vld [vmem:[%s559 + $0x50] sm:$0xf]
        %v629 = vld [vmem:[%s559 + $0x54] sm:$0xf]
        %v630 = vld [vmem:[%s559 + $0x58] sm:$0xf]
        %v631 = vld [vmem:[%s559 + $0x5c] sm:$0xf]
        %v632 = vld [vmem:[%s559 + $0x60] sm:$0xf]
        %v633 = vld [vmem:[%s559 + $0x64] sm:$0xf]
        %v634 = vld [vmem:[%s559 + $0x68] sm:$0xf]
        %v635 = vld [vmem:[%s559 + $0x6c] sm:$0xf]
        %v636 = vld [vmem:[%s559 + $0x70] sm:$0xf]
        %v637 = vld [vmem:[%s559 + $0x74] sm:$0xf]
        %v638 = vld [vmem:[%s559 + $0x78] sm:$0xf]
        %v639 = vld [vmem:[%s559 + $0x7c] sm:$0xf]
        %v640 = vld [vmem:[%s566] sm:$0xf]
        %v641 = vld [vmem:[%s566 + $0x4] sm:$0xf]
        %v642 = vld [vmem:[%s566 + $0x8] sm:$0xf]
        %v643 = vld [vmem:[%s566 + $0xc] sm:$0xf]
        %v644 = vld [vmem:[%s566 + $0x10] sm:$0xf]
        %v645 = vld [vmem:[%s566 + $0x14] sm:$0xf]
        %v646 = vld [vmem:[%s566 + $0x18] sm:$0xf]
        %v647 = vld [vmem:[%s566 + $0x1c] sm:$0xf]
        %v648 = vld [vmem:[%s566 + $0x20] sm:$0xf]
        %v649 = vld [vmem:[%s566 + $0x24] sm:$0xf]
        %v650 = vld [vmem:[%s566 + $0x28] sm:$0xf]
        %v651 = vld [vmem:[%s566 + $0x2c] sm:$0xf]
        %v652 = vld [vmem:[%s566 + $0x30] sm:$0xf]
        %v653 = vld [vmem:[%s566 + $0x34] sm:$0xf]
        %v654 = vld [vmem:[%s566 + $0x38] sm:$0xf]
        %v655 = vld [vmem:[%s566 + $0x3c] sm:$0xf]
        %v656 = vld [vmem:[%s566 + $0x40] sm:$0xf]
        %v657 = vld [vmem:[%s566 + $0x44] sm:$0xf]
        %v658 = vld [vmem:[%s566 + $0x48] sm:$0xf]
        %v659 = vld [vmem:[%s566 + $0x4c] sm:$0xf]
        %v660 = vld [vmem:[%s566 + $0x50] sm:$0xf]
        %v661 = vld [vmem:[%s566 + $0x54] sm:$0xf]
        %v662 = vld [vmem:[%s566 + $0x58] sm:$0xf]
        %v663 = vld [vmem:[%s566 + $0x5c] sm:$0xf]
        %v664 = vld [vmem:[%s566 + $0x60] sm:$0xf]
        %v665 = vld [vmem:[%s566 + $0x64] sm:$0xf]
        %v666 = vld [vmem:[%s566 + $0x68] sm:$0xf]
        %v667 = vld [vmem:[%s566 + $0x6c] sm:$0xf]
        %v668 = vld [vmem:[%s566 + $0x70] sm:$0xf]
        %v669 = vld [vmem:[%s566 + $0x74] sm:$0xf]
        %v702 = vunpack.c.l.b16 %v608
        %v703 = vunpack.c.l.b16 %v609
        %v704 = vunpack.c.l.b16 %v610
        %v705 = vunpack.c.l.b16 %v611
        %v706 = vunpack.c.l.b16 %v612
        %v707 = vunpack.c.l.b16 %v613
        %v708 = vunpack.c.l.b16 %v614
        %v709 = vunpack.c.l.b16 %v615
        %v710 = vunpack.c.l.b16 %v616
        %v711 = vunpack.c.l.b16 %v617
        %v712 = vunpack.c.l.b16 %v618
        %v713 = vunpack.c.l.b16 %v619
        %v714 = vunpack.c.l.b16 %v620
        %v715 = vunpack.c.l.b16 %v621
        %v716 = vunpack.c.l.b16 %v622
        %v717 = vunpack.c.l.b16 %v623
        %v718 = vunpack.c.l.b16 %v624
        %v719 = vunpack.c.l.b16 %v625
        %v720 = vunpack.c.l.b16 %v626
        %v721 = vunpack.c.l.b16 %v627
        %v722 = vunpack.c.l.b16 %v628
        %v723 = vunpack.c.l.b16 %v629
        %v724 = vunpack.c.l.b16 %v630
        %v725 = vunpack.c.l.b16 %v631
        %v726 = vunpack.c.l.b16 %v632
        %v727 = vunpack.c.l.b16 %v633
        %v728 = vunpack.c.l.b16 %v634
        %v729 = vunpack.c.l.b16 %v635
        %v730 = vunpack.c.l.b16 %v636
        %v731 = vunpack.c.l.b16 %v637
        %v732 = vunpack.c.l.b16 %v638
        %v733 = vunpack.c.l.b16 %v639
        %v734 = vpack.c.b16 %v703, %v702
        %v735 = vpack.c.b16 %v705, %v704
        %v736 = vpack.c.b16 %v707, %v706
        %v737 = vpack.c.b16 %v709, %v708
        %v738 = vpack.c.b16 %v711, %v710
        %v739 = vpack.c.b16 %v713, %v712
        %v740 = vpack.c.b16 %v715, %v714
        %v741 = vpack.c.b16 %v717, %v716
        %v742 = vpack.c.b16 %v719, %v718
        %v743 = vpack.c.b16 %v721, %v720
        %v744 = vpack.c.b16 %v723, %v722
        %v745 = vpack.c.b16 %v725, %v724
        %v746 = vpack.c.b16 %v727, %v726
        %v747 = vpack.c.b16 %v729, %v728
        %v748 = vpack.c.b16 %v731, %v730
        %v749 = vpack.c.b16 %v733, %v732
        %v796 = vunpack.c.l.b16 %v640
        %v797 = vunpack.c.l.b16 %v641
        %v798 = vunpack.c.l.b16 %v642
        %v799 = vunpack.c.l.b16 %v643
        %v800 = vunpack.c.l.b16 %v644
        %v801 = vunpack.c.l.b16 %v645
        %v802 = vunpack.c.l.b16 %v646
        %v803 = vunpack.c.l.b16 %v647
        %v804 = vunpack.c.l.b16 %v648
        %v805 = vunpack.c.l.b16 %v649
        %v806 = vunpack.c.l.b16 %v650
        %v807 = vunpack.c.l.b16 %v651
        %v808 = vunpack.c.l.b16 %v652
        %v809 = vunpack.c.l.b16 %v653
        %v810 = vunpack.c.l.b16 %v654
        %v811 = vunpack.c.l.b16 %v655
        %v812 = vunpack.c.l.b16 %v656
        %v813 = vunpack.c.l.b16 %v657
        %v814 = vunpack.c.l.b16 %v658
        %v815 = vunpack.c.l.b16 %v659
        %v816 = vunpack.c.l.b16 %v660
        %v817 = vunpack.c.l.b16 %v661
        %v818 = vunpack.c.l.b16 %v662
        %v819 = vunpack.c.l.b16 %v663
        %v820 = vunpack.c.l.b16 %v664
        %v821 = vunpack.c.l.b16 %v665
        %v822 = vunpack.c.l.b16 %v666
        %v823 = vunpack.c.l.b16 %v667
        %v824 = vunpack.c.l.b16 %v668
        %v825 = vunpack.c.l.b16 %v669
        %v826 = vpack.c.b16 %v797, %v796
        %v827 = vpack.c.b16 %v799, %v798
        %v828 = vpack.c.b16 %v801, %v800
        %v829 = vpack.c.b16 %v803, %v802
        %v830 = vpack.c.b16 %v805, %v804
        %v831 = vpack.c.b16 %v807, %v806
        %v832 = vpack.c.b16 %v809, %v808
        %v833 = vpack.c.b16 %v811, %v810
        %v834 = vpack.c.b16 %v813, %v812
        %v835 = vpack.c.b16 %v815, %v814
        %v836 = vpack.c.b16 %v817, %v816
        %v837 = vpack.c.b16 %v819, %v818
        %v838 = vpack.c.b16 %v821, %v820
        %v839 = vpack.c.b16 %v823, %v822
        %v840 = vpack.c.b16 %v825, %v824
        %v856 = vmax.bf16 %v734, %v735
        %v857 = vmax.bf16 %v856, %v736
        %v858 = vmax.bf16 %v857, %v738
        %v859 = vmax.bf16 %v858, %v739
        %v860 = vmax.bf16 %v859, %v740
        %v861 = vmax.bf16 %v860, %v742
        %v862 = vmax.bf16 %v861, %v743
        %v863 = vmax.bf16 %v862, %v744
        %v864 = vmax.bf16 %v736, %v737
        %865 = vrot.lane.b32.xlu0 %v734, 127
        %v866 = vpop.permute.xlu0 %865
        %867 = vrot.lane.b32.xlu0 %v826, 127
        %v868 = vpop.permute.xlu0 %867
        %vm869 = vcmask 1039360
        %v870 = vsel %vm869, %v866, %v868
        %v872 = vmax.bf16 %v864, %v870
        %v873 = vmax.bf16 %v872, %v740
        %v874 = vmax.bf16 %v873, %v741
        %875 = vrot.lane.b32.xlu0 %v738, 127
        %v876 = vpop.permute.xlu0 %875
        %877 = vrot.lane.b32.xlu0 %v830, 127
        %v878 = vpop.permute.xlu0 %877
        %v879 = vsel %vm869, %v876, %v878
        %v881 = vmax.bf16 %v874, %v879
        %v882 = vmax.bf16 %v881, %v744
        %v883 = vmax.bf16 %v882, %v745
        %884 = vrot.lane.b32.xlu0 %v742, 127
        %v885 = vpop.permute.xlu0 %884
        %886 = vrot.lane.b32.xlu0 %v834, 127
        %v887 = vpop.permute.xlu0 %886
        %v888 = vsel %vm869, %v885, %v887
        %v890 = vmax.bf16 %v883, %v888
        %v891 = vmax.bf16 %v826, %v827
        %v892 = vmax.bf16 %v891, %v828
        %v893 = vmax.bf16 %v892, %v830
        %v894 = vmax.bf16 %v893, %v831
        %v895 = vmax.bf16 %v894, %v832
        %v896 = vmax.bf16 %v895, %v834
        %v897 = vmax.bf16 %v896, %v835
        %v898 = vmax.bf16 %v897, %v836
        %v899 = vmax.bf16 %v742, %v743
        %v900 = vmax.bf16 %v899, %v744
        %v901 = vmax.bf16 %v900, %v746
        %v902 = vmax.bf16 %v901, %v747
        %v903 = vmax.bf16 %v902, %v748
        %904 = vrot.lane.b32.xlu0 %v734, 119
        %v905 = vpop.permute.xlu0 %904
        %906 = vrot.lane.b32.xlu0 %v826, 119
        %v907 = vpop.permute.xlu0 %906
        %vm908 = vcmask 973824
        %v909 = vsel %vm908, %v905, %v907
        %v911 = vmax.bf16 %v903, %v909
        %912 = vrot.lane.b32.xlu0 %v735, 119
        %v913 = vpop.permute.xlu0 %912
        %914 = vrot.lane.b32.xlu0 %v827, 119
        %v915 = vpop.permute.xlu0 %914
        %v916 = vsel %vm908, %v913, %v915
        %v918 = vmax.bf16 %v911, %v916
        %919 = vrot.lane.b32.xlu0 %v736, 119
        %v920 = vpop.permute.xlu0 %919
        %921 = vrot.lane.b32.xlu0 %v828, 119
        %v922 = vpop.permute.xlu0 %921
        %v923 = vsel %vm908, %v920, %v922
        %v925 = vmax.bf16 %v918, %v923
        %v926 = vmax.bf16 %v744, %v745
        %v927 = vmax.bf16 %v926, %v888
        %v928 = vmax.bf16 %v927, %v748
        %v929 = vmax.bf16 %v928, %v749
        %930 = vrot.lane.b32.xlu0 %v746, 127
        %v931 = vpop.permute.xlu0 %930
        %932 = vrot.lane.b32.xlu0 %v838, 127
        %v933 = vpop.permute.xlu0 %932
        %v934 = vsel %vm869, %v931, %v933
        %v936 = vmax.bf16 %v929, %v934
        %v937 = vmax.bf16 %v936, %v923
        %938 = vrot.lane.b32.xlu0 %v737, 119
        %v939 = vpop.permute.xlu0 %938
        %940 = vrot.lane.b32.xlu0 %v829, 119
        %v941 = vpop.permute.xlu0 %940
        %v942 = vsel %vm908, %v939, %v941
        %v944 = vmax.bf16 %v937, %v942
        %945 = vrot.lane.b32.xlu0 %v734, 118
        %v946 = vpop.permute.xlu0 %945
        %947 = vrot.lane.b32.xlu0 %v826, 118
        %v948 = vpop.permute.xlu0 %947
        %vm949 = vcmask 965632
        %v950 = vsel %vm949, %v946, %v948
        %v952 = vmax.bf16 %v944, %v950
        %v953 = vmax.bf16 %v834, %v835
        %v954 = vmax.bf16 %v953, %v836
        %v955 = vmax.bf16 %v954, %v838
        %v956 = vmax.bf16 %v955, %v839
        %v957 = vmax.bf16 %v956, %v840
        %v959 = vmax.bf16 %v957, %v907
        %v961 = vmax.bf16 %v959, %v915
        %v963 = vmax.bf16 %v961, %v922
        %v964 = vmax.bf16 %v828, %v829
        %v966 = vmax.bf16 %v964, %v868
        %v967 = vmax.bf16 %v966, %v832
        %v968 = vmax.bf16 %v967, %v833
        %v970 = vmax.bf16 %v968, %v878
        %v971 = vmax.bf16 %v970, %v836
        %v972 = vmax.bf16 %v971, %v837
        %v974 = vmax.bf16 %v972, %v887
        %977 = vrot.lane.b32.xlu0 %v863, 127
        %v978 = vpop.permute.xlu0 %977
        %979 = vrot.lane.b32.xlu0 %v898, 127
        %v980 = vpop.permute.xlu0 %979
        %v981 = vsel %vm869, %v978, %v980
        %985 = vrot.lane.b32.xlu0 %v925, 127
        %v986 = vpop.permute.xlu0 %985
        %987 = vrot.lane.b32.xlu0 %v963, 127
        %v988 = vpop.permute.xlu0 %987
        %v989 = vsel %vm869, %v986, %v988
        %991 = vrot.lane.b32.xlu0 %v863, 119
        %v992 = vpop.permute.xlu0 %991
        %993 = vrot.lane.b32.xlu0 %v898, 119
        %v994 = vpop.permute.xlu0 %993
        %v995 = vsel %vm908, %v992, %v994
        %999 = vrot.lane.b32.xlu0 %v890, 119
        %v1000 = vpop.permute.xlu0 %999
        %1001 = vrot.lane.b32.xlu0 %v974, 119
        %v1002 = vpop.permute.xlu0 %1001
        %v1003 = vsel %vm908, %v1000, %v1002
        %1005 = vrot.lane.b32.xlu0 %v863, 118
        %v1006 = vpop.permute.xlu0 %1005
        %1007 = vrot.lane.b32.xlu0 %v898, 118
        %v1008 = vpop.permute.xlu0 %1007
        %v1009 = vsel %vm949, %v1006, %v1008
        %v1011 = vld [vmem:[%s2] sm:$0xff]
        %v1012 = vld [vmem:[%s2 + $0x8] sm:$0xff]
        %v1013 = vld [vmem:[%s2 + $0x10] sm:$0xff]
        %v1014 = vld [vmem:[%s2 + $0x18] sm:$0xff]
        %v1019 = vunpack.c.l.b16 %v1011
        %v1020 = vunpack.c.h.b16 %v1011
        %v1021 = vunpack.c.l.b16 %v1012
        %v1022 = vunpack.c.h.b16 %v1012
        %v1023 = vunpack.c.l.b16 %v1013
        %v1024 = vunpack.c.h.b16 %v1013
        %v1025 = vunpack.c.l.b16 %v1014
        %v1026 = vunpack.c.h.b16 %v1014
        %v1027 = vpack.c.b16 %v1021, %v1019
        %v1028 = vpack.c.b16 %v1022, %v1020
        %v1029 = vpack.c.b16 %v1025, %v1023
        %v1030 = vpack.c.b16 %v1026, %v1024
        %vm1033 = vcmask 130048
        %v1035 = vsel %vm1033, %v1028, 0
        %v1038 = vsel %vm1033, %v1030, 0
        %1040 = vmatprep.subr.bf16.mxu0 0
        %1041 = vmatpush1.bf16.msra.mxu0 %v863
        %1042 = vmatprep.subr.bf16.mxu0 0
        %1043 = vmatpush1.bf16.msra.mxu0 %v890
        %1044 = vmatprep.subr.bf16.mxu0 0
        %1045 = vmatpush1.bf16.msra.mxu0 %v981
        %1046 = vmatprep.subr.bf16.mxu0 0
        %1047 = vmatpush1.bf16.msra.mxu0 %v925
        %1048 = vmatprep.subr.bf16.mxu0 0
        %1049 = vmatpush1.bf16.msra.mxu0 %v952
        %1050 = vmatprep.subr.bf16.mxu0 0
        %1051 = vmatpush1.bf16.msra.mxu0 %v989
        %1052 = vmatprep.subr.bf16.mxu0 0
        %1053 = vmatpush1.bf16.msra.mxu0 %v995
        %1054 = vmatprep.subr.bf16.mxu0 0
        %1055 = vmatpush1.bf16.msra.mxu0 %v1003
        %1056 = vmatprep.subr.bf16.mxu0 0
        %1057 = vmatpush1.bf16.msra.mxu0 %v1009
        %1058 = vmatprep.subr.bf16.mxu0 0
        %1059 = vmatpush1.bf16.msra.mxu0 0
        %1060 = vmatprep.subr.bf16.mxu0 0
        %1061 = vmatpush1.bf16.msra.mxu0 0
        %1062 = vmatprep.subr.bf16.mxu0 0
        %1063 = vmatpush1.bf16.msra.mxu0 0
        %1064 = vmatprep.subr.bf16.mxu0 0
        %1065 = vmatpush1.bf16.msra.mxu0 0
        %1066 = vmatprep.subr.bf16.mxu0 0
        %1067 = vmatpush1.bf16.msra.mxu0 0
        %1068 = vmatprep.subr.bf16.mxu0 0
        %1069 = vmatpush1.bf16.msra.mxu0 0
        %1070 = vmatprep.subr.bf16.mxu0 0
        %1071 = vmatpush1.bf16.msra.mxu0 0
        %1072 = vmatprep.mubr.bf16.mxu0 %v1035
        %1073 = vmatmul.mubr.bf16.gmra.mrb[0].mxu0 %v1027
        %v1074 = vpop.f32.mrb[0].mxu0
        %v1075 = vadd.f32 0.0, %v1074
        %v1076 = vpop.f32.mrb[0].mxu0
        %v1077 = vpop.f32.mrb[0].mxu0
        %v1078 = vadd.f32 0.0, %v1077
        %v1079 = vpop.f32.mrb[0].mxu0
        %1080 = vmatprep.mubr.bf16.mxu0 %v1038
        %1081 = vmatmul.mubr.bf16.gmra.mrb[0].mxu0 %v1029
        %v1082 = vpop.f32.mrb[0].mxu0
        %v1083 = vadd.f32 0.0, %v1082
        %v1084 = vpop.f32.mrb[0].mxu0
        %v1085 = vpop.f32.mrb[0].mxu0
        %v1086 = vadd.f32 0.0, %v1085
        %v1087 = vpop.f32.mrb[0].mxu0
        %1088 = vdwg.mxu0
        %v1089 = vld [vmem:[%s3] sm:$0xff]
        %v1090 = vld [vmem:[%s3 + $0x8] sm:$0xff]
        %v1091 = vld [vmem:[%s3 + $0x10] sm:$0xff]
        %v1092 = vld [vmem:[%s3 + $0x18] sm:$0xff]
        %1094 = vset.pattern.permute.xlu0 0
        %1095 = vperm.xlu0 %1094, %v1089
        %v1096 = vpop.permute.xlu0 %1095
        %1099 = vset.pattern.permute.xlu0 0
        %1100 = vperm.xlu0 %1099, %v1090
        %v1101 = vpop.permute.xlu0 %1100
        %1104 = vset.pattern.permute.xlu0 0
        %1105 = vperm.xlu0 %1104, %v1091
        %v1106 = vpop.permute.xlu0 %1105
        %1109 = vset.pattern.permute.xlu0 0
        %1110 = vperm.xlu0 %1109, %v1092
        %v1111 = vpop.permute.xlu0 %1110
        %v1113 = vmul.f32 %v1075, %v1096
        %v1114 = vmul.f32 %v1078, %v1101
        %v1115 = vmul.f32 %v1083, %v1106
        %v1116 = vmul.f32 %v1086, %v1111
        %v1117 = vld [vmem:[%s4] sm:$0xff]
        %v1118 = vld [vmem:[%s4 + $0x8] sm:$0xff]
        %v1119 = vld [vmem:[%s4 + $0x10] sm:$0xff]
        %v1120 = vld [vmem:[%s4 + $0x18] sm:$0xff]
        %1122 = vset.pattern.permute.xlu0 0
        %1123 = vperm.xlu0 %1122, %v1117
        %v1124 = vpop.permute.xlu0 %1123
        %1127 = vset.pattern.permute.xlu0 0
        %1128 = vperm.xlu0 %1127, %v1118
        %v1129 = vpop.permute.xlu0 %1128
        %1132 = vset.pattern.permute.xlu0 0
        %1133 = vperm.xlu0 %1132, %v1119
        %v1134 = vpop.permute.xlu0 %1133
        %1137 = vset.pattern.permute.xlu0 0
        %1138 = vperm.xlu0 %1137, %v1120
        %v1139 = vpop.permute.xlu0 %1138
        %v1141 = vadd.f32 %v1113, %v1124
        %v1142 = vadd.f32 %v1114, %v1129
        %v1143 = vadd.f32 %v1115, %v1134
        %v1144 = vadd.f32 %v1116, %v1139
        %v1145 = vmax.f32 %v1141, 0.0
        %v1146 = vmax.f32 %v1142, 0.0
        %v1147 = vmax.f32 %v1143, 0.0
        %v1148 = vmax.f32 %v1144, 0.0
        %v1149 = vmin.f32 %v1145, 6.0
        %v1150 = vmin.f32 %v1146, 6.0
        %v1151 = vmin.f32 %v1147, 6.0
        %v1152 = vmin.f32 %v1148, 6.0
        %v1153 = vpack.c.bf16 %v1150, %v1149
        %v1154 = vpack.c.bf16 %v1152, %v1151
        %v1157 = vunpack.c.l.b16 %v1153
        %v1158 = vunpack.c.h.b16 %v1153
        %v1159 = vunpack.c.l.b16 %v1154
        %v1160 = vunpack.c.h.b16 %v1154
        %v1161 = vpack.c.b16 %v1157, %v1157
        %v1162 = vpack.c.b16 %v1158, %v1158
        %v1163 = vpack.c.b16 %v1159, %v1159
        %v1164 = vpack.c.b16 %v1160, %v1160
        %1169 = vst [vmem:[%s606] sm:$0xf] %v1161
        %1170 = vst [vmem:[%s606 + $0x4] sm:$0xf] %v1162
        %1171 = vst [vmem:[%s606 + $0x8] sm:$0xf] %v1163
        %1172 = vst [vmem:[%s606 + $0xc] sm:$0xf] %v1164
        %p1173 = scmp.lt.s32.totalorder %s20, 1
        %s1174 = scalar_select %p1173, %s20, 1
        %p1175 = scmp.lt.s32.totalorder %s21, 0
        %s1176 = scalar_select %p1175, %s21, 0
        %s1177 = smul.addr %s1174, 4
        %s1178 = sadd.s32 %s1176, %s1177
        %s1179 = smul.addr %s1178, 4
        %s1180 = scalar_lea.vmem %s5, %s1179
        // Predicated region
        $region123: #{asff_level0_forward.6} parent=113 // pred_check
          %p1181 = pneg %p169
        $region124: #{asff_level0_forward.6} parent=113 // pred_check_branch
          %1183 = sbr.rel (%p1181) target = $region126
        $region125: #{asff_level0_forward.6} parent=113 // pred_region
          _
        $region126: #{asff_level0_forward.6} parent=113 // pred_fallthru
          _
      $region114: #{asff_level0_forward.6} parent=5 // pred_fallthru
        _
      %p1184 = scmp.le.s32.totalorder 2, %s11
      // Predicated region
      $region127: #{asff_level0_forward.6} parent=5 // pred_check
        %p1185 = pneg %p1184
      $region128: #{asff_level0_forward.6} parent=5 // pred_check_branch
        %1187 = sbr.rel (%p1185) target = $region130
      $region129: #{asff_level0_forward.6} parent=5 // pred_region
        %s1188 = ssub.s32 %s11, 2
        // Predicated region
        $region131: #{asff_level0_forward.6} parent=129 // pred_check
          %p1189 = pneg %p175
        $region132: #{asff_level0_forward.6} parent=129 // pred_check_branch
          %1191 = sbr.rel (%p1189) target = $region134
        $region133: #{asff_level0_forward.6} parent=129 // pred_region
          %p1192 = scmp.lt.s32.totalorder %s22, 1
          %s1193 = scalar_select %p1192, %s22, 1
          %p1194 = scmp.lt.s32.totalorder %s23, 0
          %s1195 = scalar_select %p1194, %s23, 0
          %s1196 = smul.addr %s1193, 4
          %s1197 = sadd.s32 %s1195, %s1196
          %s1198 = smul.addr %s1197, 4
          %s1199 = scalar_lea.vmem %s5, %s1198
        $region134: #{asff_level0_forward.6} parent=129 // pred_fallthru
          _
      $region130: #{asff_level0_forward.6} parent=5 // pred_fallthru
        _
    $region6: #{asff_level0_forward.6} parent=1 // loop_footer
      %s15 = sadd.s32 1, %s11
    $region7: #{asff_level0_forward.6} parent=1 // loop_footer_branch
      %10 = sbr.rel target = $region3
    $region8: #{asff_level0_forward.6} parent=1 // loop_exit
      _

// kernel: asff_level0_forward.5
$region0: #{asff_level0_forward.5}
  #allocation0 [shape = 'u32[]', space=smem, size = 0x4, offset = 0x4, fixed_abs, tag = 'smem constant byte address 0x4 - core index']
  #allocation1 [shape = 'u32[144,128]{1,0:T(1,128)}', space=vmem, size = 0x12000, scoped, tag = 'internal scratch']
  %s0 = inlined_call_operand.vmem [shape: bf16[2,4,24,261], index: 0, kind: input, shape index: {}, may-alias: {0,1}]
  %s1 = inlined_call_operand.vmem [shape: bf16[2,4,24,261], index: 1, kind: input, shape index: {}, may-alias: {0,1}]
  %s2 = inlined_call_operand.vmem [shape: bf16[32,216], index: 2, kind: input, shape index: {}]
  %s3 = inlined_call_operand.vmem [shape: f32[32,1], index: 3, kind: input, shape index: {}]
  %s4 = inlined_call_operand.vmem [shape: f32[32,1], index: 4, kind: input, shape index: {}]
  %s5 = inlined_call_operand.vmem [shape: bf16[2,32,128], index: 5, kind: output, shape index: {}]
  %s6 = sld [smem:[#allocation0]]
  $region135: #{asff_level0_forward.5} parent=0
    _
  %s8 = ssub.s32 1, %s6
  %s9 = scalar_select 0, %s8, %s6
  $region1: #{asff_level0_forward.5} parent=0
    #allocation2 [shape = 'u8[49152]{0}', space=vmem, size = 0xc000, scoped, tag = 'input window, operand 0']
    #allocation3 [shape = 'u8[49152]{0}', space=vmem, size = 0xc000, scoped, tag = 'input window, operand 1']
    loop: start=0, step=1, limit=4
    $region2: #{asff_level0_forward.5} parent=1 // loop_pre_header
      _
    $region3: #{asff_level0_forward.5} parent=1 // loop_header
      %s11 = sphi 0, %s15
      %p12 = scmp.ge.s32.totalorder %s11, 4
      %s18 = sphi 0, %s30
      %s19 = sphi 0, %s26
      %s20 = sphi 0, %s18
      %s21 = sphi 0, %s19
      %s22 = sphi 0, %s20
      %s23 = sphi 0, %s21
      %s35 = sphi 0, %s37
      %s38 = sphi 0, %s35
      %s39 = sphi 0, %s38
      %s55 = sphi 0, %s39
      %s65 = sphi 0, %s67
      %s68 = sphi 0, %s65
      %s69 = sphi 0, %s68
      %s85 = sphi 0, %s69
      %s89 = sphi 0, %s89
      %s91 = sphi 0, %s89
      %s92 = sphi 0, %s91
      %s106 = sphi 0, %s92
      %s110 = sphi 0, %s110
      %s112 = sphi 0, %s110
      %s113 = sphi 0, %s112
      %s127 = sphi 0, %s113
      %s131 = sphi 0, %s131
      %s133 = sphi 0, %s131
      %s134 = sphi 0, %s133
      %s148 = sphi 0, %s134
      %s156 = sphi 0, %s158
      %s159 = sphi 0, %s156
      %s160 = sphi 0, %s159
      %s176 = sphi 0, %s160
    $region4: #{asff_level0_forward.5} parent=1 // loop_header_branch
      %14 = sbr.rel (%p12) target = $region8
    $region5: #{asff_level0_forward.5} parent=1 // loop_body
      %s16 = ssub.s32 %s11, 1
      %s17 = ssub.s32 %s11, 2
      %s24 = sadd.s32 1, %s19
      %p25 = scmp.ge.s32.totalorder %s24, 1
      %s26 = scalar_select %p25, 0, %s24
      %s27 = sadd.s32 1, %s18
      %s28 = scalar_select %p25, %s27, %s18
      %p29 = scmp.ge.s32.totalorder %s28, 2
      %s30 = scalar_select %p29, 0, %s28
      %s31 = ssub.s32 %s18, %s30
      %s32 = ssub.s32 %s19, %s26
      %s33 = sor.u32 %s31, %s32
      %p34 = scmp.eq.s32.totalorder %s33, 0
      %s36 = sadd.s32 %s35, 1
      %s37 = scalar_select %p34, %s35, %s36
      %p40 = pneg %p34
      %p41 = scmp.eq.s32.totalorder %s11, 1
      %p42 = por %p40, %p41
      %p43 = scmp.ne.s32.totalorder %s35, %s38
      %p44 = scmp.eq.s32.totalorder %s11, 0
      %p45 = por %p43, %p44
      %p46 = scmp.ne.s32.totalorder %s35, %s38
      %p47 = scmp.eq.s32.totalorder %s16, 1
      %p48 = por %p46, %p47
      %p49 = scmp.ne.s32.totalorder %s38, %s39
      %p50 = scmp.eq.s32.totalorder %s16, 0
      %p51 = por %p49, %p50
      %p52 = scmp.ne.s32.totalorder %s38, %s39
      %p53 = scmp.eq.s32.totalorder %s17, 1
      %p54 = por %p52, %p53
      %p56 = scmp.ne.s32.totalorder %s39, %s55
      %p57 = scmp.eq.s32.totalorder %s17, 0
      %p58 = por %p56, %p57
      %s59 = sadd.s32 %s19, 1
      %s60 = sadd.s32 %s26, 1
      %s61 = ssub.s32 %s18, %s30
      %s62 = ssub.s32 %s59, %s60
      %s63 = sor.u32 %s61, %s62
      %p64 = scmp.eq.s32.totalorder %s63, 0
      %s66 = sadd.s32 %s65, 1
      %s67 = scalar_select %p64, %s65, %s66
      %p70 = pneg %p64
      %p71 = scmp.eq.s32.totalorder %s11, 1
      %p72 = por %p70, %p71
      %p73 = scmp.ne.s32.totalorder %s65, %s68
      %p74 = scmp.eq.s32.totalorder %s11, 0
      %p75 = por %p73, %p74
      %p76 = scmp.ne.s32.totalorder %s65, %s68
      %p77 = scmp.eq.s32.totalorder %s16, 1
      %p78 = por %p76, %p77
      %p79 = scmp.ne.s32.totalorder %s68, %s69
      %p80 = scmp.eq.s32.totalorder %s16, 0
      %p81 = por %p79, %p80
      %p82 = scmp.ne.s32.totalorder %s68, %s69
      %p83 = scmp.eq.s32.totalorder %s17, 1
      %p84 = por %p82, %p83
      %p86 = scmp.ne.s32.totalorder %s69, %s85
      %p87 = scmp.eq.s32.totalorder %s17, 0
      %p88 = por %p86, %p87
      %s90 = sadd.s32 %s89, 1
      %p93 = scmp.eq.s32.totalorder %s11, 1
      %p94 = scmp.ne.s32.totalorder %s89, %s91
      %p95 = scmp.eq.s32.totalorder %s11, 0
      %p96 = por %p94, %p95
      %p97 = scmp.ne.s32.totalorder %s89, %s91
      %p98 = scmp.eq.s32.totalorder %s16, 1
      %p99 = por %p97, %p98
      %p100 = scmp.ne.s32.totalorder %s91, %s92
      %p101 = scmp.eq.s32.totalorder %s16, 0
      %p102 = por %p100, %p101
      %p103 = scmp.ne.s32.totalorder %s91, %s92
      %p104 = scmp.eq.s32.totalorder %s17, 1
      %p105 = por %p103, %p104
      %p107 = scmp.ne.s32.totalorder %s92, %s106
      %p108 = scmp.eq.s32.totalorder %s17, 0
      %p109 = por %p107, %p108
      %s111 = sadd.s32 %s110, 1
      %p114 = scmp.eq.s32.totalorder %s11, 1
      %p115 = scmp.ne.s32.totalorder %s110, %s112
      %p116 = scmp.eq.s32.totalorder %s11, 0
      %p117 = por %p115, %p116
      %p118 = scmp.ne.s32.totalorder %s110, %s112
      %p119 = scmp.eq.s32.totalorder %s16, 1
      %p120 = por %p118, %p119
      %p121 = scmp.ne.s32.totalorder %s112, %s113
      %p122 = scmp.eq.s32.totalorder %s16, 0
      %p123 = por %p121, %p122
      %p124 = scmp.ne.s32.totalorder %s112, %s113
      %p125 = scmp.eq.s32.totalorder %s17, 1
      %p126 = por %p124, %p125
      %p128 = scmp.ne.s32.totalorder %s113, %s127
      %p129 = scmp.eq.s32.totalorder %s17, 0
      %p130 = por %p128, %p129
      %s132 = sadd.s32 %s131, 1
      %p135 = scmp.eq.s32.totalorder %s11, 1
      %p136 = scmp.ne.s32.totalorder %s131, %s133
      %p137 = scmp.eq.s32.totalorder %s11, 0
      %p138 = por %p136, %p137
      %p139 = scmp.ne.s32.totalorder %s131, %s133
      %p140 = scmp.eq.s32.totalorder %s16, 1
      %p141 = por %p139, %p140
      %p142 = scmp.ne.s32.totalorder %s133, %s134
      %p143 = scmp.eq.s32.totalorder %s16, 0
      %p144 = por %p142, %p143
      %p145 = scmp.ne.s32.totalorder %s133, %s134
      %p146 = scmp.eq.s32.totalorder %s17, 1
      %p147 = por %p145, %p146
      %p149 = scmp.ne.s32.totalorder %s134, %s148
      %p150 = scmp.eq.s32.totalorder %s17, 0
      %p151 = por %p149, %p150
      %s152 = ssub.s32 %s18, %s30
      %s153 = ssub.s32 %s19, %s26
      %s154 = sor.u32 %s152, %s153
      %p155 = scmp.eq.s32.totalorder %s154, 0
      %s157 = sadd.s32 %s156, 1
      %s158 = scalar_select %p155, %s156, %s157
      %p161 = pneg %p155
      %p162 = scmp.eq.s32.totalorder %s11, 1
      %p163 = por %p161, %p162
      %p164 = scmp.ne.s32.totalorder %s156, %s159
      %p165 = scmp.eq.s32.totalorder %s11, 0
      %p166 = por %p164, %p165
      %p167 = scmp.ne.s32.totalorder %s156, %s159
      %p168 = scmp.eq.s32.totalorder %s16, 1
      %p169 = por %p167, %p168
      %p170 = scmp.ne.s32.totalorder %s159, %s160
      %p171 = scmp.eq.s32.totalorder %s16, 0
      %p172 = por %p170, %p171
      %p173 = scmp.ne.s32.totalorder %s159, %s160
      %p174 = scmp.eq.s32.totalorder %s17, 1
      %p175 = por %p173, %p174
      %p177 = scmp.ne.s32.totalorder %s160, %s176
      %p178 = scmp.eq.s32.totalorder %s17, 0
      %p179 = por %p177, %p178
      %p180 = scmp.le.s32.totalorder 1, %s11
      %p181 = scmp.lt.s32.totalorder %s11, 3
      %p182 = pnand %p180, %p181
      %p183 = pneg %p182
      // Predicated region
      $region9: #{asff_level0_forward.5} parent=5 // pred_check
        _
      $region10: #{asff_level0_forward.5} parent=5 // pred_check_branch
        %185 = sbr.rel (%p182) target = $region12
      $region11: #{asff_level0_forward.5} parent=5 // pred_region
        %s186 = ssub.s32 %s11, 1
        // Predicated region
        $region13: #{asff_level0_forward.5} parent=11 // pred_check
          %p187 = pneg %p102
        $region14: #{asff_level0_forward.5} parent=11 // pred_check_branch
          %189 = sbr.rel (%p187) target = $region16
        $region15: #{asff_level0_forward.5} parent=11 // pred_region
          _
        $region16: #{asff_level0_forward.5} parent=11 // pred_fallthru
          _
        // Predicated region
        $region17: #{asff_level0_forward.5} parent=11 // pred_check
          %p190 = pneg %p123
        $region18: #{asff_level0_forward.5} parent=11 // pred_check_branch
          %192 = sbr.rel (%p190) target = $region20
        $region19: #{asff_level0_forward.5} parent=11 // pred_region
          _
        $region20: #{asff_level0_forward.5} parent=11 // pred_fallthru
          _
        // Predicated region
        $region21: #{asff_level0_forward.5} parent=11 // pred_check
          %p193 = pneg %p144
        $region22: #{asff_level0_forward.5} parent=11 // pred_check_branch
          %195 = sbr.rel (%p193) target = $region24
        $region23: #{asff_level0_forward.5} parent=11 // pred_region
          _
        $region24: #{asff_level0_forward.5} parent=11 // pred_fallthru
          _
      $region12: #{asff_level0_forward.5} parent=5 // pred_fallthru
        _
      %p196 = scmp.lt.s32.totalorder %s11, 2
      // Predicated region
      $region25: #{asff_level0_forward.5} parent=5 // pred_check
        %p197 = pneg %p196
      $region26: #{asff_level0_forward.5} parent=5 // pred_check_branch
        %199 = sbr.rel (%p197) target = $region28
      $region27: #{asff_level0_forward.5} parent=5 // pred_region
        // Predicated region
        $region29: #{asff_level0_forward.5} parent=27 // pred_check
          %p200 = pneg %p45
        $region30: #{asff_level0_forward.5} parent=27 // pred_check_branch
          %202 = sbr.rel (%p200) target = $region32
        $region31: #{asff_level0_forward.5} parent=27 // pred_region
          %s203 = sand.u32 %s35, 1
          %s204 = sand.u32 %s35, 1
          %s205 = smul.addr %s204, 48
          %s206 = scalar_lea.vmem [#allocation2], %s205
          %s207 = smul.addr %s18, 36
          %s208 = sadd.s32 %s19, %s207
          %s209 = smul.addr %s208, 4
          %s210 = scalar_lea.vmem %s0, %s209
          // Predicated region
          $region33: #{asff_level0_forward.5} parent=31 // pred_check
            _
          $region34: #{asff_level0_forward.5} parent=31 // pred_check_branch
            %212 = sbr.rel (0) target = $region36
          $region35: #{asff_level0_forward.5} parent=31 // pred_region
            // Predicated region
            $region37: #{asff_level0_forward.5} parent=35 // pred_check
              _
            $region38: #{asff_level0_forward.5} parent=35 // pred_check_branch
              %214 = sbr.rel target = $region40
            $region39: #{asff_level0_forward.5} parent=35 // pred_region
              // Predicated region
              $region52: #{asff_level0_forward.5} parent=39 // pred_check
                _
              $region53: #{asff_level0_forward.5} parent=39 // pred_check_branch
                %251 = sbr.rel (0) target = $region55
              $region54: #{asff_level0_forward.5} parent=39 // pred_region
                loop: start=0, step=1, limit=1
                $region56: #{asff_level0_forward.5} parent=54 // loop_pre_header
                  _
                $region57: #{asff_level0_forward.5} parent=54 // loop_header
                  %s253 = sphi 0, %s257
                  %p254 = scmp.ge.s32.totalorder %s253, 1
                  %s258 = sphi %s210, %s210
                  %s259 = sphi %s206, %s206
                $region58: #{asff_level0_forward.5} parent=54 // loop_header_branch
                  %256 = sbr.rel (%p254) target = $region62
                $region59: #{asff_level0_forward.5} parent=54 // loop_body
                  _
                $region60: #{asff_level0_forward.5} parent=54 // loop_footer
                  %s257 = sadd.s32 1, %s253
                $region61: #{asff_level0_forward.5} parent=54 // loop_footer_branch
                  %252 = sbr.rel target = $region57
                $region62: #{asff_level0_forward.5} parent=54 // loop_exit
                  _
                loop: start=0, step=1, limit=1
                $region63: #{asff_level0_forward.5} parent=54 // loop_pre_header
                  _
                $region64: #{asff_level0_forward.5} parent=54 // loop_header
                  %s262 = sphi 0, %s266
                  %p263 = scmp.ge.s32.totalorder %s262, 1
                  %s267 = sphi %s210, %s210
                  %s268 = sphi %s206, %s206
                $region65: #{asff_level0_forward.5} parent=54 // loop_header_branch
                  %265 = sbr.rel (%p263) target = $region69
                $region66: #{asff_level0_forward.5} parent=54 // loop_body
                  %v269 = vld [vmem:[%s267] sm:$0xf]
                  %270 = vst [vmem:[%s268] sm:$0xf] %v269
                  %v271 = vld [vmem:[%s267 + $0xc] sm:$0xf]
                  %272 = vst [vmem:[%s268 + $0x4] sm:$0xf] %v271
                  %v273 = vld [vmem:[%s267 + $0x18] sm:$0xf]
                  %274 = vst [vmem:[%s268 + $0x8] sm:$0xf] %v273
                  %v275 = vld [vmem:[%s267 + $0x24] sm:$0xf]
                  %276 = vst [vmem:[%s268 + $0xc] sm:$0xf] %v275
                  %v277 = vld [vmem:[%s267 + $0x30] sm:$0xf]
                  %278 = vst [vmem:[%s268 + $0x10] sm:$0xf] %v277
                  %v279 = vld [vmem:[%s267 + $0x3c] sm:$0xf]
                  %280 = vst [vmem:[%s268 + $0x14] sm:$0xf] %v279
                  %v281 = vld [vmem:[%s267 + $0x48] sm:$0xf]
                  %282 = vst [vmem:[%s268 + $0x18] sm:$0xf] %v281
                  %v283 = vld [vmem:[%s267 + $0x54] sm:$0xf]
                  %284 = vst [vmem:[%s268 + $0x1c] sm:$0xf] %v283
                  %v285 = vld [vmem:[%s267 + $0x60] sm:$0xf]
                  %286 = vst [vmem:[%s268 + $0x20] sm:$0xf] %v285
                  %v287 = vld [vmem:[%s267 + $0x6c] sm:$0xf]
                  %288 = vst [vmem:[%s268 + $0x24] sm:$0xf] %v287
                  %v289 = vld [vmem:[%s267 + $0x78] sm:$0xf]
                  %290 = vst [vmem:[%s268 + $0x28] sm:$0xf] %v289
                  %v291 = vld [vmem:[%s267 + $0x84] sm:$0xf]
                  %292 = vst [vmem:[%s268 + $0x2c] sm:$0xf] %v291
                $region67: #{asff_level0_forward.5} parent=54 // loop_footer
                  %s266 = sadd.s32 1, %s262
                $region68: #{asff_level0_forward.5} parent=54 // loop_footer_branch
                  %261 = sbr.rel target = $region64
                $region69: #{asff_level0_forward.5} parent=54 // loop_exit
                  _
              $region55: #{asff_level0_forward.5} parent=39 // pred_fallthru
                _
            $region40: #{asff_level0_forward.5} parent=35 // pred_fallthru
              _
            // Predicated region
            $region41: #{asff_level0_forward.5} parent=35 // pred_check
              _
            $region42: #{asff_level0_forward.5} parent=35 // pred_check_branch
              %216 = sbr.rel (0) target = $region44
            $region43: #{asff_level0_forward.5} parent=35 // pred_region
              loop: start=0, step=1, limit=1
              $region45: #{asff_level0_forward.5} parent=43 // loop_pre_header
                _
              $region46: #{asff_level0_forward.5} parent=43 // loop_header
                %s219 = sphi 0, %s223
                %p220 = scmp.ge.s32.totalorder %s219, 1
                %s224 = sphi %s210, %s210
                %s225 = sphi %s206, %s206
              $region47: #{asff_level0_forward.5} parent=43 // loop_header_branch
                %222 = sbr.rel (%p220) target = $region51
              $region48: #{asff_level0_forward.5} parent=43 // loop_body
                %v226 = vld [vmem:[%s224] sm:$0xf]
                %227 = vst [vmem:[%s225] sm:$0xf] %v226
                %v228 = vld [vmem:[%s224 + $0xc] sm:$0xf]
                %229 = vst [vmem:[%s225 + $0x4] sm:$0xf] %v228
                %v230 = vld [vmem:[%s224 + $0x18] sm:$0xf]
                %231 = vst [vmem:[%s225 + $0x8] sm:$0xf] %v230
                %v232 = vld [vmem:[%s224 + $0x24] sm:$0xf]
                %233 = vst [vmem:[%s225 + $0xc] sm:$0xf] %v232
                %v234 = vld [vmem:[%s224 + $0x30] sm:$0xf]
                %235 = vst [vmem:[%s225 + $0x10] sm:$0xf] %v234
                %v236 = vld [vmem:[%s224 + $0x3c] sm:$0xf]
                %237 = vst [vmem:[%s225 + $0x14] sm:$0xf] %v236
                %v238 = vld [vmem:[%s224 + $0x48] sm:$0xf]
                %239 = vst [vmem:[%s225 + $0x18] sm:$0xf] %v238
                %v240 = vld [vmem:[%s224 + $0x54] sm:$0xf]
                %241 = vst [vmem:[%s225 + $0x1c] sm:$0xf] %v240
                %v242 = vld [vmem:[%s224 + $0x60] sm:$0xf]
                %243 = vst [vmem:[%s225 + $0x20] sm:$0xf] %v242
                %v244 = vld [vmem:[%s224 + $0x6c] sm:$0xf]
                %245 = vst [vmem:[%s225 + $0x24] sm:$0xf] %v244
                %v246 = vld [vmem:[%s224 + $0x78] sm:$0xf]
                %247 = vst [vmem:[%s225 + $0x28] sm:$0xf] %v246
                %v248 = vld [vmem:[%s224 + $0x84] sm:$0xf]
                %249 = vst [vmem:[%s225 + $0x2c] sm:$0xf] %v248
              $region49: #{asff_level0_forward.5} parent=43 // loop_footer
                %s223 = sadd.s32 1, %s219
              $region50: #{asff_level0_forward.5} parent=43 // loop_footer_branch
                %218 = sbr.rel target = $region46
              $region51: #{asff_level0_forward.5} parent=43 // loop_exit
                _
            $region44: #{asff_level0_forward.5} parent=35 // pred_fallthru
              _
          $region36: #{asff_level0_forward.5} parent=31 // pred_fallthru
            _
          %293 = vnop
        $region32: #{asff_level0_forward.5} parent=27 // pred_fallthru
          _
        // Predicated region
        $region70: #{asff_level0_forward.5} parent=27 // pred_check
          %p294 = pneg %p75
        $region71: #{asff_level0_forward.5} parent=27 // pred_check_branch
          %296 = sbr.rel (%p294) target = $region73
        $region72: #{asff_level0_forward.5} parent=27 // pred_region
          %s297 = sand.u32 %s65, 1
          %s298 = sand.u32 %s65, 1
          %s299 = smul.addr %s298, 48
          %s300 = scalar_lea.vmem [#allocation3], %s299
          %s301 = sadd.s32 %s19, 1
          %s302 = smul.addr %s18, 36
          %s303 = sadd.s32 %s301, %s302
          %s304 = smul.addr %s303, 4
          %s305 = scalar_lea.vmem %s1, %s304
          // Predicated region
          $region74: #{asff_level0_forward.5} parent=72 // pred_check
            _
          $region75: #{asff_level0_forward.5} parent=72 // pred_check_branch
            %307 = sbr.rel (0) target = $region77
          $region76: #{asff_level0_forward.5} parent=72 // pred_region
            // Predicated region
            $region78: #{asff_level0_forward.5} parent=76 // pred_check
              _
            $region79: #{asff_level0_forward.5} parent=76 // pred_check_branch
              %309 = sbr.rel target = $region81
            $region80: #{asff_level0_forward.5} parent=76 // pred_region
              // Predicated region
              $region93: #{asff_level0_forward.5} parent=80 // pred_check
                _
              $region94: #{asff_level0_forward.5} parent=80 // pred_check_branch
                %346 = sbr.rel (0) target = $region96
              $region95: #{asff_level0_forward.5} parent=80 // pred_region
                loop: start=0, step=1, limit=1
                $region97: #{asff_level0_forward.5} parent=95 // loop_pre_header
                  _
                $region98: #{asff_level0_forward.5} parent=95 // loop_header
                  %s348 = sphi 0, %s352
                  %p349 = scmp.ge.s32.totalorder %s348, 1
                  %s353 = sphi %s305, %s305
                  %s354 = sphi %s300, %s300
                $region99: #{asff_level0_forward.5} parent=95 // loop_header_branch
                  %351 = sbr.rel (%p349) target = $region103
                $region100: #{asff_level0_forward.5} parent=95 // loop_body
                  _
                $region101: #{asff_level0_forward.5} parent=95 // loop_footer
                  %s352 = sadd.s32 1, %s348
                $region102: #{asff_level0_forward.5} parent=95 // loop_footer_branch
                  %347 = sbr.rel target = $region98
                $region103: #{asff_level0_forward.5} parent=95 // loop_exit
                  _
                loop: start=0, step=1, limit=1
                $region104: #{asff_level0_forward.5} parent=95 // loop_pre_header
                  _
                $region105: #{asff_level0_forward.5} parent=95 // loop_header
                  %s357 = sphi 0, %s361
                  %p358 = scmp.ge.s32.totalorder %s357, 1
                  %s362 = sphi %s305, %s305
                  %s363 = sphi %s300, %s300
                $region106: #{asff_level0_forward.5} parent=95 // loop_header_branch
                  %360 = sbr.rel (%p358) target = $region110
                $region107: #{asff_level0_forward.5} parent=95 // loop_body
                  %v364 = vld [vmem:[%s362] sm:$0xf]
                  %365 = vst [vmem:[%s363] sm:$0xf] %v364
                  %v366 = vld [vmem:[%s362 + $0xc] sm:$0xf]
                  %367 = vst [vmem:[%s363 + $0x4] sm:$0xf] %v366
                  %v368 = vld [vmem:[%s362 + $0x18] sm:$0xf]
                  %369 = vst [vmem:[%s363 + $0x8] sm:$0xf] %v368
                  %v370 = vld [vmem:[%s362 + $0x24] sm:$0xf]
                  %371 = vst [vmem:[%s363 + $0xc] sm:$0xf] %v370
                  %v372 = vld [vmem:[%s362 + $0x30] sm:$0xf]
                  %373 = vst [vmem:[%s363 + $0x10] sm:$0xf] %v372
                  %v374 = vld [vmem:[%s362 + $0x3c] sm:$0xf]
                  %375 = vst [vmem:[%s363 + $0x14] sm:$0xf] %v374
                  %v376 = vld [vmem:[%s362 + $0x48] sm:$0xf]
                  %377 = vst [vmem:[%s363 + $0x18] sm:$0xf] %v376
                  %v378 = vld [vmem:[%s362 + $0x54] sm:$0xf]
                  %379 = vst [vmem:[%s363 + $0x1c] sm:$0xf] %v378
                  %v380 = vld [vmem:[%s362 + $0x60] sm:$0xf]
                  %381 = vst [vmem:[%s363 + $0x20] sm:$0xf] %v380
                  %v382 = vld [vmem:[%s362 + $0x6c] sm:$0xf]
                  %383 = vst [vmem:[%s363 + $0x24] sm:$0xf] %v382
                  %v384 = vld [vmem:[%s362 + $0x78] sm:$0xf]
                  %385 = vst [vmem:[%s363 + $0x28] sm:$0xf] %v384
                  %v386 = vld [vmem:[%s362 + $0x84] sm:$0xf]
                  %387 = vst [vmem:[%s363 + $0x2c] sm:$0xf] %v386
                $region108: #{asff_level0_forward.5} parent=95 // loop_footer
                  %s361 = sadd.s32 1, %s357
                $region109: #{asff_level0_forward.5} parent=95 // loop_footer_branch
                  %356 = sbr.rel target = $region105
                $region110: #{asff_level0_forward.5} parent=95 // loop_exit
                  _
              $region96: #{asff_level0_forward.5} parent=80 // pred_fallthru
                _
            $region81: #{asff_level0_forward.5} parent=76 // pred_fallthru
              _
            // Predicated region
            $region82: #{asff_level0_forward.5} parent=76 // pred_check
              _
            $region83: #{asff_level0_forward.5} parent=76 // pred_check_branch
              %311 = sbr.rel (0) target = $region85
            $region84: #{asff_level0_forward.5} parent=76 // pred_region
              loop: start=0, step=1, limit=1
              $region86: #{asff_level0_forward.5} parent=84 // loop_pre_header
                _
              $region87: #{asff_level0_forward.5} parent=84 // loop_header
                %s314 = sphi 0, %s318
                %p315 = scmp.ge.s32.totalorder %s314, 1
                %s319 = sphi %s305, %s305
                %s320 = sphi %s300, %s300
              $region88: #{asff_level0_forward.5} parent=84 // loop_header_branch
                %317 = sbr.rel (%p315) target = $region92
              $region89: #{asff_level0_forward.5} parent=84 // loop_body
                %v321 = vld [vmem:[%s319] sm:$0xf]
                %322 = vst [vmem:[%s320] sm:$0xf] %v321
                %v323 = vld [vmem:[%s319 + $0xc] sm:$0xf]
                %324 = vst [vmem:[%s320 + $0x4] sm:$0xf] %v323
                %v325 = vld [vmem:[%s319 + $0x18] sm:$0xf]
                %326 = vst [vmem:[%s320 + $0x8] sm:$0xf] %v325
                %v327 = vld [vmem:[%s319 + $0x24] sm:$0xf]
                %328 = vst [vmem:[%s320 + $0xc] sm:$0xf] %v327
                %v329 = vld [vmem:[%s319 + $0x30] sm:$0xf]
                %330 = vst [vmem:[%s320 + $0x10] sm:$0xf] %v329
                %v331 = vld [vmem:[%s319 + $0x3c] sm:$0xf]
                %332 = vst [vmem:[%s320 + $0x14] sm:$0xf] %v331
                %v333 = vld [vmem:[%s319 + $0x48] sm:$0xf]
                %334 = vst [vmem:[%s320 + $0x18] sm:$0xf] %v333
                %v335 = vld [vmem:[%s319 + $0x54] sm:$0xf]
                %336 = vst [vmem:[%s320 + $0x1c] sm:$0xf] %v335
                %v337 = vld [vmem:[%s319 + $0x60] sm:$0xf]
                %338 = vst [vmem:[%s320 + $0x20] sm:$0xf] %v337
                %v339 = vld [vmem:[%s319 + $0x6c] sm:$0xf]
                %340 = vst [vmem:[%s320 + $0x24] sm:$0xf] %v339
                %v341 = vld [vmem:[%s319 + $0x78] sm:$0xf]
                %342 = vst [vmem:[%s320 + $0x28] sm:$0xf] %v341
                %v343 = vld [vmem:[%s319 + $0x84] sm:$0xf]
                %344 = vst [vmem:[%s320 + $0x2c] sm:$0xf] %v343
              $region90: #{asff_level0_forward.5} parent=84 // loop_footer
                %s318 = sadd.s32 1, %s314
              $region91: #{asff_level0_forward.5} parent=84 // loop_footer_branch
                %313 = sbr.rel target = $region87
              $region92: #{asff_level0_forward.5} parent=84 // loop_exit
                _
            $region85: #{asff_level0_forward.5} parent=76 // pred_fallthru
              _
          $region77: #{asff_level0_forward.5} parent=72 // pred_fallthru
            _
          %388 = vnop
        $region73: #{asff_level0_forward.5} parent=27 // pred_fallthru
          _
      $region28: #{asff_level0_forward.5} parent=5 // pred_fallthru
        _
      %p389 = scmp.le.s32.totalorder 1, %s11
      %p390 = scmp.lt.s32.totalorder %s11, 3
      %p391 = pnand %p389, %p390
      %p392 = pneg %p391
      // Predicated region
      $region111: #{asff_level0_forward.5} parent=5 // pred_check
        _
      $region112: #{asff_level0_forward.5} parent=5 // pred_check_branch
        %394 = sbr.rel (%p391) target = $region114
      $region113: #{asff_level0_forward.5} parent=5 // pred_region
        %s395 = ssub.s32 %s11, 1
        %s396 = sand.u32 %s38, 1
        %s397 = sand.u32 %s38, 1
        %s398 = smul.addr %s397, 48
        %s399 = scalar_lea.vmem [#allocation2], %s398
        // Predicated region
        $region115: #{asff_level0_forward.5} parent=113 // pred_check
          %p400 = pneg %p51
        $region116: #{asff_level0_forward.5} parent=113 // pred_check_branch
          %402 = sbr.rel (%p400) target = $region118
        $region117: #{asff_level0_forward.5} parent=113 // pred_region
          _
        $region118: #{asff_level0_forward.5} parent=113 // pred_fallthru
          _
        %s403 = sand.u32 %s68, 1
        %s404 = sand.u32 %s68, 1
        %s405 = smul.addr %s404, 48
        %s406 = scalar_lea.vmem [#allocation3], %s405
        // Predicated region
        $region119: #{asff_level0_forward.5} parent=113 // pred_check
          %p407 = pneg %p81
        $region120: #{asff_level0_forward.5} parent=113 // pred_check_branch
          %409 = sbr.rel (%p407) target = $region122
        $region121: #{asff_level0_forward.5} parent=113 // pred_region
          _
        $region122: #{asff_level0_forward.5} parent=113 // pred_fallthru
          _
        %s410 = sand.u32 %s38, 1
        %s411 = sand.u32 %s38, 1
        %s412 = smul.addr %s411, 48
        %s413 = scalar_lea.vmem [#allocation2], %s412
        %p414 = pneg %p51
        %p415 = pneg %p48
        %s416 = sand.u32 %s68, 1
        %s417 = sand.u32 %s68, 1
        %s418 = smul.addr %s417, 48
        %s419 = scalar_lea.vmem [#allocation3], %s418
        %p420 = pneg %p81
        %p421 = pneg %p78
        %p422 = pneg %p102
        %p423 = pneg %p99
        %p424 = pneg %p123
        %p425 = pneg %p120
        %p426 = pneg %p144
        %p427 = pneg %p141
        %p428 = pneg %p172
        %p429 = pneg %p169
        %p430 = scmp.lt.s32.totalorder %s20, 1
        %s431 = scalar_select %p430, %s20, 1
        %p432 = scmp.lt.s32.totalorder %s21, 0
        %s433 = scalar_select %p432, %s21, 0
        %s434 = smul.addr %s431, 4
        %s435 = sadd.s32 %s433, %s434
        %s436 = smul.addr %s435, 4
        %s437 = scalar_lea.vmem %s5, %s436
        %s438 = sadd.s32 %s21, 1
        %p439 = scmp.lt.s32.totalorder %s20, 1
        %s440 = scalar_select %p439, %s20, 1
        %p441 = scmp.lt.s32.totalorder %s21, 0
        %s442 = scalar_select %p441, %s21, 0
        %s443 = smul.addr %s440, 4
        %s444 = sadd.s32 %s442, %s443
        %s445 = smul.addr %s444, 4
        %s446 = scalar_lea.vmem %s5, %s445
        %v448 = vld [vmem:[%s399] sm:$0xf]
        %v449 = vld [vmem:[%s399 + $0x4] sm:$0xf]
        %v450 = vld [vmem:[%s399 + $0x8] sm:$0xf]
        %v451 = vld [vmem:[%s399 + $0xc] sm:$0xf]
        %v452 = vld [vmem:[%s399 + $0x10] sm:$0xf]
        %v453 = vld [vmem:[%s399 + $0x14] sm:$0xf]
        %v454 = vld [vmem:[%s399 + $0x18] sm:$0xf]
        %v455 = vld [vmem:[%s399 + $0x1c] sm:$0xf]
        %v456 = vld [vmem:[%s399 + $0x20] sm:$0xf]
        %v457 = vld [vmem:[%s399 + $0x24] sm:$0xf]
        %v458 = vld [vmem:[%s399 + $0x28] sm:$0xf]
        %v459 = vld [vmem:[%s399 + $0x2c] sm:$0xf]
        %v460 = vld [vmem:[%s406] sm:$0xf]
        %v461 = vld [vmem:[%s406 + $0x4] sm:$0xf]
        %v462 = vld [vmem:[%s406 + $0x8] sm:$0xf]
        %v463 = vld [vmem:[%s406 + $0xc] sm:$0xf]
        %v464 = vld [vmem:[%s406 + $0x10] sm:$0xf]
        %v465 = vld [vmem:[%s406 + $0x14] sm:$0xf]
        %v466 = vld [vmem:[%s406 + $0x18] sm:$0xf]
        %v467 = vld [vmem:[%s406 + $0x1c] sm:$0xf]
        %v468 = vld [vmem:[%s406 + $0x20] sm:$0xf]
        %v481 = vunpack.c.l.b16 %v448
        %v482 = vunpack.c.l.b16 %v449
        %v483 = vunpack.c.l.b16 %v450
        %v484 = vunpack.c.l.b16 %v451
        %v485 = vunpack.c.l.b16 %v452
        %v486 = vunpack.c.l.b16 %v453
        %v487 = vunpack.c.l.b16 %v454
        %v488 = vunpack.c.l.b16 %v455
        %v489 = vunpack.c.l.b16 %v456
        %v490 = vunpack.c.l.b16 %v457
        %v491 = vunpack.c.l.b16 %v458
        %v492 = vunpack.c.l.b16 %v459
        %v493 = vpack.c.b16 %v482, %v481
        %v494 = vpack.c.b16 %v483, %v483
        %v495 = vpack.c.b16 %v485, %v484
        %v496 = vpack.c.b16 %v486, %v486
        %v497 = vpack.c.b16 %v488, %v487
        %v498 = vpack.c.b16 %v489, %v489
        %v499 = vpack.c.b16 %v491, %v490
        %v500 = vpack.c.b16 %v492, %v492
        %v512 = vunpack.c.l.b16 %v460
        %v513 = vunpack.c.l.b16 %v461
        %v514 = vunpack.c.l.b16 %v462
        %v515 = vunpack.c.l.b16 %v463
        %v516 = vunpack.c.l.b16 %v464
        %v517 = vunpack.c.l.b16 %v465
        %v518 = vunpack.c.l.b16 %v466
        %v519 = vunpack.c.l.b16 %v467
        %v520 = vunpack.c.l.b16 %v468
        %v521 = vpack.c.b16 %v513, %v512
        %v522 = vpack.c.b16 %v514, %v514
        %v523 = vpack.c.b16 %v516, %v515
        %v524 = vpack.c.b16 %v517, %v517
        %v525 = vpack.c.b16 %v519, %v518
        %v526 = vpack.c.b16 %v520, %v520
        %vm527 = vcmask 1043456
        %v528 = vrot.slane %v495, 4
        %v529 = vrot.slane %v496, 4
        %v530 = vsel %vm527, %v528, %v529
        %532 = vrot.lane.b32.xlu0 %v493, 127
        %v533 = vpop.permute.xlu0 %532
        %534 = vrot.lane.b32.xlu0 %v521, 127
        %v535 = vpop.permute.xlu0 %534
        %536 = vrot.lane.b32.xlu0 %v494, 127
        %v537 = vpop.permute.xlu0 %536
        %538 = vrot.lane.b32.xlu0 %v522, 127
        %v539 = vpop.permute.xlu0 %538
        %vm540 = vcmask 1039360
        %v541 = vsel %vm540, %v533, %v535
        %v542 = vsel %vm540, %v537, %v539
        %v544 = vrot.slane %v497, 4
        %v545 = vrot.slane %v498, 4
        %v546 = vsel %vm527, %v544, %v545
        %v548 = vrot.slane %v525, 4
        %v549 = vrot.slane %v526, 4
        %v550 = vsel %vm527, %v548, %v549
        %551 = vrot.lane.b32.xlu0 %v544, 127
        %v552 = vpop.permute.xlu0 %551
        %553 = vrot.lane.b32.xlu0 %v548, 127
        %v554 = vpop.permute.xlu0 %553
        %555 = vrot.lane.b32.xlu0 %v546, 127
        %v556 = vpop.permute.xlu0 %555
        %557 = vrot.lane.b32.xlu0 %v550, 127
        %v558 = vpop.permute.xlu0 %557
        %v559 = vsel %vm540, %v552, %v554
        %v560 = vsel %vm540, %v556, %v558
        %562 = vrot.lane.b32.xlu0 %v493, 119
        %v563 = vpop.permute.xlu0 %562
        %564 = vrot.lane.b32.xlu0 %v521, 119
        %v565 = vpop.permute.xlu0 %564
        %566 = vrot.lane.b32.xlu0 %v494, 119
        %v567 = vpop.permute.xlu0 %566
        %568 = vrot.lane.b32.xlu0 %v522, 119
        %v569 = vpop.permute.xlu0 %568
        %vm570 = vcmask 973824
        %v571 = vsel %vm570, %v563, %v565
        %v572 = vsel %vm570, %v567, %v569
        %v574 = vrot.slane %v523, 4
        %v575 = vrot.slane %v524, 4
        %v576 = vsel %vm527, %v574, %v575
        %577 = vrot.lane.b32.xlu0 %v528, 119
        %v578 = vpop.permute.xlu0 %577
        %579 = vrot.lane.b32.xlu0 %v574, 119
        %v580 = vpop.permute.xlu0 %579
        %581 = vrot.lane.b32.xlu0 %v530, 119
        %v582 = vpop.permute.xlu0 %581
        %583 = vrot.lane.b32.xlu0 %v576, 119
        %v584 = vpop.permute.xlu0 %583
        %v585 = vsel %vm570, %v578, %v580
        %v586 = vsel %vm570, %v582, %v584
        %588 = vrot.lane.b32.xlu0 %v493, 118
        %v589 = vpop.permute.xlu0 %588
        %590 = vrot.lane.b32.xlu0 %v521, 118
        %v591 = vpop.permute.xlu0 %590
        %592 = vrot.lane.b32.xlu0 %v494, 118
        %v593 = vpop.permute.xlu0 %592
        %594 = vrot.lane.b32.xlu0 %v522, 118
        %v595 = vpop.permute.xlu0 %594
        %vm596 = vcmask 965632
        %v597 = vsel %vm596, %v589, %v591
        %v598 = vsel %vm596, %v593, %v595
        %vm600 = vcmask 1043456
        %v603 = vsel %vm600, %v494, %v528
        %v607 = vsel %vm600, %v542, %v544
        %v611 = vsel %vm600, %v500, %v559
        %v615 = vsel %vm600, %v572, %v585
        %v617 = vld [vmem:[%s2] sm:$0xff]
        %v618 = vld [vmem:[%s2 + $0x8] sm:$0xff]
        %v619 = vld [vmem:[%s2 + $0x10] sm:$0xff]
        %v620 = vld [vmem:[%s2 + $0x18] sm:$0xff]
        %v625 = vunpack.c.l.b16 %v617
        %v626 = vunpack.c.h.b16 %v617
        %v627 = vunpack.c.l.b16 %v618
        %v628 = vunpack.c.h.b16 %v618
        %v629 = vunpack.c.l.b16 %v619
        %v630 = vunpack.c.h.b16 %v619
        %v631 = vunpack.c.l.b16 %v620
        %v632 = vunpack.c.h.b16 %v620
        %v633 = vpack.c.b16 %v627, %v625
        %v634 = vpack.c.b16 %v628, %v626
        %v635 = vpack.c.b16 %v631, %v629
        %v636 = vpack.c.b16 %v632, %v630
        %vm639 = vcmask 719872
        %v641 = vsel %vm639, %v634, 0
        %v644 = vsel %vm639, %v636, 0
        %v647 = vsel %vm600, %v598, 0
        %649 = vmatprep.subr.bf16.mxu0 0
        %650 = vmatpush1.bf16.msra.mxu0 %v493
        %651 = vmatprep.subr.bf16.mxu0 0
        %652 = vmatpush1.bf16.msra.mxu0 %v603
        %653 = vmatprep.subr.bf16.mxu0 0
        %654 = vmatpush1.bf16.msra.mxu0 %v530
        %655 = vmatprep.subr.bf16.mxu0 0
        %656 = vmatpush1.bf16.msra.mxu0 %v541
        %657 = vmatprep.subr.bf16.mxu0 0
        %658 = vmatpush1.bf16.msra.mxu0 %v607
        %659 = vmatprep.subr.bf16.mxu0 0
        %660 = vmatpush1.bf16.msra.mxu0 %v546
        %661 = vmatprep.subr.bf16.mxu0 0
        %662 = vmatpush1.bf16.msra.mxu0 %v499
        %663 = vmatprep.subr.bf16.mxu0 0
        %664 = vmatpush1.bf16.msra.mxu0 %v611
        %665 = vmatprep.subr.bf16.mxu0 0
        %666 = vmatpush1.bf16.msra.mxu0 %v560
        %667 = vmatprep.subr.bf16.mxu0 0
        %668 = vmatpush1.bf16.msra.mxu0 %v571
        %669 = vmatprep.subr.bf16.mxu0 0
        %670 = vmatpush1.bf16.msra.mxu0 %v615
        %671 = vmatprep.subr.bf16.mxu0 0
        %672 = vmatpush1.bf16.msra.mxu0 %v586
        %673 = vmatprep.subr.bf16.mxu0 0
        %674 = vmatpush1.bf16.msra.mxu0 %v597
        %675 = vmatprep.subr.bf16.mxu0 0
        %676 = vmatpush1.bf16.msra.mxu0 %v647
        %677 = vmatprep.subr.bf16.mxu0 0
        %678 = vmatpush1.bf16.msra.mxu0 0
        %679 = vmatprep.subr.bf16.mxu0 0
        %680 = vmatpush1.bf16.msra.mxu0 0
        %681 = vmatprep.mubr.bf16.mxu0 %v641
        %682 = vmatmul.mubr.bf16.gmra.mrb[0].mxu0 %v633
        %v683 = vpop.f32.mrb[0].mxu0
        %v684 = vadd.f32 0.0, %v683
        %v685 = vpop.f32.mrb[0].mxu0
        %v686 = vpop.f32.mrb[0].mxu0
        %v687 = vadd.f32 0.0, %v686
        %v688 = vpop.f32.mrb[0].mxu0
        %689 = vmatprep.mubr.bf16.mxu0 %v644
        %690 = vmatmul.mubr.bf16.gmra.mrb[0].mxu0 %v635
        %v691 = vpop.f32.mrb[0].mxu0
        %v692 = vadd.f32 0.0, %v691
        %v693 = vpop.f32.mrb[0].mxu0
        %v694 = vpop.f32.mrb[0].mxu0
        %v695 = vadd.f32 0.0, %v694
        %v696 = vpop.f32.mrb[0].mxu0
        %697 = vdwg.mxu0
        %v698 = vld [vmem:[%s3] sm:$0xff]
        %v699 = vld [vmem:[%s3 + $0x8] sm:$0xff]
        %v700 = vld [vmem:[%s3 + $0x10] sm:$0xff]
        %v701 = vld [vmem:[%s3 + $0x18] sm:$0xff]
        %703 = vset.pattern.permute.xlu0 0
        %704 = vperm.xlu0 %703, %v698
        %v705 = vpop.permute.xlu0 %704
        %708 = vset.pattern.permute.xlu0 0
        %709 = vperm.xlu0 %708, %v699
        %v710 = vpop.permute.xlu0 %709
        %713 = vset.pattern.permute.xlu0 0
        %714 = vperm.xlu0 %713, %v700
        %v715 = vpop.permute.xlu0 %714
        %718 = vset.pattern.permute.xlu0 0
        %719 = vperm.xlu0 %718, %v701
        %v720 = vpop.permute.xlu0 %719
        %v722 = vmul.f32 %v684, %v705
        %v723 = vmul.f32 %v687, %v710
        %v724 = vmul.f32 %v692, %v715
        %v725 = vmul.f32 %v695, %v720
        %v726 = vld [vmem:[%s4] sm:$0xff]
        %v727 = vld [vmem:[%s4 + $0x8] sm:$0xff]
        %v728 = vld [vmem:[%s4 + $0x10] sm:$0xff]
        %v729 = vld [vmem:[%s4 + $0x18] sm:$0xff]
        %731 = vset.pattern.permute.xlu0 0
        %732 = vperm.xlu0 %731, %v726
        %v733 = vpop.permute.xlu0 %732
        %736 = vset.pattern.permute.xlu0 0
        %737 = vperm.xlu0 %736, %v727
        %v738 = vpop.permute.xlu0 %737
        %741 = vset.pattern.permute.xlu0 0
        %742 = vperm.xlu0 %741, %v728
        %v743 = vpop.permute.xlu0 %742
        %746 = vset.pattern.permute.xlu0 0
        %747 = vperm.xlu0 %746, %v729
        %v748 = vpop.permute.xlu0 %747
        %v750 = vadd.f32 %v722, %v733
        %v751 = vadd.f32 %v723, %v738
        %v752 = vadd.f32 %v724, %v743
        %v753 = vadd.f32 %v725, %v748
        %v754 = vmax.f32 %v750, 0.0
        %v755 = vmax.f32 %v751, 0.0
        %v756 = vmax.f32 %v752, 0.0
        %v757 = vmax.f32 %v753, 0.0
        %v758 = vmin.f32 %v754, 6.0
        %v759 = vmin.f32 %v755, 6.0
        %v760 = vmin.f32 %v756, 6.0
        %v761 = vmin.f32 %v757, 6.0
        %v762 = vpack.c.bf16 %v759, %v758
        %v763 = vpack.c.bf16 %v761, %v760
        %v766 = vunpack.c.l.b16 %v762
        %v767 = vunpack.c.h.b16 %v762
        %v768 = vunpack.c.l.b16 %v763
        %v769 = vunpack.c.h.b16 %v763
        %v770 = vpack.c.b16 %v766, %v766
        %v771 = vpack.c.b16 %v767, %v767
        %v772 = vpack.c.b16 %v768, %v768
        %v773 = vpack.c.b16 %v769, %v769
        %778 = vst [vmem:[%s446] sm:$0xf] %v770
        %779 = vst [vmem:[%s446 + $0x4] sm:$0xf] %v771
        %780 = vst [vmem:[%s446 + $0x8] sm:$0xf] %v772
        %781 = vst [vmem:[%s446 + $0xc] sm:$0xf] %v773
        %p782 = scmp.lt.s32.totalorder %s20, 1
        %s783 = scalar_select %p782, %s20, 1
        %p784 = scmp.lt.s32.totalorder %s21, 0
        %s785 = scalar_select %p784, %s21, 0
        %s786 = smul.addr %s783, 4
        %s787 = sadd.s32 %s785, %s786
        %s788 = smul.addr %s787, 4
        %s789 = scalar_lea.vmem %s5, %s788
        // Predicated region
        $region123: #{asff_level0_forward.5} parent=113 // pred_check
          %p790 = pneg %p169
        $region124: #{asff_level0_forward.5} parent=113 // pred_check_branch
          %792 = sbr.rel (%p790) target = $region126
        $region125: #{asff_level0_forward.5} parent=113 // pred_region
          _
        $region126: #{asff_level0_forward.5} parent=113 // pred_fallthru
          _
      $region114: #{asff_level0_forward.5} parent=5 // pred_fallthru
        _
      %p793 = scmp.le.s32.totalorder 2, %s11
      // Predicated region
      $region127: #{asff_level0_forward.5} parent=5 // pred_check
        %p794 = pneg %p793
      $region128: #{asff_level0_forward.5} parent=5 // pred_check_branch
        %796 = sbr.rel (%p794) target = $region130
      $region129: #{asff_level0_forward.5} parent=5 // pred_region
        %s797 = ssub.s32 %s11, 2
        // Predicated region
        $region131: #{asff_level0_forward.5} parent=129 // pred_check
          %p798 = pneg %p175
        $region132: #{asff_level0_forward.5} parent=129 // pred_check_branch
          %800 = sbr.rel (%p798) target = $region134
        $region133: #{asff_level0_forward.5} parent=129 // pred_region
          %p801 = scmp.lt.s32.totalorder %s22, 1
          %s802 = scalar_select %p801, %s22, 1
          %p803 = scmp.lt.s32.totalorder %s23, 0
          %s804 = scalar_select %p803, %s23, 0
          %s805 = smul.addr %s802, 4
          %s806 = sadd.s32 %s804, %s805
          %s807 = smul.addr %s806, 4
          %s808 = scalar_lea.vmem %s5, %s807
        $region134: #{asff_level0_forward.5} parent=129 // pred_fallthru
          _
      $region130: #{asff_level0_forward.5} parent=5 // pred_fallthru
        _
    $region6: #{asff_level0_forward.5} parent=1 // loop_footer
      %s15 = sadd.s32 1, %s11
    $region7: #{asff_level0_forward.5} parent=1 // loop_footer_branch
      %10 = sbr.rel target = $region3
    $region8: #{asff_level0_forward.5} parent=1 // loop_exit
      _

// kernel: asff_level0_forward.8
$region0: #{asff_level0_forward.8}
  #allocation0 [shape = 'u32[]', space=smem, size = 0x4, offset = 0x4, fixed_abs, tag = 'smem constant byte address 0x4 - core index']
  #allocation1 [shape = 'u32[144,128]{1,0:T(1,128)}', space=vmem, size = 0x12000, scoped, tag = 'internal scratch']
  %s0 = inlined_call_operand.vmem [shape: bf16[2,32,128], index: 0, kind: input, shape index: {}]
  %s1 = inlined_call_operand.vmem [shape: bf16[2,32,128], index: 1, kind: input, shape index: {}]
  %s2 = inlined_call_operand.vmem [shape: bf16[2,32,128], index: 2, kind: input, shape index: {}]
  %s3 = inlined_call_operand.vmem [shape: bf16[2,32,128], index: 3, kind: input, shape index: {}]
  %s4 = inlined_call_operand.vmem [shape: bf16[64,128], index: 4, kind: input, shape index: {}]
  %s5 = inlined_call_operand.vmem [shape: f32[64,1], index: 5, kind: input, shape index: {}]
  %s6 = inlined_call_operand.vmem [shape: f32[64,1], index: 6, kind: input, shape index: {}]
  %s7 = inlined_call_operand.vmem [shape: bf16[4,64], index: 7, kind: input, shape index: {}]
  %s8 = inlined_call_operand.vmem [shape: f32[4,1], index: 8, kind: input, shape index: {}]
  %s9 = inlined_call_operand.vmem [shape: bf16[2,32,128], index: 9, kind: output, shape index: {}]
  %s10 = sld [smem:[#allocation0]]
  $region69: #{asff_level0_forward.8} parent=0
    _
  %s12 = ssub.s32 1, %s10
  %s13 = scalar_select 0, %s12, %s10
  loop: start=0, step=1, limit=4
  $region2: #{asff_level0_forward.8} parent=0 // loop_pre_header
    _
  $region3: #{asff_level0_forward.8} parent=0 // loop_header
    %s15 = sphi 0, %s19
    %p16 = scmp.ge.s32.totalorder %s15, 4
    %s22 = sphi 0, %s34
    %s23 = sphi 0, %s30
    %s24 = sphi 0, %s22
    %s25 = sphi 0, %s23
    %s26 = sphi 0, %s24
    %s27 = sphi 0, %s25
    %s39 = sphi 0, %s41
    %s42 = sphi 0, %s39
    %s43 = sphi 0, %s42
    %s59 = sphi 0, %s43
    %s67 = sphi 0, %s69
    %s70 = sphi 0, %s67
    %s71 = sphi 0, %s70
    %s87 = sphi 0, %s71
    %s95 = sphi 0, %s97
    %s98 = sphi 0, %s95
    %s99 = sphi 0, %s98
    %s115 = sphi 0, %s99
    %s123 = sphi 0, %s125
    %s126 = sphi 0, %s123
    %s127 = sphi 0, %s126
    %s143 = sphi 0, %s127
    %s147 = sphi 0, %s147
    %s149 = sphi 0, %s147
    %s150 = sphi 0, %s149
    %s164 = sphi 0, %s150
    %s168 = sphi 0, %s168
    %s170 = sphi 0, %s168
    %s171 = sphi 0, %s170
    %s185 = sphi 0, %s171
    %s189 = sphi 0, %s189
    %s191 = sphi 0, %s189
    %s192 = sphi 0, %s191
    %s206 = sphi 0, %s192
    %s210 = sphi 0, %s210
    %s212 = sphi 0, %s210
    %s213 = sphi 0, %s212
    %s227 = sphi 0, %s213
    %s231 = sphi 0, %s231
    %s233 = sphi 0, %s231
    %s234 = sphi 0, %s233
    %s248 = sphi 0, %s234
    %s256 = sphi 0, %s258
    %s259 = sphi 0, %s256
    %s260 = sphi 0, %s259
    %s276 = sphi 0, %s260
  $region4: #{asff_level0_forward.8} parent=0 // loop_header_branch
    %18 = sbr.rel (%p16) target = $region8
  $region5: #{asff_level0_forward.8} parent=0 // loop_body
    %s20 = ssub.s32 %s15, 1
    %s21 = ssub.s32 %s15, 2
    %s28 = sadd.s32 1, %s23
    %p29 = scmp.ge.s32.totalorder %s28, 1
    %s30 = scalar_select %p29, 0, %s28
    %s31 = sadd.s32 1, %s22
    %s32 = scalar_select %p29, %s31, %s22
    %p33 = scmp.ge.s32.totalorder %s32, 2
    %s34 = scalar_select %p33, 0, %s32
    %s35 = ssub.s32 %s22, %s34
    %s36 = ssub.s32 %s23, %s30
    %s37 = sor.u32 %s35, %s36
    %p38 = scmp.eq.s32.totalorder %s37, 0
    %s40 = sadd.s32 %s39, 1
    %s41 = scalar_select %p38, %s39, %s40
    %p44 = pneg %p38
    %p45 = scmp.eq.s32.totalorder %s15, 1
    %p46 = por %p44, %p45
    %p47 = scmp.ne.s32.totalorder %s39, %s42
    %p48 = scmp.eq.s32.totalorder %s15, 0
    %p49 = por %p47, %p48
    %p50 = scmp.ne.s32.totalorder %s39, %s42
    %p51 = scmp.eq.s32.totalorder %s20, 1
    %p52 = por %p50, %p51
    %p53 = scmp.ne.s32.totalorder %s42, %s43
    %p54 = scmp.eq.s32.totalorder %s20, 0
    %p55 = por %p53, %p54
    %p56 = scmp.ne.s32.totalorder %s42, %s43
    %p57 = scmp.eq.s32.totalorder %s21, 1
    %p58 = por %p56, %p57
    %p60 = scmp.ne.s32.totalorder %s43, %s59
    %p61 = scmp.eq.s32.totalorder %s21, 0
    %p62 = por %p60, %p61
    %s63 = ssub.s32 %s22, %s34
    %s64 = ssub.s32 %s23, %s30
    %s65 = sor.u32 %s63, %s64
    %p66 = scmp.eq.s32.totalorder %s65, 0
    %s68 = sadd.s32 %s67, 1
    %s69 = scalar_select %p66, %s67, %s68
    %p72 = pneg %p66
    %p73 = scmp.eq.s32.totalorder %s15, 1
    %p74 = por %p72, %p73
    %p75 = scmp.ne.s32.totalorder %s67, %s70
    %p76 = scmp.eq.s32.totalorder %s15, 0
    %p77 = por %p75, %p76
    %p78 = scmp.ne.s32.totalorder %s67, %s70
    %p79 = scmp.eq.s32.totalorder %s20, 1
    %p80 = por %p78, %p79
    %p81 = scmp.ne.s32.totalorder %s70, %s71
    %p82 = scmp.eq.s32.totalorder %s20, 0
    %p83 = por %p81, %p82
    %p84 = scmp.ne.s32.totalorder %s70, %s71
    %p85 = scmp.eq.s32.totalorder %s21, 1
    %p86 = por %p84, %p85
    %p88 = scmp.ne.s32.totalorder %s71, %s87
    %p89 = scmp.eq.s32.totalorder %s21, 0
    %p90 = por %p88, %p89
    %s91 = ssub.s32 %s22, %s34
    %s92 = ssub.s32 %s23, %s30
    %s93 = sor.u32 %s91, %s92
    %p94 = scmp.eq.s32.totalorder %s93, 0
    %s96 = sadd.s32 %s95, 1
    %s97 = scalar_select %p94, %s95, %s96
    %p100 = pneg %p94
    %p101 = scmp.eq.s32.totalorder %s15, 1
    %p102 = por %p100, %p101
    %p103 = scmp.ne.s32.totalorder %s95, %s98
    %p104 = scmp.eq.s32.totalorder %s15, 0
    %p105 = por %p103, %p104
    %p106 = scmp.ne.s32.totalorder %s95, %s98
    %p107 = scmp.eq.s32.totalorder %s20, 1
    %p108 = por %p106, %p107
    %p109 = scmp.ne.s32.totalorder %s98, %s99
    %p110 = scmp.eq.s32.totalorder %s20, 0
    %p111 = por %p109, %p110
    %p112 = scmp.ne.s32.totalorder %s98, %s99
    %p113 = scmp.eq.s32.totalorder %s21, 1
    %p114 = por %p112, %p113
    %p116 = scmp.ne.s32.totalorder %s99, %s115
    %p117 = scmp.eq.s32.totalorder %s21, 0
    %p118 = por %p116, %p117
    %s119 = ssub.s32 %s22, %s34
    %s120 = ssub.s32 %s23, %s30
    %s121 = sor.u32 %s119, %s120
    %p122 = scmp.eq.s32.totalorder %s121, 0
    %s124 = sadd.s32 %s123, 1
    %s125 = scalar_select %p122, %s123, %s124
    %p128 = pneg %p122
    %p129 = scmp.eq.s32.totalorder %s15, 1
    %p130 = por %p128, %p129
    %p131 = scmp.ne.s32.totalorder %s123, %s126
    %p132 = scmp.eq.s32.totalorder %s15, 0
    %p133 = por %p131, %p132
    %p134 = scmp.ne.s32.totalorder %s123, %s126
    %p135 = scmp.eq.s32.totalorder %s20, 1
    %p136 = por %p134, %p135
    %p137 = scmp.ne.s32.totalorder %s126, %s127
    %p138 = scmp.eq.s32.totalorder %s20, 0
    %p139 = por %p137, %p138
    %p140 = scmp.ne.s32.totalorder %s126, %s127
    %p141 = scmp.eq.s32.totalorder %s21, 1
    %p142 = por %p140, %p141
    %p144 = scmp.ne.s32.totalorder %s127, %s143
    %p145 = scmp.eq.s32.totalorder %s21, 0
    %p146 = por %p144, %p145
    %s148 = sadd.s32 %s147, 1
    %p151 = scmp.eq.s32.totalorder %s15, 1
    %p152 = scmp.ne.s32.totalorder %s147, %s149
    %p153 = scmp.eq.s32.totalorder %s15, 0
    %p154 = por %p152, %p153
    %p155 = scmp.ne.s32.totalorder %s147, %s149
    %p156 = scmp.eq.s32.totalorder %s20, 1
    %p157 = por %p155, %p156
    %p158 = scmp.ne.s32.totalorder %s149, %s150
    %p159 = scmp.eq.s32.totalorder %s20, 0
    %p160 = por %p158, %p159
    %p161 = scmp.ne.s32.totalorder %s149, %s150
    %p162 = scmp.eq.s32.totalorder %s21, 1
    %p163 = por %p161, %p162
    %p165 = scmp.ne.s32.totalorder %s150, %s164
    %p166 = scmp.eq.s32.totalorder %s21, 0
    %p167 = por %p165, %p166
    %s169 = sadd.s32 %s168, 1
    %p172 = scmp.eq.s32.totalorder %s15, 1
    %p173 = scmp.ne.s32.totalorder %s168, %s170
    %p174 = scmp.eq.s32.totalorder %s15, 0
    %p175 = por %p173, %p174
    %p176 = scmp.ne.s32.totalorder %s168, %s170
    %p177 = scmp.eq.s32.totalorder %s20, 1
    %p178 = por %p176, %p177
    %p179 = scmp.ne.s32.totalorder %s170, %s171
    %p180 = scmp.eq.s32.totalorder %s20, 0
    %p181 = por %p179, %p180
    %p182 = scmp.ne.s32.totalorder %s170, %s171
    %p183 = scmp.eq.s32.totalorder %s21, 1
    %p184 = por %p182, %p183
    %p186 = scmp.ne.s32.totalorder %s171, %s185
    %p187 = scmp.eq.s32.totalorder %s21, 0
    %p188 = por %p186, %p187
    %s190 = sadd.s32 %s189, 1
    %p193 = scmp.eq.s32.totalorder %s15, 1
    %p194 = scmp.ne.s32.totalorder %s189, %s191
    %p195 = scmp.eq.s32.totalorder %s15, 0
    %p196 = por %p194, %p195
    %p197 = scmp.ne.s32.totalorder %s189, %s191
    %p198 = scmp.eq.s32.totalorder %s20, 1
    %p199 = por %p197, %p198
    %p200 = scmp.ne.s32.totalorder %s191, %s192
    %p201 = scmp.eq.s32.totalorder %s20, 0
    %p202 = por %p200, %p201
    %p203 = scmp.ne.s32.totalorder %s191, %s192
    %p204 = scmp.eq.s32.totalorder %s21, 1
    %p205 = por %p203, %p204
    %p207 = scmp.ne.s32.totalorder %s192, %s206
    %p208 = scmp.eq.s32.totalorder %s21, 0
    %p209 = por %p207, %p208
    %s211 = sadd.s32 %s210, 1
    %p214 = scmp.eq.s32.totalorder %s15, 1
    %p215 = scmp.ne.s32.totalorder %s210, %s212
    %p216 = scmp.eq.s32.totalorder %s15, 0
    %p217 = por %p215, %p216
    %p218 = scmp.ne.s32.totalorder %s210, %s212
    %p219 = scmp.eq.s32.totalorder %s20, 1
    %p220 = por %p218, %p219
    %p221 = scmp.ne.s32.totalorder %s212, %s213
    %p222 = scmp.eq.s32.totalorder %s20, 0
    %p223 = por %p221, %p222
    %p224 = scmp.ne.s32.totalorder %s212, %s213
    %p225 = scmp.eq.s32.totalorder %s21, 1
    %p226 = por %p224, %p225
    %p228 = scmp.ne.s32.totalorder %s213, %s227
    %p229 = scmp.eq.s32.totalorder %s21, 0
    %p230 = por %p228, %p229
    %s232 = sadd.s32 %s231, 1
    %p235 = scmp.eq.s32.totalorder %s15, 1
    %p236 = scmp.ne.s32.totalorder %s231, %s233
    %p237 = scmp.eq.s32.totalorder %s15, 0
    %p238 = por %p236, %p237
    %p239 = scmp.ne.s32.totalorder %s231, %s233
    %p240 = scmp.eq.s32.totalorder %s20, 1
    %p241 = por %p239, %p240
    %p242 = scmp.ne.s32.totalorder %s233, %s234
    %p243 = scmp.eq.s32.totalorder %s20, 0
    %p244 = por %p242, %p243
    %p245 = scmp.ne.s32.totalorder %s233, %s234
    %p246 = scmp.eq.s32.totalorder %s21, 1
    %p247 = por %p245, %p246
    %p249 = scmp.ne.s32.totalorder %s234, %s248
    %p250 = scmp.eq.s32.totalorder %s21, 0
    %p251 = por %p249, %p250
    %s252 = ssub.s32 %s22, %s34
    %s253 = ssub.s32 %s23, %s30
    %s254 = sor.u32 %s252, %s253
    %p255 = scmp.eq.s32.totalorder %s254, 0
    %s257 = sadd.s32 %s256, 1
    %s258 = scalar_select %p255, %s256, %s257
    %p261 = pneg %p255
    %p262 = scmp.eq.s32.totalorder %s15, 1
    %p263 = por %p261, %p262
    %p264 = scmp.ne.s32.totalorder %s256, %s259
    %p265 = scmp.eq.s32.totalorder %s15, 0
    %p266 = por %p264, %p265
    %p267 = scmp.ne.s32.totalorder %s256, %s259
    %p268 = scmp.eq.s32.totalorder %s20, 1
    %p269 = por %p267, %p268
    %p270 = scmp.ne.s32.totalorder %s259, %s260
    %p271 = scmp.eq.s32.totalorder %s20, 0
    %p272 = por %p270, %p271
    %p273 = scmp.ne.s32.totalorder %s259, %s260
    %p274 = scmp.eq.s32.totalorder %s21, 1
    %p275 = por %p273, %p274
    %p277 = scmp.ne.s32.totalorder %s260, %s276
    %p278 = scmp.eq.s32.totalorder %s21, 0
    %p279 = por %p277, %p278
    %p280 = scmp.le.s32.totalorder 1, %s15
    %p281 = scmp.lt.s32.totalorder %s15, 3
    %p282 = pnand %p280, %p281
    %p283 = pneg %p282
    // Predicated region
    $region9: #{asff_level0_forward.8} parent=5 // pred_check
      _
    $region10: #{asff_level0_forward.8} parent=5 // pred_check_branch
      %285 = sbr.rel (%p282) target = $region12
    $region11: #{asff_level0_forward.8} parent=5 // pred_region
      %s286 = ssub.s32 %s15, 1
      // Predicated region
      $region13: #{asff_level0_forward.8} parent=11 // pred_check
        %p287 = pneg %p160
      $region14: #{asff_level0_forward.8} parent=11 // pred_check_branch
        %289 = sbr.rel (%p287) target = $region16
      $region15: #{asff_level0_forward.8} parent=11 // pred_region
        _
      $region16: #{asff_level0_forward.8} parent=11 // pred_fallthru
        _
      // Predicated region
      $region17: #{asff_level0_forward.8} parent=11 // pred_check
        %p290 = pneg %p181
      $region18: #{asff_level0_forward.8} parent=11 // pred_check_branch
        %292 = sbr.rel (%p290) target = $region20
      $region19: #{asff_level0_forward.8} parent=11 // pred_region
        _
      $region20: #{asff_level0_forward.8} parent=11 // pred_fallthru
        _
      // Predicated region
      $region21: #{asff_level0_forward.8} parent=11 // pred_check
        %p293 = pneg %p202
      $region22: #{asff_level0_forward.8} parent=11 // pred_check_branch
        %295 = sbr.rel (%p293) target = $region24
      $region23: #{asff_level0_forward.8} parent=11 // pred_region
        _
      $region24: #{asff_level0_forward.8} parent=11 // pred_fallthru
        _
      // Predicated region
      $region25: #{asff_level0_forward.8} parent=11 // pred_check
        %p296 = pneg %p223
      $region26: #{asff_level0_forward.8} parent=11 // pred_check_branch
        %298 = sbr.rel (%p296) target = $region28
      $region27: #{asff_level0_forward.8} parent=11 // pred_region
        _
      $region28: #{asff_level0_forward.8} parent=11 // pred_fallthru
        _
      // Predicated region
      $region29: #{asff_level0_forward.8} parent=11 // pred_check
        %p299 = pneg %p244
      $region30: #{asff_level0_forward.8} parent=11 // pred_check_branch
        %301 = sbr.rel (%p299) target = $region32
      $region31: #{asff_level0_forward.8} parent=11 // pred_region
        _
      $region32: #{asff_level0_forward.8} parent=11 // pred_fallthru
        _
    $region12: #{asff_level0_forward.8} parent=5 // pred_fallthru
      _
    %p302 = scmp.lt.s32.totalorder %s15, 2
    // Predicated region
    $region33: #{asff_level0_forward.8} parent=5 // pred_check
      %p303 = pneg %p302
    $region34: #{asff_level0_forward.8} parent=5 // pred_check_branch
      %305 = sbr.rel (%p303) target = $region36
    $region35: #{asff_level0_forward.8} parent=5 // pred_region
      // Predicated region
      $region37: #{asff_level0_forward.8} parent=35 // pred_check
        %p306 = pneg %p49
      $region38: #{asff_level0_forward.8} parent=35 // pred_check_branch
        %308 = sbr.rel (%p306) target = $region40
      $region39: #{asff_level0_forward.8} parent=35 // pred_region
        %p309 = scmp.lt.s32.totalorder %s22, 1
        %s310 = scalar_select %p309, %s22, 1
        %p311 = scmp.lt.s32.totalorder %s23, 0
        %s312 = scalar_select %p311, %s23, 0
        %s313 = smul.addr %s310, 4
        %s314 = sadd.s32 %s312, %s313
        %s315 = smul.addr %s314, 4
        %s316 = scalar_lea.vmem %s0, %s315
      $region40: #{asff_level0_forward.8} parent=35 // pred_fallthru
        _
      // Predicated region
      $region41: #{asff_level0_forward.8} parent=35 // pred_check
        %p317 = pneg %p77
      $region42: #{asff_level0_forward.8} parent=35 // pred_check_branch
        %319 = sbr.rel (%p317) target = $region44
      $region43: #{asff_level0_forward.8} parent=35 // pred_region
        %p320 = scmp.lt.s32.totalorder %s22, 1
        %s321 = scalar_select %p320, %s22, 1
        %p322 = scmp.lt.s32.totalorder %s23, 0
        %s323 = scalar_select %p322, %s23, 0
        %s324 = smul.addr %s321, 4
        %s325 = sadd.s32 %s323, %s324
        %s326 = smul.addr %s325, 4
        %s327 = scalar_lea.vmem %s1, %s326
      $region44: #{asff_level0_forward.8} parent=35 // pred_fallthru
        _
      // Predicated region
      $region45: #{asff_level0_forward.8} parent=35 // pred_check
        %p328 = pneg %p105
      $region46: #{asff_level0_forward.8} parent=35 // pred_check_branch
        %330 = sbr.rel (%p328) target = $region48
      $region47: #{asff_level0_forward.8} parent=35 // pred_region
        %p331 = scmp.lt.s32.totalorder %s22, 1
        %s332 = scalar_select %p331, %s22, 1
        %p333 = scmp.lt.s32.totalorder %s23, 0
        %s334 = scalar_select %p333, %s23, 0
        %s335 = smul.addr %s332, 4
        %s336 = sadd.s32 %s334, %s335
        %s337 = smul.addr %s336, 4
        %s338 = scalar_lea.vmem %s2, %s337
      $region48: #{asff_level0_forward.8} parent=35 // pred_fallthru
        _
      // Predicated region
      $region49: #{asff_level0_forward.8} parent=35 // pred_check
        %p339 = pneg %p133
      $region50: #{asff_level0_forward.8} parent=35 // pred_check_branch
        %341 = sbr.rel (%p339) target = $region52
      $region51: #{asff_level0_forward.8} parent=35 // pred_region
        %p342 = scmp.lt.s32.totalorder %s22, 1
        %s343 = scalar_select %p342, %s22, 1
        %p344 = scmp.lt.s32.totalorder %s23, 0
        %s345 = scalar_select %p344, %s23, 0
        %s346 = smul.addr %s343, 4
        %s347 = sadd.s32 %s345, %s346
        %s348 = smul.addr %s347, 4
        %s349 = scalar_lea.vmem %s3, %s348
      $region52: #{asff_level0_forward.8} parent=35 // pred_fallthru
        _
    $region36: #{asff_level0_forward.8} parent=5 // pred_fallthru
      _
    %p350 = scmp.le.s32.totalorder 1, %s15
    %p351 = scmp.lt.s32.totalorder %s15, 3
    %p352 = pnand %p350, %p351
    %p353 = pneg %p352
    // Predicated region
    $region53: #{asff_level0_forward.8} parent=5 // pred_check
      _
    $region54: #{asff_level0_forward.8} parent=5 // pred_check_branch
      %355 = sbr.rel (%p352) target = $region56
    $region55: #{asff_level0_forward.8} parent=5 // pred_region
      %s356 = ssub.s32 %s15, 1
      %p357 = scmp.lt.s32.totalorder %s24, 1
      %s358 = scalar_select %p357, %s24, 1
      %p359 = scmp.lt.s32.totalorder %s25, 0
      %s360 = scalar_select %p359, %s25, 0
      %s361 = smul.addr %s358, 4
      %s362 = sadd.s32 %s360, %s361
      %s363 = smul.addr %s362, 4
      %s364 = scalar_lea.vmem %s0, %s363
      %p365 = pneg %p55
      %p366 = pneg %p52
      %p367 = scmp.lt.s32.totalorder %s24, 1
      %s368 = scalar_select %p367, %s24, 1
      %p369 = scmp.lt.s32.totalorder %s25, 0
      %s370 = scalar_select %p369, %s25, 0
      %s371 = smul.addr %s368, 4
      %s372 = sadd.s32 %s370, %s371
      %s373 = smul.addr %s372, 4
      %s374 = scalar_lea.vmem %s1, %s373
      %p375 = pneg %p83
      %p376 = pneg %p80
      %p377 = scmp.lt.s32.totalorder %s24, 1
      %s378 = scalar_select %p377, %s24, 1
      %p379 = scmp.lt.s32.totalorder %s25, 0
      %s380 = scalar_select %p379, %s25, 0
      %s381 = smul.addr %s378, 4
      %s382 = sadd.s32 %s380, %s381
      %s383 = smul.addr %s382, 4
      %s384 = scalar_lea.vmem %s2, %s383
      %p385 = pneg %p111
      %p386 = pneg %p108
      %p387 = scmp.lt.s32.totalorder %s24, 1
      %s388 = scalar_select %p387, %s24, 1
      %p389 = scmp.lt.s32.totalorder %s25, 0
      %s390 = scalar_select %p389, %s25, 0
      %s391 = smul.addr %s388, 4
      %s392 = sadd.s32 %s390, %s391
      %s393 = smul.addr %s392, 4
      %s394 = scalar_lea.vmem %s3, %s393
      %p395 = pneg %p139
      %p396 = pneg %p136
      %p397 = pneg %p160
      %p398 = pneg %p157
      %p399 = pneg %p181
      %p400 = pneg %p178
      %p401 = pneg %p202
      %p402 = pneg %p199
      %p403 = pneg %p223
      %p404 = pneg %p220
      %p405 = pneg %p244
      %p406 = pneg %p241
      %p407 = pneg %p272
      %p408 = pneg %p269
      %p409 = scmp.lt.s32.totalorder %s24, 1
      %s410 = scalar_select %p409, %s24, 1
      %p411 = scmp.lt.s32.totalorder %s25, 0
      %s412 = scalar_select %p411, %s25, 0
      %s413 = smul.addr %s410, 4
      %s414 = sadd.s32 %s412, %s413
      %s415 = smul.addr %s414, 4
      %s416 = scalar_lea.vmem %s9, %s415
      %p417 = scmp.lt.s32.totalorder %s24, 1
      %s418 = scalar_select %p417, %s24, 1
      %p419 = scmp.lt.s32.totalorder %s25, 0
      %s420 = scalar_select %p419, %s25, 0
      %s421 = smul.addr %s418, 4
      %s422 = sadd.s32 %s420, %s421
      %s423 = smul.addr %s422, 4
      %s424 = scalar_lea.vmem %s0, %s423
      %p425 = scmp.lt.s32.totalorder %s24, 1
      %s426 = scalar_select %p425, %s24, 1
      %p427 = scmp.lt.s32.totalorder %s25, 0
      %s428 = scalar_select %p427, %s25, 0
      %s429 = smul.addr %s426, 4
      %s430 = sadd.s32 %s428, %s429
      %s431 = smul.addr %s430, 4
      %s432 = scalar_lea.vmem %s1, %s431
      %p433 = scmp.lt.s32.totalorder %s24, 1
      %s434 = scalar_select %p433, %s24, 1
      %p435 = scmp.lt.s32.totalorder %s25, 0
      %s436 = scalar_select %p435, %s25, 0
      %s437 = smul.addr %s434, 4
      %s438 = sadd.s32 %s436, %s437
      %s439 = smul.addr %s438, 4
      %s440 = scalar_lea.vmem %s2, %s439
      %p441 = scmp.lt.s32.totalorder %s24, 1
      %s442 = scalar_select %p441, %s24, 1
      %p443 = scmp.lt.s32.totalorder %s25, 0
      %s444 = scalar_select %p443, %s25, 0
      %s445 = smul.addr %s442, 4
      %s446 = sadd.s32 %s444, %s445
      %s447 = smul.addr %s446, 4
      %s448 = scalar_lea.vmem %s3, %s447
      %p449 = scmp.lt.s32.totalorder %s24, 1
      %s450 = scalar_select %p449, %s24, 1
      %p451 = scmp.lt.s32.totalorder %s25, 0
      %s452 = scalar_select %p451, %s25, 0
      %s453 = smul.addr %s450, 4
      %s454 = sadd.s32 %s452, %s453
      %s455 = smul.addr %s454, 4
      %s456 = scalar_lea.vmem %s9, %s455
      %v458 = vld [vmem:[%s424] sm:$0xf]
      %v459 = vld [vmem:[%s424 + $0x4] sm:$0xf]
      %v460 = vld [vmem:[%s424 + $0x8] sm:$0xf]
      %v461 = vld [vmem:[%s424 + $0xc] sm:$0xf]
      %v462 = vld [vmem:[%s432] sm:$0xf]
      %v463 = vld [vmem:[%s432 + $0x4] sm:$0xf]
      %v464 = vld [vmem:[%s432 + $0x8] sm:$0xf]
      %v465 = vld [vmem:[%s432 + $0xc] sm:$0xf]
      %v466 = vld [vmem:[%s440] sm:$0xf]
      %v467 = vld [vmem:[%s440 + $0x4] sm:$0xf]
      %v468 = vld [vmem:[%s440 + $0x8] sm:$0xf]
      %v469 = vld [vmem:[%s440 + $0xc] sm:$0xf]
      %v470 = vld [vmem:[%s448] sm:$0xf]
      %v471 = vld [vmem:[%s448 + $0x4] sm:$0xf]
      %v472 = vld [vmem:[%s448 + $0x8] sm:$0xf]
      %v473 = vld [vmem:[%s448 + $0xc] sm:$0xf]
      %v478 = vunpack.c.l.b16 %v458
      %v479 = vunpack.c.l.b16 %v459
      %v480 = vunpack.c.l.b16 %v460
      %v481 = vunpack.c.l.b16 %v461
      %v482 = vpack.c.b16 %v479, %v478
      %v483 = vpack.c.b16 %v481, %v480
      %v490 = vunpack.c.l.b16 %v462
      %v491 = vunpack.c.l.b16 %v463
      %v492 = vunpack.c.l.b16 %v464
      %v493 = vunpack.c.l.b16 %v465
      %v494 = vpack.c.b16 %v491, %v490
      %v495 = vpack.c.b16 %v493, %v492
      %v502 = vunpack.c.l.b16 %v466
      %v503 = vunpack.c.l.b16 %v467
      %v504 = vunpack.c.l.b16 %v468
      %v505 = vunpack.c.l.b16 %v469
      %v506 = vpack.c.b16 %v503, %v502
      %v507 = vpack.c.b16 %v505, %v504
      %v514 = vunpack.c.l.b16 %v470
      %v515 = vunpack.c.l.b16 %v471
      %v516 = vunpack.c.l.b16 %v472
      %v517 = vunpack.c.l.b16 %v473
      %v518 = vpack.c.b16 %v515, %v514
      %v519 = vpack.c.b16 %v517, %v516
      %v522 = vld [vmem:[%s4] sm:$0xf]
      %v523 = vld [vmem:[%s4 + $0x4] sm:$0xf]
      %v524 = vld [vmem:[%s4 + $0x8] sm:$0xf]
      %v525 = vld [vmem:[%s4 + $0xc] sm:$0xf]
      %v526 = vld [vmem:[%s4 + $0x10] sm:$0xf]
      %v527 = vld [vmem:[%s4 + $0x14] sm:$0xf]
      %v528 = vld [vmem:[%s4 + $0x18] sm:$0xf]
      %v529 = vld [vmem:[%s4 + $0x1c] sm:$0xf]
      %v538 = vunpack.c.l.b16 %v522
      %v539 = vunpack.c.l.b16 %v523
      %v540 = vunpack.c.l.b16 %v524
      %v541 = vunpack.c.l.b16 %v525
      %v542 = vunpack.c.l.b16 %v526
      %v543 = vunpack.c.l.b16 %v527
      %v544 = vunpack.c.l.b16 %v528
      %v545 = vunpack.c.l.b16 %v529
      %v546 = vpack.c.b16 %v539, %v538
      %v547 = vpack.c.b16 %v541, %v540
      %v548 = vpack.c.b16 %v543, %v542
      %v549 = vpack.c.b16 %v545, %v544
      %554 = vmatprep.subr.bf16.mxu0 0
      %555 = vmatpush1.bf16.msra.mxu0 %v482
      %556 = vmatprep.subr.bf16.mxu0 0
      %557 = vmatpush1.bf16.msra.mxu0 %v483
      %558 = vmatprep.subr.bf16.mxu0 0
      %559 = vmatpush1.bf16.msra.mxu0 %v494
      %560 = vmatprep.subr.bf16.mxu0 0
      %561 = vmatpush1.bf16.msra.mxu0 %v495
      %562 = vmatprep.subr.bf16.mxu0 0
      %563 = vmatpush1.bf16.msra.mxu0 %v506
      %564 = vmatprep.subr.bf16.mxu0 0
      %565 = vmatpush1.bf16.msra.mxu0 %v507
      %566 = vmatprep.subr.bf16.mxu0 0
      %567 = vmatpush1.bf16.msra.mxu0 %v518
      %568 = vmatprep.subr.bf16.mxu0 0
      %569 = vmatpush1.bf16.msra.mxu0 %v519
      %570 = vmatprep.subr.bf16.mxu0 0
      %571 = vmatpush1.bf16.msra.mxu0 0
      %572 = vmatprep.subr.bf16.mxu0 0
      %573 = vmatpush1.bf16.msra.mxu0 0
      %574 = vmatprep.subr.bf16.mxu0 0
      %575 = vmatpush1.bf16.msra.mxu0 0
      %576 = vmatprep.subr.bf16.mxu0 0
      %577 = vmatpush1.bf16.msra.mxu0 0
      %578 = vmatprep.subr.bf16.mxu0 0
      %579 = vmatpush1.bf16.msra.mxu0 0
      %580 = vmatprep.subr.bf16.mxu0 0
      %581 = vmatpush1.bf16.msra.mxu0 0
      %582 = vmatprep.subr.bf16.mxu0 0
      %583 = vmatpush1.bf16.msra.mxu0 0
      %584 = vmatprep.subr.bf16.mxu0 0
      %585 = vmatpush1.bf16.msra.mxu0 0
      %586 = vmatprep.mubr.bf16.mxu0 0
      %587 = vmatmul.mubr.bf16.gmra.mrb[0].mxu0 %v546
      %v588 = vpop.f32.mrb[0].mxu0
      %v589 = vadd.f32 0.0, %v588
      %v590 = vpop.f32.mrb[0].mxu0
      %v591 = vpop.f32.mrb[0].mxu0
      %v592 = vadd.f32 0.0, %v591
      %v593 = vpop.f32.mrb[0].mxu0
      %594 = vmatprep.mubr.bf16.mxu0 0
      %595 = vmatmul.mubr.bf16.gmra.mrb[0].mxu0 %v547
      %v596 = vpop.f32.mrb[0].mxu0
      %v597 = vadd.f32 0.0, %v596
      %v598 = vpop.f32.mrb[0].mxu0
      %v599 = vpop.f32.mrb[0].mxu0
      %v600 = vadd.f32 0.0, %v599
      %v601 = vpop.f32.mrb[0].mxu0
      %602 = vmatprep.mubr.bf16.mxu0 0
      %603 = vmatmul.mubr.bf16.gmra.mrb[0].mxu0 %v548
      %v604 = vpop.f32.mrb[0].mxu0
      %v605 = vadd.f32 0.0, %v604
      %v606 = vpop.f32.mrb[0].mxu0
      %v607 = vpop.f32.mrb[0].mxu0
      %v608 = vadd.f32 0.0, %v607
      %v609 = vpop.f32.mrb[0].mxu0
      %610 = vmatprep.mubr.bf16.mxu0 0
      %611 = vmatmul.mubr.bf16.gmra.mrb[0].mxu0 %v549
      %v612 = vpop.f32.mrb[0].mxu0
      %v613 = vadd.f32 0.0, %v612
      %v614 = vpop.f32.mrb[0].mxu0
      %v615 = vpop.f32.mrb[0].mxu0
      %v616 = vadd.f32 0.0, %v615
      %v617 = vpop.f32.mrb[0].mxu0
      %618 = vdwg.mxu0
      %v619 = vld [vmem:[%s5] sm:$0xff]
      %v620 = vld [vmem:[%s5 + $0x8] sm:$0xff]
      %v621 = vld [vmem:[%s5 + $0x10] sm:$0xff]
      %v622 = vld [vmem:[%s5 + $0x18] sm:$0xff]
      %v623 = vld [vmem:[%s5 + $0x20] sm:$0xff]
      %v624 = vld [vmem:[%s5 + $0x28] sm:$0xff]
      %v625 = vld [vmem:[%s5 + $0x30] sm:$0xff]
      %v626 = vld [vmem:[%s5 + $0x38] sm:$0xff]
      %628 = vset.pattern.permute.xlu0 0
      %629 = vperm.xlu0 %628, %v619
      %v630 = vpop.permute.xlu0 %629
      %633 = vset.pattern.permute.xlu0 0
      %634 = vperm.xlu0 %633, %v620
      %v635 = vpop.permute.xlu0 %634
      %638 = vset.pattern.permute.xlu0 0
      %639 = vperm.xlu0 %638, %v621
      %v640 = vpop.permute.xlu0 %639
      %643 = vset.pattern.permute.xlu0 0
      %644 = vperm.xlu0 %643, %v622
      %v645 = vpop.permute.xlu0 %644
      %648 = vset.pattern.permute.xlu0 0
      %649 = vperm.xlu0 %648, %v623
      %v650 = vpop.permute.xlu0 %649
      %653 = vset.pattern.permute.xlu0 0
      %654 = vperm.xlu0 %653, %v624
      %v655 = vpop.permute.xlu0 %654
      %658 = vset.pattern.permute.xlu0 0
      %659 = vperm.xlu0 %658, %v625
      %v660 = vpop.permute.xlu0 %659
      %663 = vset.pattern.permute.xlu0 0
      %664 = vperm.xlu0 %663, %v626
      %v665 = vpop.permute.xlu0 %664
      %v667 = vmul.f32 %v589, %v630
      %v668 = vmul.f32 %v592, %v635
      %v669 = vmul.f32 %v597, %v640
      %v670 = vmul.f32 %v600, %v645
      %v671 = vmul.f32 %v605, %v650
      %v672 = vmul.f32 %v608, %v655
      %v673 = vmul.f32 %v613, %v660
      %v674 = vmul.f32 %v616, %v665
      %v675 = vld [vmem:[%s6] sm:$0xff]
      %v676 = vld [vmem:[%s6 + $0x8] sm:$0xff]
      %v677 = vld [vmem:[%s6 + $0x10] sm:$0xff]
      %v678 = vld [vmem:[%s6 + $0x18] sm:$0xff]
      %v679 = vld [vmem:[%s6 + $0x20] sm:$0xff]
      %v680 = vld [vmem:[%s6 + $0x28] sm:$0xff]
      %v681 = vld [vmem:[%s6 + $0x30] sm:$0xff]
      %v682 = vld [vmem:[%s6 + $0x38] sm:$0xff]
      %684 = vset.pattern.permute.xlu0 0
      %685 = vperm.xlu0 %684, %v675
      %v686 = vpop.permute.xlu0 %685
      %689 = vset.pattern.permute.xlu0 0
      %690 = vperm.xlu0 %689, %v676
      %v691 = vpop.permute.xlu0 %690
      %694 = vset.pattern.permute.xlu0 0
      %695 = vperm.xlu0 %694, %v677
      %v696 = vpop.permute.xlu0 %695
      %699 = vset.pattern.permute.xlu0 0
      %700 = vperm.xlu0 %699, %v678
      %v701 = vpop.permute.xlu0 %700
      %704 = vset.pattern.permute.xlu0 0
      %705 = vperm.xlu0 %704, %v679
      %v706 = vpop.permute.xlu0 %705
      %709 = vset.pattern.permute.xlu0 0
      %710 = vperm.xlu0 %709, %v680
      %v711 = vpop.permute.xlu0 %710
      %714 = vset.pattern.permute.xlu0 0
      %715 = vperm.xlu0 %714, %v681
      %v716 = vpop.permute.xlu0 %715
      %719 = vset.pattern.permute.xlu0 0
      %720 = vperm.xlu0 %719, %v682
      %v721 = vpop.permute.xlu0 %720
      %v723 = vadd.f32 %v667, %v686
      %v724 = vadd.f32 %v668, %v691
      %v725 = vadd.f32 %v669, %v696
      %v726 = vadd.f32 %v670, %v701
      %v727 = vadd.f32 %v671, %v706
      %v728 = vadd.f32 %v672, %v711
      %v729 = vadd.f32 %v673, %v716
      %v730 = vadd.f32 %v674, %v721
      %v731 = vmax.f32 %v723, 0.0
      %v732 = vmax.f32 %v724, 0.0
      %v733 = vmax.f32 %v725, 0.0
      %v734 = vmax.f32 %v726, 0.0
      %v735 = vmax.f32 %v727, 0.0
      %v736 = vmax.f32 %v728, 0.0
      %v737 = vmax.f32 %v729, 0.0
      %v738 = vmax.f32 %v730, 0.0
      %v739 = vmin.f32 %v731, 6.0
      %v740 = vmin.f32 %v732, 6.0
      %v741 = vmin.f32 %v733, 6.0
      %v742 = vmin.f32 %v734, 6.0
      %v743 = vmin.f32 %v735, 6.0
      %v744 = vmin.f32 %v736, 6.0
      %v745 = vmin.f32 %v737, 6.0
      %v746 = vmin.f32 %v738, 6.0
      %v747 = vld [vmem:[%s7] sm:$0x3]
      %v748 = vpack.c.bf16 %v740, %v739
      %v749 = vpack.c.bf16 %v742, %v741
      %v750 = vpack.c.bf16 %v744, %v743
      %v751 = vpack.c.bf16 %v746, %v745
      %v752 = vld [vmem:[%s8] sm:$0xf]
      %754 = vset.pattern.permute.xlu0 0
      %755 = vperm.xlu0 %754, %v752
      %v756 = vpop.permute.xlu0 %755
      %vm758 = vcmask 523264
      %v760 = vsel %vm758, %v747, 0
      %762 = vmatprep.subr.bf16.mxu0 0
      %763 = vmatpush1.bf16.msra.mxu0 %v748
      %764 = vmatprep.subr.bf16.mxu0 0
      %765 = vmatpush1.bf16.msra.mxu0 %v749
      %766 = vmatprep.subr.bf16.mxu0 0
      %767 = vmatpush1.bf16.msra.mxu0 %v750
      %768 = vmatprep.subr.bf16.mxu0 0
      %769 = vmatpush1.bf16.msra.mxu0 %v751
      %770 = vmatprep.subr.bf16.mxu0 0
      %771 = vmatpush1.bf16.msra.mxu0 0
      %772 = vmatprep.subr.bf16.mxu0 0
      %773 = vmatpush1.bf16.msra.mxu0 0
      %774 = vmatprep.subr.bf16.mxu0 0
      %775 = vmatpush1.bf16.msra.mxu0 0
      %776 = vmatprep.subr.bf16.mxu0 0
      %777 = vmatpush1.bf16.msra.mxu0 0
      %778 = vmatprep.subr.bf16.mxu0 0
      %779 = vmatpush1.bf16.msra.mxu0 0
      %780 = vmatprep.subr.bf16.mxu0 0
      %781 = vmatpush1.bf16.msra.mxu0 0
      %782 = vmatprep.subr.bf16.mxu0 0
      %783 = vmatpush1.bf16.msra.mxu0 0
      %784 = vmatprep.subr.bf16.mxu0 0
      %785 = vmatpush1.bf16.msra.mxu0 0
      %786 = vmatprep.subr.bf16.mxu0 0
      %787 = vmatpush1.bf16.msra.mxu0 0
      %788 = vmatprep.subr.bf16.mxu0 0
      %789 = vmatpush1.bf16.msra.mxu0 0
      %790 = vmatprep.subr.bf16.mxu0 0
      %791 = vmatpush1.bf16.msra.mxu0 0
      %792 = vmatprep.subr.bf16.mxu0 0
      %793 = vmatpush1.bf16.msra.mxu0 0
      %794 = vmatprep.mubr.bf16.mxu0 0
      %795 = vmatmul.mubr.bf16.gmra.mrb[0].mxu0 %v760
      %v796 = vpop.f32.mrb[0].mxu0
      %v797 = vadd.f32 %v756, %v796
      %v798 = vpop.f32.mrb[0].mxu0
      %v799 = vpop.f32.mrb[0].mxu0
      %v800 = vpop.f32.mrb[0].mxu0
      %801 = vdwg.mxu0
      %vm802 = vcmask 1043456
      %v803 = vsel %vm802, %v797, -inf
      %v804 = vrot.slane %v803, 4
      %v805 = vmax.f32 %v803, %v804
      %v806 = vrot.slane %v805, 2
      %v807 = vmax.f32 %v805, %v806
      %v808 = vrot.slane %v807, 1
      %v809 = vmax.f32 %v807, %v808
      %v810 = vsub.f32 %v797, %v809
      %v811 = vmul.f32 %v810, 1.442695
      %v812 = vpow.pop %v811
      %v813 = vsel %vm802, %v812, 0.0
      %v814 = vrot.slane %v813, 4
      %v815 = vadd.f32 %v813, %v814
      %v816 = vrot.slane %v815, 2
      %v817 = vadd.f32 %v815, %v816
      %v818 = vrot.slane %v817, 1
      %v819 = vadd.f32 %v817, %v818
      %v820 = vrcp.pop %v819
      %v821 = vmul.f32 %v812, %v820
      %v822 = vpack.c.bf16 %v821, %v821
      %v824 = vpack.i.b16 %v822, %v822
      %v826 = vlaneseq
      %v827 = vshrl.u32 %v826, 7
      %v828 = vsub.s32 0, %v827
      %v829 = vrot.slane %v824, %v828
      %v831 = vunpack.c.l.b16 %v829
      %v832 = vpack.c.b16 %v831, %v831
      %v834 = vmul.bf16 %v458, %v832
      %v835 = vmul.bf16 %v459, %v832
      %v836 = vmul.bf16 %v460, %v832
      %v837 = vmul.bf16 %v461, %v832
      %v838 = vshrl.u32 %v822, 16
      %v839 = vpack.i.b16 %v838, %v838
      %v841 = vlaneseq
      %v842 = vshrl.u32 %v841, 7
      %v843 = vsub.s32 0, %v842
      %v844 = vrot.slane %v839, %v843
      %v846 = vunpack.c.l.b16 %v844
      %v847 = vpack.c.b16 %v846, %v846
      %v849 = vmul.bf16 %v462, %v847
      %v850 = vmul.bf16 %v463, %v847
      %v851 = vmul.bf16 %v464, %v847
      %v852 = vmul.bf16 %v465, %v847
      %v853 = vadd.bf16 %v834, %v849
      %v854 = vadd.bf16 %v835, %v850
      %v855 = vadd.bf16 %v836, %v851
      %v856 = vadd.bf16 %v837, %v852
      %v857 = vlaneseq
      %v858 = vshrl.u32 %v857, 7
      %v859 = vsub.s32 1, %v858
      %v860 = vrot.slane %v824, %v859
      %v862 = vunpack.c.l.b16 %v860
      %v863 = vpack.c.b16 %v862, %v862
      %v865 = vmul.bf16 %v466, %v863
      %v866 = vmul.bf16 %v467, %v863
      %v867 = vmul.bf16 %v468, %v863
      %v868 = vmul.bf16 %v469, %v863
      %v869 = vadd.bf16 %v853, %v865
      %v870 = vadd.bf16 %v854, %v866
      %v871 = vadd.bf16 %v855, %v867
      %v872 = vadd.bf16 %v856, %v868
      %v873 = vlaneseq
      %v874 = vshrl.u32 %v873, 7
      %v875 = vsub.s32 1, %v874
      %v876 = vrot.slane %v839, %v875
      %v878 = vunpack.c.l.b16 %v876
      %v879 = vpack.c.b16 %v878, %v878
      %v881 = vmul.bf16 %v470, %v879
      %v882 = vmul.bf16 %v471, %v879
      %v883 = vmul.bf16 %v472, %v879
      %v884 = vmul.bf16 %v473, %v879
      %v885 = vadd.bf16 %v869, %v881
      %v886 = vadd.bf16 %v870, %v882
      %v887 = vadd.bf16 %v871, %v883
      %v888 = vadd.bf16 %v872, %v884
      %889 = vst [vmem:[%s456] sm:$0xf] %v885
      %890 = vst [vmem:[%s456 + $0x4] sm:$0xf] %v886
      %891 = vst [vmem:[%s456 + $0x8] sm:$0xf] %v887
      %892 = vst [vmem:[%s456 + $0xc] sm:$0xf] %v888
      %p893 = scmp.lt.s32.totalorder %s24, 1
      %s894 = scalar_select %p893, %s24, 1
      %p895 = scmp.lt.s32.totalorder %s25, 0
      %s896 = scalar_select %p895, %s25, 0
      %s897 = smul.addr %s894, 4
      %s898 = sadd.s32 %s896, %s897
      %s899 = smul.addr %s898, 4
      %s900 = scalar_lea.vmem %s9, %s899
      // Predicated region
      $region57: #{asff_level0_forward.8} parent=55 // pred_check
        %p901 = pneg %p269
      $region58: #{asff_level0_forward.8} parent=55 // pred_check_branch
        %903 = sbr.rel (%p901) target = $region60
      $region59: #{asff_level0_forward.8} parent=55 // pred_region
        _
      $region60: #{asff_level0_forward.8} parent=55 // pred_fallthru
        _
    $region56: #{asff_level0_forward.8} parent=5 // pred_fallthru
      _
    %p904 = scmp.le.s32.totalorder 2, %s15
    // Predicated region
    $region61: #{asff_level0_forward.8} parent=5 // pred_check
      %p905 = pneg %p904
    $region62: #{asff_level0_forward.8} parent=5 // pred_check_branch
      %907 = sbr.rel (%p905) target = $region64
    $region63: #{asff_level0_forward.8} parent=5 // pred_region
      %s908 = ssub.s32 %s15, 2
      // Predicated region
      $region65: #{asff_level0_forward.8} parent=63 // pred_check
        %p909 = pneg %p275
      $region66: #{asff_level0_forward.8} parent=63 // pred_check_branch
        %911 = sbr.rel (%p909) target = $region68
      $region67: #{asff_level0_forward.8} parent=63 // pred_region
        %p912 = scmp.lt.s32.totalorder %s26, 1
        %s913 = scalar_select %p912, %s26, 1
        %p914 = scmp.lt.s32.totalorder %s27, 0
        %s915 = scalar_select %p914, %s27, 0
        %s916 = smul.addr %s913, 4
        %s917 = sadd.s32 %s915, %s916
        %s918 = smul.addr %s917, 4
        %s919 = scalar_lea.vmem %s9, %s918
      $region68: #{asff_level0_forward.8} parent=63 // pred_fallthru
        _
    $region64: #{asff_level0_forward.8} parent=5 // pred_fallthru
      _
  $region6: #{asff_level0_forward.8} parent=0 // loop_footer
    %s19 = sadd.s32 1, %s15
  $region7: #{asff_level0_forward.8} parent=0 // loop_footer_branch
    %14 = sbr.rel target = $region3
  $region8: #{asff_level0_forward.8} parent=0 // loop_exit
    _

// kernel: asff_level0_forward.9
$region0: #{asff_level0_forward.9}
  #allocation0 [shape = 'u32[]', space=smem, size = 0x4, offset = 0x4, fixed_abs, tag = 'smem constant byte address 0x4 - core index']
  #allocation1 [shape = 'u32[144,128]{1,0:T(1,128)}', space=vmem, size = 0x12000, scoped, tag = 'internal scratch']
  %s0 = inlined_call_operand.vmem [shape: bf16[2,1,32,260], index: 0, kind: input, shape index: {}, may-alias: {0,1}]
  %s1 = inlined_call_operand.vmem [shape: bf16[2,1,32,260], index: 1, kind: input, shape index: {}, may-alias: {0,1}]
  %s2 = inlined_call_operand.vmem [shape: bf16[64,288], index: 2, kind: input, shape index: {}]
  %s3 = inlined_call_operand.vmem [shape: f32[64,1], index: 3, kind: input, shape index: {}]
  %s4 = inlined_call_operand.vmem [shape: f32[64,1], index: 4, kind: input, shape index: {}]
  %s5 = inlined_call_operand.vmem [shape: f32[2,64,128], index: 5, kind: output, shape index: {}]
  %s6 = sld [smem:[#allocation0]]
  $region135: #{asff_level0_forward.9} parent=0
    _
  %s8 = ssub.s32 1, %s6
  %s9 = scalar_select 0, %s8, %s6
  $region1: #{asff_level0_forward.9} parent=0
    #allocation2 [shape = 'u8[16384]{0}', space=vmem, size = 0x4000, scoped, tag = 'input window, operand 0']
    #allocation3 [shape = 'u8[16384]{0}', space=vmem, size = 0x4000, scoped, tag = 'input window, operand 1']
    loop: start=0, step=1, limit=4
    $region2: #{asff_level0_forward.9} parent=1 // loop_pre_header
      _
    $region3: #{asff_level0_forward.9} parent=1 // loop_header
      %s11 = sphi 0, %s15
      %p12 = scmp.ge.s32.totalorder %s11, 4
      %s18 = sphi 0, %s30
      %s19 = sphi 0, %s26
      %s20 = sphi 0, %s18
      %s21 = sphi 0, %s19
      %s22 = sphi 0, %s20
      %s23 = sphi 0, %s21
      %s35 = sphi 0, %s37
      %s38 = sphi 0, %s35
      %s39 = sphi 0, %s38
      %s55 = sphi 0, %s39
      %s65 = sphi 0, %s67
      %s68 = sphi 0, %s65
      %s69 = sphi 0, %s68
      %s85 = sphi 0, %s69
      %s89 = sphi 0, %s89
      %s91 = sphi 0, %s89
      %s92 = sphi 0, %s91
      %s106 = sphi 0, %s92
      %s110 = sphi 0, %s110
      %s112 = sphi 0, %s110
      %s113 = sphi 0, %s112
      %s127 = sphi 0, %s113
      %s131 = sphi 0, %s131
      %s133 = sphi 0, %s131
      %s134 = sphi 0, %s133
      %s148 = sphi 0, %s134
      %s156 = sphi 0, %s158
      %s159 = sphi 0, %s156
      %s160 = sphi 0, %s159
      %s176 = sphi 0, %s160
    $region4: #{asff_level0_forward.9} parent=1 // loop_header_branch
      %14 = sbr.rel (%p12) target = $region8
    $region5: #{asff_level0_forward.9} parent=1 // loop_body
      %s16 = ssub.s32 %s11, 1
      %s17 = ssub.s32 %s11, 2
      %s24 = sadd.s32 1, %s19
      %p25 = scmp.ge.s32.totalorder %s24, 1
      %s26 = scalar_select %p25, 0, %s24
      %s27 = sadd.s32 1, %s18
      %s28 = scalar_select %p25, %s27, %s18
      %p29 = scmp.ge.s32.totalorder %s28, 2
      %s30 = scalar_select %p29, 0, %s28
      %s31 = ssub.s32 %s18, %s30
      %s32 = ssub.s32 %s19, %s26
      %s33 = sor.u32 %s31, %s32
      %p34 = scmp.eq.s32.totalorder %s33, 0
      %s36 = sadd.s32 %s35, 1
      %s37 = scalar_select %p34, %s35, %s36
      %p40 = pneg %p34
      %p41 = scmp.eq.s32.totalorder %s11, 1
      %p42 = por %p40, %p41
      %p43 = scmp.ne.s32.totalorder %s35, %s38
      %p44 = scmp.eq.s32.totalorder %s11, 0
      %p45 = por %p43, %p44
      %p46 = scmp.ne.s32.totalorder %s35, %s38
      %p47 = scmp.eq.s32.totalorder %s16, 1
      %p48 = por %p46, %p47
      %p49 = scmp.ne.s32.totalorder %s38, %s39
      %p50 = scmp.eq.s32.totalorder %s16, 0
      %p51 = por %p49, %p50
      %p52 = scmp.ne.s32.totalorder %s38, %s39
      %p53 = scmp.eq.s32.totalorder %s17, 1
      %p54 = por %p52, %p53
      %p56 = scmp.ne.s32.totalorder %s39, %s55
      %p57 = scmp.eq.s32.totalorder %s17, 0
      %p58 = por %p56, %p57
      %s59 = sadd.s32 %s19, 1
      %s60 = sadd.s32 %s26, 1
      %s61 = ssub.s32 %s18, %s30
      %s62 = ssub.s32 %s59, %s60
      %s63 = sor.u32 %s61, %s62
      %p64 = scmp.eq.s32.totalorder %s63, 0
      %s66 = sadd.s32 %s65, 1
      %s67 = scalar_select %p64, %s65, %s66
      %p70 = pneg %p64
      %p71 = scmp.eq.s32.totalorder %s11, 1
      %p72 = por %p70, %p71
      %p73 = scmp.ne.s32.totalorder %s65, %s68
      %p74 = scmp.eq.s32.totalorder %s11, 0
      %p75 = por %p73, %p74
      %p76 = scmp.ne.s32.totalorder %s65, %s68
      %p77 = scmp.eq.s32.totalorder %s16, 1
      %p78 = por %p76, %p77
      %p79 = scmp.ne.s32.totalorder %s68, %s69
      %p80 = scmp.eq.s32.totalorder %s16, 0
      %p81 = por %p79, %p80
      %p82 = scmp.ne.s32.totalorder %s68, %s69
      %p83 = scmp.eq.s32.totalorder %s17, 1
      %p84 = por %p82, %p83
      %p86 = scmp.ne.s32.totalorder %s69, %s85
      %p87 = scmp.eq.s32.totalorder %s17, 0
      %p88 = por %p86, %p87
      %s90 = sadd.s32 %s89, 1
      %p93 = scmp.eq.s32.totalorder %s11, 1
      %p94 = scmp.ne.s32.totalorder %s89, %s91
      %p95 = scmp.eq.s32.totalorder %s11, 0
      %p96 = por %p94, %p95
      %p97 = scmp.ne.s32.totalorder %s89, %s91
      %p98 = scmp.eq.s32.totalorder %s16, 1
      %p99 = por %p97, %p98
      %p100 = scmp.ne.s32.totalorder %s91, %s92
      %p101 = scmp.eq.s32.totalorder %s16, 0
      %p102 = por %p100, %p101
      %p103 = scmp.ne.s32.totalorder %s91, %s92
      %p104 = scmp.eq.s32.totalorder %s17, 1
      %p105 = por %p103, %p104
      %p107 = scmp.ne.s32.totalorder %s92, %s106
      %p108 = scmp.eq.s32.totalorder %s17, 0
      %p109 = por %p107, %p108
      %s111 = sadd.s32 %s110, 1
      %p114 = scmp.eq.s32.totalorder %s11, 1
      %p115 = scmp.ne.s32.totalorder %s110, %s112
      %p116 = scmp.eq.s32.totalorder %s11, 0
      %p117 = por %p115, %p116
      %p118 = scmp.ne.s32.totalorder %s110, %s112
      %p119 = scmp.eq.s32.totalorder %s16, 1
      %p120 = por %p118, %p119
      %p121 = scmp.ne.s32.totalorder %s112, %s113
      %p122 = scmp.eq.s32.totalorder %s16, 0
      %p123 = por %p121, %p122
      %p124 = scmp.ne.s32.totalorder %s112, %s113
      %p125 = scmp.eq.s32.totalorder %s17, 1
      %p126 = por %p124, %p125
      %p128 = scmp.ne.s32.totalorder %s113, %s127
      %p129 = scmp.eq.s32.totalorder %s17, 0
      %p130 = por %p128, %p129
      %s132 = sadd.s32 %s131, 1
      %p135 = scmp.eq.s32.totalorder %s11, 1
      %p136 = scmp.ne.s32.totalorder %s131, %s133
      %p137 = scmp.eq.s32.totalorder %s11, 0
      %p138 = por %p136, %p137
      %p139 = scmp.ne.s32.totalorder %s131, %s133
      %p140 = scmp.eq.s32.totalorder %s16, 1
      %p141 = por %p139, %p140
      %p142 = scmp.ne.s32.totalorder %s133, %s134
      %p143 = scmp.eq.s32.totalorder %s16, 0
      %p144 = por %p142, %p143
      %p145 = scmp.ne.s32.totalorder %s133, %s134
      %p146 = scmp.eq.s32.totalorder %s17, 1
      %p147 = por %p145, %p146
      %p149 = scmp.ne.s32.totalorder %s134, %s148
      %p150 = scmp.eq.s32.totalorder %s17, 0
      %p151 = por %p149, %p150
      %s152 = ssub.s32 %s18, %s30
      %s153 = ssub.s32 %s19, %s26
      %s154 = sor.u32 %s152, %s153
      %p155 = scmp.eq.s32.totalorder %s154, 0
      %s157 = sadd.s32 %s156, 1
      %s158 = scalar_select %p155, %s156, %s157
      %p161 = pneg %p155
      %p162 = scmp.eq.s32.totalorder %s11, 1
      %p163 = por %p161, %p162
      %p164 = scmp.ne.s32.totalorder %s156, %s159
      %p165 = scmp.eq.s32.totalorder %s11, 0
      %p166 = por %p164, %p165
      %p167 = scmp.ne.s32.totalorder %s156, %s159
      %p168 = scmp.eq.s32.totalorder %s16, 1
      %p169 = por %p167, %p168
      %p170 = scmp.ne.s32.totalorder %s159, %s160
      %p171 = scmp.eq.s32.totalorder %s16, 0
      %p172 = por %p170, %p171
      %p173 = scmp.ne.s32.totalorder %s159, %s160
      %p174 = scmp.eq.s32.totalorder %s17, 1
      %p175 = por %p173, %p174
      %p177 = scmp.ne.s32.totalorder %s160, %s176
      %p178 = scmp.eq.s32.totalorder %s17, 0
      %p179 = por %p177, %p178
      %p180 = scmp.le.s32.totalorder 1, %s11
      %p181 = scmp.lt.s32.totalorder %s11, 3
      %p182 = pnand %p180, %p181
      %p183 = pneg %p182
      // Predicated region
      $region9: #{asff_level0_forward.9} parent=5 // pred_check
        _
      $region10: #{asff_level0_forward.9} parent=5 // pred_check_branch
        %185 = sbr.rel (%p182) target = $region12
      $region11: #{asff_level0_forward.9} parent=5 // pred_region
        %s186 = ssub.s32 %s11, 1
        // Predicated region
        $region13: #{asff_level0_forward.9} parent=11 // pred_check
          %p187 = pneg %p102
        $region14: #{asff_level0_forward.9} parent=11 // pred_check_branch
          %189 = sbr.rel (%p187) target = $region16
        $region15: #{asff_level0_forward.9} parent=11 // pred_region
          _
        $region16: #{asff_level0_forward.9} parent=11 // pred_fallthru
          _
        // Predicated region
        $region17: #{asff_level0_forward.9} parent=11 // pred_check
          %p190 = pneg %p123
        $region18: #{asff_level0_forward.9} parent=11 // pred_check_branch
          %192 = sbr.rel (%p190) target = $region20
        $region19: #{asff_level0_forward.9} parent=11 // pred_region
          _
        $region20: #{asff_level0_forward.9} parent=11 // pred_fallthru
          _
        // Predicated region
        $region21: #{asff_level0_forward.9} parent=11 // pred_check
          %p193 = pneg %p144
        $region22: #{asff_level0_forward.9} parent=11 // pred_check_branch
          %195 = sbr.rel (%p193) target = $region24
        $region23: #{asff_level0_forward.9} parent=11 // pred_region
          _
        $region24: #{asff_level0_forward.9} parent=11 // pred_fallthru
          _
      $region12: #{asff_level0_forward.9} parent=5 // pred_fallthru
        _
      %p196 = scmp.lt.s32.totalorder %s11, 2
      // Predicated region
      $region25: #{asff_level0_forward.9} parent=5 // pred_check
        %p197 = pneg %p196
      $region26: #{asff_level0_forward.9} parent=5 // pred_check_branch
        %199 = sbr.rel (%p197) target = $region28
      $region27: #{asff_level0_forward.9} parent=5 // pred_region
        // Predicated region
        $region29: #{asff_level0_forward.9} parent=27 // pred_check
          %p200 = pneg %p45
        $region30: #{asff_level0_forward.9} parent=27 // pred_check_branch
          %202 = sbr.rel (%p200) target = $region32
        $region31: #{asff_level0_forward.9} parent=27 // pred_region
          %s203 = sand.u32 %s35, 1
          %s204 = sand.u32 %s35, 1
          %s205 = smul.addr %s204, 16
          %s206 = scalar_lea.vmem [#allocation2], %s205
          %s207 = smul.addr %s18, 12
          %s208 = sadd.s32 %s19, %s207
          %s209 = smul.addr %s208, 4
          %s210 = scalar_lea.vmem %s0, %s209
          // Predicated region
          $region33: #{asff_level0_forward.9} parent=31 // pred_check
            _
          $region34: #{asff_level0_forward.9} parent=31 // pred_check_branch
            %212 = sbr.rel (0) target = $region36
          $region35: #{asff_level0_forward.9} parent=31 // pred_region
            // Predicated region
            $region37: #{asff_level0_forward.9} parent=35 // pred_check
              _
            $region38: #{asff_level0_forward.9} parent=35 // pred_check_branch
              %214 = sbr.rel target = $region40
            $region39: #{asff_level0_forward.9} parent=35 // pred_region
              // Predicated region
              $region52: #{asff_level0_forward.9} parent=39 // pred_check
                _
              $region53: #{asff_level0_forward.9} parent=39 // pred_check_branch
                %235 = sbr.rel (0) target = $region55
              $region54: #{asff_level0_forward.9} parent=39 // pred_region
                loop: start=0, step=1, limit=1
                $region56: #{asff_level0_forward.9} parent=54 // loop_pre_header
                  _
                $region57: #{asff_level0_forward.9} parent=54 // loop_header
                  %s237 = sphi 0, %s241
                  %p238 = scmp.ge.s32.totalorder %s237, 1
                  %s242 = sphi %s210, %s210
                  %s243 = sphi %s206, %s206
                $region58: #{asff_level0_forward.9} parent=54 // loop_header_branch
                  %240 = sbr.rel (%p238) target = $region62
                $region59: #{asff_level0_forward.9} parent=54 // loop_body
                  _
                $region60: #{asff_level0_forward.9} parent=54 // loop_footer
                  %s241 = sadd.s32 1, %s237
                $region61: #{asff_level0_forward.9} parent=54 // loop_footer_branch
                  %236 = sbr.rel target = $region57
                $region62: #{asff_level0_forward.9} parent=54 // loop_exit
                  _
                loop: start=0, step=1, limit=1
                $region63: #{asff_level0_forward.9} parent=54 // loop_pre_header
                  _
                $region64: #{asff_level0_forward.9} parent=54 // loop_header
                  %s246 = sphi 0, %s250
                  %p247 = scmp.ge.s32.totalorder %s246, 1
                  %s251 = sphi %s210, %s210
                  %s252 = sphi %s206, %s206
                $region65: #{asff_level0_forward.9} parent=54 // loop_header_branch
                  %249 = sbr.rel (%p247) target = $region69
                $region66: #{asff_level0_forward.9} parent=54 // loop_body
                  %v253 = vld [vmem:[%s251] sm:$0xf]
                  %254 = vst [vmem:[%s252] sm:$0xf] %v253
                  %v255 = vld [vmem:[%s251 + $0xc] sm:$0xf]
                  %256 = vst [vmem:[%s252 + $0x4] sm:$0xf] %v255
                  %v257 = vld [vmem:[%s251 + $0x18] sm:$0xf]
                  %258 = vst [vmem:[%s252 + $0x8] sm:$0xf] %v257
                  %v259 = vld [vmem:[%s251 + $0x24] sm:$0xf]
                  %260 = vst [vmem:[%s252 + $0xc] sm:$0xf] %v259
                $region67: #{asff_level0_forward.9} parent=54 // loop_footer
                  %s250 = sadd.s32 1, %s246
                $region68: #{asff_level0_forward.9} parent=54 // loop_footer_branch
                  %245 = sbr.rel target = $region64
                $region69: #{asff_level0_forward.9} parent=54 // loop_exit
                  _
              $region55: #{asff_level0_forward.9} parent=39 // pred_fallthru
                _
            $region40: #{asff_level0_forward.9} parent=35 // pred_fallthru
              _
            // Predicated region
            $region41: #{asff_level0_forward.9} parent=35 // pred_check
              _
            $region42: #{asff_level0_forward.9} parent=35 // pred_check_branch
              %216 = sbr.rel (0) target = $region44
            $region43: #{asff_level0_forward.9} parent=35 // pred_region
              loop: start=0, step=1, limit=1
              $region45: #{asff_level0_forward.9} parent=43 // loop_pre_header
                _
              $region46: #{asff_level0_forward.9} parent=43 // loop_header
                %s219 = sphi 0, %s223
                %p220 = scmp.ge.s32.totalorder %s219, 1
                %s224 = sphi %s210, %s210
                %s225 = sphi %s206, %s206
              $region47: #{asff_level0_forward.9} parent=43 // loop_header_branch
                %222 = sbr.rel (%p220) target = $region51
              $region48: #{asff_level0_forward.9} parent=43 // loop_body
                %v226 = vld [vmem:[%s224] sm:$0xf]
                %227 = vst [vmem:[%s225] sm:$0xf] %v226
                %v228 = vld [vmem:[%s224 + $0xc] sm:$0xf]
                %229 = vst [vmem:[%s225 + $0x4] sm:$0xf] %v228
                %v230 = vld [vmem:[%s224 + $0x18] sm:$0xf]
                %231 = vst [vmem:[%s225 + $0x8] sm:$0xf] %v230
                %v232 = vld [vmem:[%s224 + $0x24] sm:$0xf]
                %233 = vst [vmem:[%s225 + $0xc] sm:$0xf] %v232
              $region49: #{asff_level0_forward.9} parent=43 // loop_footer
                %s223 = sadd.s32 1, %s219
              $region50: #{asff_level0_forward.9} parent=43 // loop_footer_branch
                %218 = sbr.rel target = $region46
              $region51: #{asff_level0_forward.9} parent=43 // loop_exit
                _
            $region44: #{asff_level0_forward.9} parent=35 // pred_fallthru
              _
          $region36: #{asff_level0_forward.9} parent=31 // pred_fallthru
            _
          %261 = vnop
        $region32: #{asff_level0_forward.9} parent=27 // pred_fallthru
          _
        // Predicated region
        $region70: #{asff_level0_forward.9} parent=27 // pred_check
          %p262 = pneg %p75
        $region71: #{asff_level0_forward.9} parent=27 // pred_check_branch
          %264 = sbr.rel (%p262) target = $region73
        $region72: #{asff_level0_forward.9} parent=27 // pred_region
          %s265 = sand.u32 %s65, 1
          %s266 = sand.u32 %s65, 1
          %s267 = smul.addr %s266, 16
          %s268 = scalar_lea.vmem [#allocation3], %s267
          %s269 = sadd.s32 %s19, 1
          %s270 = smul.addr %s18, 12
          %s271 = sadd.s32 %s269, %s270
          %s272 = smul.addr %s271, 4
          %s273 = scalar_lea.vmem %s1, %s272
          // Predicated region
          $region74: #{asff_level0_forward.9} parent=72 // pred_check
            _
          $region75: #{asff_level0_forward.9} parent=72 // pred_check_branch
            %275 = sbr.rel (0) target = $region77
          $region76: #{asff_level0_forward.9} parent=72 // pred_region
            // Predicated region
            $region78: #{asff_level0_forward.9} parent=76 // pred_check
              _
            $region79: #{asff_level0_forward.9} parent=76 // pred_check_branch
              %277 = sbr.rel target = $region81
            $region80: #{asff_level0_forward.9} parent=76 // pred_region
              // Predicated region
              $region93: #{asff_level0_forward.9} parent=80 // pred_check
                _
              $region94: #{asff_level0_forward.9} parent=80 // pred_check_branch
                %298 = sbr.rel (0) target = $region96
              $region95: #{asff_level0_forward.9} parent=80 // pred_region
                loop: start=0, step=1, limit=1
                $region97: #{asff_level0_forward.9} parent=95 // loop_pre_header
                  _
                $region98: #{asff_level0_forward.9} parent=95 // loop_header
                  %s300 = sphi 0, %s304
                  %p301 = scmp.ge.s32.totalorder %s300, 1
                  %s305 = sphi %s273, %s273
                  %s306 = sphi %s268, %s268
                $region99: #{asff_level0_forward.9} parent=95 // loop_header_branch
                  %303 = sbr.rel (%p301) target = $region103
                $region100: #{asff_level0_forward.9} parent=95 // loop_body
                  _
                $region101: #{asff_level0_forward.9} parent=95 // loop_footer
                  %s304 = sadd.s32 1, %s300
                $region102: #{asff_level0_forward.9} parent=95 // loop_footer_branch
                  %299 = sbr.rel target = $region98
                $region103: #{asff_level0_forward.9} parent=95 // loop_exit
                  _
                loop: start=0, step=1, limit=1
                $region104: #{asff_level0_forward.9} parent=95 // loop_pre_header
                  _
                $region105: #{asff_level0_forward.9} parent=95 // loop_header
                  %s309 = sphi 0, %s313
                  %p310 = scmp.ge.s32.totalorder %s309, 1
                  %s314 = sphi %s273, %s273
                  %s315 = sphi %s268, %s268
                $region106: #{asff_level0_forward.9} parent=95 // loop_header_branch
                  %312 = sbr.rel (%p310) target = $region110
                $region107: #{asff_level0_forward.9} parent=95 // loop_body
                  %v316 = vld [vmem:[%s314] sm:$0xf]
                  %317 = vst [vmem:[%s315] sm:$0xf] %v316
                  %v318 = vld [vmem:[%s314 + $0xc] sm:$0xf]
                  %319 = vst [vmem:[%s315 + $0x4] sm:$0xf] %v318
                  %v320 = vld [vmem:[%s314 + $0x18] sm:$0xf]
                  %321 = vst [vmem:[%s315 + $0x8] sm:$0xf] %v320
                  %v322 = vld [vmem:[%s314 + $0x24] sm:$0xf]
                  %323 = vst [vmem:[%s315 + $0xc] sm:$0xf] %v322
                $region108: #{asff_level0_forward.9} parent=95 // loop_footer
                  %s313 = sadd.s32 1, %s309
                $region109: #{asff_level0_forward.9} parent=95 // loop_footer_branch
                  %308 = sbr.rel target = $region105
                $region110: #{asff_level0_forward.9} parent=95 // loop_exit
                  _
              $region96: #{asff_level0_forward.9} parent=80 // pred_fallthru
                _
            $region81: #{asff_level0_forward.9} parent=76 // pred_fallthru
              _
            // Predicated region
            $region82: #{asff_level0_forward.9} parent=76 // pred_check
              _
            $region83: #{asff_level0_forward.9} parent=76 // pred_check_branch
              %279 = sbr.rel (0) target = $region85
            $region84: #{asff_level0_forward.9} parent=76 // pred_region
              loop: start=0, step=1, limit=1
              $region86: #{asff_level0_forward.9} parent=84 // loop_pre_header
                _
              $region87: #{asff_level0_forward.9} parent=84 // loop_header
                %s282 = sphi 0, %s286
                %p283 = scmp.ge.s32.totalorder %s282, 1
                %s287 = sphi %s273, %s273
                %s288 = sphi %s268, %s268
              $region88: #{asff_level0_forward.9} parent=84 // loop_header_branch
                %285 = sbr.rel (%p283) target = $region92
              $region89: #{asff_level0_forward.9} parent=84 // loop_body
                %v289 = vld [vmem:[%s287] sm:$0xf]
                %290 = vst [vmem:[%s288] sm:$0xf] %v289
                %v291 = vld [vmem:[%s287 + $0xc] sm:$0xf]
                %292 = vst [vmem:[%s288 + $0x4] sm:$0xf] %v291
                %v293 = vld [vmem:[%s287 + $0x18] sm:$0xf]
                %294 = vst [vmem:[%s288 + $0x8] sm:$0xf] %v293
                %v295 = vld [vmem:[%s287 + $0x24] sm:$0xf]
                %296 = vst [vmem:[%s288 + $0xc] sm:$0xf] %v295
              $region90: #{asff_level0_forward.9} parent=84 // loop_footer
                %s286 = sadd.s32 1, %s282
              $region91: #{asff_level0_forward.9} parent=84 // loop_footer_branch
                %281 = sbr.rel target = $region87
              $region92: #{asff_level0_forward.9} parent=84 // loop_exit
                _
            $region85: #{asff_level0_forward.9} parent=76 // pred_fallthru
              _
          $region77: #{asff_level0_forward.9} parent=72 // pred_fallthru
            _
          %324 = vnop
        $region73: #{asff_level0_forward.9} parent=27 // pred_fallthru
          _
      $region28: #{asff_level0_forward.9} parent=5 // pred_fallthru
        _
      %p325 = scmp.le.s32.totalorder 1, %s11
      %p326 = scmp.lt.s32.totalorder %s11, 3
      %p327 = pnand %p325, %p326
      %p328 = pneg %p327
      // Predicated region
      $region111: #{asff_level0_forward.9} parent=5 // pred_check
        _
      $region112: #{asff_level0_forward.9} parent=5 // pred_check_branch
        %330 = sbr.rel (%p327) target = $region114
      $region113: #{asff_level0_forward.9} parent=5 // pred_region
        %s331 = ssub.s32 %s11, 1
        %s332 = sand.u32 %s38, 1
        %s333 = sand.u32 %s38, 1
        %s334 = smul.addr %s333, 16
        %s335 = scalar_lea.vmem [#allocation2], %s334
        // Predicated region
        $region115: #{asff_level0_forward.9} parent=113 // pred_check
          %p336 = pneg %p51
        $region116: #{asff_level0_forward.9} parent=113 // pred_check_branch
          %338 = sbr.rel (%p336) target = $region118
        $region117: #{asff_level0_forward.9} parent=113 // pred_region
          _
        $region118: #{asff_level0_forward.9} parent=113 // pred_fallthru
          _
        %s339 = sand.u32 %s68, 1
        %s340 = sand.u32 %s68, 1
        %s341 = smul.addr %s340, 16
        %s342 = scalar_lea.vmem [#allocation3], %s341
        // Predicated region
        $region119: #{asff_level0_forward.9} parent=113 // pred_check
          %p343 = pneg %p81
        $region120: #{asff_level0_forward.9} parent=113 // pred_check_branch
          %345 = sbr.rel (%p343) target = $region122
        $region121: #{asff_level0_forward.9} parent=113 // pred_region
          _
        $region122: #{asff_level0_forward.9} parent=113 // pred_fallthru
          _
        %s346 = sand.u32 %s38, 1
        %s347 = sand.u32 %s38, 1
        %s348 = smul.addr %s347, 16
        %s349 = scalar_lea.vmem [#allocation2], %s348
        %p350 = pneg %p51
        %p351 = pneg %p48
        %s352 = sand.u32 %s68, 1
        %s353 = sand.u32 %s68, 1
        %s354 = smul.addr %s353, 16
        %s355 = scalar_lea.vmem [#allocation3], %s354
        %p356 = pneg %p81
        %p357 = pneg %p78
        %p358 = pneg %p102
        %p359 = pneg %p99
        %p360 = pneg %p123
        %p361 = pneg %p120
        %p362 = pneg %p144
        %p363 = pneg %p141
        %p364 = pneg %p172
        %p365 = pneg %p169
        %p366 = scmp.lt.s32.totalorder %s20, 1
        %s367 = scalar_select %p366, %s20, 1
        %p368 = scmp.lt.s32.totalorder %s21, 0
        %s369 = scalar_select %p368, %s21, 0
        %s370 = smul.addr %s367, 8
        %s371 = sadd.s32 %s369, %s370
        %s372 = smul.addr %s371, 8
        %s373 = scalar_lea.vmem %s5, %s372
        %s374 = sadd.s32 %s21, 1
        %p375 = scmp.lt.s32.totalorder %s20, 1
        %s376 = scalar_select %p375, %s20, 1
        %p377 = scmp.lt.s32.totalorder %s21, 0
        %s378 = scalar_select %p377, %s21, 0
        %s379 = smul.addr %s376, 8
        %s380 = sadd.s32 %s378, %s379
        %s381 = smul.addr %s380, 8
        %s382 = scalar_lea.vmem %s5, %s381
        %v384 = vld [vmem:[%s335] sm:$0xf]
        %v385 = vld [vmem:[%s335 + $0x4] sm:$0xf]
        %v386 = vld [vmem:[%s335 + $0x8] sm:$0xf]
        %v387 = vld [vmem:[%s335 + $0xc] sm:$0xf]
        %v388 = vld [vmem:[%s342] sm:$0xf]
        %v389 = vld [vmem:[%s342 + $0x4] sm:$0xf]
        %v390 = vld [vmem:[%s342 + $0x8] sm:$0xf]
        %v391 = vld [vmem:[%s342 + $0xc] sm:$0xf]
        %v396 = vunpack.c.l.b16 %v384
        %v397 = vunpack.c.l.b16 %v385
        %v398 = vunpack.c.l.b16 %v386
        %v399 = vunpack.c.l.b16 %v387
        %v400 = vpack.c.b16 %v397, %v396
        %v401 = vpack.c.b16 %v399, %v398
        %v408 = vunpack.c.l.b16 %v388
        %v409 = vunpack.c.l.b16 %v389
        %v410 = vunpack.c.l.b16 %v390
        %v411 = vunpack.c.l.b16 %v391
        %v412 = vpack.c.b16 %v409, %v408
        %v413 = vpack.c.b16 %v411, %v410
        %414 = vrot.lane.b32.xlu0 %v400, 127
        %v415 = vpop.permute.xlu0 %414
        %416 = vrot.lane.b32.xlu0 %v412, 127
        %v417 = vpop.permute.xlu0 %416
        %418 = vrot.lane.b32.xlu0 %v401, 127
        %v419 = vpop.permute.xlu0 %418
        %420 = vrot.lane.b32.xlu0 %v413, 127
        %v421 = vpop.permute.xlu0 %420
        %vm422 = vcmask 1039360
        %v423 = vsel %vm422, %v415, %v417
        %v424 = vsel %vm422, %v419, %v421
        %427 = vrot.lane.b32.xlu0 %v400, 126
        %v428 = vpop.permute.xlu0 %427
        %429 = vrot.lane.b32.xlu0 %v412, 126
        %v430 = vpop.permute.xlu0 %429
        %431 = vrot.lane.b32.xlu0 %v401, 126
        %v432 = vpop.permute.xlu0 %431
        %433 = vrot.lane.b32.xlu0 %v413, 126
        %v434 = vpop.permute.xlu0 %433
        %vm435 = vcmask 1031168
        %v436 = vsel %vm435, %v428, %v430
        %v437 = vsel %vm435, %v432, %v434
        %440 = vrot.lane.b32.xlu0 %v400, 118
        %v441 = vpop.permute.xlu0 %440
        %442 = vrot.lane.b32.xlu0 %v412, 118
        %v443 = vpop.permute.xlu0 %442
        %444 = vrot.lane.b32.xlu0 %v401, 118
        %v445 = vpop.permute.xlu0 %444
        %446 = vrot.lane.b32.xlu0 %v413, 118
        %v447 = vpop.permute.xlu0 %446
        %vm448 = vcmask 965632
        %v449 = vsel %vm448, %v441, %v443
        %v450 = vsel %vm448, %v445, %v447
        %453 = vrot.lane.b32.xlu0 %v400, 117
        %v454 = vpop.permute.xlu0 %453
        %455 = vrot.lane.b32.xlu0 %v412, 117
        %v456 = vpop.permute.xlu0 %455
        %457 = vrot.lane.b32.xlu0 %v401, 117
        %v458 = vpop.permute.xlu0 %457
        %459 = vrot.lane.b32.xlu0 %v413, 117
        %v460 = vpop.permute.xlu0 %459
        %vm461 = vcmask 957440
        %v462 = vsel %vm461, %v454, %v456
        %v463 = vsel %vm461, %v458, %v460
        %466 = vrot.lane.b32.xlu0 %v400, 116
        %v467 = vpop.permute.xlu0 %466
        %468 = vrot.lane.b32.xlu0 %v412, 116
        %v469 = vpop.permute.xlu0 %468
        %470 = vrot.lane.b32.xlu0 %v401, 116
        %v471 = vpop.permute.xlu0 %470
        %472 = vrot.lane.b32.xlu0 %v413, 116
        %v473 = vpop.permute.xlu0 %472
        %vm474 = vcmask 949248
        %v475 = vsel %vm474, %v467, %v469
        %v476 = vsel %vm474, %v471, %v473
        %479 = vrot.lane.b32.xlu0 %v400, 108
        %v480 = vpop.permute.xlu0 %479
        %481 = vrot.lane.b32.xlu0 %v412, 108
        %v482 = vpop.permute.xlu0 %481
        %483 = vrot.lane.b32.xlu0 %v401, 108
        %v484 = vpop.permute.xlu0 %483
        %485 = vrot.lane.b32.xlu0 %v413, 108
        %v486 = vpop.permute.xlu0 %485
        %vm487 = vcmask 883712
        %v488 = vsel %vm487, %v480, %v482
        %v489 = vsel %vm487, %v484, %v486
        %492 = vrot.lane.b32.xlu0 %v400, 107
        %v493 = vpop.permute.xlu0 %492
        %494 = vrot.lane.b32.xlu0 %v412, 107
        %v495 = vpop.permute.xlu0 %494
        %496 = vrot.lane.b32.xlu0 %v401, 107
        %v497 = vpop.permute.xlu0 %496
        %498 = vrot.lane.b32.xlu0 %v413, 107
        %v499 = vpop.permute.xlu0 %498
        %vm500 = vcmask 875520
        %v501 = vsel %vm500, %v493, %v495
        %v502 = vsel %vm500, %v497, %v499
        %505 = vrot.lane.b32.xlu0 %v400, 106
        %v506 = vpop.permute.xlu0 %505
        %507 = vrot.lane.b32.xlu0 %v412, 106
        %v508 = vpop.permute.xlu0 %507
        %509 = vrot.lane.b32.xlu0 %v401, 106
        %v510 = vpop.permute.xlu0 %509
        %511 = vrot.lane.b32.xlu0 %v413, 106
        %v512 = vpop.permute.xlu0 %511
        %vm513 = vcmask 867328
        %v514 = vsel %vm513, %v506, %v508
        %v515 = vsel %vm513, %v510, %v512
        %v518 = vld [vmem:[%s2] sm:$0xff]
        %v519 = vld [vmem:[%s2 + $0x8] sm:$0xf]
        %v520 = vld [vmem:[%s2 + $0xc] sm:$0xff]
        %v521 = vld [vmem:[%s2 + $0x14] sm:$0xf]
        %v522 = vld [vmem:[%s2 + $0x18] sm:$0xff]
        %v523 = vld [vmem:[%s2 + $0x20] sm:$0xf]
        %v524 = vld [vmem:[%s2 + $0x24] sm:$0xff]
        %v525 = vld [vmem:[%s2 + $0x2c] sm:$0xf]
        %v526 = vld [vmem:[%s2 + $0x30] sm:$0xff]
        %v527 = vld [vmem:[%s2 + $0x38] sm:$0xf]
        %v528 = vld [vmem:[%s2 + $0x3c] sm:$0xff]
        %v529 = vld [vmem:[%s2 + $0x44] sm:$0xf]
        %v530 = vld [vmem:[%s2 + $0x48] sm:$0xff]
        %v531 = vld [vmem:[%s2 + $0x50] sm:$0xf]
        %v532 = vld [vmem:[%s2 + $0x54] sm:$0xff]
        %v533 = vld [vmem:[%s2 + $0x5c] sm:$0xf]
        %v550 = vunpack.c.l.b16 %v518
        %v551 = vunpack.c.h.b16 %v518
        %v552 = vunpack.c.l.b16 %v519
        %v553 = vunpack.c.l.b16 %v520
        %v554 = vunpack.c.h.b16 %v520
        %v555 = vunpack.c.l.b16 %v521
        %v556 = vunpack.c.l.b16 %v522
        %v557 = vunpack.c.h.b16 %v522
        %v558 = vunpack.c.l.b16 %v523
        %v559 = vunpack.c.l.b16 %v524
        %v560 = vunpack.c.h.b16 %v524
        %v561 = vunpack.c.l.b16 %v525
        %v562 = vunpack.c.l.b16 %v526
        %v563 = vunpack.c.h.b16 %v526
        %v564 = vunpack.c.l.b16 %v527
        %v565 = vunpack.c.l.b16 %v528
        %v566 = vunpack.c.h.b16 %v528
        %v567 = vunpack.c.l.b16 %v529
        %v568 = vunpack.c.l.b16 %v530
        %v569 = vunpack.c.h.b16 %v530
        %v570 = vunpack.c.l.b16 %v531
        %v571 = vunpack.c.l.b16 %v532
        %v572 = vunpack.c.h.b16 %v532
        %v573 = vunpack.c.l.b16 %v533
        %v574 = vpack.c.b16 %v553, %v550
        %v575 = vpack.c.b16 %v554, %v551
        %v576 = vpack.c.b16 %v555, %v552
        %v577 = vpack.c.b16 %v559, %v556
        %v578 = vpack.c.b16 %v560, %v557
        %v579 = vpack.c.b16 %v561, %v558
        %v580 = vpack.c.b16 %v565, %v562
        %v581 = vpack.c.b16 %v566, %v563
        %v582 = vpack.c.b16 %v567, %v564
        %v583 = vpack.c.b16 %v571, %v568
        %v584 = vpack.c.b16 %v572, %v569
        %v585 = vpack.c.b16 %v573, %v570
        %vm594 = vcmask 261120
        %v596 = vsel %vm594, %v576, 0
        %v599 = vsel %vm594, %v579, 0
        %v602 = vsel %vm594, %v582, 0
        %v605 = vsel %vm594, %v585, 0
        %607 = vmatprep.subr.bf16.mxu0 0
        %608 = vmatpush1.bf16.msra.mxu0 %v400
        %609 = vmatprep.subr.bf16.mxu0 0
        %610 = vmatpush1.bf16.msra.mxu0 %v401
        %611 = vmatprep.subr.bf16.mxu0 0
        %612 = vmatpush1.bf16.msra.mxu0 %v423
        %613 = vmatprep.subr.bf16.mxu0 0
        %614 = vmatpush1.bf16.msra.mxu0 %v424
        %615 = vmatprep.subr.bf16.mxu0 0
        %616 = vmatpush1.bf16.msra.mxu0 %v436
        %617 = vmatprep.subr.bf16.mxu0 0
        %618 = vmatpush1.bf16.msra.mxu0 %v437
        %619 = vmatprep.subr.bf16.mxu0 0
        %620 = vmatpush1.bf16.msra.mxu0 %v449
        %621 = vmatprep.subr.bf16.mxu0 0
        %622 = vmatpush1.bf16.msra.mxu0 %v450
        %623 = vmatprep.subr.bf16.mxu0 0
        %624 = vmatpush1.bf16.msra.mxu0 %v462
        %625 = vmatprep.subr.bf16.mxu0 0
        %626 = vmatpush1.bf16.msra.mxu0 %v463
        %627 = vmatprep.subr.bf16.mxu0 0
        %628 = vmatpush1.bf16.msra.mxu0 %v475
        %629 = vmatprep.subr.bf16.mxu0 0
        %630 = vmatpush1.bf16.msra.mxu0 %v476
        %631 = vmatprep.subr.bf16.mxu0 0
        %632 = vmatpush1.bf16.msra.mxu0 %v488
        %633 = vmatprep.subr.bf16.mxu0 0
        %634 = vmatpush1.bf16.msra.mxu0 %v489
        %635 = vmatprep.subr.bf16.mxu0 0
        %636 = vmatpush1.bf16.msra.mxu0 %v501
        %637 = vmatprep.subr.bf16.mxu0 0
        %638 = vmatpush1.bf16.msra.mxu0 %v502
        %639 = vmatprep.mubr.bf16.mxu0 %v575
        %640 = vmatmul.mubr.bf16.gmra.mrb[0].mxu0 %v574
        %v641 = vpop.f32.mrb[0].mxu0
        %v642 = vadd.f32 0.0, %v641
        %v643 = vpop.f32.mrb[0].mxu0
        %v644 = vpop.f32.mrb[0].mxu0
        %v645 = vadd.f32 0.0, %v644
        %v646 = vpop.f32.mrb[0].mxu0
        %647 = vmatprep.mubr.bf16.mxu0 %v578
        %648 = vmatmul.mubr.bf16.gmra.mrb[0].mxu0 %v577
        %v649 = vpop.f32.mrb[0].mxu0
        %v650 = vadd.f32 0.0, %v649
        %v651 = vpop.f32.mrb[0].mxu0
        %v652 = vpop.f32.mrb[0].mxu0
        %v653 = vadd.f32 0.0, %v652
        %v654 = vpop.f32.mrb[0].mxu0
        %655 = vmatprep.mubr.bf16.mxu0 %v581
        %656 = vmatmul.mubr.bf16.gmra.mrb[0].mxu0 %v580
        %v657 = vpop.f32.mrb[0].mxu0
        %v658 = vadd.f32 0.0, %v657
        %v659 = vpop.f32.mrb[0].mxu0
        %v660 = vpop.f32.mrb[0].mxu0
        %v661 = vadd.f32 0.0, %v660
        %v662 = vpop.f32.mrb[0].mxu0
        %663 = vmatprep.mubr.bf16.mxu0 %v584
        %664 = vmatmul.mubr.bf16.gmra.mrb[0].mxu0 %v583
        %v665 = vpop.f32.mrb[0].mxu0
        %v666 = vadd.f32 0.0, %v665
        %v667 = vpop.f32.mrb[0].mxu0
        %v668 = vpop.f32.mrb[0].mxu0
        %v669 = vadd.f32 0.0, %v668
        %v670 = vpop.f32.mrb[0].mxu0
        %671 = vdwg.mxu0
        %672 = vmatprep.subr.bf16.mxu0 0
        %673 = vmatpush1.bf16.msra.mxu0 %v514
        %674 = vmatprep.subr.bf16.mxu0 0
        %675 = vmatpush1.bf16.msra.mxu0 %v515
        %676 = vmatprep.subr.bf16.mxu0 0
        %677 = vmatpush1.bf16.msra.mxu0 0
        %678 = vmatprep.subr.bf16.mxu0 0
        %679 = vmatpush1.bf16.msra.mxu0 0
        %680 = vmatprep.subr.bf16.mxu0 0
        %681 = vmatpush1.bf16.msra.mxu0 0
        %682 = vmatprep.subr.bf16.mxu0 0
        %683 = vmatpush1.bf16.msra.mxu0 0
        %684 = vmatprep.subr.bf16.mxu0 0
        %685 = vmatpush1.bf16.msra.mxu0 0
        %686 = vmatprep.subr.bf16.mxu0 0
        %687 = vmatpush1.bf16.msra.mxu0 0
        %688 = vmatprep.subr.bf16.mxu0 0
        %689 = vmatpush1.bf16.msra.mxu0 0
        %690 = vmatprep.subr.bf16.mxu0 0
        %691 = vmatpush1.bf16.msra.mxu0 0
        %692 = vmatprep.subr.bf16.mxu0 0
        %693 = vmatpush1.bf16.msra.mxu0 0
        %694 = vmatprep.subr.bf16.mxu0 0
        %695 = vmatpush1.bf16.msra.mxu0 0
        %696 = vmatprep.subr.bf16.mxu0 0
        %697 = vmatpush1.bf16.msra.mxu0 0
        %698 = vmatprep.subr.bf16.mxu0 0
        %699 = vmatpush1.bf16.msra.mxu0 0
        %700 = vmatprep.subr.bf16.mxu0 0
        %701 = vmatpush1.bf16.msra.mxu0 0
        %702 = vmatprep.subr.bf16.mxu0 0
        %703 = vmatpush1.bf16.msra.mxu0 0
        %704 = vmatprep.mubr.bf16.mxu0 0
        %705 = vmatmul.mubr.bf16.gmra.mrb[0].mxu0 %v596
        %v706 = vpop.f32.mrb[0].mxu0
        %v707 = vadd.f32 %v642, %v706
        %v708 = vpop.f32.mrb[0].mxu0
        %v709 = vpop.f32.mrb[0].mxu0
        %v710 = vadd.f32 %v645, %v709
        %v711 = vpop.f32.mrb[0].mxu0
        %712 = vmatprep.mubr.bf16.mxu0 0
        %713 = vmatmul.mubr.bf16.gmra.mrb[0].mxu0 %v599
        %v714 = vpop.f32.mrb[0].mxu0
        %v715 = vadd.f32 %v650, %v714
        %v716 = vpop.f32.mrb[0].mxu0
        %v717 = vpop.f32.mrb[0].mxu0
        %v718 = vadd.f32 %v653, %v717
        %v719 = vpop.f32.mrb[0].mxu0
        %720 = vmatprep.mubr.bf16.mxu0 0
        %721 = vmatmul.mubr.bf16.gmra.mrb[0].mxu0 %v602
        %v722 = vpop.f32.mrb[0].mxu0
        %v723 = vadd.f32 %v658, %v722
        %v724 = vpop.f32.mrb[0].mxu0
        %v725 = vpop.f32.mrb[0].mxu0
        %v726 = vadd.f32 %v661, %v725
        %v727 = vpop.f32.mrb[0].mxu0
        %728 = vmatprep.mubr.bf16.mxu0 0
        %729 = vmatmul.mubr.bf16.gmra.mrb[0].mxu0 %v605
        %v730 = vpop.f32.mrb[0].mxu0
        %v731 = vadd.f32 %v666, %v730
        %v732 = vpop.f32.mrb[0].mxu0
        %v733 = vpop.f32.mrb[0].mxu0
        %v734 = vadd.f32 %v669, %v733
        %v735 = vpop.f32.mrb[0].mxu0
        %736 = vdwg.mxu0
        %v737 = vld [vmem:[%s3] sm:$0xff]
        %v738 = vld [vmem:[%s3 + $0x8] sm:$0xff]
        %v739 = vld [vmem:[%s3 + $0x10] sm:$0xff]
        %v740 = vld [vmem:[%s3 + $0x18] sm:$0xff]
        %v741 = vld [vmem:[%s3 + $0x20] sm:$0xff]
        %v742 = vld [vmem:[%s3 + $0x28] sm:$0xff]
        %v743 = vld [vmem:[%s3 + $0x30] sm:$0xff]
        %v744 = vld [vmem:[%s3 + $0x38] sm:$0xff]
        %746 = vset.pattern.permute.xlu0 0
        %747 = vperm.xlu0 %746, %v737
        %v748 = vpop.permute.xlu0 %747
        %751 = vset.pattern.permute.xlu0 0
        %752 = vperm.xlu0 %751, %v738
        %v753 = vpop.permute.xlu0 %752
        %756 = vset.pattern.permute.xlu0 0
        %757 = vperm.xlu0 %756, %v739
        %v758 = vpop.permute.xlu0 %757
        %761 = vset.pattern.permute.xlu0 0
        %762 = vperm.xlu0 %761, %v740
        %v763 = vpop.permute.xlu0 %762
        %766 = vset.pattern.permute.xlu0 0
        %767 = vperm.xlu0 %766, %v741
        %v768 = vpop.permute.xlu0 %767
        %771 = vset.pattern.permute.xlu0 0
        %772 = vperm.xlu0 %771, %v742
        %v773 = vpop.permute.xlu0 %772
        %776 = vset.pattern.permute.xlu0 0
        %777 = vperm.xlu0 %776, %v743
        %v778 = vpop.permute.xlu0 %777
        %781 = vset.pattern.permute.xlu0 0
        %782 = vperm.xlu0 %781, %v744
        %v783 = vpop.permute.xlu0 %782
        %v785 = vmul.f32 %v707, %v748
        %v786 = vmul.f32 %v710, %v753
        %v787 = vmul.f32 %v715, %v758
        %v788 = vmul.f32 %v718, %v763
        %v789 = vmul.f32 %v723, %v768
        %v790 = vmul.f32 %v726, %v773
        %v791 = vmul.f32 %v731, %v778
        %v792 = vmul.f32 %v734, %v783
        %v793 = vld [vmem:[%s4] sm:$0xff]
        %v794 = vld [vmem:[%s4 + $0x8] sm:$0xff]
        %v795 = vld [vmem:[%s4 + $0x10] sm:$0xff]
        %v796 = vld [vmem:[%s4 + $0x18] sm:$0xff]
        %v797 = vld [vmem:[%s4 + $0x20] sm:$0xff]
        %v798 = vld [vmem:[%s4 + $0x28] sm:$0xff]
        %v799 = vld [vmem:[%s4 + $0x30] sm:$0xff]
        %v800 = vld [vmem:[%s4 + $0x38] sm:$0xff]
        %802 = vset.pattern.permute.xlu0 0
        %803 = vperm.xlu0 %802, %v793
        %v804 = vpop.permute.xlu0 %803
        %807 = vset.pattern.permute.xlu0 0
        %808 = vperm.xlu0 %807, %v794
        %v809 = vpop.permute.xlu0 %808
        %812 = vset.pattern.permute.xlu0 0
        %813 = vperm.xlu0 %812, %v795
        %v814 = vpop.permute.xlu0 %813
        %817 = vset.pattern.permute.xlu0 0
        %818 = vperm.xlu0 %817, %v796
        %v819 = vpop.permute.xlu0 %818
        %822 = vset.pattern.permute.xlu0 0
        %823 = vperm.xlu0 %822, %v797
        %v824 = vpop.permute.xlu0 %823
        %827 = vset.pattern.permute.xlu0 0
        %828 = vperm.xlu0 %827, %v798
        %v829 = vpop.permute.xlu0 %828
        %832 = vset.pattern.permute.xlu0 0
        %833 = vperm.xlu0 %832, %v799
        %v834 = vpop.permute.xlu0 %833
        %837 = vset.pattern.permute.xlu0 0
        %838 = vperm.xlu0 %837, %v800
        %v839 = vpop.permute.xlu0 %838
        %v841 = vadd.f32 %v785, %v804
        %v842 = vadd.f32 %v786, %v809
        %v843 = vadd.f32 %v787, %v814
        %v844 = vadd.f32 %v788, %v819
        %v845 = vadd.f32 %v789, %v824
        %v846 = vadd.f32 %v790, %v829
        %v847 = vadd.f32 %v791, %v834
        %v848 = vadd.f32 %v792, %v839
        %v849 = vmax.f32 %v841, 0.0
        %v850 = vmax.f32 %v842, 0.0
        %v851 = vmax.f32 %v843, 0.0
        %v852 = vmax.f32 %v844, 0.0
        %v853 = vmax.f32 %v845, 0.0
        %v854 = vmax.f32 %v846, 0.0
        %v855 = vmax.f32 %v847, 0.0
        %v856 = vmax.f32 %v848, 0.0
        %v857 = vmin.f32 %v849, 6.0
        %v858 = vmin.f32 %v850, 6.0
        %v859 = vmin.f32 %v851, 6.0
        %v860 = vmin.f32 %v852, 6.0
        %v861 = vmin.f32 %v853, 6.0
        %v862 = vmin.f32 %v854, 6.0
        %v863 = vmin.f32 %v855, 6.0
        %v864 = vmin.f32 %v856, 6.0
        %865 = vst [vmem:[%s382] sm:$0xff] %v857
        %866 = vst [vmem:[%s382 + $0x8] sm:$0xff] %v858
        %867 = vst [vmem:[%s382 + $0x10] sm:$0xff] %v859
        %868 = vst [vmem:[%s382 + $0x18] sm:$0xff] %v860
        %869 = vst [vmem:[%s382 + $0x20] sm:$0xff] %v861
        %870 = vst [vmem:[%s382 + $0x28] sm:$0xff] %v862
        %871 = vst [vmem:[%s382 + $0x30] sm:$0xff] %v863
        %872 = vst [vmem:[%s382 + $0x38] sm:$0xff] %v864
        %p873 = scmp.lt.s32.totalorder %s20, 1
        %s874 = scalar_select %p873, %s20, 1
        %p875 = scmp.lt.s32.totalorder %s21, 0
        %s876 = scalar_select %p875, %s21, 0
        %s877 = smul.addr %s874, 8
        %s878 = sadd.s32 %s876, %s877
        %s879 = smul.addr %s878, 8
        %s880 = scalar_lea.vmem %s5, %s879
        // Predicated region
        $region123: #{asff_level0_forward.9} parent=113 // pred_check
          %p881 = pneg %p169
        $region124: #{asff_level0_forward.9} parent=113 // pred_check_branch
          %883 = sbr.rel (%p881) target = $region126
        $region125: #{asff_level0_forward.9} parent=113 // pred_region
          _
        $region126: #{asff_level0_forward.9} parent=113 // pred_fallthru
          _
      $region114: #{asff_level0_forward.9} parent=5 // pred_fallthru
        _
      %p884 = scmp.le.s32.totalorder 2, %s11
      // Predicated region
      $region127: #{asff_level0_forward.9} parent=5 // pred_check
        %p885 = pneg %p884
      $region128: #{asff_level0_forward.9} parent=5 // pred_check_branch
        %887 = sbr.rel (%p885) target = $region130
      $region129: #{asff_level0_forward.9} parent=5 // pred_region
        %s888 = ssub.s32 %s11, 2
        // Predicated region
        $region131: #{asff_level0_forward.9} parent=129 // pred_check
          %p889 = pneg %p175
        $region132: #{asff_level0_forward.9} parent=129 // pred_check_branch
          %891 = sbr.rel (%p889) target = $region134
        $region133: #{asff_level0_forward.9} parent=129 // pred_region
          %p892 = scmp.lt.s32.totalorder %s22, 1
          %s893 = scalar_select %p892, %s22, 1
          %p894 = scmp.lt.s32.totalorder %s23, 0
          %s895 = scalar_select %p894, %s23, 0
          %s896 = smul.addr %s893, 8
          %s897 = sadd.s32 %s895, %s896
          %s898 = smul.addr %s897, 8
          %s899 = scalar_lea.vmem %s5, %s898
        $region134: #{asff_level0_forward.9} parent=129 // pred_fallthru
          _
      $region130: #{asff_level0_forward.9} parent=5 // pred_fallthru
        _
    $region6: #{asff_level0_forward.9} parent=1 // loop_footer
      %s15 = sadd.s32 1, %s11
    $region7: #{asff_level0_forward.9} parent=1 // loop_footer_branch
      %10 = sbr.rel target = $region3
    $region8: #{asff_level0_forward.9} parent=1 // loop_exit
      _

</llo_original>
